<compile_context>
chip_gen: v5e
topology: v5e:2x2
jax: 0.10.0
libtpu: 0.0.40
codegen_flags: <defaults>
</compile_context>

<pallas_src>
import functools

import jax
import jax.numpy as jnp
from jax.experimental import pallas as pl
from jax.experimental.pallas import tpu as pltpu

LANE = 128  # all channel dims are padded to one full lane group


def _sigmoid(x):
    # tanh form -> EUP slot, avoids an extra VPU divide.
    return 0.5 * (jnp.tanh(0.5 * x) + 1.0)


def _round_up(x, m):
    return (x + m - 1) // m * m


def _pick_row_tile(Ho, Wt, max_m=512):
    """Largest divisor R of Ho with R*Wt <= max_m (keeps the f32 acc bounded)."""
    for r in range(Ho, 0, -1):
        if Ho % r == 0 and r * Wt <= max_m:
            return r
    return 1


# ----------------------------------------------------------------------------
# Direct 3x3 conv kernel: in-kernel padding, row-blocked tap matmuls,
# fused bias + SiLU + residual.
# ----------------------------------------------------------------------------
def _conv3x3_kernel(x_ref, w_ref, b_ref, o_ref, pad_ref, *,
                    stride, act, has_res, Hin, Win, R, Wo, Wt):
    """Grid = (batch, row_tile).

    x_ref  : stride1 -> (1, H, W, C)        raw NHWC input block (bf16)
             stride2 -> (1, 4, Hq, Wq, C)   parity planes of the unpadded input
    w_ref  : (9, C, Cout)                   taps in (di*3+dj) order (bf16)
    b_ref  : (1, Cout)                      bias (f32, BN folded)
    o_ref  : (1, R, Wo, Cout)               output row block (bf16)
    pad_ref: VMEM scratch holding the zero-padded (parity-plane) input so every
             tap is a contiguous static-width slice and the residual needs no
             second DMA.
    """
    cout = o_ref.shape[-1]

    # Build the zero-padded input in VMEM (cheap VMEM traffic, no HBM pre-pass).
    pad_ref[...] = jnp.zeros(pad_ref.shape, pad_ref.dtype)
    if stride == 1:
        # symmetric pad=1 (PyTorch / TF-SAME agree for stride 1)
        pad_ref[0, 1:1 + Hin, 1:1 + Win, :] = x_ref[0]
    else:
        # TF "SAME" for stride 2: data at origin, zero row/col at bottom/right.
        pad_ref[:, 0:Hin, 0:Win, :] = x_ref[0]

    i0 = pl.multiple_of(pl.program_id(1) * R, R)   # first output row of this tile
    M = R * Wt

    # Bias-seeded f32 accumulator (one broadcast per row block).
    acc = jnp.broadcast_to(b_ref[...], (M, cout)).astype(jnp.float32)

    for di in range(3):
        for dj in range(3):
            if stride == 1:
                q, oi, oj = 0, di, dj
            else:
                q, oi, oj = (di % 2) * 2 + (dj % 2), di // 2, dj // 2
            win = pad_ref[q, pl.ds(oi + i0, R), oj:oj + Wt, :]   # (R, Wt, C) bf16
            acc = acc + jnp.dot(win.reshape(M, win.shape[-1]), w_ref[di * 3 + dj],
                                preferred_element_type=jnp.float32)

    if act == "silu":
        acc = acc * _sigmoid(acc)
    if has_res:
        # Residual = the conv's own input, read from the resident padded block.
        res = pad_ref[0, pl.ds(1 + i0, R), 1:1 + Wt, :]
        acc = acc + res.reshape(M, res.shape[-1]).astype(jnp.float32)

    out = acc.reshape(R, Wt, cout)[:, :Wo, :]        # drop width-padding junk
    o_ref[0] = out.astype(o_ref.dtype)


def conv3x3(x_nhwc, w_taps, bias, *, stride, act, residual_from_input=False):
    """3x3 conv; stride 1 uses pad=1, stride 2 uses TF 'SAME' padding.

    Channels are already padded to LANE.  `residual_from_input=True` adds the
    conv's own input as a residual (FusedMBConv expand=1) without a second DMA.
    """
    B, H, W, C = x_nhwc.shape
    assert C == LANE and w_taps.shape == (9, LANE, LANE)
    assert H % stride == 0 and W % stride == 0  # TODO(synk): odd sizes unhandled
    assert not residual_from_input or stride == 1
    Ho, Wo = H // stride, W // stride
    Wt = _round_up(Wo, 8)                      # sublane-aligned working width
    R = _pick_row_tile(Ho, Wt)
    T = Ho // R

    if stride == 2:
        # One space-to-depth pass (unpadded input): planes[b, pi*2+pj, i, j] =
        # x[b, 2i+pi, 2j+pj].  TODO(synk): move in-kernel (strided pl.ds).
        Hq, Wq = H // 2, W // 2
        xin = x_nhwc.reshape(B, Hq, 2, Wq, 2, C).transpose(0, 2, 4, 1, 3, 5)
        xin = xin.reshape(B, 4, Hq, Wq, C)
        in_spec = pl.BlockSpec((1, 4, Hq, Wq, LANE), lambda b, t: (b, 0, 0, 0, 0))
        Hin, Win, nplanes = Hq, Wq, 4
        Hs, Ws = Hq + 1, Wt + 1
    else:
        xin = x_nhwc
        in_spec = pl.BlockSpec((1, H, W, LANE), lambda b, t: (b, 0, 0, 0))
        Hin, Win, nplanes = H, W, 1
        Hs, Ws = H + 2, Wt + 2

    kernel = functools.partial(
        _conv3x3_kernel, stride=stride, act=act, has_res=residual_from_input,
        Hin=Hin, Win=Win, R=R, Wo=Wo, Wt=Wt)

    return pl.pallas_call(
        kernel,
        out_shape=jax.ShapeDtypeStruct((B, Ho, Wo, LANE), jnp.bfloat16),
        grid=(B, T),
        in_specs=[
            in_spec,                                                   # resident across t
            pl.BlockSpec((9, LANE, LANE), lambda b, t: (0, 0, 0)),
            pl.BlockSpec((1, LANE), lambda b, t: (0, 0)),
        ],
        out_specs=pl.BlockSpec((1, R, Wo, LANE), lambda b, t: (b, t, 0, 0)),
        scratch_shapes=[pltpu.VMEM((nplanes, Hs, Ws, LANE), jnp.bfloat16)],
        compiler_params=pltpu.CompilerParams(
            dimension_semantics=("parallel", "arbitrary"),   # megacore over batch
            vmem_limit_bytes=32 * 1024 * 1024),
    )(xin, w_taps, bias)


# ----------------------------------------------------------------------------
# Fused tail kernel: 1x1 project -> 1x1 conv_head (SiLU) -> global avg pool
#                    -> classifier -> (sigmoid), all full-plane matmuls.
# ----------------------------------------------------------------------------
def _tail_kernel(x_ref, wp_ref, bp_ref, wh_ref, bh_ref, wf_ref, bf_ref, o_ref,
                 *, n_px, activate):
    x2d = x_ref[0]                                            # (n_px, C) bf16
    h1 = jnp.dot(x2d, wp_ref[...],
                 preferred_element_type=jnp.float32) + bp_ref[...]     # project
    # NOTE: bf16 recast before conv_head is a small intermediate-precision
    # divergence vs PyTorch fp32 (accepted; f32 accumulation kept).
    h2 = jnp.dot(h1.astype(jnp.bfloat16), wh_ref[...],
                 preferred_element_type=jnp.float32) + bh_ref[...]     # conv_head
    h2 = h2 * _sigmoid(h2)                                              # SiLU
    pooled = jnp.sum(h2, axis=0, keepdims=True) * (1.0 / float(n_px))   # GAP
    logits = jnp.dot(pooled.astype(jnp.bfloat16), wf_ref[...],
                     preferred_element_type=jnp.float32) + bf_ref[...]
    if activate:
        logits = _sigmoid(logits)
    o_ref[0] = logits.astype(o_ref.dtype)


def fused_tail(x_flat, wp, bp, wh, bh, wf, bf, *, activate):
    B, n_px, C = x_flat.shape
    assert C == LANE and n_px % 8 == 0
    kernel = functools.partial(_tail_kernel, n_px=n_px, activate=activate)
    out = pl.pallas_call(
        kernel,
        out_shape=jax.ShapeDtypeStruct((B, 1, LANE), jnp.float32),
        grid=(B,),
        in_specs=[
            pl.BlockSpec((1, n_px, LANE), lambda b: (b, 0, 0)),
            pl.BlockSpec((LANE, LANE), lambda b: (0, 0)),
            pl.BlockSpec((1, LANE), lambda b: (0, 0)),
            pl.BlockSpec((LANE, LANE), lambda b: (0, 0)),
            pl.BlockSpec((1, LANE), lambda b: (0, 0)),
            pl.BlockSpec((LANE, LANE), lambda b: (0, 0)),
            pl.BlockSpec((1, LANE), lambda b: (0, 0)),
        ],
        out_specs=pl.BlockSpec((1, 1, LANE), lambda b: (b, 0, 0)),
        compiler_params=pltpu.CompilerParams(
            dimension_semantics=("parallel",),
            vmem_limit_bytes=32 * 1024 * 1024),
    )(x_flat, wp, bp, wh, bh, wf, bf)
    return out[:, 0, :]                                       # (B, LANE) f32


# ----------------------------------------------------------------------------
# Deterministic parameter init — weights padded to 128 lanes, pre-arranged in
# kernel layout and cast to bf16 ONCE here (BN folded into zero biases).
# ----------------------------------------------------------------------------
def init_params(key):
    ks = jax.random.split(key, 6)

    def conv_w(k, cin, cout):
        fan_in = cin * 9
        w = (jax.random.normal(k, (3, 3, cin, cout), jnp.float32)
             * (2.0 / fan_in) ** 0.5)
        w = jnp.pad(w, ((0, 0), (0, 0), (0, LANE - cin), (0, LANE - cout)))
        return w.reshape(9, LANE, LANE).astype(jnp.bfloat16)

    def mat_w(k, cin, cout, scale):
        w = jax.random.normal(k, (cin, cout), jnp.float32) * scale
        w = jnp.pad(w, ((0, LANE - cin), (0, LANE - cout)))
        return w.astype(jnp.bfloat16)

    def bias():
        return jnp.zeros((1, LANE), jnp.float32)

    p = {}
    p["stem_w"], p["stem_b"] = conv_w(ks[0], 3, 16), bias()            # 3 -> 16, s2
    p["b1_w"], p["b1_b"] = conv_w(ks[1], 16, 16), bias()               # 16 -> 16, s1
    p["b2_exp_w"], p["b2_exp_b"] = conv_w(ks[2], 16, 64), bias()       # 16 -> 64, s2
    p["b2_prj_w"], p["b2_prj_b"] = mat_w(ks[3], 64, 32, (2.0 / 64) ** 0.5), bias()
    p["head_w"], p["head_b"] = mat_w(ks[4], 32, 64, (2.0 / 32) ** 0.5), bias()
    p["fc_w"], p["fc_b"] = mat_w(ks[5], 64, 1, (1.0 / 64) ** 0.5), bias()
    return p


# ----------------------------------------------------------------------------
# Forward pass (TimmModel.forward with num_classes=1, activate=True -> sigmoid)
# ----------------------------------------------------------------------------
def timm_model_forward(params, x_nchw, activate=True, num_classes=1):
    # One-time layout plumbing: NCHW -> NHWC, pad channels to 128 lanes, bf16.
    x = jnp.transpose(x_nchw, (0, 2, 3, 1))
    assert x.shape[-1] <= LANE
    x = jnp.pad(x, ((0, 0), (0, 0), (0, 0), (0, LANE - x.shape[-1])))
    x = x.astype(jnp.bfloat16)

    # stem: 3x3 stride 2 (TF SAME), SiLU
    x = conv3x3(x, params["stem_w"], params["stem_b"], stride=2, act="silu")
    # block1: FusedMBConv expand=1 (3x3 stride 1, SiLU) + residual from input
    x = conv3x3(x, params["b1_w"], params["b1_b"], stride=1, act="silu",
                residual_from_input=True)
    # block2: FusedMBConv expand conv (3x3 stride 2, TF SAME, SiLU)
    x = conv3x3(x, params["b2_exp_w"], params["b2_exp_b"], stride=2, act="silu")

    if num_classes > 1 and activate:
        # TODO(synk): softmax branch unused for the num_classes=1 default config.
        raise NotImplementedError("softmax head not implemented")

    # Fused: 1x1 project + 1x1 conv_head (SiLU) + global pool + fc (+ sigmoid)
    B, Ho, Wo, C = x.shape
    x_flat = x.reshape(B, Ho * Wo, C)            # free metadata reshape in XLA
    out = fused_tail(x_flat, params["b2_prj_w"], params["b2_prj_b"],
                     params["head_w"], params["head_b"],
                     params["fc_w"], params["fc_b"], activate=activate)
    return out[:, :num_classes]                  # (B, num_classes) f32


if __name__ == "__main__":
    key = jax.random.PRNGKey(0)
    k_param, k_x = jax.random.split(key)
    params = init_params(k_param)
    x = jax.random.normal(k_x, (2, 3, 16, 16), jnp.float32)  # NCHW like PyTorch
    fwd = jax.jit(timm_model_forward)
    out = jax.block_until_ready(fwd(params, x))
    assert out.shape == (2, 1) and out.dtype == jnp.float32
    assert bool(jnp.all((out >= 0.0) & (out <= 1.0)))
    print("KERNEL_OK")
</pallas_src>

<mosaic_0001>
module attributes {stable_mosaic.version = 11 : i64} {
  func.func @_conv3x3_kernel(%arg0: i32, %arg1: i32, %arg2: memref<1x4x8x8x128xbf16, #tpu.memory_space<vmem>>, %arg3: memref<9x128x128xbf16, #tpu.memory_space<vmem>>, %arg4: memref<1x128xf32, #tpu.memory_space<vmem>>, %arg5: memref<1x8x8x128xbf16, #tpu.memory_space<vmem>>, %arg6: memref<4x9x9x128xbf16, #tpu.memory_space<vmem>>) attributes {dimension_semantics = [#tpu.dimension_semantics<parallel>, #tpu.dimension_semantics<arbitrary>], iteration_bounds = array<i64: 2, 1>, scalar_prefetch = 0 : i64, scratch_operands = 1 : i64, tpu.core_type = #tpu.core_type<tc>, window_params = [{transform_indices = @transform_0, window_bounds = array<i64: 1, 4, 8, 8, 128>}, {pipeline_mode = #tpu.pipeline_mode<synchronous>, transform_indices = @transform_1, window_bounds = array<i64: 9, 128, 128>}, {pipeline_mode = #tpu.pipeline_mode<synchronous>, transform_indices = @transform_2, window_bounds = array<i64: 1, 128>}, {transform_indices = @transform_3, window_bounds = array<i64: 1, 8, 8, 128>}]} {
    %cst = arith.constant 0.000000e+00 : bf16
    %0 = vector.broadcast %cst : bf16 to vector<4x9x9x128xbf16>
    %c0 = arith.constant 0 : index
    %c0_0 = arith.constant 0 : index
    %c0_1 = arith.constant 0 : index
    %c0_2 = arith.constant 0 : index
    %1 = vector.load %arg6[%c0, %c0_0, %c0_1, %c0_2] : memref<4x9x9x128xbf16, #tpu.memory_space<vmem>>, vector<4x9x9x128xbf16>
    tpu.vector_store %arg6[%c0, %c0_0, %c0_1, %c0_2], %0 {strides = array<i32>} : memref<4x9x9x128xbf16, #tpu.memory_space<vmem>>, vector<4x9x9x128xbf16>,
    %c0_3 = arith.constant 0 : index
    %c0_4 = arith.constant 0 : index
    %c0_5 = arith.constant 0 : index
    %c0_6 = arith.constant 0 : index
    %c0_7 = arith.constant 0 : index
    %2 = vector.load %arg2[%c0_3, %c0_4, %c0_5, %c0_6, %c0_7] : memref<1x4x8x8x128xbf16, #tpu.memory_space<vmem>>, vector<1x4x8x8x128xbf16>
    %3 = vector.shape_cast %2 : vector<1x4x8x8x128xbf16> to vector<4x8x8x128xbf16>
    %c0_8 = arith.constant 0 : index
    %c0_9 = arith.constant 0 : index
    %c0_10 = arith.constant 0 : index
    %c0_11 = arith.constant 0 : index
    %4 = vector.load %arg6[%c0_8, %c0_9, %c0_10, %c0_11] : memref<4x9x9x128xbf16, #tpu.memory_space<vmem>>, vector<4x8x8x128xbf16>
    tpu.vector_store %arg6[%c0_8, %c0_9, %c0_10, %c0_11], %3 {strides = array<i32>} : memref<4x9x9x128xbf16, #tpu.memory_space<vmem>>, vector<4x8x8x128xbf16>,
    %c8_i32 = arith.constant 8 : i32
    %5 = arith.muli %arg1, %c8_i32 : i32
    %6 = tpu.assume_multiple %5, 8 : i32
    %c0_12 = arith.constant 0 : index
    %c0_13 = arith.constant 0 : index
    %7 = vector.load %arg4[%c0_12, %c0_13] : memref<1x128xf32, #tpu.memory_space<vmem>>, vector<1x128xf32>
    %8 = vector.shape_cast %7 : vector<1x128xf32> to vector<1x128xf32>
    %9 = vector.broadcast %8 : vector<1x128xf32> to vector<64x128xf32>
    %c0_i32 = arith.constant 0 : i32
    %10 = arith.addi %c0_i32, %6 : i32
    %c0_14 = arith.constant 0 : index
    %11 = arith.index_cast %10 : i32 to index
    %c0_15 = arith.constant 0 : index
    %c0_16 = arith.constant 0 : index
    %12 = vector.load %arg6[%c0_14, %11, %c0_15, %c0_16] : memref<4x9x9x128xbf16, #tpu.memory_space<vmem>>, vector<1x8x8x128xbf16>
    %13 = vector.shape_cast %12 : vector<1x8x8x128xbf16> to vector<8x8x128xbf16>
    %14 = vector.shape_cast %13 : vector<8x8x128xbf16> to vector<64x128xbf16>
    %c0_17 = arith.constant 0 : index
    %c0_18 = arith.constant 0 : index
    %c0_19 = arith.constant 0 : index
    %15 = vector.load %arg3[%c0_17, %c0_18, %c0_19] : memref<9x128x128xbf16, #tpu.memory_space<vmem>>, vector<1x128x128xbf16>
    %16 = vector.shape_cast %15 : vector<1x128x128xbf16> to vector<128x128xbf16>
    %cst_20 = arith.constant dense<0.000000e+00> : vector<64x128xf32>
    %17 = tpu.matmul %14, %16, %cst_20 {dimension_numbers = #tpu.dot_dimension_numbers<[1], [0], [0], [1], [0, 0, 1, 1], [], []>} : vector<64x128xbf16>, vector<128x128xbf16>, vector<64x128xf32> -> vector<64x128xf32>
    %18 = arith.addf %9, %17 : vector<64x128xf32>
    %c0_i32_21 = arith.constant 0 : i32
    %19 = arith.addi %c0_i32_21, %6 : i32
    %c1 = arith.constant 1 : index
    %20 = arith.index_cast %19 : i32 to index
    %c0_22 = arith.constant 0 : index
    %c0_23 = arith.constant 0 : index
    %21 = vector.load %arg6[%c1, %20, %c0_22, %c0_23] : memref<4x9x9x128xbf16, #tpu.memory_space<vmem>>, vector<1x8x8x128xbf16>
    %22 = vector.shape_cast %21 : vector<1x8x8x128xbf16> to vector<8x8x128xbf16>
    %23 = vector.shape_cast %22 : vector<8x8x128xbf16> to vector<64x128xbf16>
    %c1_24 = arith.constant 1 : index
    %c0_25 = arith.constant 0 : index
    %c0_26 = arith.constant 0 : index
    %24 = vector.load %arg3[%c1_24, %c0_25, %c0_26] : memref<9x128x128xbf16, #tpu.memory_space<vmem>>, vector<1x128x128xbf16>
    %25 = vector.shape_cast %24 : vector<1x128x128xbf16> to vector<128x128xbf16>
    %cst_27 = arith.constant dense<0.000000e+00> : vector<64x128xf32>
    %26 = tpu.matmul %23, %25, %cst_27 {dimension_numbers = #tpu.dot_dimension_numbers<[1], [0], [0], [1], [0, 0, 1, 1], [], []>} : vector<64x128xbf16>, vector<128x128xbf16>, vector<64x128xf32> -> vector<64x128xf32>
    %27 = arith.addf %18, %26 : vector<64x128xf32>
    %c0_i32_28 = arith.constant 0 : i32
    %28 = arith.addi %c0_i32_28, %6 : i32
    %c0_29 = arith.constant 0 : index
    %29 = arith.index_cast %28 : i32 to index
    %c1_30 = arith.constant 1 : index
    %c0_31 = arith.constant 0 : index
    %30 = vector.load %arg6[%c0_29, %29, %c1_30, %c0_31] : memref<4x9x9x128xbf16, #tpu.memory_space<vmem>>, vector<1x8x8x128xbf16>
    %31 = vector.shape_cast %30 : vector<1x8x8x128xbf16> to vector<8x8x128xbf16>
    %32 = vector.shape_cast %31 : vector<8x8x128xbf16> to vector<64x128xbf16>
    %c2 = arith.constant 2 : index
    %c0_32 = arith.constant 0 : index
    %c0_33 = arith.constant 0 : index
    %33 = vector.load %arg3[%c2, %c0_32, %c0_33] : memref<9x128x128xbf16, #tpu.memory_space<vmem>>, vector<1x128x128xbf16>
    %34 = vector.shape_cast %33 : vector<1x128x128xbf16> to vector<128x128xbf16>
    %cst_34 = arith.constant dense<0.000000e+00> : vector<64x128xf32>
    %35 = tpu.matmul %32, %34, %cst_34 {dimension_numbers = #tpu.dot_dimension_numbers<[1], [0], [0], [1], [0, 0, 1, 1], [], []>} : vector<64x128xbf16>, vector<128x128xbf16>, vector<64x128xf32> -> vector<64x128xf32>
    %36 = arith.addf %27, %35 : vector<64x128xf32>
    %c0_i32_35 = arith.constant 0 : i32
    %37 = arith.addi %c0_i32_35, %6 : i32
    %c2_36 = arith.constant 2 : index
    %38 = arith.index_cast %37 : i32 to index
    %c0_37 = arith.constant 0 : index
    %c0_38 = arith.constant 0 : index
    %39 = vector.load %arg6[%c2_36, %38, %c0_37, %c0_38] : memref<4x9x9x128xbf16, #tpu.memory_space<vmem>>, vector<1x8x8x128xbf16>
    %40 = vector.shape_cast %39 : vector<1x8x8x128xbf16> to vector<8x8x128xbf16>
    %41 = vector.shape_cast %40 : vector<8x8x128xbf16> to vector<64x128xbf16>
    %c3 = arith.constant 3 : index
    %c0_39 = arith.constant 0 : index
    %c0_40 = arith.constant 0 : index
    %42 = vector.load %arg3[%c3, %c0_39, %c0_40] : memref<9x128x128xbf16, #tpu.memory_space<vmem>>, vector<1x128x128xbf16>
    %43 = vector.shape_cast %42 : vector<1x128x128xbf16> to vector<128x128xbf16>
    %cst_41 = arith.constant dense<0.000000e+00> : vector<64x128xf32>
    %44 = tpu.matmul %41, %43, %cst_41 {dimension_numbers = #tpu.dot_dimension_numbers<[1], [0], [0], [1], [0, 0, 1, 1], [], []>} : vector<64x128xbf16>, vector<128x128xbf16>, vector<64x128xf32> -> vector<64x128xf32>
    %45 = arith.addf %36, %44 : vector<64x128xf32>
    %c0_i32_42 = arith.constant 0 : i32
    %46 = arith.addi %c0_i32_42, %6 : i32
    %c3_43 = arith.constant 3 : index
    %47 = arith.index_cast %46 : i32 to index
    %c0_44 = arith.constant 0 : index
    %c0_45 = arith.constant 0 : index
    %48 = vector.load %arg6[%c3_43, %47, %c0_44, %c0_45] : memref<4x9x9x128xbf16, #tpu.memory_space<vmem>>, vector<1x8x8x128xbf16>
    %49 = vector.shape_cast %48 : vector<1x8x8x128xbf16> to vector<8x8x128xbf16>
    %50 = vector.shape_cast %49 : vector<8x8x128xbf16> to vector<64x128xbf16>
    %c4 = arith.constant 4 : index
    %c0_46 = arith.constant 0 : index
    %c0_47 = arith.constant 0 : index
    %51 = vector.load %arg3[%c4, %c0_46, %c0_47] : memref<9x128x128xbf16, #tpu.memory_space<vmem>>, vector<1x128x128xbf16>
    %52 = vector.shape_cast %51 : vector<1x128x128xbf16> to vector<128x128xbf16>
    %cst_48 = arith.constant dense<0.000000e+00> : vector<64x128xf32>
    %53 = tpu.matmul %50, %52, %cst_48 {dimension_numbers = #tpu.dot_dimension_numbers<[1], [0], [0], [1], [0, 0, 1, 1], [], []>} : vector<64x128xbf16>, vector<128x128xbf16>, vector<64x128xf32> -> vector<64x128xf32>
    %54 = arith.addf %45, %53 : vector<64x128xf32>
    %c0_i32_49 = arith.constant 0 : i32
    %55 = arith.addi %c0_i32_49, %6 : i32
    %c2_50 = arith.constant 2 : index
    %56 = arith.index_cast %55 : i32 to index
    %c1_51 = arith.constant 1 : index
    %c0_52 = arith.constant 0 : index
    %57 = vector.load %arg6[%c2_50, %56, %c1_51, %c0_52] : memref<4x9x9x128xbf16, #tpu.memory_space<vmem>>, vector<1x8x8x128xbf16>
    %58 = vector.shape_cast %57 : vector<1x8x8x128xbf16> to vector<8x8x128xbf16>
    %59 = vector.shape_cast %58 : vector<8x8x128xbf16> to vector<64x128xbf16>
    %c5 = arith.constant 5 : index
    %c0_53 = arith.constant 0 : index
    %c0_54 = arith.constant 0 : index
    %60 = vector.load %arg3[%c5, %c0_53, %c0_54] : memref<9x128x128xbf16, #tpu.memory_space<vmem>>, vector<1x128x128xbf16>
    %61 = vector.shape_cast %60 : vector<1x128x128xbf16> to vector<128x128xbf16>
    %cst_55 = arith.constant dense<0.000000e+00> : vector<64x128xf32>
    %62 = tpu.matmul %59, %61, %cst_55 {dimension_numbers = #tpu.dot_dimension_numbers<[1], [0], [0], [1], [0, 0, 1, 1], [], []>} : vector<64x128xbf16>, vector<128x128xbf16>, vector<64x128xf32> -> vector<64x128xf32>
    %63 = arith.addf %54, %62 : vector<64x128xf32>
    %c1_i32 = arith.constant 1 : i32
    %64 = arith.addi %c1_i32, %6 : i32
    %c0_56 = arith.constant 0 : index
    %65 = arith.index_cast %64 : i32 to index
    %c0_57 = arith.constant 0 : index
    %c0_58 = arith.constant 0 : index
    %66 = vector.load %arg6[%c0_56, %65, %c0_57, %c0_58] : memref<4x9x9x128xbf16, #tpu.memory_space<vmem>>, vector<1x8x8x128xbf16>
    %67 = vector.shape_cast %66 : vector<1x8x8x128xbf16> to vector<8x8x128xbf16>
    %68 = vector.shape_cast %67 : vector<8x8x128xbf16> to vector<64x128xbf16>
    %c6 = arith.constant 6 : index
    %c0_59 = arith.constant 0 : index
    %c0_60 = arith.constant 0 : index
    %69 = vector.load %arg3[%c6, %c0_59, %c0_60] : memref<9x128x128xbf16, #tpu.memory_space<vmem>>, vector<1x128x128xbf16>
    %70 = vector.shape_cast %69 : vector<1x128x128xbf16> to vector<128x128xbf16>
    %cst_61 = arith.constant dense<0.000000e+00> : vector<64x128xf32>
    %71 = tpu.matmul %68, %70, %cst_61 {dimension_numbers = #tpu.dot_dimension_numbers<[1], [0], [0], [1], [0, 0, 1, 1], [], []>} : vector<64x128xbf16>, vector<128x128xbf16>, vector<64x128xf32> -> vector<64x128xf32>
    %72 = arith.addf %63, %71 : vector<64x128xf32>
    %c1_i32_62 = arith.constant 1 : i32
    %73 = arith.addi %c1_i32_62, %6 : i32
    %c1_63 = arith.constant 1 : index
    %74 = arith.index_cast %73 : i32 to index
    %c0_64 = arith.constant 0 : index
    %c0_65 = arith.constant 0 : index
    %75 = vector.load %arg6[%c1_63, %74, %c0_64, %c0_65] : memref<4x9x9x128xbf16, #tpu.memory_space<vmem>>, vector<1x8x8x128xbf16>
    %76 = vector.shape_cast %75 : vector<1x8x8x128xbf16> to vector<8x8x128xbf16>
    %77 = vector.shape_cast %76 : vector<8x8x128xbf16> to vector<64x128xbf16>
    %c7 = arith.constant 7 : index
    %c0_66 = arith.constant 0 : index
    %c0_67 = arith.constant 0 : index
    %78 = vector.load %arg3[%c7, %c0_66, %c0_67] : memref<9x128x128xbf16, #tpu.memory_space<vmem>>, vector<1x128x128xbf16>
    %79 = vector.shape_cast %78 : vector<1x128x128xbf16> to vector<128x128xbf16>
    %cst_68 = arith.constant dense<0.000000e+00> : vector<64x128xf32>
    %80 = tpu.matmul %77, %79, %cst_68 {dimension_numbers = #tpu.dot_dimension_numbers<[1], [0], [0], [1], [0, 0, 1, 1], [], []>} : vector<64x128xbf16>, vector<128x128xbf16>, vector<64x128xf32> -> vector<64x128xf32>
    %81 = arith.addf %72, %80 : vector<64x128xf32>
    %c1_i32_69 = arith.constant 1 : i32
    %82 = arith.addi %c1_i32_69, %6 : i32
    %c0_70 = arith.constant 0 : index
    %83 = arith.index_cast %82 : i32 to index
    %c1_71 = arith.constant 1 : index
    %c0_72 = arith.constant 0 : index
    %84 = vector.load %arg6[%c0_70, %83, %c1_71, %c0_72] : memref<4x9x9x128xbf16, #tpu.memory_space<vmem>>, vector<1x8x8x128xbf16>
    %85 = vector.shape_cast %84 : vector<1x8x8x128xbf16> to vector<8x8x128xbf16>
    %86 = vector.shape_cast %85 : vector<8x8x128xbf16> to vector<64x128xbf16>
    %c8 = arith.constant 8 : index
    %c0_73 = arith.constant 0 : index
    %c0_74 = arith.constant 0 : index
    %87 = vector.load %arg3[%c8, %c0_73, %c0_74] : memref<9x128x128xbf16, #tpu.memory_space<vmem>>, vector<1x128x128xbf16>
    %88 = vector.shape_cast %87 : vector<1x128x128xbf16> to vector<128x128xbf16>
    %cst_75 = arith.constant dense<0.000000e+00> : vector<64x128xf32>
    %89 = tpu.matmul %86, %88, %cst_75 {dimension_numbers = #tpu.dot_dimension_numbers<[1], [0], [0], [1], [0, 0, 1, 1], [], []>} : vector<64x128xbf16>, vector<128x128xbf16>, vector<64x128xf32> -> vector<64x128xf32>
    %90 = arith.addf %81, %89 : vector<64x128xf32>
    %cst_76 = arith.constant 5.000000e-01 : f32
    %91 = vector.broadcast %cst_76 : f32 to vector<64x128xf32>
    %92 = arith.mulf %91, %90 : vector<64x128xf32>
    %93 = math.tanh %92 : vector<64x128xf32>
    %cst_77 = arith.constant 1.000000e+00 : f32
    %94 = vector.broadcast %cst_77 : f32 to vector<64x128xf32>
    %95 = arith.addf %93, %94 : vector<64x128xf32>
    %cst_78 = arith.constant 5.000000e-01 : f32
    %96 = vector.broadcast %cst_78 : f32 to vector<64x128xf32>
    %97 = arith.mulf %96, %95 : vector<64x128xf32>
    %98 = arith.mulf %90, %97 : vector<64x128xf32>
    %99 = vector.shape_cast %98 : vector<64x128xf32> to vector<8x8x128xf32>
    %100 = arith.truncf %99 : vector<8x8x128xf32> to vector<8x8x128xbf16>
    %c0_79 = arith.constant 0 : index
    %c0_80 = arith.constant 0 : index
    %c0_81 = arith.constant 0 : index
    %c0_82 = arith.constant 0 : index
    %101 = vector.load %arg5[%c0_79, %c0_80, %c0_81, %c0_82] : memref<1x8x8x128xbf16, #tpu.memory_space<vmem>>, vector<1x8x8x128xbf16>
    %102 = vector.shape_cast %101 : vector<1x8x8x128xbf16> to vector<8x8x128xbf16>
    %103 = vector.shape_cast %100 : vector<8x8x128xbf16> to vector<1x8x8x128xbf16>
    tpu.vector_store %arg5[%c0_79, %c0_80, %c0_81, %c0_82], %103 {strides = array<i32>} : memref<1x8x8x128xbf16, #tpu.memory_space<vmem>>, vector<1x8x8x128xbf16>,
    return
  }
  func.func @transform_0(%arg0: i32, %arg1: i32) -> (i32, i32, i32, i32, i32) {
    %c0_i32 = arith.constant 0 : i32
    %c0_i32_0 = arith.constant 0 : i32
    %c0_i32_1 = arith.constant 0 : i32
    %c0_i32_2 = arith.constant 0 : i32
    %c0_i32_3 = arith.constant 0 : i32
    return %arg0, %c0_i32, %c0_i32_0, %c0_i32_1, %c0_i32_2 : i32, i32, i32, i32, i32
  }
  func.func @transform_1(%arg0: i32, %arg1: i32) -> (i32, i32, i32) {
    %c0_i32 = arith.constant 0 : i32
    %c0_i32_0 = arith.constant 0 : i32
    %c0_i32_1 = arith.constant 0 : i32
    %c0_i32_2 = arith.constant 0 : i32
    return %c0_i32, %c0_i32_0, %c0_i32_1 : i32, i32, i32
  }
  func.func @transform_2(%arg0: i32, %arg1: i32) -> (i32, i32) {
    %c0_i32 = arith.constant 0 : i32
    %c0_i32_0 = arith.constant 0 : i32
    %c0_i32_1 = arith.constant 0 : i32
    return %c0_i32, %c0_i32_0 : i32, i32
  }
  func.func @transform_3(%arg0: i32, %arg1: i32) -> (i32, i32, i32, i32) {
    %c0_i32 = arith.constant 0 : i32
    %c0_i32_0 = arith.constant 0 : i32
    %c0_i32_1 = arith.constant 0 : i32
    return %arg0, %arg1, %c0_i32, %c0_i32_0 : i32, i32, i32, i32
  }
}

module attributes {stable_mosaic.version = 11 : i64} {
  func.func @_conv3x3_kernel(%arg0: i32, %arg1: i32, %arg2: memref<1x8x8x128xbf16, #tpu.memory_space<vmem>>, %arg3: memref<9x128x128xbf16, #tpu.memory_space<vmem>>, %arg4: memref<1x128xf32, #tpu.memory_space<vmem>>, %arg5: memref<1x8x8x128xbf16, #tpu.memory_space<vmem>>, %arg6: memref<1x10x10x128xbf16, #tpu.memory_space<vmem>>) attributes {dimension_semantics = [#tpu.dimension_semantics<parallel>, #tpu.dimension_semantics<arbitrary>], iteration_bounds = array<i64: 2, 1>, scalar_prefetch = 0 : i64, scratch_operands = 1 : i64, tpu.core_type = #tpu.core_type<tc>, window_params = [{transform_indices = @transform_0, window_bounds = array<i64: 1, 8, 8, 128>}, {pipeline_mode = #tpu.pipeline_mode<synchronous>, transform_indices = @transform_1, window_bounds = array<i64: 9, 128, 128>}, {pipeline_mode = #tpu.pipeline_mode<synchronous>, transform_indices = @transform_2, window_bounds = array<i64: 1, 128>}, {transform_indices = @transform_3, window_bounds = array<i64: 1, 8, 8, 128>}]} {
    %cst = arith.constant 0.000000e+00 : bf16
    %0 = vector.broadcast %cst : bf16 to vector<1x10x10x128xbf16>
    %c0 = arith.constant 0 : index
    %c0_0 = arith.constant 0 : index
    %c0_1 = arith.constant 0 : index
    %c0_2 = arith.constant 0 : index
    %1 = vector.load %arg6[%c0, %c0_0, %c0_1, %c0_2] : memref<1x10x10x128xbf16, #tpu.memory_space<vmem>>, vector<1x10x10x128xbf16>
    tpu.vector_store %arg6[%c0, %c0_0, %c0_1, %c0_2], %0 {strides = array<i32>} : memref<1x10x10x128xbf16, #tpu.memory_space<vmem>>, vector<1x10x10x128xbf16>,
    %c0_3 = arith.constant 0 : index
    %c0_4 = arith.constant 0 : index
    %c0_5 = arith.constant 0 : index
    %c0_6 = arith.constant 0 : index
    %2 = vector.load %arg2[%c0_3, %c0_4, %c0_5, %c0_6] : memref<1x8x8x128xbf16, #tpu.memory_space<vmem>>, vector<1x8x8x128xbf16>
    %3 = vector.shape_cast %2 : vector<1x8x8x128xbf16> to vector<8x8x128xbf16>
    %c0_7 = arith.constant 0 : index
    %c1 = arith.constant 1 : index
    %c1_8 = arith.constant 1 : index
    %c0_9 = arith.constant 0 : index
    %4 = vector.load %arg6[%c0_7, %c1, %c1_8, %c0_9] : memref<1x10x10x128xbf16, #tpu.memory_space<vmem>>, vector<1x8x8x128xbf16>
    %5 = vector.shape_cast %4 : vector<1x8x8x128xbf16> to vector<8x8x128xbf16>
    %6 = vector.shape_cast %3 : vector<8x8x128xbf16> to vector<1x8x8x128xbf16>
    tpu.vector_store %arg6[%c0_7, %c1, %c1_8, %c0_9], %6 {strides = array<i32>} : memref<1x10x10x128xbf16, #tpu.memory_space<vmem>>, vector<1x8x8x128xbf16>,
    %c8_i32 = arith.constant 8 : i32
    %7 = arith.muli %arg1, %c8_i32 : i32
    %8 = tpu.assume_multiple %7, 8 : i32
    %c0_10 = arith.constant 0 : index
    %c0_11 = arith.constant 0 : index
    %9 = vector.load %arg4[%c0_10, %c0_11] : memref<1x128xf32, #tpu.memory_space<vmem>>, vector<1x128xf32>
    %10 = vector.shape_cast %9 : vector<1x128xf32> to vector<1x128xf32>
    %11 = vector.broadcast %10 : vector<1x128xf32> to vector<64x128xf32>
    %c0_i32 = arith.constant 0 : i32
    %12 = arith.addi %c0_i32, %8 : i32
    %c0_12 = arith.constant 0 : index
    %13 = arith.index_cast %12 : i32 to index
    %c0_13 = arith.constant 0 : index
    %c0_14 = arith.constant 0 : index
    %14 = vector.load %arg6[%c0_12, %13, %c0_13, %c0_14] : memref<1x10x10x128xbf16, #tpu.memory_space<vmem>>, vector<1x8x8x128xbf16>
    %15 = vector.shape_cast %14 : vector<1x8x8x128xbf16> to vector<8x8x128xbf16>
    %16 = vector.shape_cast %15 : vector<8x8x128xbf16> to vector<64x128xbf16>
    %c0_15 = arith.constant 0 : index
    %c0_16 = arith.constant 0 : index
    %c0_17 = arith.constant 0 : index
    %17 = vector.load %arg3[%c0_15, %c0_16, %c0_17] : memref<9x128x128xbf16, #tpu.memory_space<vmem>>, vector<1x128x128xbf16>
    %18 = vector.shape_cast %17 : vector<1x128x128xbf16> to vector<128x128xbf16>
    %cst_18 = arith.constant dense<0.000000e+00> : vector<64x128xf32>
    %19 = tpu.matmul %16, %18, %cst_18 {dimension_numbers = #tpu.dot_dimension_numbers<[1], [0], [0], [1], [0, 0, 1, 1], [], []>} : vector<64x128xbf16>, vector<128x128xbf16>, vector<64x128xf32> -> vector<64x128xf32>
    %20 = arith.addf %11, %19 : vector<64x128xf32>
    %c0_i32_19 = arith.constant 0 : i32
    %21 = arith.addi %c0_i32_19, %8 : i32
    %c0_20 = arith.constant 0 : index
    %22 = arith.index_cast %21 : i32 to index
    %c1_21 = arith.constant 1 : index
    %c0_22 = arith.constant 0 : index
    %23 = vector.load %arg6[%c0_20, %22, %c1_21, %c0_22] : memref<1x10x10x128xbf16, #tpu.memory_space<vmem>>, vector<1x8x8x128xbf16>
    %24 = vector.shape_cast %23 : vector<1x8x8x128xbf16> to vector<8x8x128xbf16>
    %25 = vector.shape_cast %24 : vector<8x8x128xbf16> to vector<64x128xbf16>
    %c1_23 = arith.constant 1 : index
    %c0_24 = arith.constant 0 : index
    %c0_25 = arith.constant 0 : index
    %26 = vector.load %arg3[%c1_23, %c0_24, %c0_25] : memref<9x128x128xbf16, #tpu.memory_space<vmem>>, vector<1x128x128xbf16>
    %27 = vector.shape_cast %26 : vector<1x128x128xbf16> to vector<128x128xbf16>
    %cst_26 = arith.constant dense<0.000000e+00> : vector<64x128xf32>
    %28 = tpu.matmul %25, %27, %cst_26 {dimension_numbers = #tpu.dot_dimension_numbers<[1], [0], [0], [1], [0, 0, 1, 1], [], []>} : vector<64x128xbf16>, vector<128x128xbf16>, vector<64x128xf32> -> vector<64x128xf32>
    %29 = arith.addf %20, %28 : vector<64x128xf32>
    %c0_i32_27 = arith.constant 0 : i32
    %30 = arith.addi %c0_i32_27, %8 : i32
    %c0_28 = arith.constant 0 : index
    %31 = arith.index_cast %30 : i32 to index
    %c2 = arith.constant 2 : index
    %c0_29 = arith.constant 0 : index
    %32 = vector.load %arg6[%c0_28, %31, %c2, %c0_29] : memref<1x10x10x128xbf16, #tpu.memory_space<vmem>>, vector<1x8x8x128xbf16>
    %33 = vector.shape_cast %32 : vector<1x8x8x128xbf16> to vector<8x8x128xbf16>
    %34 = vector.shape_cast %33 : vector<8x8x128xbf16> to vector<64x128xbf16>
    %c2_30 = arith.constant 2 : index
    %c0_31 = arith.constant 0 : index
    %c0_32 = arith.constant 0 : index
    %35 = vector.load %arg3[%c2_30, %c0_31, %c0_32] : memref<9x128x128xbf16, #tpu.memory_space<vmem>>, vector<1x128x128xbf16>
    %36 = vector.shape_cast %35 : vector<1x128x128xbf16> to vector<128x128xbf16>
    %cst_33 = arith.constant dense<0.000000e+00> : vector<64x128xf32>
    %37 = tpu.matmul %34, %36, %cst_33 {dimension_numbers = #tpu.dot_dimension_numbers<[1], [0], [0], [1], [0, 0, 1, 1], [], []>} : vector<64x128xbf16>, vector<128x128xbf16>, vector<64x128xf32> -> vector<64x128xf32>
    %38 = arith.addf %29, %37 : vector<64x128xf32>
    %c1_i32 = arith.constant 1 : i32
    %39 = arith.addi %c1_i32, %8 : i32
    %c0_34 = arith.constant 0 : index
    %40 = arith.index_cast %39 : i32 to index
    %c0_35 = arith.constant 0 : index
    %c0_36 = arith.constant 0 : index
    %41 = vector.load %arg6[%c0_34, %40, %c0_35, %c0_36] : memref<1x10x10x128xbf16, #tpu.memory_space<vmem>>, vector<1x8x8x128xbf16>
    %42 = vector.shape_cast %41 : vector<1x8x8x128xbf16> to vector<8x8x128xbf16>
    %43 = vector.shape_cast %42 : vector<8x8x128xbf16> to vector<64x128xbf16>
    %c3 = arith.constant 3 : index
    %c0_37 = arith.constant 0 : index
    %c0_38 = arith.constant 0 : index
    %44 = vector.load %arg3[%c3, %c0_37, %c0_38] : memref<9x128x128xbf16, #tpu.memory_space<vmem>>, vector<1x128x128xbf16>
    %45 = vector.shape_cast %44 : vector<1x128x128xbf16> to vector<128x128xbf16>
    %cst_39 = arith.constant dense<0.000000e+00> : vector<64x128xf32>
    %46 = tpu.matmul %43, %45, %cst_39 {dimension_numbers = #tpu.dot_dimension_numbers<[1], [0], [0], [1], [0, 0, 1, 1], [], []>} : vector<64x128xbf16>, vector<128x128xbf16>, vector<64x128xf32> -> vector<64x128xf32>
    %47 = arith.addf %38, %46 : vector<64x128xf32>
    %c1_i32_40 = arith.constant 1 : i32
    %48 = arith.addi %c1_i32_40, %8 : i32
    %c0_41 = arith.constant 0 : index
    %49 = arith.index_cast %48 : i32 to index
    %c1_42 = arith.constant 1 : index
    %c0_43 = arith.constant 0 : index
    %50 = vector.load %arg6[%c0_41, %49, %c1_42, %c0_43] : memref<1x10x10x128xbf16, #tpu.memory_space<vmem>>, vector<1x8x8x128xbf16>
    %51 = vector.shape_cast %50 : vector<1x8x8x128xbf16> to vector<8x8x128xbf16>
    %52 = vector.shape_cast %51 : vector<8x8x128xbf16> to vector<64x128xbf16>
    %c4 = arith.constant 4 : index
    %c0_44 = arith.constant 0 : index
    %c0_45 = arith.constant 0 : index
    %53 = vector.load %arg3[%c4, %c0_44, %c0_45] : memref<9x128x128xbf16, #tpu.memory_space<vmem>>, vector<1x128x128xbf16>
    %54 = vector.shape_cast %53 : vector<1x128x128xbf16> to vector<128x128xbf16>
    %cst_46 = arith.constant dense<0.000000e+00> : vector<64x128xf32>
    %55 = tpu.matmul %52, %54, %cst_46 {dimension_numbers = #tpu.dot_dimension_numbers<[1], [0], [0], [1], [0, 0, 1, 1], [], []>} : vector<64x128xbf16>, vector<128x128xbf16>, vector<64x128xf32> -> vector<64x128xf32>
    %56 = arith.addf %47, %55 : vector<64x128xf32>
    %c1_i32_47 = arith.constant 1 : i32
    %57 = arith.addi %c1_i32_47, %8 : i32
    %c0_48 = arith.constant 0 : index
    %58 = arith.index_cast %57 : i32 to index
    %c2_49 = arith.constant 2 : index
    %c0_50 = arith.constant 0 : index
    %59 = vector.load %arg6[%c0_48, %58, %c2_49, %c0_50] : memref<1x10x10x128xbf16, #tpu.memory_space<vmem>>, vector<1x8x8x128xbf16>
    %60 = vector.shape_cast %59 : vector<1x8x8x128xbf16> to vector<8x8x128xbf16>
    %61 = vector.shape_cast %60 : vector<8x8x128xbf16> to vector<64x128xbf16>
    %c5 = arith.constant 5 : index
    %c0_51 = arith.constant 0 : index
    %c0_52 = arith.constant 0 : index
    %62 = vector.load %arg3[%c5, %c0_51, %c0_52] : memref<9x128x128xbf16, #tpu.memory_space<vmem>>, vector<1x128x128xbf16>
    %63 = vector.shape_cast %62 : vector<1x128x128xbf16> to vector<128x128xbf16>
    %cst_53 = arith.constant dense<0.000000e+00> : vector<64x128xf32>
    %64 = tpu.matmul %61, %63, %cst_53 {dimension_numbers = #tpu.dot_dimension_numbers<[1], [0], [0], [1], [0, 0, 1, 1], [], []>} : vector<64x128xbf16>, vector<128x128xbf16>, vector<64x128xf32> -> vector<64x128xf32>
    %65 = arith.addf %56, %64 : vector<64x128xf32>
    %c2_i32 = arith.constant 2 : i32
    %66 = arith.addi %c2_i32, %8 : i32
    %c0_54 = arith.constant 0 : index
    %67 = arith.index_cast %66 : i32 to index
    %c0_55 = arith.constant 0 : index
    %c0_56 = arith.constant 0 : index
    %68 = vector.load %arg6[%c0_54, %67, %c0_55, %c0_56] : memref<1x10x10x128xbf16, #tpu.memory_space<vmem>>, vector<1x8x8x128xbf16>
    %69 = vector.shape_cast %68 : vector<1x8x8x128xbf16> to vector<8x8x128xbf16>
    %70 = vector.shape_cast %69 : vector<8x8x128xbf16> to vector<64x128xbf16>
    %c6 = arith.constant 6 : index
    %c0_57 = arith.constant 0 : index
    %c0_58 = arith.constant 0 : index
    %71 = vector.load %arg3[%c6, %c0_57, %c0_58] : memref<9x128x128xbf16, #tpu.memory_space<vmem>>, vector<1x128x128xbf16>
    %72 = vector.shape_cast %71 : vector<1x128x128xbf16> to vector<128x128xbf16>
    %cst_59 = arith.constant dense<0.000000e+00> : vector<64x128xf32>
    %73 = tpu.matmul %70, %72, %cst_59 {dimension_numbers = #tpu.dot_dimension_numbers<[1], [0], [0], [1], [0, 0, 1, 1], [], []>} : vector<64x128xbf16>, vector<128x128xbf16>, vector<64x128xf32> -> vector<64x128xf32>
    %74 = arith.addf %65, %73 : vector<64x128xf32>
    %c2_i32_60 = arith.constant 2 : i32
    %75 = arith.addi %c2_i32_60, %8 : i32
    %c0_61 = arith.constant 0 : index
    %76 = arith.index_cast %75 : i32 to index
    %c1_62 = arith.constant 1 : index
    %c0_63 = arith.constant 0 : index
    %77 = vector.load %arg6[%c0_61, %76, %c1_62, %c0_63] : memref<1x10x10x128xbf16, #tpu.memory_space<vmem>>, vector<1x8x8x128xbf16>
    %78 = vector.shape_cast %77 : vector<1x8x8x128xbf16> to vector<8x8x128xbf16>
    %79 = vector.shape_cast %78 : vector<8x8x128xbf16> to vector<64x128xbf16>
    %c7 = arith.constant 7 : index
    %c0_64 = arith.constant 0 : index
    %c0_65 = arith.constant 0 : index
    %80 = vector.load %arg3[%c7, %c0_64, %c0_65] : memref<9x128x128xbf16, #tpu.memory_space<vmem>>, vector<1x128x128xbf16>
    %81 = vector.shape_cast %80 : vector<1x128x128xbf16> to vector<128x128xbf16>
    %cst_66 = arith.constant dense<0.000000e+00> : vector<64x128xf32>
    %82 = tpu.matmul %79, %81, %cst_66 {dimension_numbers = #tpu.dot_dimension_numbers<[1], [0], [0], [1], [0, 0, 1, 1], [], []>} : vector<64x128xbf16>, vector<128x128xbf16>, vector<64x128xf32> -> vector<64x128xf32>
    %83 = arith.addf %74, %82 : vector<64x128xf32>
    %c2_i32_67 = arith.constant 2 : i32
    %84 = arith.addi %c2_i32_67, %8 : i32
    %c0_68 = arith.constant 0 : index
    %85 = arith.index_cast %84 : i32 to index
    %c2_69 = arith.constant 2 : index
    %c0_70 = arith.constant 0 : index
    %86 = vector.load %arg6[%c0_68, %85, %c2_69, %c0_70] : memref<1x10x10x128xbf16, #tpu.memory_space<vmem>>, vector<1x8x8x128xbf16>
    %87 = vector.shape_cast %86 : vector<1x8x8x128xbf16> to vector<8x8x128xbf16>
    %88 = vector.shape_cast %87 : vector<8x8x128xbf16> to vector<64x128xbf16>
    %c8 = arith.constant 8 : index
    %c0_71 = arith.constant 0 : index
    %c0_72 = arith.constant 0 : index
    %89 = vector.load %arg3[%c8, %c0_71, %c0_72] : memref<9x128x128xbf16, #tpu.memory_space<vmem>>, vector<1x128x128xbf16>
    %90 = vector.shape_cast %89 : vector<1x128x128xbf16> to vector<128x128xbf16>
    %cst_73 = arith.constant dense<0.000000e+00> : vector<64x128xf32>
    %91 = tpu.matmul %88, %90, %cst_73 {dimension_numbers = #tpu.dot_dimension_numbers<[1], [0], [0], [1], [0, 0, 1, 1], [], []>} : vector<64x128xbf16>, vector<128x128xbf16>, vector<64x128xf32> -> vector<64x128xf32>
    %92 = arith.addf %83, %91 : vector<64x128xf32>
    %cst_74 = arith.constant 5.000000e-01 : f32
    %93 = vector.broadcast %cst_74 : f32 to vector<64x128xf32>
    %94 = arith.mulf %93, %92 : vector<64x128xf32>
    %95 = math.tanh %94 : vector<64x128xf32>
    %cst_75 = arith.constant 1.000000e+00 : f32
    %96 = vector.broadcast %cst_75 : f32 to vector<64x128xf32>
    %97 = arith.addf %95, %96 : vector<64x128xf32>
    %cst_76 = arith.constant 5.000000e-01 : f32
    %98 = vector.broadcast %cst_76 : f32 to vector<64x128xf32>
    %99 = arith.mulf %98, %97 : vector<64x128xf32>
    %100 = arith.mulf %92, %99 : vector<64x128xf32>
    %c1_i32_77 = arith.constant 1 : i32
    %101 = arith.addi %c1_i32_77, %8 : i32
    %c0_78 = arith.constant 0 : index
    %102 = arith.index_cast %101 : i32 to index
    %c1_79 = arith.constant 1 : index
    %c0_80 = arith.constant 0 : index
    %103 = vector.load %arg6[%c0_78, %102, %c1_79, %c0_80] : memref<1x10x10x128xbf16, #tpu.memory_space<vmem>>, vector<1x8x8x128xbf16>
    %104 = vector.shape_cast %103 : vector<1x8x8x128xbf16> to vector<8x8x128xbf16>
    %105 = vector.shape_cast %104 : vector<8x8x128xbf16> to vector<64x128xbf16>
    %106 = arith.extf %105 : vector<64x128xbf16> to vector<64x128xf32>
    %107 = arith.addf %100, %106 : vector<64x128xf32>
    %108 = vector.shape_cast %107 : vector<64x128xf32> to vector<8x8x128xf32>
    %109 = arith.truncf %108 : vector<8x8x128xf32> to vector<8x8x128xbf16>
    %c0_81 = arith.constant 0 : index
    %c0_82 = arith.constant 0 : index
    %c0_83 = arith.constant 0 : index
    %c0_84 = arith.constant 0 : index
    %110 = vector.load %arg5[%c0_81, %c0_82, %c0_83, %c0_84] : memref<1x8x8x128xbf16, #tpu.memory_space<vmem>>, vector<1x8x8x128xbf16>
    %111 = vector.shape_cast %110 : vector<1x8x8x128xbf16> to vector<8x8x128xbf16>
    %112 = vector.shape_cast %109 : vector<8x8x128xbf16> to vector<1x8x8x128xbf16>
    tpu.vector_store %arg5[%c0_81, %c0_82, %c0_83, %c0_84], %112 {strides = array<i32>} : memref<1x8x8x128xbf16, #tpu.memory_space<vmem>>, vector<1x8x8x128xbf16>,
    return
  }
  func.func @transform_0(%arg0: i32, %arg1: i32) -> (i32, i32, i32, i32) {
    %c0_i32 = arith.constant 0 : i32
    %c0_i32_0 = arith.constant 0 : i32
    %c0_i32_1 = arith.constant 0 : i32
    %c0_i32_2 = arith.constant 0 : i32
    return %arg0, %c0_i32, %c0_i32_0, %c0_i32_1 : i32, i32, i32, i32
  }
  func.func @transform_1(%arg0: i32, %arg1: i32) -> (i32, i32, i32) {
    %c0_i32 = arith.constant 0 : i32
    %c0_i32_0 = arith.constant 0 : i32
    %c0_i32_1 = arith.constant 0 : i32
    %c0_i32_2 = arith.constant 0 : i32
    return %c0_i32, %c0_i32_0, %c0_i32_1 : i32, i32, i32
  }
  func.func @transform_2(%arg0: i32, %arg1: i32) -> (i32, i32) {
    %c0_i32 = arith.constant 0 : i32
    %c0_i32_0 = arith.constant 0 : i32
    %c0_i32_1 = arith.constant 0 : i32
    return %c0_i32, %c0_i32_0 : i32, i32
  }
  func.func @transform_3(%arg0: i32, %arg1: i32) -> (i32, i32, i32, i32) {
    %c0_i32 = arith.constant 0 : i32
    %c0_i32_0 = arith.constant 0 : i32
    %c0_i32_1 = arith.constant 0 : i32
    return %arg0, %arg1, %c0_i32, %c0_i32_0 : i32, i32, i32, i32
  }
}

module attributes {stable_mosaic.version = 11 : i64} {
  func.func @_conv3x3_kernel(%arg0: i32, %arg1: i32, %arg2: memref<1x4x4x4x128xbf16, #tpu.memory_space<vmem>>, %arg3: memref<9x128x128xbf16, #tpu.memory_space<vmem>>, %arg4: memref<1x128xf32, #tpu.memory_space<vmem>>, %arg5: memref<1x4x4x128xbf16, #tpu.memory_space<vmem>>, %arg6: memref<4x5x9x128xbf16, #tpu.memory_space<vmem>>) attributes {dimension_semantics = [#tpu.dimension_semantics<parallel>, #tpu.dimension_semantics<arbitrary>], iteration_bounds = array<i64: 2, 1>, scalar_prefetch = 0 : i64, scratch_operands = 1 : i64, tpu.core_type = #tpu.core_type<tc>, window_params = [{transform_indices = @transform_0, window_bounds = array<i64: 1, 4, 4, 4, 128>}, {pipeline_mode = #tpu.pipeline_mode<synchronous>, transform_indices = @transform_1, window_bounds = array<i64: 9, 128, 128>}, {pipeline_mode = #tpu.pipeline_mode<synchronous>, transform_indices = @transform_2, window_bounds = array<i64: 1, 128>}, {transform_indices = @transform_3, window_bounds = array<i64: 1, 4, 4, 128>}]} {
    %cst = arith.constant 0.000000e+00 : bf16
    %0 = vector.broadcast %cst : bf16 to vector<4x5x9x128xbf16>
    %c0 = arith.constant 0 : index
    %c0_0 = arith.constant 0 : index
    %c0_1 = arith.constant 0 : index
    %c0_2 = arith.constant 0 : index
    %1 = vector.load %arg6[%c0, %c0_0, %c0_1, %c0_2] : memref<4x5x9x128xbf16, #tpu.memory_space<vmem>>, vector<4x5x9x128xbf16>
    tpu.vector_store %arg6[%c0, %c0_0, %c0_1, %c0_2], %0 {strides = array<i32>} : memref<4x5x9x128xbf16, #tpu.memory_space<vmem>>, vector<4x5x9x128xbf16>,
    %c0_3 = arith.constant 0 : index
    %c0_4 = arith.constant 0 : index
    %c0_5 = arith.constant 0 : index
    %c0_6 = arith.constant 0 : index
    %c0_7 = arith.constant 0 : index
    %2 = vector.load %arg2[%c0_3, %c0_4, %c0_5, %c0_6, %c0_7] : memref<1x4x4x4x128xbf16, #tpu.memory_space<vmem>>, vector<1x4x4x4x128xbf16>
    %3 = vector.shape_cast %2 : vector<1x4x4x4x128xbf16> to vector<4x4x4x128xbf16>
    %c0_8 = arith.constant 0 : index
    %c0_9 = arith.constant 0 : index
    %c0_10 = arith.constant 0 : index
    %c0_11 = arith.constant 0 : index
    %4 = vector.load %arg6[%c0_8, %c0_9, %c0_10, %c0_11] : memref<4x5x9x128xbf16, #tpu.memory_space<vmem>>, vector<4x4x4x128xbf16>
    tpu.vector_store %arg6[%c0_8, %c0_9, %c0_10, %c0_11], %3 {strides = array<i32>} : memref<4x5x9x128xbf16, #tpu.memory_space<vmem>>, vector<4x4x4x128xbf16>,
    %c4_i32 = arith.constant 4 : i32
    %5 = arith.muli %arg1, %c4_i32 : i32
    %6 = tpu.assume_multiple %5, 4 : i32
    %c0_12 = arith.constant 0 : index
    %c0_13 = arith.constant 0 : index
    %7 = vector.load %arg4[%c0_12, %c0_13] : memref<1x128xf32, #tpu.memory_space<vmem>>, vector<1x128xf32>
    %8 = vector.shape_cast %7 : vector<1x128xf32> to vector<1x128xf32>
    %9 = vector.broadcast %8 : vector<1x128xf32> to vector<32x128xf32>
    %c0_i32 = arith.constant 0 : i32
    %10 = arith.addi %c0_i32, %6 : i32
    %c0_14 = arith.constant 0 : index
    %11 = arith.index_cast %10 : i32 to index
    %c0_15 = arith.constant 0 : index
    %c0_16 = arith.constant 0 : index
    %12 = vector.load %arg6[%c0_14, %11, %c0_15, %c0_16] : memref<4x5x9x128xbf16, #tpu.memory_space<vmem>>, vector<1x4x8x128xbf16>
    %13 = vector.shape_cast %12 : vector<1x4x8x128xbf16> to vector<4x8x128xbf16>
    %14 = vector.shape_cast %13 : vector<4x8x128xbf16> to vector<32x128xbf16>
    %c0_17 = arith.constant 0 : index
    %c0_18 = arith.constant 0 : index
    %c0_19 = arith.constant 0 : index
    %15 = vector.load %arg3[%c0_17, %c0_18, %c0_19] : memref<9x128x128xbf16, #tpu.memory_space<vmem>>, vector<1x128x128xbf16>
    %16 = vector.shape_cast %15 : vector<1x128x128xbf16> to vector<128x128xbf16>
    %cst_20 = arith.constant dense<0.000000e+00> : vector<32x128xf32>
    %17 = tpu.matmul %14, %16, %cst_20 {dimension_numbers = #tpu.dot_dimension_numbers<[1], [0], [0], [1], [0, 0, 1, 1], [], []>} : vector<32x128xbf16>, vector<128x128xbf16>, vector<32x128xf32> -> vector<32x128xf32>
    %18 = arith.addf %9, %17 : vector<32x128xf32>
    %c0_i32_21 = arith.constant 0 : i32
    %19 = arith.addi %c0_i32_21, %6 : i32
    %c1 = arith.constant 1 : index
    %20 = arith.index_cast %19 : i32 to index
    %c0_22 = arith.constant 0 : index
    %c0_23 = arith.constant 0 : index
    %21 = vector.load %arg6[%c1, %20, %c0_22, %c0_23] : memref<4x5x9x128xbf16, #tpu.memory_space<vmem>>, vector<1x4x8x128xbf16>
    %22 = vector.shape_cast %21 : vector<1x4x8x128xbf16> to vector<4x8x128xbf16>
    %23 = vector.shape_cast %22 : vector<4x8x128xbf16> to vector<32x128xbf16>
    %c1_24 = arith.constant 1 : index
    %c0_25 = arith.constant 0 : index
    %c0_26 = arith.constant 0 : index
    %24 = vector.load %arg3[%c1_24, %c0_25, %c0_26] : memref<9x128x128xbf16, #tpu.memory_space<vmem>>, vector<1x128x128xbf16>
    %25 = vector.shape_cast %24 : vector<1x128x128xbf16> to vector<128x128xbf16>
    %cst_27 = arith.constant dense<0.000000e+00> : vector<32x128xf32>
    %26 = tpu.matmul %23, %25, %cst_27 {dimension_numbers = #tpu.dot_dimension_numbers<[1], [0], [0], [1], [0, 0, 1, 1], [], []>} : vector<32x128xbf16>, vector<128x128xbf16>, vector<32x128xf32> -> vector<32x128xf32>
    %27 = arith.addf %18, %26 : vector<32x128xf32>
    %c0_i32_28 = arith.constant 0 : i32
    %28 = arith.addi %c0_i32_28, %6 : i32
    %c0_29 = arith.constant 0 : index
    %29 = arith.index_cast %28 : i32 to index
    %c1_30 = arith.constant 1 : index
    %c0_31 = arith.constant 0 : index
    %30 = vector.load %arg6[%c0_29, %29, %c1_30, %c0_31] : memref<4x5x9x128xbf16, #tpu.memory_space<vmem>>, vector<1x4x8x128xbf16>
    %31 = vector.shape_cast %30 : vector<1x4x8x128xbf16> to vector<4x8x128xbf16>
    %32 = vector.shape_cast %31 : vector<4x8x128xbf16> to vector<32x128xbf16>
    %c2 = arith.constant 2 : index
    %c0_32 = arith.constant 0 : index
    %c0_33 = arith.constant 0 : index
    %33 = vector.load %arg3[%c2, %c0_32, %c0_33] : memref<9x128x128xbf16, #tpu.memory_space<vmem>>, vector<1x128x128xbf16>
    %34 = vector.shape_cast %33 : vector<1x128x128xbf16> to vector<128x128xbf16>
    %cst_34 = arith.constant dense<0.000000e+00> : vector<32x128xf32>
    %35 = tpu.matmul %32, %34, %cst_34 {dimension_numbers = #tpu.dot_dimension_numbers<[1], [0], [0], [1], [0, 0, 1, 1], [], []>} : vector<32x128xbf16>, vector<128x128xbf16>, vector<32x128xf32> -> vector<32x128xf32>
    %36 = arith.addf %27, %35 : vector<32x128xf32>
    %c0_i32_35 = arith.constant 0 : i32
    %37 = arith.addi %c0_i32_35, %6 : i32
    %c2_36 = arith.constant 2 : index
    %38 = arith.index_cast %37 : i32 to index
    %c0_37 = arith.constant 0 : index
    %c0_38 = arith.constant 0 : index
    %39 = vector.load %arg6[%c2_36, %38, %c0_37, %c0_38] : memref<4x5x9x128xbf16, #tpu.memory_space<vmem>>, vector<1x4x8x128xbf16>
    %40 = vector.shape_cast %39 : vector<1x4x8x128xbf16> to vector<4x8x128xbf16>
    %41 = vector.shape_cast %40 : vector<4x8x128xbf16> to vector<32x128xbf16>
    %c3 = arith.constant 3 : index
    %c0_39 = arith.constant 0 : index
    %c0_40 = arith.constant 0 : index
    %42 = vector.load %arg3[%c3, %c0_39, %c0_40] : memref<9x128x128xbf16, #tpu.memory_space<vmem>>, vector<1x128x128xbf16>
    %43 = vector.shape_cast %42 : vector<1x128x128xbf16> to vector<128x128xbf16>
    %cst_41 = arith.constant dense<0.000000e+00> : vector<32x128xf32>
    %44 = tpu.matmul %41, %43, %cst_41 {dimension_numbers = #tpu.dot_dimension_numbers<[1], [0], [0], [1], [0, 0, 1, 1], [], []>} : vector<32x128xbf16>, vector<128x128xbf16>, vector<32x128xf32> -> vector<32x128xf32>
    %45 = arith.addf %36, %44 : vector<32x128xf32>
    %c0_i32_42 = arith.constant 0 : i32
    %46 = arith.addi %c0_i32_42, %6 : i32
    %c3_43 = arith.constant 3 : index
    %47 = arith.index_cast %46 : i32 to index
    %c0_44 = arith.constant 0 : index
    %c0_45 = arith.constant 0 : index
    %48 = vector.load %arg6[%c3_43, %47, %c0_44, %c0_45] : memref<4x5x9x128xbf16, #tpu.memory_space<vmem>>, vector<1x4x8x128xbf16>
    %49 = vector.shape_cast %48 : vector<1x4x8x128xbf16> to vector<4x8x128xbf16>
    %50 = vector.shape_cast %49 : vector<4x8x128xbf16> to vector<32x128xbf16>
    %c4 = arith.constant 4 : index
    %c0_46 = arith.constant 0 : index
    %c0_47 = arith.constant 0 : index
    %51 = vector.load %arg3[%c4, %c0_46, %c0_47] : memref<9x128x128xbf16, #tpu.memory_space<vmem>>, vector<1x128x128xbf16>
    %52 = vector.shape_cast %51 : vector<1x128x128xbf16> to vector<128x128xbf16>
    %cst_48 = arith.constant dense<0.000000e+00> : vector<32x128xf32>
    %53 = tpu.matmul %50, %52, %cst_48 {dimension_numbers = #tpu.dot_dimension_numbers<[1], [0], [0], [1], [0, 0, 1, 1], [], []>} : vector<32x128xbf16>, vector<128x128xbf16>, vector<32x128xf32> -> vector<32x128xf32>
    %54 = arith.addf %45, %53 : vector<32x128xf32>
    %c0_i32_49 = arith.constant 0 : i32
    %55 = arith.addi %c0_i32_49, %6 : i32
    %c2_50 = arith.constant 2 : index
    %56 = arith.index_cast %55 : i32 to index
    %c1_51 = arith.constant 1 : index
    %c0_52 = arith.constant 0 : index
    %57 = vector.load %arg6[%c2_50, %56, %c1_51, %c0_52] : memref<4x5x9x128xbf16, #tpu.memory_space<vmem>>, vector<1x4x8x128xbf16>
    %58 = vector.shape_cast %57 : vector<1x4x8x128xbf16> to vector<4x8x128xbf16>
    %59 = vector.shape_cast %58 : vector<4x8x128xbf16> to vector<32x128xbf16>
    %c5 = arith.constant 5 : index
    %c0_53 = arith.constant 0 : index
    %c0_54 = arith.constant 0 : index
    %60 = vector.load %arg3[%c5, %c0_53, %c0_54] : memref<9x128x128xbf16, #tpu.memory_space<vmem>>, vector<1x128x128xbf16>
    %61 = vector.shape_cast %60 : vector<1x128x128xbf16> to vector<128x128xbf16>
    %cst_55 = arith.constant dense<0.000000e+00> : vector<32x128xf32>
    %62 = tpu.matmul %59, %61, %cst_55 {dimension_numbers = #tpu.dot_dimension_numbers<[1], [0], [0], [1], [0, 0, 1, 1], [], []>} : vector<32x128xbf16>, vector<128x128xbf16>, vector<32x128xf32> -> vector<32x128xf32>
    %63 = arith.addf %54, %62 : vector<32x128xf32>
    %c1_i32 = arith.constant 1 : i32
    %64 = arith.addi %c1_i32, %6 : i32
    %c0_56 = arith.constant 0 : index
    %65 = arith.index_cast %64 : i32 to index
    %c0_57 = arith.constant 0 : index
    %c0_58 = arith.constant 0 : index
    %66 = vector.load %arg6[%c0_56, %65, %c0_57, %c0_58] : memref<4x5x9x128xbf16, #tpu.memory_space<vmem>>, vector<1x4x8x128xbf16>
    %67 = vector.shape_cast %66 : vector<1x4x8x128xbf16> to vector<4x8x128xbf16>
    %68 = vector.shape_cast %67 : vector<4x8x128xbf16> to vector<32x128xbf16>
    %c6 = arith.constant 6 : index
    %c0_59 = arith.constant 0 : index
    %c0_60 = arith.constant 0 : index
    %69 = vector.load %arg3[%c6, %c0_59, %c0_60] : memref<9x128x128xbf16, #tpu.memory_space<vmem>>, vector<1x128x128xbf16>
    %70 = vector.shape_cast %69 : vector<1x128x128xbf16> to vector<128x128xbf16>
    %cst_61 = arith.constant dense<0.000000e+00> : vector<32x128xf32>
    %71 = tpu.matmul %68, %70, %cst_61 {dimension_numbers = #tpu.dot_dimension_numbers<[1], [0], [0], [1], [0, 0, 1, 1], [], []>} : vector<32x128xbf16>, vector<128x128xbf16>, vector<32x128xf32> -> vector<32x128xf32>
    %72 = arith.addf %63, %71 : vector<32x128xf32>
    %c1_i32_62 = arith.constant 1 : i32
    %73 = arith.addi %c1_i32_62, %6 : i32
    %c1_63 = arith.constant 1 : index
    %74 = arith.index_cast %73 : i32 to index
    %c0_64 = arith.constant 0 : index
    %c0_65 = arith.constant 0 : index
    %75 = vector.load %arg6[%c1_63, %74, %c0_64, %c0_65] : memref<4x5x9x128xbf16, #tpu.memory_space<vmem>>, vector<1x4x8x128xbf16>
    %76 = vector.shape_cast %75 : vector<1x4x8x128xbf16> to vector<4x8x128xbf16>
    %77 = vector.shape_cast %76 : vector<4x8x128xbf16> to vector<32x128xbf16>
    %c7 = arith.constant 7 : index
    %c0_66 = arith.constant 0 : index
    %c0_67 = arith.constant 0 : index
    %78 = vector.load %arg3[%c7, %c0_66, %c0_67] : memref<9x128x128xbf16, #tpu.memory_space<vmem>>, vector<1x128x128xbf16>
    %79 = vector.shape_cast %78 : vector<1x128x128xbf16> to vector<128x128xbf16>
    %cst_68 = arith.constant dense<0.000000e+00> : vector<32x128xf32>
    %80 = tpu.matmul %77, %79, %cst_68 {dimension_numbers = #tpu.dot_dimension_numbers<[1], [0], [0], [1], [0, 0, 1, 1], [], []>} : vector<32x128xbf16>, vector<128x128xbf16>, vector<32x128xf32> -> vector<32x128xf32>
    %81 = arith.addf %72, %80 : vector<32x128xf32>
    %c1_i32_69 = arith.constant 1 : i32
    %82 = arith.addi %c1_i32_69, %6 : i32
    %c0_70 = arith.constant 0 : index
    %83 = arith.index_cast %82 : i32 to index
    %c1_71 = arith.constant 1 : index
    %c0_72 = arith.constant 0 : index
    %84 = vector.load %arg6[%c0_70, %83, %c1_71, %c0_72] : memref<4x5x9x128xbf16, #tpu.memory_space<vmem>>, vector<1x4x8x128xbf16>
    %85 = vector.shape_cast %84 : vector<1x4x8x128xbf16> to vector<4x8x128xbf16>
    %86 = vector.shape_cast %85 : vector<4x8x128xbf16> to vector<32x128xbf16>
    %c8 = arith.constant 8 : index
    %c0_73 = arith.constant 0 : index
    %c0_74 = arith.constant 0 : index
    %87 = vector.load %arg3[%c8, %c0_73, %c0_74] : memref<9x128x128xbf16, #tpu.memory_space<vmem>>, vector<1x128x128xbf16>
    %88 = vector.shape_cast %87 : vector<1x128x128xbf16> to vector<128x128xbf16>
    %cst_75 = arith.constant dense<0.000000e+00> : vector<32x128xf32>
    %89 = tpu.matmul %86, %88, %cst_75 {dimension_numbers = #tpu.dot_dimension_numbers<[1], [0], [0], [1], [0, 0, 1, 1], [], []>} : vector<32x128xbf16>, vector<128x128xbf16>, vector<32x128xf32> -> vector<32x128xf32>
    %90 = arith.addf %81, %89 : vector<32x128xf32>
    %cst_76 = arith.constant 5.000000e-01 : f32
    %91 = vector.broadcast %cst_76 : f32 to vector<32x128xf32>
    %92 = arith.mulf %91, %90 : vector<32x128xf32>
    %93 = math.tanh %92 : vector<32x128xf32>
    %cst_77 = arith.constant 1.000000e+00 : f32
    %94 = vector.broadcast %cst_77 : f32 to vector<32x128xf32>
    %95 = arith.addf %93, %94 : vector<32x128xf32>
    %cst_78 = arith.constant 5.000000e-01 : f32
    %96 = vector.broadcast %cst_78 : f32 to vector<32x128xf32>
    %97 = arith.mulf %96, %95 : vector<32x128xf32>
    %98 = arith.mulf %90, %97 : vector<32x128xf32>
    %99 = vector.shape_cast %98 : vector<32x128xf32> to vector<4x8x128xf32>
    %100 = vector.extract_strided_slice %99 {offsets = [0, 0, 0], sizes = [4, 4, 128], strides = [1, 1, 1]} : vector<4x8x128xf32> to vector<4x4x128xf32>
    %101 = arith.truncf %100 : vector<4x4x128xf32> to vector<4x4x128xbf16>
    %c0_79 = arith.constant 0 : index
    %c0_80 = arith.constant 0 : index
    %c0_81 = arith.constant 0 : index
    %c0_82 = arith.constant 0 : index
    %102 = vector.load %arg5[%c0_79, %c0_80, %c0_81, %c0_82] : memref<1x4x4x128xbf16, #tpu.memory_space<vmem>>, vector<1x4x4x128xbf16>
    %103 = vector.shape_cast %102 : vector<1x4x4x128xbf16> to vector<4x4x128xbf16>
    %104 = vector.shape_cast %101 : vector<4x4x128xbf16> to vector<1x4x4x128xbf16>
    tpu.vector_store %arg5[%c0_79, %c0_80, %c0_81, %c0_82], %104 {strides = array<i32>} : memref<1x4x4x128xbf16, #tpu.memory_space<vmem>>, vector<1x4x4x128xbf16>,
    return
  }
  func.func @transform_0(%arg0: i32, %arg1: i32) -> (i32, i32, i32, i32, i32) {
    %c0_i32 = arith.constant 0 : i32
    %c0_i32_0 = arith.constant 0 : i32
    %c0_i32_1 = arith.constant 0 : i32
    %c0_i32_2 = arith.constant 0 : i32
    %c0_i32_3 = arith.constant 0 : i32
    return %arg0, %c0_i32, %c0_i32_0, %c0_i32_1, %c0_i32_2 : i32, i32, i32, i32, i32
  }
  func.func @transform_1(%arg0: i32, %arg1: i32) -> (i32, i32, i32) {
    %c0_i32 = arith.constant 0 : i32
    %c0_i32_0 = arith.constant 0 : i32
    %c0_i32_1 = arith.constant 0 : i32
    %c0_i32_2 = arith.constant 0 : i32
    return %c0_i32, %c0_i32_0, %c0_i32_1 : i32, i32, i32
  }
  func.func @transform_2(%arg0: i32, %arg1: i32) -> (i32, i32) {
    %c0_i32 = arith.constant 0 : i32
    %c0_i32_0 = arith.constant 0 : i32
    %c0_i32_1 = arith.constant 0 : i32
    return %c0_i32, %c0_i32_0 : i32, i32
  }
  func.func @transform_3(%arg0: i32, %arg1: i32) -> (i32, i32, i32, i32) {
    %c0_i32 = arith.constant 0 : i32
    %c0_i32_0 = arith.constant 0 : i32
    %c0_i32_1 = arith.constant 0 : i32
    return %arg0, %arg1, %c0_i32, %c0_i32_0 : i32, i32, i32, i32
  }
}

module attributes {stable_mosaic.version = 11 : i64} {
  func.func @_tail_kernel(%arg0: i32, %arg1: memref<1x16x128xbf16, #tpu.memory_space<vmem>>, %arg2: memref<128x128xbf16, #tpu.memory_space<vmem>>, %arg3: memref<1x128xf32, #tpu.memory_space<vmem>>, %arg4: memref<128x128xbf16, #tpu.memory_space<vmem>>, %arg5: memref<1x128xf32, #tpu.memory_space<vmem>>, %arg6: memref<128x128xbf16, #tpu.memory_space<vmem>>, %arg7: memref<1x128xf32, #tpu.memory_space<vmem>>, %arg8: memref<1x1x128xf32, #tpu.memory_space<vmem>>) attributes {dimension_semantics = [#tpu.dimension_semantics<parallel>], iteration_bounds = array<i64: 2>, scalar_prefetch = 0 : i64, scratch_operands = 0 : i64, tpu.core_type = #tpu.core_type<tc>, window_params = [{transform_indices = @transform_0, window_bounds = array<i64: 1, 16, 128>}, {pipeline_mode = #tpu.pipeline_mode<synchronous>, transform_indices = @transform_1, window_bounds = array<i64: 128, 128>}, {pipeline_mode = #tpu.pipeline_mode<synchronous>, transform_indices = @transform_2, window_bounds = array<i64: 1, 128>}, {pipeline_mode = #tpu.pipeline_mode<synchronous>, transform_indices = @transform_3, window_bounds = array<i64: 128, 128>}, {pipeline_mode = #tpu.pipeline_mode<synchronous>, transform_indices = @transform_4, window_bounds = array<i64: 1, 128>}, {pipeline_mode = #tpu.pipeline_mode<synchronous>, transform_indices = @transform_5, window_bounds = array<i64: 128, 128>}, {pipeline_mode = #tpu.pipeline_mode<synchronous>, transform_indices = @transform_6, window_bounds = array<i64: 1, 128>}, {transform_indices = @transform_7, window_bounds = array<i64: 1, 1, 128>}]} {
    %c0 = arith.constant 0 : index
    %c0_0 = arith.constant 0 : index
    %c0_1 = arith.constant 0 : index
    %0 = vector.load %arg1[%c0, %c0_0, %c0_1] : memref<1x16x128xbf16, #tpu.memory_space<vmem>>, vector<1x16x128xbf16>
    %1 = vector.shape_cast %0 : vector<1x16x128xbf16> to vector<16x128xbf16>
    %c0_2 = arith.constant 0 : index
    %c0_3 = arith.constant 0 : index
    %2 = vector.load %arg2[%c0_2, %c0_3] : memref<128x128xbf16, #tpu.memory_space<vmem>>, vector<128x128xbf16>
    %cst = arith.constant dense<0.000000e+00> : vector<16x128xf32>
    %3 = tpu.matmul %1, %2, %cst {dimension_numbers = #tpu.dot_dimension_numbers<[1], [0], [0], [1], [0, 0, 1, 1], [], []>} : vector<16x128xbf16>, vector<128x128xbf16>, vector<16x128xf32> -> vector<16x128xf32>
    %c0_4 = arith.constant 0 : index
    %c0_5 = arith.constant 0 : index
    %4 = vector.load %arg3[%c0_4, %c0_5] : memref<1x128xf32, #tpu.memory_space<vmem>>, vector<1x128xf32>
    %5 = vector.broadcast %4 : vector<1x128xf32> to vector<16x128xf32>
    %6 = arith.addf %3, %5 : vector<16x128xf32>
    %7 = arith.truncf %6 : vector<16x128xf32> to vector<16x128xbf16>
    %c0_6 = arith.constant 0 : index
    %c0_7 = arith.constant 0 : index
    %8 = vector.load %arg4[%c0_6, %c0_7] : memref<128x128xbf16, #tpu.memory_space<vmem>>, vector<128x128xbf16>
    %cst_8 = arith.constant dense<0.000000e+00> : vector<16x128xf32>
    %9 = tpu.matmul %7, %8, %cst_8 {dimension_numbers = #tpu.dot_dimension_numbers<[1], [0], [0], [1], [0, 0, 1, 1], [], []>} : vector<16x128xbf16>, vector<128x128xbf16>, vector<16x128xf32> -> vector<16x128xf32>
    %c0_9 = arith.constant 0 : index
    %c0_10 = arith.constant 0 : index
    %10 = vector.load %arg5[%c0_9, %c0_10] : memref<1x128xf32, #tpu.memory_space<vmem>>, vector<1x128xf32>
    %11 = vector.broadcast %10 : vector<1x128xf32> to vector<16x128xf32>
    %12 = arith.addf %9, %11 : vector<16x128xf32>
    %cst_11 = arith.constant 5.000000e-01 : f32
    %13 = vector.broadcast %cst_11 : f32 to vector<16x128xf32>
    %14 = arith.mulf %13, %12 : vector<16x128xf32>
    %15 = math.tanh %14 : vector<16x128xf32>
    %cst_12 = arith.constant 1.000000e+00 : f32
    %16 = vector.broadcast %cst_12 : f32 to vector<16x128xf32>
    %17 = arith.addf %15, %16 : vector<16x128xf32>
    %cst_13 = arith.constant 5.000000e-01 : f32
    %18 = vector.broadcast %cst_13 : f32 to vector<16x128xf32>
    %19 = arith.mulf %18, %17 : vector<16x128xf32>
    %20 = arith.mulf %12, %19 : vector<16x128xf32>
    %cst_14 = arith.constant dense<0.000000e+00> : vector<128xf32>
    %21 = vector.multi_reduction <add>, %20, %cst_14 [0] : vector<16x128xf32> to vector<128xf32>
    %22 = vector.shape_cast %21 : vector<128xf32> to vector<1x128xf32>
    %cst_15 = arith.constant 6.250000e-02 : f32
    %23 = vector.broadcast %cst_15 : f32 to vector<1x128xf32>
    %24 = arith.mulf %22, %23 : vector<1x128xf32>
    %25 = arith.truncf %24 : vector<1x128xf32> to vector<1x128xbf16>
    %c0_16 = arith.constant 0 : index
    %c0_17 = arith.constant 0 : index
    %26 = vector.load %arg6[%c0_16, %c0_17] : memref<128x128xbf16, #tpu.memory_space<vmem>>, vector<128x128xbf16>
    %cst_18 = arith.constant dense<0.000000e+00> : vector<1x128xf32>
    %27 = tpu.matmul %25, %26, %cst_18 {dimension_numbers = #tpu.dot_dimension_numbers<[1], [0], [0], [1], [0, 0, 1, 1], [], []>} : vector<1x128xbf16>, vector<128x128xbf16>, vector<1x128xf32> -> vector<1x128xf32>
    %c0_19 = arith.constant 0 : index
    %c0_20 = arith.constant 0 : index
    %28 = vector.load %arg7[%c0_19, %c0_20] : memref<1x128xf32, #tpu.memory_space<vmem>>, vector<1x128xf32>
    %29 = arith.addf %27, %28 : vector<1x128xf32>
    %cst_21 = arith.constant 5.000000e-01 : f32
    %30 = vector.broadcast %cst_21 : f32 to vector<1x128xf32>
    %31 = arith.mulf %30, %29 : vector<1x128xf32>
    %32 = math.tanh %31 : vector<1x128xf32>
    %cst_22 = arith.constant 1.000000e+00 : f32
    %33 = vector.broadcast %cst_22 : f32 to vector<1x128xf32>
    %34 = arith.addf %32, %33 : vector<1x128xf32>
    %cst_23 = arith.constant 5.000000e-01 : f32
    %35 = vector.broadcast %cst_23 : f32 to vector<1x128xf32>
    %36 = arith.mulf %35, %34 : vector<1x128xf32>
    %c0_24 = arith.constant 0 : index
    %c0_25 = arith.constant 0 : index
    %c0_26 = arith.constant 0 : index
    %37 = vector.load %arg8[%c0_24, %c0_25, %c0_26] : memref<1x1x128xf32, #tpu.memory_space<vmem>>, vector<1x1x128xf32>
    %38 = vector.shape_cast %37 : vector<1x1x128xf32> to vector<1x128xf32>
    %39 = vector.shape_cast %36 : vector<1x128xf32> to vector<1x1x128xf32>
    tpu.vector_store %arg8[%c0_24, %c0_25, %c0_26], %39 {strides = array<i32>} : memref<1x1x128xf32, #tpu.memory_space<vmem>>, vector<1x1x128xf32>,
    return
  }
  func.func @transform_0(%arg0: i32) -> (i32, i32, i32) {
    %c0_i32 = arith.constant 0 : i32
    %c0_i32_0 = arith.constant 0 : i32
    %c0_i32_1 = arith.constant 0 : i32
    return %arg0, %c0_i32, %c0_i32_0 : i32, i32, i32
  }
  func.func @transform_1(%arg0: i32) -> (i32, i32) {
    %c0_i32 = arith.constant 0 : i32
    %c0_i32_0 = arith.constant 0 : i32
    %c0_i32_1 = arith.constant 0 : i32
    return %c0_i32, %c0_i32_0 : i32, i32
  }
  func.func @transform_2(%arg0: i32) -> (i32, i32) {
    %c0_i32 = arith.constant 0 : i32
    %c0_i32_0 = arith.constant 0 : i32
    %c0_i32_1 = arith.constant 0 : i32
    return %c0_i32, %c0_i32_0 : i32, i32
  }
  func.func @transform_3(%arg0: i32) -> (i32, i32) {
    %c0_i32 = arith.constant 0 : i32
    %c0_i32_0 = arith.constant 0 : i32
    %c0_i32_1 = arith.constant 0 : i32
    return %c0_i32, %c0_i32_0 : i32, i32
  }
  func.func @transform_4(%arg0: i32) -> (i32, i32) {
    %c0_i32 = arith.constant 0 : i32
    %c0_i32_0 = arith.constant 0 : i32
    %c0_i32_1 = arith.constant 0 : i32
    return %c0_i32, %c0_i32_0 : i32, i32
  }
  func.func @transform_5(%arg0: i32) -> (i32, i32) {
    %c0_i32 = arith.constant 0 : i32
    %c0_i32_0 = arith.constant 0 : i32
    %c0_i32_1 = arith.constant 0 : i32
    return %c0_i32, %c0_i32_0 : i32, i32
  }
  func.func @transform_6(%arg0: i32) -> (i32, i32) {
    %c0_i32 = arith.constant 0 : i32
    %c0_i32_0 = arith.constant 0 : i32
    %c0_i32_1 = arith.constant 0 : i32
    return %c0_i32, %c0_i32_0 : i32, i32
  }
  func.func @transform_7(%arg0: i32) -> (i32, i32, i32) {
    %c0_i32 = arith.constant 0 : i32
    %c0_i32_0 = arith.constant 0 : i32
    %c0_i32_1 = arith.constant 0 : i32
    return %arg0, %c0_i32, %c0_i32_0 : i32, i32, i32
  }
}

</mosaic_0001>

<llo_original>
// kernel: timm_model_forward.7
$region0: #{timm_model_forward.7}
  #allocation0 [shape = 'u32[]', space=smem, size = 0x4, offset = 0x4, fixed_abs, tag = 'smem constant byte address 0x4 - core index']
  #allocation1 [shape = 'u32[72,128]{1,0:T(1,128)}', space=vmem, size = 0x9000, scoped, tag = 'internal scratch']
  %s0 = inlined_call_operand.vmem [shape: bf16[2,16,128], index: 0, kind: input, shape index: {}]
  %s1 = inlined_call_operand.vmem [shape: bf16[128,128], index: 1, kind: input, shape index: {}]
  %s2 = inlined_call_operand.vmem [shape: f32[1,128], index: 2, kind: input, shape index: {}]
  %s3 = inlined_call_operand.vmem [shape: bf16[128,128], index: 3, kind: input, shape index: {}]
  %s4 = inlined_call_operand.vmem [shape: f32[1,128], index: 4, kind: input, shape index: {}]
  %s5 = inlined_call_operand.vmem [shape: bf16[128,128], index: 5, kind: input, shape index: {}]
  %s6 = inlined_call_operand.vmem [shape: f32[1,128], index: 6, kind: input, shape index: {}]
  %s7 = inlined_call_operand.vmem [shape: f32[2,1,128], index: 7, kind: output, shape index: {}]
  %s8 = sld [smem:[#allocation0]]
  $region61: #{timm_model_forward.7} parent=0
    _
  %s10 = ssub.s32 1, %s8
  %s11 = scalar_select 0, %s10, %s8
  loop: start=0, step=1, limit=4
  $region2: #{timm_model_forward.7} parent=0 // loop_pre_header
    _
  $region3: #{timm_model_forward.7} parent=0 // loop_header
    %s13 = sphi 0, %s17
    %p14 = scmp.ge.s32.totalorder %s13, 4
    %s23 = sphi 0, %s25
    %s26 = sphi 0, %s23
    %s27 = sphi 0, %s26
    %s43 = sphi 0, %s27
    %s47 = sphi 0, %s47
    %s49 = sphi 0, %s47
    %s50 = sphi 0, %s49
    %s64 = sphi 0, %s50
    %s68 = sphi 0, %s68
    %s70 = sphi 0, %s68
    %s71 = sphi 0, %s70
    %s85 = sphi 0, %s71
    %s89 = sphi 0, %s89
    %s91 = sphi 0, %s89
    %s92 = sphi 0, %s91
    %s106 = sphi 0, %s92
    %s110 = sphi 0, %s110
    %s112 = sphi 0, %s110
    %s113 = sphi 0, %s112
    %s127 = sphi 0, %s113
    %s131 = sphi 0, %s131
    %s133 = sphi 0, %s131
    %s134 = sphi 0, %s133
    %s148 = sphi 0, %s134
    %s152 = sphi 0, %s152
    %s154 = sphi 0, %s152
    %s155 = sphi 0, %s154
    %s169 = sphi 0, %s155
    %s175 = sphi 0, %s177
    %s178 = sphi 0, %s175
    %s179 = sphi 0, %s178
    %s195 = sphi 0, %s179
  $region4: #{timm_model_forward.7} parent=0 // loop_header_branch
    %16 = sbr.rel (%p14) target = $region8
  $region5: #{timm_model_forward.7} parent=0 // loop_body
    %s18 = ssub.s32 %s13, 1
    %s19 = ssub.s32 %s13, 2
    %s20 = sadd.s32 %s13, 1
    %s21 = ssub.s32 %s13, %s20
    %p22 = scmp.eq.s32.totalorder %s21, 0
    %s24 = sadd.s32 %s23, 1
    %s25 = scalar_select %p22, %s23, %s24
    %p28 = pneg %p22
    %p29 = scmp.eq.s32.totalorder %s13, 1
    %p30 = por %p28, %p29
    %p31 = scmp.ne.s32.totalorder %s23, %s26
    %p32 = scmp.eq.s32.totalorder %s13, 0
    %p33 = por %p31, %p32
    %p34 = scmp.ne.s32.totalorder %s23, %s26
    %p35 = scmp.eq.s32.totalorder %s18, 1
    %p36 = por %p34, %p35
    %p37 = scmp.ne.s32.totalorder %s26, %s27
    %p38 = scmp.eq.s32.totalorder %s18, 0
    %p39 = por %p37, %p38
    %p40 = scmp.ne.s32.totalorder %s26, %s27
    %p41 = scmp.eq.s32.totalorder %s19, 1
    %p42 = por %p40, %p41
    %p44 = scmp.ne.s32.totalorder %s27, %s43
    %p45 = scmp.eq.s32.totalorder %s19, 0
    %p46 = por %p44, %p45
    %s48 = sadd.s32 %s47, 1
    %p51 = scmp.eq.s32.totalorder %s13, 1
    %p52 = scmp.ne.s32.totalorder %s47, %s49
    %p53 = scmp.eq.s32.totalorder %s13, 0
    %p54 = por %p52, %p53
    %p55 = scmp.ne.s32.totalorder %s47, %s49
    %p56 = scmp.eq.s32.totalorder %s18, 1
    %p57 = por %p55, %p56
    %p58 = scmp.ne.s32.totalorder %s49, %s50
    %p59 = scmp.eq.s32.totalorder %s18, 0
    %p60 = por %p58, %p59
    %p61 = scmp.ne.s32.totalorder %s49, %s50
    %p62 = scmp.eq.s32.totalorder %s19, 1
    %p63 = por %p61, %p62
    %p65 = scmp.ne.s32.totalorder %s50, %s64
    %p66 = scmp.eq.s32.totalorder %s19, 0
    %p67 = por %p65, %p66
    %s69 = sadd.s32 %s68, 1
    %p72 = scmp.eq.s32.totalorder %s13, 1
    %p73 = scmp.ne.s32.totalorder %s68, %s70
    %p74 = scmp.eq.s32.totalorder %s13, 0
    %p75 = por %p73, %p74
    %p76 = scmp.ne.s32.totalorder %s68, %s70
    %p77 = scmp.eq.s32.totalorder %s18, 1
    %p78 = por %p76, %p77
    %p79 = scmp.ne.s32.totalorder %s70, %s71
    %p80 = scmp.eq.s32.totalorder %s18, 0
    %p81 = por %p79, %p80
    %p82 = scmp.ne.s32.totalorder %s70, %s71
    %p83 = scmp.eq.s32.totalorder %s19, 1
    %p84 = por %p82, %p83
    %p86 = scmp.ne.s32.totalorder %s71, %s85
    %p87 = scmp.eq.s32.totalorder %s19, 0
    %p88 = por %p86, %p87
    %s90 = sadd.s32 %s89, 1
    %p93 = scmp.eq.s32.totalorder %s13, 1
    %p94 = scmp.ne.s32.totalorder %s89, %s91
    %p95 = scmp.eq.s32.totalorder %s13, 0
    %p96 = por %p94, %p95
    %p97 = scmp.ne.s32.totalorder %s89, %s91
    %p98 = scmp.eq.s32.totalorder %s18, 1
    %p99 = por %p97, %p98
    %p100 = scmp.ne.s32.totalorder %s91, %s92
    %p101 = scmp.eq.s32.totalorder %s18, 0
    %p102 = por %p100, %p101
    %p103 = scmp.ne.s32.totalorder %s91, %s92
    %p104 = scmp.eq.s32.totalorder %s19, 1
    %p105 = por %p103, %p104
    %p107 = scmp.ne.s32.totalorder %s92, %s106
    %p108 = scmp.eq.s32.totalorder %s19, 0
    %p109 = por %p107, %p108
    %s111 = sadd.s32 %s110, 1
    %p114 = scmp.eq.s32.totalorder %s13, 1
    %p115 = scmp.ne.s32.totalorder %s110, %s112
    %p116 = scmp.eq.s32.totalorder %s13, 0
    %p117 = por %p115, %p116
    %p118 = scmp.ne.s32.totalorder %s110, %s112
    %p119 = scmp.eq.s32.totalorder %s18, 1
    %p120 = por %p118, %p119
    %p121 = scmp.ne.s32.totalorder %s112, %s113
    %p122 = scmp.eq.s32.totalorder %s18, 0
    %p123 = por %p121, %p122
    %p124 = scmp.ne.s32.totalorder %s112, %s113
    %p125 = scmp.eq.s32.totalorder %s19, 1
    %p126 = por %p124, %p125
    %p128 = scmp.ne.s32.totalorder %s113, %s127
    %p129 = scmp.eq.s32.totalorder %s19, 0
    %p130 = por %p128, %p129
    %s132 = sadd.s32 %s131, 1
    %p135 = scmp.eq.s32.totalorder %s13, 1
    %p136 = scmp.ne.s32.totalorder %s131, %s133
    %p137 = scmp.eq.s32.totalorder %s13, 0
    %p138 = por %p136, %p137
    %p139 = scmp.ne.s32.totalorder %s131, %s133
    %p140 = scmp.eq.s32.totalorder %s18, 1
    %p141 = por %p139, %p140
    %p142 = scmp.ne.s32.totalorder %s133, %s134
    %p143 = scmp.eq.s32.totalorder %s18, 0
    %p144 = por %p142, %p143
    %p145 = scmp.ne.s32.totalorder %s133, %s134
    %p146 = scmp.eq.s32.totalorder %s19, 1
    %p147 = por %p145, %p146
    %p149 = scmp.ne.s32.totalorder %s134, %s148
    %p150 = scmp.eq.s32.totalorder %s19, 0
    %p151 = por %p149, %p150
    %s153 = sadd.s32 %s152, 1
    %p156 = scmp.eq.s32.totalorder %s13, 1
    %p157 = scmp.ne.s32.totalorder %s152, %s154
    %p158 = scmp.eq.s32.totalorder %s13, 0
    %p159 = por %p157, %p158
    %p160 = scmp.ne.s32.totalorder %s152, %s154
    %p161 = scmp.eq.s32.totalorder %s18, 1
    %p162 = por %p160, %p161
    %p163 = scmp.ne.s32.totalorder %s154, %s155
    %p164 = scmp.eq.s32.totalorder %s18, 0
    %p165 = por %p163, %p164
    %p166 = scmp.ne.s32.totalorder %s154, %s155
    %p167 = scmp.eq.s32.totalorder %s19, 1
    %p168 = por %p166, %p167
    %p170 = scmp.ne.s32.totalorder %s155, %s169
    %p171 = scmp.eq.s32.totalorder %s19, 0
    %p172 = por %p170, %p171
    %s173 = ssub.s32 %s13, %s20
    %p174 = scmp.eq.s32.totalorder %s173, 0
    %s176 = sadd.s32 %s175, 1
    %s177 = scalar_select %p174, %s175, %s176
    %p180 = pneg %p174
    %p181 = scmp.eq.s32.totalorder %s13, 1
    %p182 = por %p180, %p181
    %p183 = scmp.ne.s32.totalorder %s175, %s178
    %p184 = scmp.eq.s32.totalorder %s13, 0
    %p185 = por %p183, %p184
    %p186 = scmp.ne.s32.totalorder %s175, %s178
    %p187 = scmp.eq.s32.totalorder %s18, 1
    %p188 = por %p186, %p187
    %p189 = scmp.ne.s32.totalorder %s178, %s179
    %p190 = scmp.eq.s32.totalorder %s18, 0
    %p191 = por %p189, %p190
    %p192 = scmp.ne.s32.totalorder %s178, %s179
    %p193 = scmp.eq.s32.totalorder %s19, 1
    %p194 = por %p192, %p193
    %p196 = scmp.ne.s32.totalorder %s179, %s195
    %p197 = scmp.eq.s32.totalorder %s19, 0
    %p198 = por %p196, %p197
    %p199 = scmp.le.s32.totalorder 1, %s13
    %p200 = scmp.lt.s32.totalorder %s13, 3
    %p201 = pnand %p199, %p200
    %p202 = pneg %p201
    // Predicated region
    $region9: #{timm_model_forward.7} parent=5 // pred_check
      _
    $region10: #{timm_model_forward.7} parent=5 // pred_check_branch
      %204 = sbr.rel (%p201) target = $region12
    $region11: #{timm_model_forward.7} parent=5 // pred_region
      %s205 = ssub.s32 %s13, 1
      // Predicated region
      $region13: #{timm_model_forward.7} parent=11 // pred_check
        %p206 = pneg %p60
      $region14: #{timm_model_forward.7} parent=11 // pred_check_branch
        %208 = sbr.rel (%p206) target = $region16
      $region15: #{timm_model_forward.7} parent=11 // pred_region
        _
      $region16: #{timm_model_forward.7} parent=11 // pred_fallthru
        _
      // Predicated region
      $region17: #{timm_model_forward.7} parent=11 // pred_check
        %p209 = pneg %p81
      $region18: #{timm_model_forward.7} parent=11 // pred_check_branch
        %211 = sbr.rel (%p209) target = $region20
      $region19: #{timm_model_forward.7} parent=11 // pred_region
        _
      $region20: #{timm_model_forward.7} parent=11 // pred_fallthru
        _
      // Predicated region
      $region21: #{timm_model_forward.7} parent=11 // pred_check
        %p212 = pneg %p102
      $region22: #{timm_model_forward.7} parent=11 // pred_check_branch
        %214 = sbr.rel (%p212) target = $region24
      $region23: #{timm_model_forward.7} parent=11 // pred_region
        _
      $region24: #{timm_model_forward.7} parent=11 // pred_fallthru
        _
      // Predicated region
      $region25: #{timm_model_forward.7} parent=11 // pred_check
        %p215 = pneg %p123
      $region26: #{timm_model_forward.7} parent=11 // pred_check_branch
        %217 = sbr.rel (%p215) target = $region28
      $region27: #{timm_model_forward.7} parent=11 // pred_region
        _
      $region28: #{timm_model_forward.7} parent=11 // pred_fallthru
        _
      // Predicated region
      $region29: #{timm_model_forward.7} parent=11 // pred_check
        %p218 = pneg %p144
      $region30: #{timm_model_forward.7} parent=11 // pred_check_branch
        %220 = sbr.rel (%p218) target = $region32
      $region31: #{timm_model_forward.7} parent=11 // pred_region
        _
      $region32: #{timm_model_forward.7} parent=11 // pred_fallthru
        _
      // Predicated region
      $region33: #{timm_model_forward.7} parent=11 // pred_check
        %p221 = pneg %p165
      $region34: #{timm_model_forward.7} parent=11 // pred_check_branch
        %223 = sbr.rel (%p221) target = $region36
      $region35: #{timm_model_forward.7} parent=11 // pred_region
        _
      $region36: #{timm_model_forward.7} parent=11 // pred_fallthru
        _
    $region12: #{timm_model_forward.7} parent=5 // pred_fallthru
      _
    %p224 = scmp.lt.s32.totalorder %s13, 2
    // Predicated region
    $region37: #{timm_model_forward.7} parent=5 // pred_check
      %p225 = pneg %p224
    $region38: #{timm_model_forward.7} parent=5 // pred_check_branch
      %227 = sbr.rel (%p225) target = $region40
    $region39: #{timm_model_forward.7} parent=5 // pred_region
      // Predicated region
      $region41: #{timm_model_forward.7} parent=39 // pred_check
        %p228 = pneg %p33
      $region42: #{timm_model_forward.7} parent=39 // pred_check_branch
        %230 = sbr.rel (%p228) target = $region44
      $region43: #{timm_model_forward.7} parent=39 // pred_region
        %p231 = scmp.lt.s32.totalorder %s13, 1
        %s232 = scalar_select %p231, %s13, 1
        %s233 = smul.addr %s232, 2
        %s234 = smul.addr %s233, 4
        %s235 = scalar_lea.vmem %s0, %s234
      $region44: #{timm_model_forward.7} parent=39 // pred_fallthru
        _
    $region40: #{timm_model_forward.7} parent=5 // pred_fallthru
      _
    %p236 = scmp.le.s32.totalorder 1, %s13
    %p237 = scmp.lt.s32.totalorder %s13, 3
    %p238 = pnand %p236, %p237
    %p239 = pneg %p238
    // Predicated region
    $region45: #{timm_model_forward.7} parent=5 // pred_check
      _
    $region46: #{timm_model_forward.7} parent=5 // pred_check_branch
      %241 = sbr.rel (%p238) target = $region48
    $region47: #{timm_model_forward.7} parent=5 // pred_region
      %s242 = ssub.s32 %s13, 1
      %p243 = scmp.lt.s32.totalorder %s18, 1
      %s244 = scalar_select %p243, %s18, 1
      %s245 = smul.addr %s244, 2
      %s246 = smul.addr %s245, 4
      %s247 = scalar_lea.vmem %s0, %s246
      %p248 = pneg %p39
      %p249 = pneg %p36
      %p250 = pneg %p60
      %p251 = pneg %p57
      %p252 = pneg %p81
      %p253 = pneg %p78
      %p254 = pneg %p102
      %p255 = pneg %p99
      %p256 = pneg %p123
      %p257 = pneg %p120
      %p258 = pneg %p144
      %p259 = pneg %p141
      %p260 = pneg %p165
      %p261 = pneg %p162
      %p262 = pneg %p191
      %p263 = pneg %p188
      %p264 = scmp.lt.s32.totalorder %s18, 1
      %s265 = scalar_select %p264, %s18, 1
      %s266 = scalar_lea.vmem %s7, %s265
      %p267 = scmp.lt.s32.totalorder %s18, 1
      %s268 = scalar_select %p267, %s18, 1
      %s269 = smul.addr %s268, 2
      %s270 = smul.addr %s269, 4
      %s271 = scalar_lea.vmem %s0, %s270
      %p272 = scmp.lt.s32.totalorder %s18, 1
      %s273 = scalar_select %p272, %s18, 1
      %s274 = scalar_lea.vmem %s7, %s273
      %v275 = vld [vmem:[%s271] sm:$0xf]
      %v276 = vld [vmem:[%s271 + $0x4] sm:$0xf]
      %v277 = vld [vmem:[%s1] sm:$0xf]
      %v278 = vld [vmem:[%s1 + $0x4] sm:$0xf]
      %v279 = vld [vmem:[%s1 + $0x8] sm:$0xf]
      %v280 = vld [vmem:[%s1 + $0xc] sm:$0xf]
      %v281 = vld [vmem:[%s1 + $0x10] sm:$0xf]
      %v282 = vld [vmem:[%s1 + $0x14] sm:$0xf]
      %v283 = vld [vmem:[%s1 + $0x18] sm:$0xf]
      %v284 = vld [vmem:[%s1 + $0x1c] sm:$0xf]
      %v285 = vld [vmem:[%s1 + $0x20] sm:$0xf]
      %v286 = vld [vmem:[%s1 + $0x24] sm:$0xf]
      %v287 = vld [vmem:[%s1 + $0x28] sm:$0xf]
      %v288 = vld [vmem:[%s1 + $0x2c] sm:$0xf]
      %v289 = vld [vmem:[%s1 + $0x30] sm:$0xf]
      %v290 = vld [vmem:[%s1 + $0x34] sm:$0xf]
      %v291 = vld [vmem:[%s1 + $0x38] sm:$0xf]
      %v292 = vld [vmem:[%s1 + $0x3c] sm:$0xf]
      %v293 = vld [vmem:[%s2] sm:$0x1]
      %v295 = vperm.slane %v293, 0
      %v299 = vunpack.c.l.b16 %v275
      %v300 = vunpack.c.l.b16 %v276
      %v301 = vpack.c.b16 %v300, %v299
      %v319 = vunpack.c.l.b16 %v277
      %v320 = vunpack.c.l.b16 %v278
      %v321 = vunpack.c.l.b16 %v279
      %v322 = vunpack.c.l.b16 %v280
      %v323 = vunpack.c.l.b16 %v281
      %v324 = vunpack.c.l.b16 %v282
      %v325 = vunpack.c.l.b16 %v283
      %v326 = vunpack.c.l.b16 %v284
      %v327 = vunpack.c.l.b16 %v285
      %v328 = vunpack.c.l.b16 %v286
      %v329 = vunpack.c.l.b16 %v287
      %v330 = vunpack.c.l.b16 %v288
      %v331 = vunpack.c.l.b16 %v289
      %v332 = vunpack.c.l.b16 %v290
      %v333 = vunpack.c.l.b16 %v291
      %v334 = vunpack.c.l.b16 %v292
      %v335 = vpack.c.b16 %v320, %v319
      %v336 = vpack.c.b16 %v322, %v321
      %v337 = vpack.c.b16 %v324, %v323
      %v338 = vpack.c.b16 %v326, %v325
      %v339 = vpack.c.b16 %v328, %v327
      %v340 = vpack.c.b16 %v330, %v329
      %v341 = vpack.c.b16 %v332, %v331
      %v342 = vpack.c.b16 %v334, %v333
      %351 = vmatpush.bf16.msra.mxu0 %v342
      %352 = vmatpush.bf16.msra.mxu0 %v341
      %353 = vmatpush.bf16.msra.mxu0 %v340
      %354 = vmatpush.bf16.msra.mxu0 %v339
      %355 = vmatpush.bf16.msra.mxu0 %v338
      %356 = vmatpush.bf16.msra.mxu0 %v337
      %357 = vmatpush.bf16.msra.mxu0 %v336
      %358 = vmatpush.bf16.msra.mxu0 %v335
      %359 = vmatmul.bf16.gmra.mxu0 %v301
      %v360 = vpop.f32.mrf.mxu0
      %v361 = vadd.f32 %v295, %v360
      %v362 = vpop.f32.mrf.mxu0
      %v363 = vadd.f32 %v295, %v362
      %364 = vdwg.mxu0
      %v365 = vpack.c.bf16 %v363, %v361
      %v366 = vld [vmem:[%s3] sm:$0xf]
      %v367 = vld [vmem:[%s3 + $0x4] sm:$0xf]
      %v368 = vld [vmem:[%s3 + $0x8] sm:$0xf]
      %v369 = vld [vmem:[%s3 + $0xc] sm:$0xf]
      %v370 = vld [vmem:[%s3 + $0x10] sm:$0xf]
      %v371 = vld [vmem:[%s3 + $0x14] sm:$0xf]
      %v372 = vld [vmem:[%s3 + $0x18] sm:$0xf]
      %v373 = vld [vmem:[%s3 + $0x1c] sm:$0xf]
      %v374 = vld [vmem:[%s3 + $0x20] sm:$0xf]
      %v375 = vld [vmem:[%s3 + $0x24] sm:$0xf]
      %v376 = vld [vmem:[%s3 + $0x28] sm:$0xf]
      %v377 = vld [vmem:[%s3 + $0x2c] sm:$0xf]
      %v378 = vld [vmem:[%s3 + $0x30] sm:$0xf]
      %v379 = vld [vmem:[%s3 + $0x34] sm:$0xf]
      %v380 = vld [vmem:[%s3 + $0x38] sm:$0xf]
      %v381 = vld [vmem:[%s3 + $0x3c] sm:$0xf]
      %v382 = vld [vmem:[%s4] sm:$0x1]
      %v384 = vperm.slane %v382, 0
      %v402 = vunpack.c.l.b16 %v366
      %v403 = vunpack.c.l.b16 %v367
      %v404 = vunpack.c.l.b16 %v368
      %v405 = vunpack.c.l.b16 %v369
      %v406 = vunpack.c.l.b16 %v370
      %v407 = vunpack.c.l.b16 %v371
      %v408 = vunpack.c.l.b16 %v372
      %v409 = vunpack.c.l.b16 %v373
      %v410 = vunpack.c.l.b16 %v374
      %v411 = vunpack.c.l.b16 %v375
      %v412 = vunpack.c.l.b16 %v376
      %v413 = vunpack.c.l.b16 %v377
      %v414 = vunpack.c.l.b16 %v378
      %v415 = vunpack.c.l.b16 %v379
      %v416 = vunpack.c.l.b16 %v380
      %v417 = vunpack.c.l.b16 %v381
      %v418 = vpack.c.b16 %v403, %v402
      %v419 = vpack.c.b16 %v405, %v404
      %v420 = vpack.c.b16 %v407, %v406
      %v421 = vpack.c.b16 %v409, %v408
      %v422 = vpack.c.b16 %v411, %v410
      %v423 = vpack.c.b16 %v413, %v412
      %v424 = vpack.c.b16 %v415, %v414
      %v425 = vpack.c.b16 %v417, %v416
      %434 = vmatpush.bf16.msra.mxu0 %v425
      %435 = vmatpush.bf16.msra.mxu0 %v424
      %436 = vmatpush.bf16.msra.mxu0 %v423
      %437 = vmatpush.bf16.msra.mxu0 %v422
      %438 = vmatpush.bf16.msra.mxu0 %v421
      %439 = vmatpush.bf16.msra.mxu0 %v420
      %440 = vmatpush.bf16.msra.mxu0 %v419
      %441 = vmatpush.bf16.msra.mxu0 %v418
      %442 = vmatmul.bf16.gmra.mxu0 %v365
      %v443 = vpop.f32.mrf.mxu0
      %v444 = vadd.f32 %v384, %v443
      %v445 = vpop.f32.mrf.mxu0
      %v446 = vadd.f32 %v384, %v445
      %447 = vdwg.mxu0
      %v448 = vmul.f32 %v444, 0.5
      %v449 = vmul.f32 %v446, 0.5
      %v450 = vtanh.pop %v448
      %v451 = vtanh.pop %v449
      %v452 = vadd.f32 %v450, 1.0
      %v453 = vadd.f32 %v451, 1.0
      %v454 = vmul.f32 %v452, 0.5
      %v455 = vmul.f32 %v453, 0.5
      %v456 = vmul.f32 %v444, %v454
      %v457 = vmul.f32 %v446, %v455
      %v458 = vadd.f32 %v456, %v457
      %v459 = vrot.slane %v458, 4
      %v460 = vadd.f32 %v458, %v459
      %v461 = vrot.slane %v460, 2
      %v462 = vadd.f32 %v460, %v461
      %v463 = vrot.slane %v462, 1
      %v464 = vadd.f32 %v462, %v463
      %v465 = vmul.f32 %v464, 0.0625
      %v466 = vpack.c.bf16 %v465, %v465
      %v467 = vld [vmem:[%s5] sm:$0xf]
      %v468 = vld [vmem:[%s5 + $0x4] sm:$0xf]
      %v469 = vld [vmem:[%s5 + $0x8] sm:$0xf]
      %v470 = vld [vmem:[%s5 + $0xc] sm:$0xf]
      %v471 = vld [vmem:[%s5 + $0x10] sm:$0xf]
      %v472 = vld [vmem:[%s5 + $0x14] sm:$0xf]
      %v473 = vld [vmem:[%s5 + $0x18] sm:$0xf]
      %v474 = vld [vmem:[%s5 + $0x1c] sm:$0xf]
      %v475 = vld [vmem:[%s5 + $0x20] sm:$0xf]
      %v476 = vld [vmem:[%s5 + $0x24] sm:$0xf]
      %v477 = vld [vmem:[%s5 + $0x28] sm:$0xf]
      %v478 = vld [vmem:[%s5 + $0x2c] sm:$0xf]
      %v479 = vld [vmem:[%s5 + $0x30] sm:$0xf]
      %v480 = vld [vmem:[%s5 + $0x34] sm:$0xf]
      %v481 = vld [vmem:[%s5 + $0x38] sm:$0xf]
      %v482 = vld [vmem:[%s5 + $0x3c] sm:$0xf]
      %v483 = vld [vmem:[%s6] sm:$0x1]
      %v500 = vunpack.c.l.b16 %v467
      %v501 = vunpack.c.l.b16 %v468
      %v502 = vunpack.c.l.b16 %v469
      %v503 = vunpack.c.l.b16 %v470
      %v504 = vunpack.c.l.b16 %v471
      %v505 = vunpack.c.l.b16 %v472
      %v506 = vunpack.c.l.b16 %v473
      %v507 = vunpack.c.l.b16 %v474
      %v508 = vunpack.c.l.b16 %v475
      %v509 = vunpack.c.l.b16 %v476
      %v510 = vunpack.c.l.b16 %v477
      %v511 = vunpack.c.l.b16 %v478
      %v512 = vunpack.c.l.b16 %v479
      %v513 = vunpack.c.l.b16 %v480
      %v514 = vunpack.c.l.b16 %v481
      %v515 = vunpack.c.l.b16 %v482
      %v516 = vpack.c.b16 %v501, %v500
      %v517 = vpack.c.b16 %v503, %v502
      %v518 = vpack.c.b16 %v505, %v504
      %v519 = vpack.c.b16 %v507, %v506
      %v520 = vpack.c.b16 %v509, %v508
      %v521 = vpack.c.b16 %v511, %v510
      %v522 = vpack.c.b16 %v513, %v512
      %v523 = vpack.c.b16 %v515, %v514
      %532 = vmatpush.bf16.msra.mxu0 %v523
      %533 = vmatpush.bf16.msra.mxu0 %v522
      %534 = vmatpush.bf16.msra.mxu0 %v521
      %535 = vmatpush.bf16.msra.mxu0 %v520
      %536 = vmatpush.bf16.msra.mxu0 %v519
      %537 = vmatpush.bf16.msra.mxu0 %v518
      %538 = vmatpush.bf16.msra.mxu0 %v517
      %539 = vmatpush.bf16.msra.mxu0 %v516
      %540 = vmatmul.bf16.gmra.mxu0 %v466
      %v541 = vpop.f32.mrf.mxu0
      %v542 = vadd.f32 %v483, %v541
      %v543 = vpop.f32.mrf.mxu0
      %544 = vdwg.mxu0
      %v545 = vmul.f32 %v542, 0.5
      %v546 = vtanh.pop %v545
      %v547 = vadd.f32 %v546, 1.0
      %v548 = vmul.f32 %v547, 0.5
      %549 = vst [vmem:[%s274] sm:$0x1] %v548
      %p550 = scmp.lt.s32.totalorder %s18, 1
      %s551 = scalar_select %p550, %s18, 1
      %s552 = scalar_lea.vmem %s7, %s551
      // Predicated region
      $region49: #{timm_model_forward.7} parent=47 // pred_check
        %p553 = pneg %p188
      $region50: #{timm_model_forward.7} parent=47 // pred_check_branch
        %555 = sbr.rel (%p553) target = $region52
      $region51: #{timm_model_forward.7} parent=47 // pred_region
        _
      $region52: #{timm_model_forward.7} parent=47 // pred_fallthru
        _
    $region48: #{timm_model_forward.7} parent=5 // pred_fallthru
      _
    %p556 = scmp.le.s32.totalorder 2, %s13
    // Predicated region
    $region53: #{timm_model_forward.7} parent=5 // pred_check
      %p557 = pneg %p556
    $region54: #{timm_model_forward.7} parent=5 // pred_check_branch
      %559 = sbr.rel (%p557) target = $region56
    $region55: #{timm_model_forward.7} parent=5 // pred_region
      %s560 = ssub.s32 %s13, 2
      // Predicated region
      $region57: #{timm_model_forward.7} parent=55 // pred_check
        %p561 = pneg %p194
      $region58: #{timm_model_forward.7} parent=55 // pred_check_branch
        %563 = sbr.rel (%p561) target = $region60
      $region59: #{timm_model_forward.7} parent=55 // pred_region
        %p564 = scmp.lt.s32.totalorder %s19, 1
        %s565 = scalar_select %p564, %s19, 1
        %s566 = scalar_lea.vmem %s7, %s565
      $region60: #{timm_model_forward.7} parent=55 // pred_fallthru
        _
    $region56: #{timm_model_forward.7} parent=5 // pred_fallthru
      _
  $region6: #{timm_model_forward.7} parent=0 // loop_footer
    %s17 = sadd.s32 1, %s13
  $region7: #{timm_model_forward.7} parent=0 // loop_footer_branch
    %12 = sbr.rel target = $region3
  $region8: #{timm_model_forward.7} parent=0 // loop_exit
    _

// kernel: timm_model_forward.6
$region0: #{timm_model_forward.6}
  #allocation0 [shape = 'u32[]', space=smem, size = 0x4, offset = 0x4, fixed_abs, tag = 'smem constant byte address 0x4 - core index']
  #allocation1 [shape = 'u32[72,128]{1,0:T(1,128)}', space=vmem, size = 0x9000, scoped, tag = 'internal scratch']
  #allocation2 [shape = 'bf16[4,5,9,128]{3,2,1,0:T(8,128)(2,1)}', space=vmem, size = 0x14000, scoped, tag = 'scratch operand']
  %s0 = inlined_call_operand.vmem [shape: bf16[2,4,4,4,128], index: 0, kind: input, shape index: {}]
  %s1 = inlined_call_operand.hbm [shape: bf16[9,128,128], index: 1, kind: input, shape index: {}]
  %s2 = inlined_call_operand.vmem [shape: f32[1,128], index: 2, kind: input, shape index: {}]
  %s3 = inlined_call_operand.vmem [shape: bf16[2,4,4,128], index: 3, kind: output, shape index: {}]
  %s4 = sld [smem:[#allocation0]]
  $region49: #{timm_model_forward.6} parent=0
    _
  %s6 = ssub.s32 1, %s4
  %s7 = scalar_select 0, %s6, %s4
  $region1: #{timm_model_forward.6} parent=0
    #allocation3 [shape = 'u8[294912]{0}', space=vmem, size = 0x48000, scoped, tag = 'input window, operand 1, single buffered']
    #allocation4 [shape = 's32[2]{0}', space=sflag, size = 0x8, scoped, tag = 'scoped memory for timm_model_forward.6']
    %8 = vsyncpa [#allocation4], 0
    loop: start=0, step=1, limit=4
    $region2: #{timm_model_forward.6} parent=1 // loop_pre_header
      _
    $region3: #{timm_model_forward.6} parent=1 // loop_header
      %s10 = sphi 0, %s14
      %p11 = scmp.ge.s32.totalorder %s10, 4
      %s17 = sphi 0, %s29
      %s18 = sphi 0, %s25
      %s19 = sphi 0, %s17
      %s20 = sphi 0, %s18
      %s21 = sphi 0, %s19
      %s22 = sphi 0, %s20
      %s32 = sphi 0, %s34
      %s35 = sphi 0, %s32
      %s36 = sphi 0, %s35
      %s52 = sphi 0, %s36
      %s56 = sphi 0, %s56
      %s58 = sphi 0, %s56
      %s59 = sphi 0, %s58
      %s73 = sphi 0, %s59
      %s77 = sphi 0, %s77
      %s79 = sphi 0, %s77
      %s80 = sphi 0, %s79
      %s94 = sphi 0, %s80
      %s102 = sphi 0, %s104
      %s105 = sphi 0, %s102
      %s106 = sphi 0, %s105
      %s122 = sphi 0, %s106
    $region4: #{timm_model_forward.6} parent=1 // loop_header_branch
      %13 = sbr.rel (%p11) target = $region8
    $region5: #{timm_model_forward.6} parent=1 // loop_body
      %s15 = ssub.s32 %s10, 1
      %s16 = ssub.s32 %s10, 2
      %s23 = sadd.s32 1, %s18
      %p24 = scmp.ge.s32.totalorder %s23, 1
      %s25 = scalar_select %p24, 0, %s23
      %s26 = sadd.s32 1, %s17
      %s27 = scalar_select %p24, %s26, %s17
      %p28 = scmp.ge.s32.totalorder %s27, 2
      %s29 = scalar_select %p28, 0, %s27
      %s30 = ssub.s32 %s17, %s29
      %p31 = scmp.eq.s32.totalorder %s30, 0
      %s33 = sadd.s32 %s32, 1
      %s34 = scalar_select %p31, %s32, %s33
      %p37 = pneg %p31
      %p38 = scmp.eq.s32.totalorder %s10, 1
      %p39 = por %p37, %p38
      %p40 = scmp.ne.s32.totalorder %s32, %s35
      %p41 = scmp.eq.s32.totalorder %s10, 0
      %p42 = por %p40, %p41
      %p43 = scmp.ne.s32.totalorder %s32, %s35
      %p44 = scmp.eq.s32.totalorder %s15, 1
      %p45 = por %p43, %p44
      %p46 = scmp.ne.s32.totalorder %s35, %s36
      %p47 = scmp.eq.s32.totalorder %s15, 0
      %p48 = por %p46, %p47
      %p49 = scmp.ne.s32.totalorder %s35, %s36
      %p50 = scmp.eq.s32.totalorder %s16, 1
      %p51 = por %p49, %p50
      %p53 = scmp.ne.s32.totalorder %s36, %s52
      %p54 = scmp.eq.s32.totalorder %s16, 0
      %p55 = por %p53, %p54
      %s57 = sadd.s32 %s56, 1
      %p60 = scmp.eq.s32.totalorder %s10, 1
      %p61 = scmp.ne.s32.totalorder %s56, %s58
      %p62 = scmp.eq.s32.totalorder %s10, 0
      %p63 = por %p61, %p62
      %p64 = scmp.ne.s32.totalorder %s56, %s58
      %p65 = scmp.eq.s32.totalorder %s15, 1
      %p66 = por %p64, %p65
      %p67 = scmp.ne.s32.totalorder %s58, %s59
      %p68 = scmp.eq.s32.totalorder %s15, 0
      %p69 = por %p67, %p68
      %p70 = scmp.ne.s32.totalorder %s58, %s59
      %p71 = scmp.eq.s32.totalorder %s16, 1
      %p72 = por %p70, %p71
      %p74 = scmp.ne.s32.totalorder %s59, %s73
      %p75 = scmp.eq.s32.totalorder %s16, 0
      %p76 = por %p74, %p75
      %s78 = sadd.s32 %s77, 1
      %p81 = scmp.eq.s32.totalorder %s10, 1
      %p82 = scmp.ne.s32.totalorder %s77, %s79
      %p83 = scmp.eq.s32.totalorder %s10, 0
      %p84 = por %p82, %p83
      %p85 = scmp.ne.s32.totalorder %s77, %s79
      %p86 = scmp.eq.s32.totalorder %s15, 1
      %p87 = por %p85, %p86
      %p88 = scmp.ne.s32.totalorder %s79, %s80
      %p89 = scmp.eq.s32.totalorder %s15, 0
      %p90 = por %p88, %p89
      %p91 = scmp.ne.s32.totalorder %s79, %s80
      %p92 = scmp.eq.s32.totalorder %s16, 1
      %p93 = por %p91, %p92
      %p95 = scmp.ne.s32.totalorder %s80, %s94
      %p96 = scmp.eq.s32.totalorder %s16, 0
      %p97 = por %p95, %p96
      %s98 = ssub.s32 %s17, %s29
      %s99 = ssub.s32 %s18, %s25
      %s100 = sor.u32 %s98, %s99
      %p101 = scmp.eq.s32.totalorder %s100, 0
      %s103 = sadd.s32 %s102, 1
      %s104 = scalar_select %p101, %s102, %s103
      %p107 = pneg %p101
      %p108 = scmp.eq.s32.totalorder %s10, 1
      %p109 = por %p107, %p108
      %p110 = scmp.ne.s32.totalorder %s102, %s105
      %p111 = scmp.eq.s32.totalorder %s10, 0
      %p112 = por %p110, %p111
      %p113 = scmp.ne.s32.totalorder %s102, %s105
      %p114 = scmp.eq.s32.totalorder %s15, 1
      %p115 = por %p113, %p114
      %p116 = scmp.ne.s32.totalorder %s105, %s106
      %p117 = scmp.eq.s32.totalorder %s15, 0
      %p118 = por %p116, %p117
      %p119 = scmp.ne.s32.totalorder %s105, %s106
      %p120 = scmp.eq.s32.totalorder %s16, 1
      %p121 = por %p119, %p120
      %p123 = scmp.ne.s32.totalorder %s106, %s122
      %p124 = scmp.eq.s32.totalorder %s16, 0
      %p125 = por %p123, %p124
      %p126 = scmp.le.s32.totalorder 1, %s10
      %p127 = scmp.lt.s32.totalorder %s10, 3
      %p128 = pnand %p126, %p127
      %p129 = pneg %p128
      // Predicated region
      $region9: #{timm_model_forward.6} parent=5 // pred_check
        _
      $region10: #{timm_model_forward.6} parent=5 // pred_check_branch
        %131 = sbr.rel (%p128) target = $region12
      $region11: #{timm_model_forward.6} parent=5 // pred_region
        %s132 = ssub.s32 %s10, 1
        // Predicated region
        $region13: #{timm_model_forward.6} parent=11 // pred_check
          %p133 = pneg %p69
        $region14: #{timm_model_forward.6} parent=11 // pred_check_branch
          %135 = sbr.rel (%p133) target = $region16
        $region15: #{timm_model_forward.6} parent=11 // pred_region
          %137 = vsyncadd [#allocation4], 0
          %s138 = sshll.u32 %s1, 4
          %s139 = int_to_ptr.hbm [resolvable:$true] %s138
          %s140 = sshll.u32 [#allocation3], 4
          %s141 = int_to_ptr.vmem [resolvable:$true] %s140
          %146 = dma.hbm_to_vmem [thread:$0]  %s139, 9216, %s141, [#allocation4], 64, 64, 4
        $region16: #{timm_model_forward.6} parent=11 // pred_fallthru
          _
        // Predicated region
        $region17: #{timm_model_forward.6} parent=11 // pred_check
          %p147 = pneg %p90
        $region18: #{timm_model_forward.6} parent=11 // pred_check_branch
          %149 = sbr.rel (%p147) target = $region20
        $region19: #{timm_model_forward.6} parent=11 // pred_region
          _
        $region20: #{timm_model_forward.6} parent=11 // pred_fallthru
          _
      $region12: #{timm_model_forward.6} parent=5 // pred_fallthru
        _
      %p150 = scmp.lt.s32.totalorder %s10, 2
      // Predicated region
      $region21: #{timm_model_forward.6} parent=5 // pred_check
        %p151 = pneg %p150
      $region22: #{timm_model_forward.6} parent=5 // pred_check_branch
        %153 = sbr.rel (%p151) target = $region24
      $region23: #{timm_model_forward.6} parent=5 // pred_region
        // Predicated region
        $region25: #{timm_model_forward.6} parent=23 // pred_check
          %p154 = pneg %p42
        $region26: #{timm_model_forward.6} parent=23 // pred_check_branch
          %156 = sbr.rel (%p154) target = $region28
        $region27: #{timm_model_forward.6} parent=23 // pred_region
          %p157 = scmp.lt.s32.totalorder %s17, 1
          %s158 = scalar_select %p157, %s17, 1
          %s159 = smul.addr %s158, 16
          %s160 = smul.addr %s159, 2
          %s161 = scalar_lea.vmem %s0, %s160
        $region28: #{timm_model_forward.6} parent=23 // pred_fallthru
          _
      $region24: #{timm_model_forward.6} parent=5 // pred_fallthru
        _
      %p162 = scmp.le.s32.totalorder 1, %s10
      %p163 = scmp.lt.s32.totalorder %s10, 3
      %p164 = pnand %p162, %p163
      %p165 = pneg %p164
      // Predicated region
      $region29: #{timm_model_forward.6} parent=5 // pred_check
        _
      $region30: #{timm_model_forward.6} parent=5 // pred_check_branch
        %167 = sbr.rel (%p164) target = $region32
      $region31: #{timm_model_forward.6} parent=5 // pred_region
        %s168 = ssub.s32 %s10, 1
        // Predicated region
        $region33: #{timm_model_forward.6} parent=31 // pred_check
          %p169 = pneg %p69
        $region34: #{timm_model_forward.6} parent=31 // pred_check_branch
          %171 = sbr.rel (%p169) target = $region36
        $region35: #{timm_model_forward.6} parent=31 // pred_region
          %173 = dma.done [#allocation4], 9216
        $region36: #{timm_model_forward.6} parent=31 // pred_fallthru
          _
        %p174 = scmp.lt.s32.totalorder %s19, 1
        %s175 = scalar_select %p174, %s19, 1
        %s176 = smul.addr %s175, 16
        %s177 = smul.addr %s176, 2
        %s178 = scalar_lea.vmem %s0, %s177
        %p179 = pneg %p48
        %p180 = pneg %p45
        %p181 = pneg %p69
        %p182 = pneg %p66
        %p183 = pneg %p90
        %p184 = pneg %p87
        %p185 = pneg %p118
        %p186 = pneg %p115
        %s187 = smul.u32 4, %s20
        %p188 = scmp.lt.s32.totalorder %s19, 1
        %s189 = scalar_select %p188, %s19, 1
        %p190 = scmp.lt.s32.totalorder %s187, 3
        %s191 = scalar_select %p190, %s187, 3
        %s192 = smul.addr %s189, 4
        %s193 = sadd.s32 %s191, %s192
        %s194 = smul.addr %s193, 2
        %s195 = scalar_lea.vmem %s3, %s194
        %p196 = scmp.lt.s32.totalorder %s19, 1
        %s197 = scalar_select %p196, %s19, 1
        %s198 = smul.addr %s197, 16
        %s199 = smul.addr %s198, 2
        %s200 = scalar_lea.vmem %s0, %s199
        %s201 = smul.u32 4, %s20
        %p202 = scmp.lt.s32.totalorder %s19, 1
        %s203 = scalar_select %p202, %s19, 1
        %p204 = scmp.lt.s32.totalorder %s201, 3
        %s205 = scalar_select %p204, %s201, 3
        %s206 = smul.addr %s203, 4
        %s207 = sadd.s32 %s205, %s206
        %s208 = smul.addr %s207, 2
        %s209 = scalar_lea.vmem %s3, %s208
        %s210 = smul.u32 4, %s20
        %212 = vst [vmem:[#allocation2] sm:$0xf] 0
        %vm213 = vcmask 1040384
        %vm214 = vsmask.f32 256
        %vm215 = vmand %vm213, %vm214
        %v216 = vld [vmem:[#allocation2 + $0x4] sm:$0x1]
        %v217 = vsel %vm215, 0, %v216
        %218 = vst [vmem:[#allocation2 + $0x4] sm:$0x1] %v217
        %219 = vst [vmem:[#allocation2 + $0x8] sm:$0xf] 0
        %v220 = vld [vmem:[#allocation2 + $0xc] sm:$0x1]
        %v221 = vsel %vm215, 0, %v220
        %222 = vst [vmem:[#allocation2 + $0xc] sm:$0x1] %v221
        %223 = vst [vmem:[#allocation2 + $0x10] sm:$0xf] 0
        %v224 = vld [vmem:[#allocation2 + $0x14] sm:$0x1]
        %v225 = vsel %vm215, 0, %v224
        %226 = vst [vmem:[#allocation2 + $0x14] sm:$0x1] %v225
        %227 = vst [vmem:[#allocation2 + $0x18] sm:$0xf] 0
        %v228 = vld [vmem:[#allocation2 + $0x1c] sm:$0x1]
        %v229 = vsel %vm215, 0, %v228
        %230 = vst [vmem:[#allocation2 + $0x1c] sm:$0x1] %v229
        %231 = vst [vmem:[#allocation2 + $0x20] sm:$0xf] 0
        %v232 = vld [vmem:[#allocation2 + $0x24] sm:$0x1]
        %v233 = vsel %vm215, 0, %v232
        %234 = vst [vmem:[#allocation2 + $0x24] sm:$0x1] %v233
        %235 = vst [vmem:[#allocation2 + $0x28] sm:$0xf] 0
        %v236 = vld [vmem:[#allocation2 + $0x2c] sm:$0x1]
        %v237 = vsel %vm215, 0, %v236
        %238 = vst [vmem:[#allocation2 + $0x2c] sm:$0x1] %v237
        %239 = vst [vmem:[#allocation2 + $0x30] sm:$0xf] 0
        %v240 = vld [vmem:[#allocation2 + $0x34] sm:$0x1]
        %v241 = vsel %vm215, 0, %v240
        %242 = vst [vmem:[#allocation2 + $0x34] sm:$0x1] %v241
        %243 = vst [vmem:[#allocation2 + $0x38] sm:$0xf] 0
        %v244 = vld [vmem:[#allocation2 + $0x3c] sm:$0x1]
        %v245 = vsel %vm215, 0, %v244
        %246 = vst [vmem:[#allocation2 + $0x3c] sm:$0x1] %v245
        %247 = vst [vmem:[#allocation2 + $0x40] sm:$0xf] 0
        %v248 = vld [vmem:[#allocation2 + $0x44] sm:$0x1]
        %v249 = vsel %vm215, 0, %v248
        %250 = vst [vmem:[#allocation2 + $0x44] sm:$0x1] %v249
        %251 = vst [vmem:[#allocation2 + $0x48] sm:$0xf] 0
        %v252 = vld [vmem:[#allocation2 + $0x4c] sm:$0x1]
        %v253 = vsel %vm215, 0, %v252
        %254 = vst [vmem:[#allocation2 + $0x4c] sm:$0x1] %v253
        %255 = vst [vmem:[#allocation2 + $0x50] sm:$0xf] 0
        %v256 = vld [vmem:[#allocation2 + $0x54] sm:$0x1]
        %v257 = vsel %vm215, 0, %v256
        %258 = vst [vmem:[#allocation2 + $0x54] sm:$0x1] %v257
        %259 = vst [vmem:[#allocation2 + $0x58] sm:$0xf] 0
        %v260 = vld [vmem:[#allocation2 + $0x5c] sm:$0x1]
        %v261 = vsel %vm215, 0, %v260
        %262 = vst [vmem:[#allocation2 + $0x5c] sm:$0x1] %v261
        %263 = vst [vmem:[#allocation2 + $0x60] sm:$0xf] 0
        %v264 = vld [vmem:[#allocation2 + $0x64] sm:$0x1]
        %v265 = vsel %vm215, 0, %v264
        %266 = vst [vmem:[#allocation2 + $0x64] sm:$0x1] %v265
        %267 = vst [vmem:[#allocation2 + $0x68] sm:$0xf] 0
        %v268 = vld [vmem:[#allocation2 + $0x6c] sm:$0x1]
        %v269 = vsel %vm215, 0, %v268
        %270 = vst [vmem:[#allocation2 + $0x6c] sm:$0x1] %v269
        %271 = vst [vmem:[#allocation2 + $0x70] sm:$0xf] 0
        %v272 = vld [vmem:[#allocation2 + $0x74] sm:$0x1]
        %v273 = vsel %vm215, 0, %v272
        %274 = vst [vmem:[#allocation2 + $0x74] sm:$0x1] %v273
        %275 = vst [vmem:[#allocation2 + $0x78] sm:$0xf] 0
        %v276 = vld [vmem:[#allocation2 + $0x7c] sm:$0x1]
        %v277 = vsel %vm215, 0, %v276
        %278 = vst [vmem:[#allocation2 + $0x7c] sm:$0x1] %v277
        %279 = vst [vmem:[#allocation2 + $0x80] sm:$0xf] 0
        %v280 = vld [vmem:[#allocation2 + $0x84] sm:$0x1]
        %v281 = vsel %vm215, 0, %v280
        %282 = vst [vmem:[#allocation2 + $0x84] sm:$0x1] %v281
        %283 = vst [vmem:[#allocation2 + $0x88] sm:$0xf] 0
        %v284 = vld [vmem:[#allocation2 + $0x8c] sm:$0x1]
        %v285 = vsel %vm215, 0, %v284
        %286 = vst [vmem:[#allocation2 + $0x8c] sm:$0x1] %v285
        %287 = vst [vmem:[#allocation2 + $0x90] sm:$0xf] 0
        %v288 = vld [vmem:[#allocation2 + $0x94] sm:$0x1]
        %v289 = vsel %vm215, 0, %v288
        %290 = vst [vmem:[#allocation2 + $0x94] sm:$0x1] %v289
        %291 = vst [vmem:[#allocation2 + $0x98] sm:$0xf] 0
        %v292 = vld [vmem:[#allocation2 + $0x9c] sm:$0x1]
        %v293 = vsel %vm215, 0, %v292
        %294 = vst [vmem:[#allocation2 + $0x9c] sm:$0x1] %v293
        %v295 = vld [vmem:[%s200] sm:$0x3]
        %v296 = vld [vmem:[%s200 + $0x2] sm:$0x3]
        %v297 = vld [vmem:[%s200 + $0x4] sm:$0x3]
        %v298 = vld [vmem:[%s200 + $0x6] sm:$0x3]
        %v299 = vld [vmem:[%s200 + $0x8] sm:$0x3]
        %v300 = vld [vmem:[%s200 + $0xa] sm:$0x3]
        %v301 = vld [vmem:[%s200 + $0xc] sm:$0x3]
        %v302 = vld [vmem:[%s200 + $0xe] sm:$0x3]
        %v303 = vld [vmem:[%s200 + $0x10] sm:$0x3]
        %v304 = vld [vmem:[%s200 + $0x12] sm:$0x3]
        %v305 = vld [vmem:[%s200 + $0x14] sm:$0x3]
        %v306 = vld [vmem:[%s200 + $0x16] sm:$0x3]
        %v307 = vld [vmem:[%s200 + $0x18] sm:$0x3]
        %v308 = vld [vmem:[%s200 + $0x1a] sm:$0x3]
        %v309 = vld [vmem:[%s200 + $0x1c] sm:$0x3]
        %v310 = vld [vmem:[%s200 + $0x1e] sm:$0x3]
        %311 = vst [vmem:[#allocation2] sm:$0x3] %v295
        %312 = vst [vmem:[#allocation2 + $0x8] sm:$0x3] %v296
        %313 = vst [vmem:[#allocation2 + $0x10] sm:$0x3] %v297
        %314 = vst [vmem:[#allocation2 + $0x18] sm:$0x3] %v298
        %315 = vst [vmem:[#allocation2 + $0x28] sm:$0x3] %v299
        %316 = vst [vmem:[#allocation2 + $0x30] sm:$0x3] %v300
        %317 = vst [vmem:[#allocation2 + $0x38] sm:$0x3] %v301
        %318 = vst [vmem:[#allocation2 + $0x40] sm:$0x3] %v302
        %319 = vst [vmem:[#allocation2 + $0x50] sm:$0x3] %v303
        %320 = vst [vmem:[#allocation2 + $0x58] sm:$0x3] %v304
        %321 = vst [vmem:[#allocation2 + $0x60] sm:$0x3] %v305
        %322 = vst [vmem:[#allocation2 + $0x68] sm:$0x3] %v306
        %323 = vst [vmem:[#allocation2 + $0x78] sm:$0x3] %v307
        %324 = vst [vmem:[#allocation2 + $0x80] sm:$0x3] %v308
        %325 = vst [vmem:[#allocation2 + $0x88] sm:$0x3] %v309
        %326 = vst [vmem:[#allocation2 + $0x90] sm:$0x3] %v310
        %s327 = smul.u32 %s20, 4
        %v328 = vld [vmem:[%s2] sm:$0x1]
        %v330 = vperm.slane %v328, 0
        %s332 = smul.u32 %s327, 2
        %s333 = smul.addr %s332, 4
        %s334 = scalar_lea.vmem [#allocation2], %s333
        %v335 = vld [vmem:[%s334] sm:$0xf]
        %v336 = vld [vmem:[%s334 + $0x8] sm:$0xf]
        %v337 = vld [vmem:[%s334 + $0x10] sm:$0xf]
        %v338 = vld [vmem:[%s334 + $0x18] sm:$0xf]
        %v339 = vld [vmem:[#allocation3] sm:$0xf]
        %v340 = vld [vmem:[#allocation3 + $0x4] sm:$0xf]
        %v341 = vld [vmem:[#allocation3 + $0x8] sm:$0xf]
        %v342 = vld [vmem:[#allocation3 + $0xc] sm:$0xf]
        %v343 = vld [vmem:[#allocation3 + $0x10] sm:$0xf]
        %v344 = vld [vmem:[#allocation3 + $0x14] sm:$0xf]
        %v345 = vld [vmem:[#allocation3 + $0x18] sm:$0xf]
        %v346 = vld [vmem:[#allocation3 + $0x1c] sm:$0xf]
        %v347 = vld [vmem:[#allocation3 + $0x20] sm:$0xf]
        %v348 = vld [vmem:[#allocation3 + $0x24] sm:$0xf]
        %v349 = vld [vmem:[#allocation3 + $0x28] sm:$0xf]
        %v350 = vld [vmem:[#allocation3 + $0x2c] sm:$0xf]
        %v351 = vld [vmem:[#allocation3 + $0x30] sm:$0xf]
        %v352 = vld [vmem:[#allocation3 + $0x34] sm:$0xf]
        %v353 = vld [vmem:[#allocation3 + $0x38] sm:$0xf]
        %v354 = vld [vmem:[#allocation3 + $0x3c] sm:$0xf]
        %v359 = vunpack.c.l.b16 %v335
        %v360 = vunpack.c.l.b16 %v336
        %v361 = vunpack.c.l.b16 %v337
        %v362 = vunpack.c.l.b16 %v338
        %v363 = vpack.c.b16 %v360, %v359
        %v364 = vpack.c.b16 %v362, %v361
        %v383 = vunpack.c.l.b16 %v339
        %v384 = vunpack.c.l.b16 %v340
        %v385 = vunpack.c.l.b16 %v341
        %v386 = vunpack.c.l.b16 %v342
        %v387 = vunpack.c.l.b16 %v343
        %v388 = vunpack.c.l.b16 %v344
        %v389 = vunpack.c.l.b16 %v345
        %v390 = vunpack.c.l.b16 %v346
        %v391 = vunpack.c.l.b16 %v347
        %v392 = vunpack.c.l.b16 %v348
        %v393 = vunpack.c.l.b16 %v349
        %v394 = vunpack.c.l.b16 %v350
        %v395 = vunpack.c.l.b16 %v351
        %v396 = vunpack.c.l.b16 %v352
        %v397 = vunpack.c.l.b16 %v353
        %v398 = vunpack.c.l.b16 %v354
        %v399 = vpack.c.b16 %v384, %v383
        %v400 = vpack.c.b16 %v386, %v385
        %v401 = vpack.c.b16 %v388, %v387
        %v402 = vpack.c.b16 %v390, %v389
        %v403 = vpack.c.b16 %v392, %v391
        %v404 = vpack.c.b16 %v394, %v393
        %v405 = vpack.c.b16 %v396, %v395
        %v406 = vpack.c.b16 %v398, %v397
        %415 = vmatpush.bf16.msra.mxu0 %v406
        %416 = vmatpush.bf16.msra.mxu0 %v405
        %417 = vmatpush.bf16.msra.mxu0 %v404
        %418 = vmatpush.bf16.msra.mxu0 %v403
        %419 = vmatpush.bf16.msra.mxu0 %v402
        %420 = vmatpush.bf16.msra.mxu0 %v401
        %421 = vmatpush.bf16.msra.mxu0 %v400
        %422 = vmatpush.bf16.msra.mxu0 %v399
        %423 = vmatmul.bf16.gmra.mxu0 %v363
        %v424 = vpop.f32.mrf.mxu0
        %v425 = vadd.f32 0.0, %v424
        %v426 = vpop.f32.mrf.mxu0
        %v427 = vadd.f32 0.0, %v426
        %428 = vmatmul.bf16.gmra.mxu0 %v364
        %v429 = vpop.f32.mrf.mxu0
        %v430 = vadd.f32 0.0, %v429
        %v431 = vpop.f32.mrf.mxu0
        %v432 = vadd.f32 0.0, %v431
        %433 = vdwg.mxu0
        %v434 = vadd.f32 %v330, %v425
        %v435 = vadd.f32 %v330, %v427
        %v436 = vadd.f32 %v330, %v430
        %v437 = vadd.f32 %v330, %v432
        %s438 = sadd.s32 %s332, 10
        %s439 = smul.addr %s438, 4
        %s440 = scalar_lea.vmem [#allocation2], %s439
        %v441 = vld [vmem:[%s440] sm:$0xf]
        %v442 = vld [vmem:[%s440 + $0x8] sm:$0xf]
        %v443 = vld [vmem:[%s440 + $0x10] sm:$0xf]
        %v444 = vld [vmem:[%s440 + $0x18] sm:$0xf]
        %s445 = scalar_lea.vmem [#allocation3], 64
        %v446 = vld [vmem:[%s445] sm:$0xf]
        %v447 = vld [vmem:[%s445 + $0x4] sm:$0xf]
        %v448 = vld [vmem:[%s445 + $0x8] sm:$0xf]
        %v449 = vld [vmem:[%s445 + $0xc] sm:$0xf]
        %v450 = vld [vmem:[%s445 + $0x10] sm:$0xf]
        %v451 = vld [vmem:[%s445 + $0x14] sm:$0xf]
        %v452 = vld [vmem:[%s445 + $0x18] sm:$0xf]
        %v453 = vld [vmem:[%s445 + $0x1c] sm:$0xf]
        %v454 = vld [vmem:[%s445 + $0x20] sm:$0xf]
        %v455 = vld [vmem:[%s445 + $0x24] sm:$0xf]
        %v456 = vld [vmem:[%s445 + $0x28] sm:$0xf]
        %v457 = vld [vmem:[%s445 + $0x2c] sm:$0xf]
        %v458 = vld [vmem:[%s445 + $0x30] sm:$0xf]
        %v459 = vld [vmem:[%s445 + $0x34] sm:$0xf]
        %v460 = vld [vmem:[%s445 + $0x38] sm:$0xf]
        %v461 = vld [vmem:[%s445 + $0x3c] sm:$0xf]
        %v466 = vunpack.c.l.b16 %v441
        %v467 = vunpack.c.l.b16 %v442
        %v468 = vunpack.c.l.b16 %v443
        %v469 = vunpack.c.l.b16 %v444
        %v470 = vpack.c.b16 %v467, %v466
        %v471 = vpack.c.b16 %v469, %v468
        %v490 = vunpack.c.l.b16 %v446
        %v491 = vunpack.c.l.b16 %v447
        %v492 = vunpack.c.l.b16 %v448
        %v493 = vunpack.c.l.b16 %v449
        %v494 = vunpack.c.l.b16 %v450
        %v495 = vunpack.c.l.b16 %v451
        %v496 = vunpack.c.l.b16 %v452
        %v497 = vunpack.c.l.b16 %v453
        %v498 = vunpack.c.l.b16 %v454
        %v499 = vunpack.c.l.b16 %v455
        %v500 = vunpack.c.l.b16 %v456
        %v501 = vunpack.c.l.b16 %v457
        %v502 = vunpack.c.l.b16 %v458
        %v503 = vunpack.c.l.b16 %v459
        %v504 = vunpack.c.l.b16 %v460
        %v505 = vunpack.c.l.b16 %v461
        %v506 = vpack.c.b16 %v491, %v490
        %v507 = vpack.c.b16 %v493, %v492
        %v508 = vpack.c.b16 %v495, %v494
        %v509 = vpack.c.b16 %v497, %v496
        %v510 = vpack.c.b16 %v499, %v498
        %v511 = vpack.c.b16 %v501, %v500
        %v512 = vpack.c.b16 %v503, %v502
        %v513 = vpack.c.b16 %v505, %v504
        %522 = vmatpush.bf16.msra.mxu0 %v513
        %523 = vmatpush.bf16.msra.mxu0 %v512
        %524 = vmatpush.bf16.msra.mxu0 %v511
        %525 = vmatpush.bf16.msra.mxu0 %v510
        %526 = vmatpush.bf16.msra.mxu0 %v509
        %527 = vmatpush.bf16.msra.mxu0 %v508
        %528 = vmatpush.bf16.msra.mxu0 %v507
        %529 = vmatpush.bf16.msra.mxu0 %v506
        %530 = vmatmul.bf16.gmra.mxu0 %v470
        %v531 = vpop.f32.mrf.mxu0
        %v532 = vadd.f32 0.0, %v531
        %v533 = vpop.f32.mrf.mxu0
        %v534 = vadd.f32 0.0, %v533
        %535 = vmatmul.bf16.gmra.mxu0 %v471
        %v536 = vpop.f32.mrf.mxu0
        %v537 = vadd.f32 0.0, %v536
        %v538 = vpop.f32.mrf.mxu0
        %v539 = vadd.f32 0.0, %v538
        %540 = vdwg.mxu0
        %v541 = vadd.f32 %v434, %v532
        %v542 = vadd.f32 %v435, %v534
        %v543 = vadd.f32 %v436, %v537
        %v544 = vadd.f32 %v437, %v539
        %v545 = vld [vmem:[%s334] sm:$0xf]
        %v546 = vld [vmem:[%s334 + $0x4] sm:$0x1]
        %v547 = vld [vmem:[%s334 + $0x8] sm:$0xf]
        %v548 = vld [vmem:[%s334 + $0xc] sm:$0x1]
        %v549 = vld [vmem:[%s334 + $0x10] sm:$0xf]
        %v550 = vld [vmem:[%s334 + $0x14] sm:$0x1]
        %v551 = vld [vmem:[%s334 + $0x18] sm:$0xf]
        %v552 = vld [vmem:[%s334 + $0x1c] sm:$0x1]
        %vm553 = vsmask.f32 3328
        %vm554 = vsmask.f32 7440
        %vm555 = vmor %vm553, %vm554
        %v557 = vshrl.u32 %v545, 16
        %v559 = vrot.slane %v557, 4
        %v560 = vshll.u32 %v545, 16
        %v562 = vrot.slane %v560, 5
        %v563 = vor.u32 %v559, %v562
        %v564 = vrot.slane %v563, 4
        %v566 = vshll.u32 %v546, 16
        %v568 = vrot.slane %v566, 5
        %v569 = vsel %vm555, %v564, %v568
        %v571 = vshrl.u32 %v547, 16
        %v573 = vrot.slane %v571, 4
        %v574 = vshll.u32 %v547, 16
        %v576 = vrot.slane %v574, 5
        %v577 = vor.u32 %v573, %v576
        %v578 = vrot.slane %v577, 4
        %v580 = vshll.u32 %v548, 16
        %v582 = vrot.slane %v580, 5
        %v583 = vsel %vm555, %v578, %v582
        %v585 = vshrl.u32 %v549, 16
        %v587 = vrot.slane %v585, 4
        %v588 = vshll.u32 %v549, 16
        %v590 = vrot.slane %v588, 5
        %v591 = vor.u32 %v587, %v590
        %v592 = vrot.slane %v591, 4
        %v594 = vshll.u32 %v550, 16
        %v596 = vrot.slane %v594, 5
        %v597 = vsel %vm555, %v592, %v596
        %v599 = vshrl.u32 %v551, 16
        %v601 = vrot.slane %v599, 4
        %v602 = vshll.u32 %v551, 16
        %v604 = vrot.slane %v602, 5
        %v605 = vor.u32 %v601, %v604
        %v606 = vrot.slane %v605, 4
        %v608 = vshll.u32 %v552, 16
        %v610 = vrot.slane %v608, 5
        %v611 = vsel %vm555, %v606, %v610
        %s612 = scalar_lea.vmem [#allocation3], 128
        %v613 = vld [vmem:[%s612] sm:$0xf]
        %v614 = vld [vmem:[%s612 + $0x4] sm:$0xf]
        %v615 = vld [vmem:[%s612 + $0x8] sm:$0xf]
        %v616 = vld [vmem:[%s612 + $0xc] sm:$0xf]
        %v617 = vld [vmem:[%s612 + $0x10] sm:$0xf]
        %v618 = vld [vmem:[%s612 + $0x14] sm:$0xf]
        %v619 = vld [vmem:[%s612 + $0x18] sm:$0xf]
        %v620 = vld [vmem:[%s612 + $0x1c] sm:$0xf]
        %v621 = vld [vmem:[%s612 + $0x20] sm:$0xf]
        %v622 = vld [vmem:[%s612 + $0x24] sm:$0xf]
        %v623 = vld [vmem:[%s612 + $0x28] sm:$0xf]
        %v624 = vld [vmem:[%s612 + $0x2c] sm:$0xf]
        %v625 = vld [vmem:[%s612 + $0x30] sm:$0xf]
        %v626 = vld [vmem:[%s612 + $0x34] sm:$0xf]
        %v627 = vld [vmem:[%s612 + $0x38] sm:$0xf]
        %v628 = vld [vmem:[%s612 + $0x3c] sm:$0xf]
        %v629 = vunpack.c.l.b16 %v569
        %v630 = vunpack.c.l.b16 %v583
        %v631 = vunpack.c.l.b16 %v597
        %v632 = vunpack.c.l.b16 %v611
        %v633 = vpack.c.b16 %v630, %v629
        %v634 = vpack.c.b16 %v632, %v631
        %v653 = vunpack.c.l.b16 %v613
        %v654 = vunpack.c.l.b16 %v614
        %v655 = vunpack.c.l.b16 %v615
        %v656 = vunpack.c.l.b16 %v616
        %v657 = vunpack.c.l.b16 %v617
        %v658 = vunpack.c.l.b16 %v618
        %v659 = vunpack.c.l.b16 %v619
        %v660 = vunpack.c.l.b16 %v620
        %v661 = vunpack.c.l.b16 %v621
        %v662 = vunpack.c.l.b16 %v622
        %v663 = vunpack.c.l.b16 %v623
        %v664 = vunpack.c.l.b16 %v624
        %v665 = vunpack.c.l.b16 %v625
        %v666 = vunpack.c.l.b16 %v626
        %v667 = vunpack.c.l.b16 %v627
        %v668 = vunpack.c.l.b16 %v628
        %v669 = vpack.c.b16 %v654, %v653
        %v670 = vpack.c.b16 %v656, %v655
        %v671 = vpack.c.b16 %v658, %v657
        %v672 = vpack.c.b16 %v660, %v659
        %v673 = vpack.c.b16 %v662, %v661
        %v674 = vpack.c.b16 %v664, %v663
        %v675 = vpack.c.b16 %v666, %v665
        %v676 = vpack.c.b16 %v668, %v667
        %685 = vmatpush.bf16.msra.mxu0 %v676
        %686 = vmatpush.bf16.msra.mxu0 %v675
        %687 = vmatpush.bf16.msra.mxu0 %v674
        %688 = vmatpush.bf16.msra.mxu0 %v673
        %689 = vmatpush.bf16.msra.mxu0 %v672
        %690 = vmatpush.bf16.msra.mxu0 %v671
        %691 = vmatpush.bf16.msra.mxu0 %v670
        %692 = vmatpush.bf16.msra.mxu0 %v669
        %693 = vmatmul.bf16.gmra.mxu0 %v633
        %v694 = vpop.f32.mrf.mxu0
        %v695 = vadd.f32 0.0, %v694
        %v696 = vpop.f32.mrf.mxu0
        %v697 = vadd.f32 0.0, %v696
        %698 = vmatmul.bf16.gmra.mxu0 %v634
        %v699 = vpop.f32.mrf.mxu0
        %v700 = vadd.f32 0.0, %v699
        %v701 = vpop.f32.mrf.mxu0
        %v702 = vadd.f32 0.0, %v701
        %703 = vdwg.mxu0
        %v704 = vadd.f32 %v541, %v695
        %v705 = vadd.f32 %v542, %v697
        %v706 = vadd.f32 %v543, %v700
        %v707 = vadd.f32 %v544, %v702
        %s708 = sadd.s32 %s332, 20
        %s709 = smul.addr %s708, 4
        %s710 = scalar_lea.vmem [#allocation2], %s709
        %v711 = vld [vmem:[%s710] sm:$0xf]
        %v712 = vld [vmem:[%s710 + $0x8] sm:$0xf]
        %v713 = vld [vmem:[%s710 + $0x10] sm:$0xf]
        %v714 = vld [vmem:[%s710 + $0x18] sm:$0xf]
        %s715 = scalar_lea.vmem [#allocation3], 192
        %v716 = vld [vmem:[%s715] sm:$0xf]
        %v717 = vld [vmem:[%s715 + $0x4] sm:$0xf]
        %v718 = vld [vmem:[%s715 + $0x8] sm:$0xf]
        %v719 = vld [vmem:[%s715 + $0xc] sm:$0xf]
        %v720 = vld [vmem:[%s715 + $0x10] sm:$0xf]
        %v721 = vld [vmem:[%s715 + $0x14] sm:$0xf]
        %v722 = vld [vmem:[%s715 + $0x18] sm:$0xf]
        %v723 = vld [vmem:[%s715 + $0x1c] sm:$0xf]
        %v724 = vld [vmem:[%s715 + $0x20] sm:$0xf]
        %v725 = vld [vmem:[%s715 + $0x24] sm:$0xf]
        %v726 = vld [vmem:[%s715 + $0x28] sm:$0xf]
        %v727 = vld [vmem:[%s715 + $0x2c] sm:$0xf]
        %v728 = vld [vmem:[%s715 + $0x30] sm:$0xf]
        %v729 = vld [vmem:[%s715 + $0x34] sm:$0xf]
        %v730 = vld [vmem:[%s715 + $0x38] sm:$0xf]
        %v731 = vld [vmem:[%s715 + $0x3c] sm:$0xf]
        %v736 = vunpack.c.l.b16 %v711
        %v737 = vunpack.c.l.b16 %v712
        %v738 = vunpack.c.l.b16 %v713
        %v739 = vunpack.c.l.b16 %v714
        %v740 = vpack.c.b16 %v737, %v736
        %v741 = vpack.c.b16 %v739, %v738
        %v760 = vunpack.c.l.b16 %v716
        %v761 = vunpack.c.l.b16 %v717
        %v762 = vunpack.c.l.b16 %v718
        %v763 = vunpack.c.l.b16 %v719
        %v764 = vunpack.c.l.b16 %v720
        %v765 = vunpack.c.l.b16 %v721
        %v766 = vunpack.c.l.b16 %v722
        %v767 = vunpack.c.l.b16 %v723
        %v768 = vunpack.c.l.b16 %v724
        %v769 = vunpack.c.l.b16 %v725
        %v770 = vunpack.c.l.b16 %v726
        %v771 = vunpack.c.l.b16 %v727
        %v772 = vunpack.c.l.b16 %v728
        %v773 = vunpack.c.l.b16 %v729
        %v774 = vunpack.c.l.b16 %v730
        %v775 = vunpack.c.l.b16 %v731
        %v776 = vpack.c.b16 %v761, %v760
        %v777 = vpack.c.b16 %v763, %v762
        %v778 = vpack.c.b16 %v765, %v764
        %v779 = vpack.c.b16 %v767, %v766
        %v780 = vpack.c.b16 %v769, %v768
        %v781 = vpack.c.b16 %v771, %v770
        %v782 = vpack.c.b16 %v773, %v772
        %v783 = vpack.c.b16 %v775, %v774
        %792 = vmatpush.bf16.msra.mxu0 %v783
        %793 = vmatpush.bf16.msra.mxu0 %v782
        %794 = vmatpush.bf16.msra.mxu0 %v781
        %795 = vmatpush.bf16.msra.mxu0 %v780
        %796 = vmatpush.bf16.msra.mxu0 %v779
        %797 = vmatpush.bf16.msra.mxu0 %v778
        %798 = vmatpush.bf16.msra.mxu0 %v777
        %799 = vmatpush.bf16.msra.mxu0 %v776
        %800 = vmatmul.bf16.gmra.mxu0 %v740
        %v801 = vpop.f32.mrf.mxu0
        %v802 = vadd.f32 0.0, %v801
        %v803 = vpop.f32.mrf.mxu0
        %v804 = vadd.f32 0.0, %v803
        %805 = vmatmul.bf16.gmra.mxu0 %v741
        %v806 = vpop.f32.mrf.mxu0
        %v807 = vadd.f32 0.0, %v806
        %v808 = vpop.f32.mrf.mxu0
        %v809 = vadd.f32 0.0, %v808
        %810 = vdwg.mxu0
        %v811 = vadd.f32 %v704, %v802
        %v812 = vadd.f32 %v705, %v804
        %v813 = vadd.f32 %v706, %v807
        %v814 = vadd.f32 %v707, %v809
        %s815 = sadd.s32 %s332, 30
        %s816 = smul.addr %s815, 4
        %s817 = scalar_lea.vmem [#allocation2], %s816
        %v818 = vld [vmem:[%s817] sm:$0xf]
        %v819 = vld [vmem:[%s817 + $0x8] sm:$0xf]
        %v820 = vld [vmem:[%s817 + $0x10] sm:$0xf]
        %v821 = vld [vmem:[%s817 + $0x18] sm:$0xf]
        %s822 = scalar_lea.vmem [#allocation3], 256
        %v823 = vld [vmem:[%s822] sm:$0xf]
        %v824 = vld [vmem:[%s822 + $0x4] sm:$0xf]
        %v825 = vld [vmem:[%s822 + $0x8] sm:$0xf]
        %v826 = vld [vmem:[%s822 + $0xc] sm:$0xf]
        %v827 = vld [vmem:[%s822 + $0x10] sm:$0xf]
        %v828 = vld [vmem:[%s822 + $0x14] sm:$0xf]
        %v829 = vld [vmem:[%s822 + $0x18] sm:$0xf]
        %v830 = vld [vmem:[%s822 + $0x1c] sm:$0xf]
        %v831 = vld [vmem:[%s822 + $0x20] sm:$0xf]
        %v832 = vld [vmem:[%s822 + $0x24] sm:$0xf]
        %v833 = vld [vmem:[%s822 + $0x28] sm:$0xf]
        %v834 = vld [vmem:[%s822 + $0x2c] sm:$0xf]
        %v835 = vld [vmem:[%s822 + $0x30] sm:$0xf]
        %v836 = vld [vmem:[%s822 + $0x34] sm:$0xf]
        %v837 = vld [vmem:[%s822 + $0x38] sm:$0xf]
        %v838 = vld [vmem:[%s822 + $0x3c] sm:$0xf]
        %v843 = vunpack.c.l.b16 %v818
        %v844 = vunpack.c.l.b16 %v819
        %v845 = vunpack.c.l.b16 %v820
        %v846 = vunpack.c.l.b16 %v821
        %v847 = vpack.c.b16 %v844, %v843
        %v848 = vpack.c.b16 %v846, %v845
        %v867 = vunpack.c.l.b16 %v823
        %v868 = vunpack.c.l.b16 %v824
        %v869 = vunpack.c.l.b16 %v825
        %v870 = vunpack.c.l.b16 %v826
        %v871 = vunpack.c.l.b16 %v827
        %v872 = vunpack.c.l.b16 %v828
        %v873 = vunpack.c.l.b16 %v829
        %v874 = vunpack.c.l.b16 %v830
        %v875 = vunpack.c.l.b16 %v831
        %v876 = vunpack.c.l.b16 %v832
        %v877 = vunpack.c.l.b16 %v833
        %v878 = vunpack.c.l.b16 %v834
        %v879 = vunpack.c.l.b16 %v835
        %v880 = vunpack.c.l.b16 %v836
        %v881 = vunpack.c.l.b16 %v837
        %v882 = vunpack.c.l.b16 %v838
        %v883 = vpack.c.b16 %v868, %v867
        %v884 = vpack.c.b16 %v870, %v869
        %v885 = vpack.c.b16 %v872, %v871
        %v886 = vpack.c.b16 %v874, %v873
        %v887 = vpack.c.b16 %v876, %v875
        %v888 = vpack.c.b16 %v878, %v877
        %v889 = vpack.c.b16 %v880, %v879
        %v890 = vpack.c.b16 %v882, %v881
        %899 = vmatpush.bf16.msra.mxu0 %v890
        %900 = vmatpush.bf16.msra.mxu0 %v889
        %901 = vmatpush.bf16.msra.mxu0 %v888
        %902 = vmatpush.bf16.msra.mxu0 %v887
        %903 = vmatpush.bf16.msra.mxu0 %v886
        %904 = vmatpush.bf16.msra.mxu0 %v885
        %905 = vmatpush.bf16.msra.mxu0 %v884
        %906 = vmatpush.bf16.msra.mxu0 %v883
        %907 = vmatmul.bf16.gmra.mxu0 %v847
        %v908 = vpop.f32.mrf.mxu0
        %v909 = vadd.f32 0.0, %v908
        %v910 = vpop.f32.mrf.mxu0
        %v911 = vadd.f32 0.0, %v910
        %912 = vmatmul.bf16.gmra.mxu0 %v848
        %v913 = vpop.f32.mrf.mxu0
        %v914 = vadd.f32 0.0, %v913
        %v915 = vpop.f32.mrf.mxu0
        %v916 = vadd.f32 0.0, %v915
        %917 = vdwg.mxu0
        %v918 = vadd.f32 %v811, %v909
        %v919 = vadd.f32 %v812, %v911
        %v920 = vadd.f32 %v813, %v914
        %v921 = vadd.f32 %v814, %v916
        %v922 = vld [vmem:[%s710] sm:$0xf]
        %v923 = vld [vmem:[%s710 + $0x4] sm:$0x1]
        %v924 = vld [vmem:[%s710 + $0x8] sm:$0xf]
        %v925 = vld [vmem:[%s710 + $0xc] sm:$0x1]
        %v926 = vld [vmem:[%s710 + $0x10] sm:$0xf]
        %v927 = vld [vmem:[%s710 + $0x14] sm:$0x1]
        %v928 = vld [vmem:[%s710 + $0x18] sm:$0xf]
        %v929 = vld [vmem:[%s710 + $0x1c] sm:$0x1]
        %v931 = vshrl.u32 %v922, 16
        %v933 = vrot.slane %v931, 4
        %v934 = vshll.u32 %v922, 16
        %v936 = vrot.slane %v934, 5
        %v937 = vor.u32 %v933, %v936
        %v938 = vrot.slane %v937, 4
        %v940 = vshll.u32 %v923, 16
        %v942 = vrot.slane %v940, 5
        %v943 = vsel %vm555, %v938, %v942
        %v945 = vshrl.u32 %v924, 16
        %v947 = vrot.slane %v945, 4
        %v948 = vshll.u32 %v924, 16
        %v950 = vrot.slane %v948, 5
        %v951 = vor.u32 %v947, %v950
        %v952 = vrot.slane %v951, 4
        %v954 = vshll.u32 %v925, 16
        %v956 = vrot.slane %v954, 5
        %v957 = vsel %vm555, %v952, %v956
        %v959 = vshrl.u32 %v926, 16
        %v961 = vrot.slane %v959, 4
        %v962 = vshll.u32 %v926, 16
        %v964 = vrot.slane %v962, 5
        %v965 = vor.u32 %v961, %v964
        %v966 = vrot.slane %v965, 4
        %v968 = vshll.u32 %v927, 16
        %v970 = vrot.slane %v968, 5
        %v971 = vsel %vm555, %v966, %v970
        %v973 = vshrl.u32 %v928, 16
        %v975 = vrot.slane %v973, 4
        %v976 = vshll.u32 %v928, 16
        %v978 = vrot.slane %v976, 5
        %v979 = vor.u32 %v975, %v978
        %v980 = vrot.slane %v979, 4
        %v982 = vshll.u32 %v929, 16
        %v984 = vrot.slane %v982, 5
        %v985 = vsel %vm555, %v980, %v984
        %s986 = scalar_lea.vmem [#allocation3], 320
        %v987 = vld [vmem:[%s986] sm:$0xf]
        %v988 = vld [vmem:[%s986 + $0x4] sm:$0xf]
        %v989 = vld [vmem:[%s986 + $0x8] sm:$0xf]
        %v990 = vld [vmem:[%s986 + $0xc] sm:$0xf]
        %v991 = vld [vmem:[%s986 + $0x10] sm:$0xf]
        %v992 = vld [vmem:[%s986 + $0x14] sm:$0xf]
        %v993 = vld [vmem:[%s986 + $0x18] sm:$0xf]
        %v994 = vld [vmem:[%s986 + $0x1c] sm:$0xf]
        %v995 = vld [vmem:[%s986 + $0x20] sm:$0xf]
        %v996 = vld [vmem:[%s986 + $0x24] sm:$0xf]
        %v997 = vld [vmem:[%s986 + $0x28] sm:$0xf]
        %v998 = vld [vmem:[%s986 + $0x2c] sm:$0xf]
        %v999 = vld [vmem:[%s986 + $0x30] sm:$0xf]
        %v1000 = vld [vmem:[%s986 + $0x34] sm:$0xf]
        %v1001 = vld [vmem:[%s986 + $0x38] sm:$0xf]
        %v1002 = vld [vmem:[%s986 + $0x3c] sm:$0xf]
        %v1003 = vunpack.c.l.b16 %v943
        %v1004 = vunpack.c.l.b16 %v957
        %v1005 = vunpack.c.l.b16 %v971
        %v1006 = vunpack.c.l.b16 %v985
        %v1007 = vpack.c.b16 %v1004, %v1003
        %v1008 = vpack.c.b16 %v1006, %v1005
        %v1027 = vunpack.c.l.b16 %v987
        %v1028 = vunpack.c.l.b16 %v988
        %v1029 = vunpack.c.l.b16 %v989
        %v1030 = vunpack.c.l.b16 %v990
        %v1031 = vunpack.c.l.b16 %v991
        %v1032 = vunpack.c.l.b16 %v992
        %v1033 = vunpack.c.l.b16 %v993
        %v1034 = vunpack.c.l.b16 %v994
        %v1035 = vunpack.c.l.b16 %v995
        %v1036 = vunpack.c.l.b16 %v996
        %v1037 = vunpack.c.l.b16 %v997
        %v1038 = vunpack.c.l.b16 %v998
        %v1039 = vunpack.c.l.b16 %v999
        %v1040 = vunpack.c.l.b16 %v1000
        %v1041 = vunpack.c.l.b16 %v1001
        %v1042 = vunpack.c.l.b16 %v1002
        %v1043 = vpack.c.b16 %v1028, %v1027
        %v1044 = vpack.c.b16 %v1030, %v1029
        %v1045 = vpack.c.b16 %v1032, %v1031
        %v1046 = vpack.c.b16 %v1034, %v1033
        %v1047 = vpack.c.b16 %v1036, %v1035
        %v1048 = vpack.c.b16 %v1038, %v1037
        %v1049 = vpack.c.b16 %v1040, %v1039
        %v1050 = vpack.c.b16 %v1042, %v1041
        %1059 = vmatpush.bf16.msra.mxu0 %v1050
        %1060 = vmatpush.bf16.msra.mxu0 %v1049
        %1061 = vmatpush.bf16.msra.mxu0 %v1048
        %1062 = vmatpush.bf16.msra.mxu0 %v1047
        %1063 = vmatpush.bf16.msra.mxu0 %v1046
        %1064 = vmatpush.bf16.msra.mxu0 %v1045
        %1065 = vmatpush.bf16.msra.mxu0 %v1044
        %1066 = vmatpush.bf16.msra.mxu0 %v1043
        %1067 = vmatmul.bf16.gmra.mxu0 %v1007
        %v1068 = vpop.f32.mrf.mxu0
        %v1069 = vadd.f32 0.0, %v1068
        %v1070 = vpop.f32.mrf.mxu0
        %v1071 = vadd.f32 0.0, %v1070
        %1072 = vmatmul.bf16.gmra.mxu0 %v1008
        %v1073 = vpop.f32.mrf.mxu0
        %v1074 = vadd.f32 0.0, %v1073
        %v1075 = vpop.f32.mrf.mxu0
        %v1076 = vadd.f32 0.0, %v1075
        %1077 = vdwg.mxu0
        %v1078 = vadd.f32 %v918, %v1069
        %v1079 = vadd.f32 %v919, %v1071
        %v1080 = vadd.f32 %v920, %v1074
        %v1081 = vadd.f32 %v921, %v1076
        %s1082 = sadd.s32 %s327, 1
        %s1083 = smul.u32 %s1082, 2
        %s1084 = smul.addr %s1083, 4
        %s1085 = scalar_lea.vmem [#allocation2], %s1084
        %v1086 = vld [vmem:[%s1085] sm:$0xf]
        %v1087 = vld [vmem:[%s1085 + $0x8] sm:$0xf]
        %v1088 = vld [vmem:[%s1085 + $0x10] sm:$0xf]
        %v1089 = vld [vmem:[%s1085 + $0x18] sm:$0xf]
        %s1090 = scalar_lea.vmem [#allocation3], 384
        %v1091 = vld [vmem:[%s1090] sm:$0xf]
        %v1092 = vld [vmem:[%s1090 + $0x4] sm:$0xf]
        %v1093 = vld [vmem:[%s1090 + $0x8] sm:$0xf]
        %v1094 = vld [vmem:[%s1090 + $0xc] sm:$0xf]
        %v1095 = vld [vmem:[%s1090 + $0x10] sm:$0xf]
        %v1096 = vld [vmem:[%s1090 + $0x14] sm:$0xf]
        %v1097 = vld [vmem:[%s1090 + $0x18] sm:$0xf]
        %v1098 = vld [vmem:[%s1090 + $0x1c] sm:$0xf]
        %v1099 = vld [vmem:[%s1090 + $0x20] sm:$0xf]
        %v1100 = vld [vmem:[%s1090 + $0x24] sm:$0xf]
        %v1101 = vld [vmem:[%s1090 + $0x28] sm:$0xf]
        %v1102 = vld [vmem:[%s1090 + $0x2c] sm:$0xf]
        %v1103 = vld [vmem:[%s1090 + $0x30] sm:$0xf]
        %v1104 = vld [vmem:[%s1090 + $0x34] sm:$0xf]
        %v1105 = vld [vmem:[%s1090 + $0x38] sm:$0xf]
        %v1106 = vld [vmem:[%s1090 + $0x3c] sm:$0xf]
        %v1111 = vunpack.c.l.b16 %v1086
        %v1112 = vunpack.c.l.b16 %v1087
        %v1113 = vunpack.c.l.b16 %v1088
        %v1114 = vunpack.c.l.b16 %v1089
        %v1115 = vpack.c.b16 %v1112, %v1111
        %v1116 = vpack.c.b16 %v1114, %v1113
        %v1135 = vunpack.c.l.b16 %v1091
        %v1136 = vunpack.c.l.b16 %v1092
        %v1137 = vunpack.c.l.b16 %v1093
        %v1138 = vunpack.c.l.b16 %v1094
        %v1139 = vunpack.c.l.b16 %v1095
        %v1140 = vunpack.c.l.b16 %v1096
        %v1141 = vunpack.c.l.b16 %v1097
        %v1142 = vunpack.c.l.b16 %v1098
        %v1143 = vunpack.c.l.b16 %v1099
        %v1144 = vunpack.c.l.b16 %v1100
        %v1145 = vunpack.c.l.b16 %v1101
        %v1146 = vunpack.c.l.b16 %v1102
        %v1147 = vunpack.c.l.b16 %v1103
        %v1148 = vunpack.c.l.b16 %v1104
        %v1149 = vunpack.c.l.b16 %v1105
        %v1150 = vunpack.c.l.b16 %v1106
        %v1151 = vpack.c.b16 %v1136, %v1135
        %v1152 = vpack.c.b16 %v1138, %v1137
        %v1153 = vpack.c.b16 %v1140, %v1139
        %v1154 = vpack.c.b16 %v1142, %v1141
        %v1155 = vpack.c.b16 %v1144, %v1143
        %v1156 = vpack.c.b16 %v1146, %v1145
        %v1157 = vpack.c.b16 %v1148, %v1147
        %v1158 = vpack.c.b16 %v1150, %v1149
        %1167 = vmatpush.bf16.msra.mxu0 %v1158
        %1168 = vmatpush.bf16.msra.mxu0 %v1157
        %1169 = vmatpush.bf16.msra.mxu0 %v1156
        %1170 = vmatpush.bf16.msra.mxu0 %v1155
        %1171 = vmatpush.bf16.msra.mxu0 %v1154
        %1172 = vmatpush.bf16.msra.mxu0 %v1153
        %1173 = vmatpush.bf16.msra.mxu0 %v1152
        %1174 = vmatpush.bf16.msra.mxu0 %v1151
        %1175 = vmatmul.bf16.gmra.mxu0 %v1115
        %v1176 = vpop.f32.mrf.mxu0
        %v1177 = vadd.f32 0.0, %v1176
        %v1178 = vpop.f32.mrf.mxu0
        %v1179 = vadd.f32 0.0, %v1178
        %1180 = vmatmul.bf16.gmra.mxu0 %v1116
        %v1181 = vpop.f32.mrf.mxu0
        %v1182 = vadd.f32 0.0, %v1181
        %v1183 = vpop.f32.mrf.mxu0
        %v1184 = vadd.f32 0.0, %v1183
        %1185 = vdwg.mxu0
        %v1186 = vadd.f32 %v1078, %v1177
        %v1187 = vadd.f32 %v1079, %v1179
        %v1188 = vadd.f32 %v1080, %v1182
        %v1189 = vadd.f32 %v1081, %v1184
        %s1190 = sadd.s32 %s1083, 10
        %s1191 = smul.addr %s1190, 4
        %s1192 = scalar_lea.vmem [#allocation2], %s1191
        %v1193 = vld [vmem:[%s1192] sm:$0xf]
        %v1194 = vld [vmem:[%s1192 + $0x8] sm:$0xf]
        %v1195 = vld [vmem:[%s1192 + $0x10] sm:$0xf]
        %v1196 = vld [vmem:[%s1192 + $0x18] sm:$0xf]
        %s1197 = scalar_lea.vmem [#allocation3], 448
        %v1198 = vld [vmem:[%s1197] sm:$0xf]
        %v1199 = vld [vmem:[%s1197 + $0x4] sm:$0xf]
        %v1200 = vld [vmem:[%s1197 + $0x8] sm:$0xf]
        %v1201 = vld [vmem:[%s1197 + $0xc] sm:$0xf]
        %v1202 = vld [vmem:[%s1197 + $0x10] sm:$0xf]
        %v1203 = vld [vmem:[%s1197 + $0x14] sm:$0xf]
        %v1204 = vld [vmem:[%s1197 + $0x18] sm:$0xf]
        %v1205 = vld [vmem:[%s1197 + $0x1c] sm:$0xf]
        %v1206 = vld [vmem:[%s1197 + $0x20] sm:$0xf]
        %v1207 = vld [vmem:[%s1197 + $0x24] sm:$0xf]
        %v1208 = vld [vmem:[%s1197 + $0x28] sm:$0xf]
        %v1209 = vld [vmem:[%s1197 + $0x2c] sm:$0xf]
        %v1210 = vld [vmem:[%s1197 + $0x30] sm:$0xf]
        %v1211 = vld [vmem:[%s1197 + $0x34] sm:$0xf]
        %v1212 = vld [vmem:[%s1197 + $0x38] sm:$0xf]
        %v1213 = vld [vmem:[%s1197 + $0x3c] sm:$0xf]
        %v1218 = vunpack.c.l.b16 %v1193
        %v1219 = vunpack.c.l.b16 %v1194
        %v1220 = vunpack.c.l.b16 %v1195
        %v1221 = vunpack.c.l.b16 %v1196
        %v1222 = vpack.c.b16 %v1219, %v1218
        %v1223 = vpack.c.b16 %v1221, %v1220
        %v1242 = vunpack.c.l.b16 %v1198
        %v1243 = vunpack.c.l.b16 %v1199
        %v1244 = vunpack.c.l.b16 %v1200
        %v1245 = vunpack.c.l.b16 %v1201
        %v1246 = vunpack.c.l.b16 %v1202
        %v1247 = vunpack.c.l.b16 %v1203
        %v1248 = vunpack.c.l.b16 %v1204
        %v1249 = vunpack.c.l.b16 %v1205
        %v1250 = vunpack.c.l.b16 %v1206
        %v1251 = vunpack.c.l.b16 %v1207
        %v1252 = vunpack.c.l.b16 %v1208
        %v1253 = vunpack.c.l.b16 %v1209
        %v1254 = vunpack.c.l.b16 %v1210
        %v1255 = vunpack.c.l.b16 %v1211
        %v1256 = vunpack.c.l.b16 %v1212
        %v1257 = vunpack.c.l.b16 %v1213
        %v1258 = vpack.c.b16 %v1243, %v1242
        %v1259 = vpack.c.b16 %v1245, %v1244
        %v1260 = vpack.c.b16 %v1247, %v1246
        %v1261 = vpack.c.b16 %v1249, %v1248
        %v1262 = vpack.c.b16 %v1251, %v1250
        %v1263 = vpack.c.b16 %v1253, %v1252
        %v1264 = vpack.c.b16 %v1255, %v1254
        %v1265 = vpack.c.b16 %v1257, %v1256
        %1274 = vmatpush.bf16.msra.mxu0 %v1265
        %1275 = vmatpush.bf16.msra.mxu0 %v1264
        %1276 = vmatpush.bf16.msra.mxu0 %v1263
        %1277 = vmatpush.bf16.msra.mxu0 %v1262
        %1278 = vmatpush.bf16.msra.mxu0 %v1261
        %1279 = vmatpush.bf16.msra.mxu0 %v1260
        %1280 = vmatpush.bf16.msra.mxu0 %v1259
        %1281 = vmatpush.bf16.msra.mxu0 %v1258
        %1282 = vmatmul.bf16.gmra.mxu0 %v1222
        %v1283 = vpop.f32.mrf.mxu0
        %v1284 = vadd.f32 0.0, %v1283
        %v1285 = vpop.f32.mrf.mxu0
        %v1286 = vadd.f32 0.0, %v1285
        %1287 = vmatmul.bf16.gmra.mxu0 %v1223
        %v1288 = vpop.f32.mrf.mxu0
        %v1289 = vadd.f32 0.0, %v1288
        %v1290 = vpop.f32.mrf.mxu0
        %v1291 = vadd.f32 0.0, %v1290
        %1292 = vdwg.mxu0
        %v1293 = vadd.f32 %v1186, %v1284
        %v1294 = vadd.f32 %v1187, %v1286
        %v1295 = vadd.f32 %v1188, %v1289
        %v1296 = vadd.f32 %v1189, %v1291
        %v1297 = vld [vmem:[%s1085] sm:$0xf]
        %v1298 = vld [vmem:[%s1085 + $0x4] sm:$0x1]
        %v1299 = vld [vmem:[%s1085 + $0x8] sm:$0xf]
        %v1300 = vld [vmem:[%s1085 + $0xc] sm:$0x1]
        %v1301 = vld [vmem:[%s1085 + $0x10] sm:$0xf]
        %v1302 = vld [vmem:[%s1085 + $0x14] sm:$0x1]
        %v1303 = vld [vmem:[%s1085 + $0x18] sm:$0xf]
        %v1304 = vld [vmem:[%s1085 + $0x1c] sm:$0x1]
        %v1306 = vshrl.u32 %v1297, 16
        %v1308 = vrot.slane %v1306, 4
        %v1309 = vshll.u32 %v1297, 16
        %v1311 = vrot.slane %v1309, 5
        %v1312 = vor.u32 %v1308, %v1311
        %v1313 = vrot.slane %v1312, 4
        %v1315 = vshll.u32 %v1298, 16
        %v1317 = vrot.slane %v1315, 5
        %v1318 = vsel %vm555, %v1313, %v1317
        %v1320 = vshrl.u32 %v1299, 16
        %v1322 = vrot.slane %v1320, 4
        %v1323 = vshll.u32 %v1299, 16
        %v1325 = vrot.slane %v1323, 5
        %v1326 = vor.u32 %v1322, %v1325
        %v1327 = vrot.slane %v1326, 4
        %v1329 = vshll.u32 %v1300, 16
        %v1331 = vrot.slane %v1329, 5
        %v1332 = vsel %vm555, %v1327, %v1331
        %v1334 = vshrl.u32 %v1301, 16
        %v1336 = vrot.slane %v1334, 4
        %v1337 = vshll.u32 %v1301, 16
        %v1339 = vrot.slane %v1337, 5
        %v1340 = vor.u32 %v1336, %v1339
        %v1341 = vrot.slane %v1340, 4
        %v1343 = vshll.u32 %v1302, 16
        %v1345 = vrot.slane %v1343, 5
        %v1346 = vsel %vm555, %v1341, %v1345
        %v1348 = vshrl.u32 %v1303, 16
        %v1350 = vrot.slane %v1348, 4
        %v1351 = vshll.u32 %v1303, 16
        %v1353 = vrot.slane %v1351, 5
        %v1354 = vor.u32 %v1350, %v1353
        %v1355 = vrot.slane %v1354, 4
        %v1357 = vshll.u32 %v1304, 16
        %v1359 = vrot.slane %v1357, 5
        %v1360 = vsel %vm555, %v1355, %v1359
        %s1361 = scalar_lea.vmem [#allocation3], 512
        %v1362 = vld [vmem:[%s1361] sm:$0xf]
        %v1363 = vld [vmem:[%s1361 + $0x4] sm:$0xf]
        %v1364 = vld [vmem:[%s1361 + $0x8] sm:$0xf]
        %v1365 = vld [vmem:[%s1361 + $0xc] sm:$0xf]
        %v1366 = vld [vmem:[%s1361 + $0x10] sm:$0xf]
        %v1367 = vld [vmem:[%s1361 + $0x14] sm:$0xf]
        %v1368 = vld [vmem:[%s1361 + $0x18] sm:$0xf]
        %v1369 = vld [vmem:[%s1361 + $0x1c] sm:$0xf]
        %v1370 = vld [vmem:[%s1361 + $0x20] sm:$0xf]
        %v1371 = vld [vmem:[%s1361 + $0x24] sm:$0xf]
        %v1372 = vld [vmem:[%s1361 + $0x28] sm:$0xf]
        %v1373 = vld [vmem:[%s1361 + $0x2c] sm:$0xf]
        %v1374 = vld [vmem:[%s1361 + $0x30] sm:$0xf]
        %v1375 = vld [vmem:[%s1361 + $0x34] sm:$0xf]
        %v1376 = vld [vmem:[%s1361 + $0x38] sm:$0xf]
        %v1377 = vld [vmem:[%s1361 + $0x3c] sm:$0xf]
        %v1378 = vunpack.c.l.b16 %v1318
        %v1379 = vunpack.c.l.b16 %v1332
        %v1380 = vunpack.c.l.b16 %v1346
        %v1381 = vunpack.c.l.b16 %v1360
        %v1382 = vpack.c.b16 %v1379, %v1378
        %v1383 = vpack.c.b16 %v1381, %v1380
        %v1402 = vunpack.c.l.b16 %v1362
        %v1403 = vunpack.c.l.b16 %v1363
        %v1404 = vunpack.c.l.b16 %v1364
        %v1405 = vunpack.c.l.b16 %v1365
        %v1406 = vunpack.c.l.b16 %v1366
        %v1407 = vunpack.c.l.b16 %v1367
        %v1408 = vunpack.c.l.b16 %v1368
        %v1409 = vunpack.c.l.b16 %v1369
        %v1410 = vunpack.c.l.b16 %v1370
        %v1411 = vunpack.c.l.b16 %v1371
        %v1412 = vunpack.c.l.b16 %v1372
        %v1413 = vunpack.c.l.b16 %v1373
        %v1414 = vunpack.c.l.b16 %v1374
        %v1415 = vunpack.c.l.b16 %v1375
        %v1416 = vunpack.c.l.b16 %v1376
        %v1417 = vunpack.c.l.b16 %v1377
        %v1418 = vpack.c.b16 %v1403, %v1402
        %v1419 = vpack.c.b16 %v1405, %v1404
        %v1420 = vpack.c.b16 %v1407, %v1406
        %v1421 = vpack.c.b16 %v1409, %v1408
        %v1422 = vpack.c.b16 %v1411, %v1410
        %v1423 = vpack.c.b16 %v1413, %v1412
        %v1424 = vpack.c.b16 %v1415, %v1414
        %v1425 = vpack.c.b16 %v1417, %v1416
        %1434 = vmatpush.bf16.msra.mxu0 %v1425
        %1435 = vmatpush.bf16.msra.mxu0 %v1424
        %1436 = vmatpush.bf16.msra.mxu0 %v1423
        %1437 = vmatpush.bf16.msra.mxu0 %v1422
        %1438 = vmatpush.bf16.msra.mxu0 %v1421
        %1439 = vmatpush.bf16.msra.mxu0 %v1420
        %1440 = vmatpush.bf16.msra.mxu0 %v1419
        %1441 = vmatpush.bf16.msra.mxu0 %v1418
        %1442 = vmatmul.bf16.gmra.mxu0 %v1382
        %v1443 = vpop.f32.mrf.mxu0
        %v1444 = vadd.f32 0.0, %v1443
        %v1445 = vpop.f32.mrf.mxu0
        %v1446 = vadd.f32 0.0, %v1445
        %1447 = vmatmul.bf16.gmra.mxu0 %v1383
        %v1448 = vpop.f32.mrf.mxu0
        %v1449 = vadd.f32 0.0, %v1448
        %v1450 = vpop.f32.mrf.mxu0
        %v1451 = vadd.f32 0.0, %v1450
        %1452 = vdwg.mxu0
        %v1453 = vadd.f32 %v1293, %v1444
        %v1454 = vadd.f32 %v1294, %v1446
        %v1455 = vadd.f32 %v1295, %v1449
        %v1456 = vadd.f32 %v1296, %v1451
        %v1457 = vmul.f32 %v1453, 0.5
        %v1458 = vmul.f32 %v1454, 0.5
        %v1459 = vmul.f32 %v1455, 0.5
        %v1460 = vmul.f32 %v1456, 0.5
        %v1461 = vtanh.pop %v1457
        %v1462 = vtanh.pop %v1458
        %v1463 = vtanh.pop %v1459
        %v1464 = vtanh.pop %v1460
        %v1465 = vadd.f32 %v1461, 1.0
        %v1466 = vadd.f32 %v1462, 1.0
        %v1467 = vadd.f32 %v1463, 1.0
        %v1468 = vadd.f32 %v1464, 1.0
        %v1469 = vmul.f32 %v1465, 0.5
        %v1470 = vmul.f32 %v1466, 0.5
        %v1471 = vmul.f32 %v1467, 0.5
        %v1472 = vmul.f32 %v1468, 0.5
        %v1473 = vmul.f32 %v1453, %v1469
        %v1474 = vmul.f32 %v1454, %v1470
        %v1475 = vmul.f32 %v1455, %v1471
        %v1476 = vmul.f32 %v1456, %v1472
        %v1477 = vpack.c.bf16 %v1473, %v1473
        %v1478 = vpack.c.bf16 %v1474, %v1474
        %v1479 = vpack.c.bf16 %v1475, %v1475
        %v1480 = vpack.c.bf16 %v1476, %v1476
        %1481 = vst [vmem:[%s209] sm:$0x3] %v1477
        %1482 = vst [vmem:[%s209 + $0x2] sm:$0x3] %v1478
        %1483 = vst [vmem:[%s209 + $0x4] sm:$0x3] %v1479
        %1484 = vst [vmem:[%s209 + $0x6] sm:$0x3] %v1480
        %s1485 = smul.u32 4, %s20
        %p1486 = scmp.lt.s32.totalorder %s19, 1
        %s1487 = scalar_select %p1486, %s19, 1
        %p1488 = scmp.lt.s32.totalorder %s1485, 3
        %s1489 = scalar_select %p1488, %s1485, 3
        %s1490 = smul.addr %s1487, 4
        %s1491 = sadd.s32 %s1489, %s1490
        %s1492 = smul.addr %s1491, 2
        %s1493 = scalar_lea.vmem %s3, %s1492
        // Predicated region
        $region37: #{timm_model_forward.6} parent=31 // pred_check
          %p1494 = pneg %p115
        $region38: #{timm_model_forward.6} parent=31 // pred_check_branch
          %1496 = sbr.rel (%p1494) target = $region40
        $region39: #{timm_model_forward.6} parent=31 // pred_region
          %s1497 = smul.u32 4, %s20
        $region40: #{timm_model_forward.6} parent=31 // pred_fallthru
          _
      $region32: #{timm_model_forward.6} parent=5 // pred_fallthru
        _
      %p1498 = scmp.le.s32.totalorder 2, %s10
      // Predicated region
      $region41: #{timm_model_forward.6} parent=5 // pred_check
        %p1499 = pneg %p1498
      $region42: #{timm_model_forward.6} parent=5 // pred_check_branch
        %1501 = sbr.rel (%p1499) target = $region44
      $region43: #{timm_model_forward.6} parent=5 // pred_region
        %s1502 = ssub.s32 %s10, 2
        // Predicated region
        $region45: #{timm_model_forward.6} parent=43 // pred_check
          %p1503 = pneg %p121
        $region46: #{timm_model_forward.6} parent=43 // pred_check_branch
          %1505 = sbr.rel (%p1503) target = $region48
        $region47: #{timm_model_forward.6} parent=43 // pred_region
          %s1506 = smul.u32 4, %s22
          %p1507 = scmp.lt.s32.totalorder %s21, 1
          %s1508 = scalar_select %p1507, %s21, 1
          %p1509 = scmp.lt.s32.totalorder %s1506, 3
          %s1510 = scalar_select %p1509, %s1506, 3
          %s1511 = smul.addr %s1508, 4
          %s1512 = sadd.s32 %s1510, %s1511
          %s1513 = smul.addr %s1512, 2
          %s1514 = scalar_lea.vmem %s3, %s1513
        $region48: #{timm_model_forward.6} parent=43 // pred_fallthru
          _
      $region44: #{timm_model_forward.6} parent=5 // pred_fallthru
        _
    $region6: #{timm_model_forward.6} parent=1 // loop_footer
      %s14 = sadd.s32 1, %s10
    $region7: #{timm_model_forward.6} parent=1 // loop_footer_branch
      %9 = sbr.rel target = $region3
    $region8: #{timm_model_forward.6} parent=1 // loop_exit
      _
    %1515 = vsyncpa [#allocation4], 1
    %s1516 = scalar_lea.sflag [#allocation4], 1
    %1517 = vsyncpa %s1516, 1

// kernel: timm_model_forward.5
$region0: #{timm_model_forward.5}
  #allocation0 [shape = 'u32[]', space=smem, size = 0x4, offset = 0x4, fixed_abs, tag = 'smem constant byte address 0x4 - core index']
  #allocation1 [shape = 'u32[72,128]{1,0:T(1,128)}', space=vmem, size = 0x9000, scoped, tag = 'internal scratch']
  #allocation2 [shape = 'bf16[1,10,10,128]{3,2,1,0:T(8,128)(2,1)}', space=vmem, size = 0xa000, scoped, tag = 'scratch operand']
  %s0 = inlined_call_operand.vmem [shape: bf16[2,8,8,128], index: 0, kind: input, shape index: {}]
  %s1 = inlined_call_operand.vmem [shape: bf16[9,128,128], index: 1, kind: input, shape index: {}]
  %s2 = inlined_call_operand.vmem [shape: f32[1,128], index: 2, kind: input, shape index: {}]
  %s3 = inlined_call_operand.vmem [shape: bf16[2,8,8,128], index: 3, kind: output, shape index: {}]
  %s4 = sld [smem:[#allocation0]]
  $region45: #{timm_model_forward.5} parent=0
    _
  %s6 = ssub.s32 1, %s4
  %s7 = scalar_select 0, %s6, %s4
  loop: start=0, step=1, limit=4
  $region2: #{timm_model_forward.5} parent=0 // loop_pre_header
    _
  $region3: #{timm_model_forward.5} parent=0 // loop_header
    %s9 = sphi 0, %s13
    %p10 = scmp.ge.s32.totalorder %s9, 4
    %s16 = sphi 0, %s28
    %s17 = sphi 0, %s24
    %s18 = sphi 0, %s16
    %s19 = sphi 0, %s17
    %s20 = sphi 0, %s18
    %s21 = sphi 0, %s19
    %s31 = sphi 0, %s33
    %s34 = sphi 0, %s31
    %s35 = sphi 0, %s34
    %s51 = sphi 0, %s35
    %s55 = sphi 0, %s55
    %s57 = sphi 0, %s55
    %s58 = sphi 0, %s57
    %s72 = sphi 0, %s58
    %s76 = sphi 0, %s76
    %s78 = sphi 0, %s76
    %s79 = sphi 0, %s78
    %s93 = sphi 0, %s79
    %s101 = sphi 0, %s103
    %s104 = sphi 0, %s101
    %s105 = sphi 0, %s104
    %s121 = sphi 0, %s105
  $region4: #{timm_model_forward.5} parent=0 // loop_header_branch
    %12 = sbr.rel (%p10) target = $region8
  $region5: #{timm_model_forward.5} parent=0 // loop_body
    %s14 = ssub.s32 %s9, 1
    %s15 = ssub.s32 %s9, 2
    %s22 = sadd.s32 1, %s17
    %p23 = scmp.ge.s32.totalorder %s22, 1
    %s24 = scalar_select %p23, 0, %s22
    %s25 = sadd.s32 1, %s16
    %s26 = scalar_select %p23, %s25, %s16
    %p27 = scmp.ge.s32.totalorder %s26, 2
    %s28 = scalar_select %p27, 0, %s26
    %s29 = ssub.s32 %s16, %s28
    %p30 = scmp.eq.s32.totalorder %s29, 0
    %s32 = sadd.s32 %s31, 1
    %s33 = scalar_select %p30, %s31, %s32
    %p36 = pneg %p30
    %p37 = scmp.eq.s32.totalorder %s9, 1
    %p38 = por %p36, %p37
    %p39 = scmp.ne.s32.totalorder %s31, %s34
    %p40 = scmp.eq.s32.totalorder %s9, 0
    %p41 = por %p39, %p40
    %p42 = scmp.ne.s32.totalorder %s31, %s34
    %p43 = scmp.eq.s32.totalorder %s14, 1
    %p44 = por %p42, %p43
    %p45 = scmp.ne.s32.totalorder %s34, %s35
    %p46 = scmp.eq.s32.totalorder %s14, 0
    %p47 = por %p45, %p46
    %p48 = scmp.ne.s32.totalorder %s34, %s35
    %p49 = scmp.eq.s32.totalorder %s15, 1
    %p50 = por %p48, %p49
    %p52 = scmp.ne.s32.totalorder %s35, %s51
    %p53 = scmp.eq.s32.totalorder %s15, 0
    %p54 = por %p52, %p53
    %s56 = sadd.s32 %s55, 1
    %p59 = scmp.eq.s32.totalorder %s9, 1
    %p60 = scmp.ne.s32.totalorder %s55, %s57
    %p61 = scmp.eq.s32.totalorder %s9, 0
    %p62 = por %p60, %p61
    %p63 = scmp.ne.s32.totalorder %s55, %s57
    %p64 = scmp.eq.s32.totalorder %s14, 1
    %p65 = por %p63, %p64
    %p66 = scmp.ne.s32.totalorder %s57, %s58
    %p67 = scmp.eq.s32.totalorder %s14, 0
    %p68 = por %p66, %p67
    %p69 = scmp.ne.s32.totalorder %s57, %s58
    %p70 = scmp.eq.s32.totalorder %s15, 1
    %p71 = por %p69, %p70
    %p73 = scmp.ne.s32.totalorder %s58, %s72
    %p74 = scmp.eq.s32.totalorder %s15, 0
    %p75 = por %p73, %p74
    %s77 = sadd.s32 %s76, 1
    %p80 = scmp.eq.s32.totalorder %s9, 1
    %p81 = scmp.ne.s32.totalorder %s76, %s78
    %p82 = scmp.eq.s32.totalorder %s9, 0
    %p83 = por %p81, %p82
    %p84 = scmp.ne.s32.totalorder %s76, %s78
    %p85 = scmp.eq.s32.totalorder %s14, 1
    %p86 = por %p84, %p85
    %p87 = scmp.ne.s32.totalorder %s78, %s79
    %p88 = scmp.eq.s32.totalorder %s14, 0
    %p89 = por %p87, %p88
    %p90 = scmp.ne.s32.totalorder %s78, %s79
    %p91 = scmp.eq.s32.totalorder %s15, 1
    %p92 = por %p90, %p91
    %p94 = scmp.ne.s32.totalorder %s79, %s93
    %p95 = scmp.eq.s32.totalorder %s15, 0
    %p96 = por %p94, %p95
    %s97 = ssub.s32 %s16, %s28
    %s98 = ssub.s32 %s17, %s24
    %s99 = sor.u32 %s97, %s98
    %p100 = scmp.eq.s32.totalorder %s99, 0
    %s102 = sadd.s32 %s101, 1
    %s103 = scalar_select %p100, %s101, %s102
    %p106 = pneg %p100
    %p107 = scmp.eq.s32.totalorder %s9, 1
    %p108 = por %p106, %p107
    %p109 = scmp.ne.s32.totalorder %s101, %s104
    %p110 = scmp.eq.s32.totalorder %s9, 0
    %p111 = por %p109, %p110
    %p112 = scmp.ne.s32.totalorder %s101, %s104
    %p113 = scmp.eq.s32.totalorder %s14, 1
    %p114 = por %p112, %p113
    %p115 = scmp.ne.s32.totalorder %s104, %s105
    %p116 = scmp.eq.s32.totalorder %s14, 0
    %p117 = por %p115, %p116
    %p118 = scmp.ne.s32.totalorder %s104, %s105
    %p119 = scmp.eq.s32.totalorder %s15, 1
    %p120 = por %p118, %p119
    %p122 = scmp.ne.s32.totalorder %s105, %s121
    %p123 = scmp.eq.s32.totalorder %s15, 0
    %p124 = por %p122, %p123
    %p125 = scmp.le.s32.totalorder 1, %s9
    %p126 = scmp.lt.s32.totalorder %s9, 3
    %p127 = pnand %p125, %p126
    %p128 = pneg %p127
    // Predicated region
    $region9: #{timm_model_forward.5} parent=5 // pred_check
      _
    $region10: #{timm_model_forward.5} parent=5 // pred_check_branch
      %130 = sbr.rel (%p127) target = $region12
    $region11: #{timm_model_forward.5} parent=5 // pred_region
      %s131 = ssub.s32 %s9, 1
      // Predicated region
      $region13: #{timm_model_forward.5} parent=11 // pred_check
        %p132 = pneg %p68
      $region14: #{timm_model_forward.5} parent=11 // pred_check_branch
        %134 = sbr.rel (%p132) target = $region16
      $region15: #{timm_model_forward.5} parent=11 // pred_region
        _
      $region16: #{timm_model_forward.5} parent=11 // pred_fallthru
        _
      // Predicated region
      $region17: #{timm_model_forward.5} parent=11 // pred_check
        %p135 = pneg %p89
      $region18: #{timm_model_forward.5} parent=11 // pred_check_branch
        %137 = sbr.rel (%p135) target = $region20
      $region19: #{timm_model_forward.5} parent=11 // pred_region
        _
      $region20: #{timm_model_forward.5} parent=11 // pred_fallthru
        _
    $region12: #{timm_model_forward.5} parent=5 // pred_fallthru
      _
    %p138 = scmp.lt.s32.totalorder %s9, 2
    // Predicated region
    $region21: #{timm_model_forward.5} parent=5 // pred_check
      %p139 = pneg %p138
    $region22: #{timm_model_forward.5} parent=5 // pred_check_branch
      %141 = sbr.rel (%p139) target = $region24
    $region23: #{timm_model_forward.5} parent=5 // pred_region
      // Predicated region
      $region25: #{timm_model_forward.5} parent=23 // pred_check
        %p142 = pneg %p41
      $region26: #{timm_model_forward.5} parent=23 // pred_check_branch
        %144 = sbr.rel (%p142) target = $region28
      $region27: #{timm_model_forward.5} parent=23 // pred_region
        %p145 = scmp.lt.s32.totalorder %s16, 1
        %s146 = scalar_select %p145, %s16, 1
        %s147 = smul.addr %s146, 8
        %s148 = smul.addr %s147, 4
        %s149 = scalar_lea.vmem %s0, %s148
      $region28: #{timm_model_forward.5} parent=23 // pred_fallthru
        _
    $region24: #{timm_model_forward.5} parent=5 // pred_fallthru
      _
    %p150 = scmp.le.s32.totalorder 1, %s9
    %p151 = scmp.lt.s32.totalorder %s9, 3
    %p152 = pnand %p150, %p151
    %p153 = pneg %p152
    // Predicated region
    $region29: #{timm_model_forward.5} parent=5 // pred_check
      _
    $region30: #{timm_model_forward.5} parent=5 // pred_check_branch
      %155 = sbr.rel (%p152) target = $region32
    $region31: #{timm_model_forward.5} parent=5 // pred_region
      %s156 = ssub.s32 %s9, 1
      %p157 = scmp.lt.s32.totalorder %s18, 1
      %s158 = scalar_select %p157, %s18, 1
      %s159 = smul.addr %s158, 8
      %s160 = smul.addr %s159, 4
      %s161 = scalar_lea.vmem %s0, %s160
      %p162 = pneg %p47
      %p163 = pneg %p44
      %p164 = pneg %p68
      %p165 = pneg %p65
      %p166 = pneg %p89
      %p167 = pneg %p86
      %p168 = pneg %p117
      %p169 = pneg %p114
      %s170 = smul.u32 8, %s19
      %p171 = scmp.lt.s32.totalorder %s18, 1
      %s172 = scalar_select %p171, %s18, 1
      %p173 = scmp.lt.s32.totalorder %s170, 7
      %s174 = scalar_select %p173, %s170, 7
      %s175 = smul.addr %s172, 8
      %s176 = sadd.s32 %s174, %s175
      %s177 = smul.addr %s176, 4
      %s178 = scalar_lea.vmem %s3, %s177
      %p179 = scmp.lt.s32.totalorder %s18, 1
      %s180 = scalar_select %p179, %s18, 1
      %s181 = smul.addr %s180, 8
      %s182 = smul.addr %s181, 4
      %s183 = scalar_lea.vmem %s0, %s182
      %s184 = smul.u32 8, %s19
      %p185 = scmp.lt.s32.totalorder %s18, 1
      %s186 = scalar_select %p185, %s18, 1
      %p187 = scmp.lt.s32.totalorder %s184, 7
      %s188 = scalar_select %p187, %s184, 7
      %s189 = smul.addr %s186, 8
      %s190 = sadd.s32 %s188, %s189
      %s191 = smul.addr %s190, 4
      %s192 = scalar_lea.vmem %s3, %s191
      %s193 = smul.u32 8, %s19
      %195 = vst [vmem:[#allocation2] sm:$0xf] 0
      %196 = vst [vmem:[#allocation2 + $0x4] sm:$0x1] 0
      %197 = vst [vmem:[#allocation2 + $0x8] sm:$0xf] 0
      %198 = vst [vmem:[#allocation2 + $0xc] sm:$0x1] 0
      %199 = vst [vmem:[#allocation2 + $0x10] sm:$0xf] 0
      %200 = vst [vmem:[#allocation2 + $0x14] sm:$0x1] 0
      %201 = vst [vmem:[#allocation2 + $0x18] sm:$0xf] 0
      %202 = vst [vmem:[#allocation2 + $0x1c] sm:$0x1] 0
      %203 = vst [vmem:[#allocation2 + $0x20] sm:$0xf] 0
      %204 = vst [vmem:[#allocation2 + $0x24] sm:$0x1] 0
      %205 = vst [vmem:[#allocation2 + $0x28] sm:$0xf] 0
      %206 = vst [vmem:[#allocation2 + $0x2c] sm:$0x1] 0
      %207 = vst [vmem:[#allocation2 + $0x30] sm:$0xf] 0
      %208 = vst [vmem:[#allocation2 + $0x34] sm:$0x1] 0
      %209 = vst [vmem:[#allocation2 + $0x38] sm:$0xf] 0
      %210 = vst [vmem:[#allocation2 + $0x3c] sm:$0x1] 0
      %211 = vst [vmem:[#allocation2 + $0x40] sm:$0xf] 0
      %212 = vst [vmem:[#allocation2 + $0x44] sm:$0x1] 0
      %213 = vst [vmem:[#allocation2 + $0x48] sm:$0xf] 0
      %214 = vst [vmem:[#allocation2 + $0x4c] sm:$0x1] 0
      %v215 = vld [vmem:[%s183] sm:$0xf]
      %v216 = vld [vmem:[%s183 + $0x4] sm:$0xf]
      %v217 = vld [vmem:[%s183 + $0x8] sm:$0xf]
      %v218 = vld [vmem:[%s183 + $0xc] sm:$0xf]
      %v219 = vld [vmem:[%s183 + $0x10] sm:$0xf]
      %v220 = vld [vmem:[%s183 + $0x14] sm:$0xf]
      %v221 = vld [vmem:[%s183 + $0x18] sm:$0xf]
      %v222 = vld [vmem:[%s183 + $0x1c] sm:$0xf]
      %v224 = vshrl.u32 %v215, 16
      %v226 = vrot.slane %v224, 7
      %v227 = vshll.u32 %v215, 16
      %v229 = vor.u32 %v226, %v227
      %v230 = vrot.slane %v226, 4
      %v232 = vshrl.u32 %v216, 16
      %v234 = vrot.slane %v232, 7
      %v235 = vshll.u32 %v216, 16
      %v237 = vor.u32 %v234, %v235
      %v238 = vrot.slane %v234, 4
      %v240 = vshrl.u32 %v217, 16
      %v242 = vrot.slane %v240, 7
      %v243 = vshll.u32 %v217, 16
      %v245 = vor.u32 %v242, %v243
      %v246 = vrot.slane %v242, 4
      %v248 = vshrl.u32 %v218, 16
      %v250 = vrot.slane %v248, 7
      %v251 = vshll.u32 %v218, 16
      %v253 = vor.u32 %v250, %v251
      %v254 = vrot.slane %v250, 4
      %v256 = vshrl.u32 %v219, 16
      %v258 = vrot.slane %v256, 7
      %v259 = vshll.u32 %v219, 16
      %v261 = vor.u32 %v258, %v259
      %v262 = vrot.slane %v258, 4
      %v264 = vshrl.u32 %v220, 16
      %v266 = vrot.slane %v264, 7
      %v267 = vshll.u32 %v220, 16
      %v269 = vor.u32 %v266, %v267
      %v270 = vrot.slane %v266, 4
      %v272 = vshrl.u32 %v221, 16
      %v274 = vrot.slane %v272, 7
      %v275 = vshll.u32 %v221, 16
      %v277 = vor.u32 %v274, %v275
      %v278 = vrot.slane %v274, 4
      %v280 = vshrl.u32 %v222, 16
      %v282 = vrot.slane %v280, 7
      %v283 = vshll.u32 %v222, 16
      %v285 = vor.u32 %v282, %v283
      %v286 = vrot.slane %v282, 4
      %s303 = scalar_lea.vmem [#allocation2], 8
      %vm304 = vcmask 1043456
      %vm305 = vsmask.f32 7938
      %vm306 = vmand %vm304, %vm305
      %v307 = vld [vmem:[%s303] sm:$0xf]
      %v308 = vsel %vm306, %v229, %v307
      %309 = vst [vmem:[%s303] sm:$0xf] %v308
      %vm310 = vcmask 1040384
      %vm311 = vsmask.f32 256
      %vm312 = vmand %vm310, %vm311
      %v313 = vld [vmem:[%s303 + $0x4] sm:$0x1]
      %v314 = vsel %vm312, %v230, %v313
      %315 = vst [vmem:[%s303 + $0x4] sm:$0x1] %v314
      %v316 = vld [vmem:[%s303 + $0x8] sm:$0xf]
      %v317 = vsel %vm306, %v237, %v316
      %318 = vst [vmem:[%s303 + $0x8] sm:$0xf] %v317
      %v319 = vld [vmem:[%s303 + $0xc] sm:$0x1]
      %v320 = vsel %vm312, %v238, %v319
      %321 = vst [vmem:[%s303 + $0xc] sm:$0x1] %v320
      %v322 = vld [vmem:[%s303 + $0x10] sm:$0xf]
      %v323 = vsel %vm306, %v245, %v322
      %324 = vst [vmem:[%s303 + $0x10] sm:$0xf] %v323
      %v325 = vld [vmem:[%s303 + $0x14] sm:$0x1]
      %v326 = vsel %vm312, %v246, %v325
      %327 = vst [vmem:[%s303 + $0x14] sm:$0x1] %v326
      %v328 = vld [vmem:[%s303 + $0x18] sm:$0xf]
      %v329 = vsel %vm306, %v253, %v328
      %330 = vst [vmem:[%s303 + $0x18] sm:$0xf] %v329
      %v331 = vld [vmem:[%s303 + $0x1c] sm:$0x1]
      %v332 = vsel %vm312, %v254, %v331
      %333 = vst [vmem:[%s303 + $0x1c] sm:$0x1] %v332
      %v334 = vld [vmem:[%s303 + $0x20] sm:$0xf]
      %v335 = vsel %vm306, %v261, %v334
      %336 = vst [vmem:[%s303 + $0x20] sm:$0xf] %v335
      %v337 = vld [vmem:[%s303 + $0x24] sm:$0x1]
      %v338 = vsel %vm312, %v262, %v337
      %339 = vst [vmem:[%s303 + $0x24] sm:$0x1] %v338
      %v340 = vld [vmem:[%s303 + $0x28] sm:$0xf]
      %v341 = vsel %vm306, %v269, %v340
      %342 = vst [vmem:[%s303 + $0x28] sm:$0xf] %v341
      %v343 = vld [vmem:[%s303 + $0x2c] sm:$0x1]
      %v344 = vsel %vm312, %v270, %v343
      %345 = vst [vmem:[%s303 + $0x2c] sm:$0x1] %v344
      %v346 = vld [vmem:[%s303 + $0x30] sm:$0xf]
      %v347 = vsel %vm306, %v277, %v346
      %348 = vst [vmem:[%s303 + $0x30] sm:$0xf] %v347
      %v349 = vld [vmem:[%s303 + $0x34] sm:$0x1]
      %v350 = vsel %vm312, %v278, %v349
      %351 = vst [vmem:[%s303 + $0x34] sm:$0x1] %v350
      %v352 = vld [vmem:[%s303 + $0x38] sm:$0xf]
      %v353 = vsel %vm306, %v285, %v352
      %354 = vst [vmem:[%s303 + $0x38] sm:$0xf] %v353
      %v355 = vld [vmem:[%s303 + $0x3c] sm:$0x1]
      %v356 = vsel %vm312, %v286, %v355
      %357 = vst [vmem:[%s303 + $0x3c] sm:$0x1] %v356
      %s358 = smul.u32 %s19, 8
      %v359 = vld [vmem:[%s2] sm:$0x1]
      %v361 = vperm.slane %v359, 0
      %s363 = smul.u32 %s358, 2
      %s364 = smul.addr %s363, 4
      %s365 = scalar_lea.vmem [#allocation2], %s364
      %v366 = vld [vmem:[%s365] sm:$0xf]
      %v367 = vld [vmem:[%s365 + $0x8] sm:$0xf]
      %v368 = vld [vmem:[%s365 + $0x10] sm:$0xf]
      %v369 = vld [vmem:[%s365 + $0x18] sm:$0xf]
      %v370 = vld [vmem:[%s365 + $0x20] sm:$0xf]
      %v371 = vld [vmem:[%s365 + $0x28] sm:$0xf]
      %v372 = vld [vmem:[%s365 + $0x30] sm:$0xf]
      %v373 = vld [vmem:[%s365 + $0x38] sm:$0xf]
      %v374 = vld [vmem:[%s1] sm:$0xf]
      %v375 = vld [vmem:[%s1 + $0x4] sm:$0xf]
      %v376 = vld [vmem:[%s1 + $0x8] sm:$0xf]
      %v377 = vld [vmem:[%s1 + $0xc] sm:$0xf]
      %v378 = vld [vmem:[%s1 + $0x10] sm:$0xf]
      %v379 = vld [vmem:[%s1 + $0x14] sm:$0xf]
      %v380 = vld [vmem:[%s1 + $0x18] sm:$0xf]
      %v381 = vld [vmem:[%s1 + $0x1c] sm:$0xf]
      %v382 = vld [vmem:[%s1 + $0x20] sm:$0xf]
      %v383 = vld [vmem:[%s1 + $0x24] sm:$0xf]
      %v384 = vld [vmem:[%s1 + $0x28] sm:$0xf]
      %v385 = vld [vmem:[%s1 + $0x2c] sm:$0xf]
      %v386 = vld [vmem:[%s1 + $0x30] sm:$0xf]
      %v387 = vld [vmem:[%s1 + $0x34] sm:$0xf]
      %v388 = vld [vmem:[%s1 + $0x38] sm:$0xf]
      %v389 = vld [vmem:[%s1 + $0x3c] sm:$0xf]
      %v398 = vunpack.c.l.b16 %v366
      %v399 = vunpack.c.l.b16 %v367
      %v400 = vunpack.c.l.b16 %v368
      %v401 = vunpack.c.l.b16 %v369
      %v402 = vunpack.c.l.b16 %v370
      %v403 = vunpack.c.l.b16 %v371
      %v404 = vunpack.c.l.b16 %v372
      %v405 = vunpack.c.l.b16 %v373
      %v406 = vpack.c.b16 %v399, %v398
      %v407 = vpack.c.b16 %v401, %v400
      %v408 = vpack.c.b16 %v403, %v402
      %v409 = vpack.c.b16 %v405, %v404
      %v430 = vunpack.c.l.b16 %v374
      %v431 = vunpack.c.l.b16 %v375
      %v432 = vunpack.c.l.b16 %v376
      %v433 = vunpack.c.l.b16 %v377
      %v434 = vunpack.c.l.b16 %v378
      %v435 = vunpack.c.l.b16 %v379
      %v436 = vunpack.c.l.b16 %v380
      %v437 = vunpack.c.l.b16 %v381
      %v438 = vunpack.c.l.b16 %v382
      %v439 = vunpack.c.l.b16 %v383
      %v440 = vunpack.c.l.b16 %v384
      %v441 = vunpack.c.l.b16 %v385
      %v442 = vunpack.c.l.b16 %v386
      %v443 = vunpack.c.l.b16 %v387
      %v444 = vunpack.c.l.b16 %v388
      %v445 = vunpack.c.l.b16 %v389
      %v446 = vpack.c.b16 %v431, %v430
      %v447 = vpack.c.b16 %v433, %v432
      %v448 = vpack.c.b16 %v435, %v434
      %v449 = vpack.c.b16 %v437, %v436
      %v450 = vpack.c.b16 %v439, %v438
      %v451 = vpack.c.b16 %v441, %v440
      %v452 = vpack.c.b16 %v443, %v442
      %v453 = vpack.c.b16 %v445, %v444
      %462 = vmatpush.bf16.msra.mxu0 %v453
      %463 = vmatpush.bf16.msra.mxu0 %v452
      %464 = vmatpush.bf16.msra.mxu0 %v451
      %465 = vmatpush.bf16.msra.mxu0 %v450
      %466 = vmatpush.bf16.msra.mxu0 %v449
      %467 = vmatpush.bf16.msra.mxu0 %v448
      %468 = vmatpush.bf16.msra.mxu0 %v447
      %469 = vmatpush.bf16.msra.mxu0 %v446
      %470 = vmatmul.bf16.gmra.mxu0 %v406
      %v471 = vpop.f32.mrf.mxu0
      %v472 = vadd.f32 0.0, %v471
      %v473 = vpop.f32.mrf.mxu0
      %v474 = vadd.f32 0.0, %v473
      %475 = vmatmul.bf16.gmra.mxu0 %v407
      %v476 = vpop.f32.mrf.mxu0
      %v477 = vadd.f32 0.0, %v476
      %v478 = vpop.f32.mrf.mxu0
      %v479 = vadd.f32 0.0, %v478
      %480 = vmatmul.bf16.gmra.mxu0 %v408
      %v481 = vpop.f32.mrf.mxu0
      %v482 = vadd.f32 0.0, %v481
      %v483 = vpop.f32.mrf.mxu0
      %v484 = vadd.f32 0.0, %v483
      %485 = vmatmul.bf16.gmra.mxu0 %v409
      %v486 = vpop.f32.mrf.mxu0
      %v487 = vadd.f32 0.0, %v486
      %v488 = vpop.f32.mrf.mxu0
      %v489 = vadd.f32 0.0, %v488
      %490 = vdwg.mxu0
      %v491 = vadd.f32 %v361, %v472
      %v492 = vadd.f32 %v361, %v474
      %v493 = vadd.f32 %v361, %v477
      %v494 = vadd.f32 %v361, %v479
      %v495 = vadd.f32 %v361, %v482
      %v496 = vadd.f32 %v361, %v484
      %v497 = vadd.f32 %v361, %v487
      %v498 = vadd.f32 %v361, %v489
      %v499 = vld [vmem:[%s365] sm:$0xf]
      %v500 = vld [vmem:[%s365 + $0x4] sm:$0x1]
      %v501 = vld [vmem:[%s365 + $0x8] sm:$0xf]
      %v502 = vld [vmem:[%s365 + $0xc] sm:$0x1]
      %v503 = vld [vmem:[%s365 + $0x10] sm:$0xf]
      %v504 = vld [vmem:[%s365 + $0x14] sm:$0x1]
      %v505 = vld [vmem:[%s365 + $0x18] sm:$0xf]
      %v506 = vld [vmem:[%s365 + $0x1c] sm:$0x1]
      %v507 = vld [vmem:[%s365 + $0x20] sm:$0xf]
      %v508 = vld [vmem:[%s365 + $0x24] sm:$0x1]
      %v509 = vld [vmem:[%s365 + $0x28] sm:$0xf]
      %v510 = vld [vmem:[%s365 + $0x2c] sm:$0x1]
      %v511 = vld [vmem:[%s365 + $0x30] sm:$0xf]
      %v512 = vld [vmem:[%s365 + $0x34] sm:$0x1]
      %v513 = vld [vmem:[%s365 + $0x38] sm:$0xf]
      %v514 = vld [vmem:[%s365 + $0x3c] sm:$0x1]
      %vm515 = vsmask.f32 3328
      %vm516 = vsmask.f32 7440
      %vm517 = vmor %vm515, %vm516
      %v519 = vshrl.u32 %v499, 16
      %v521 = vrot.slane %v519, 4
      %v522 = vshll.u32 %v499, 16
      %v524 = vrot.slane %v522, 5
      %v525 = vor.u32 %v521, %v524
      %v526 = vrot.slane %v525, 4
      %v528 = vshll.u32 %v500, 16
      %v530 = vrot.slane %v528, 5
      %v531 = vsel %vm517, %v526, %v530
      %v533 = vshrl.u32 %v501, 16
      %v535 = vrot.slane %v533, 4
      %v536 = vshll.u32 %v501, 16
      %v538 = vrot.slane %v536, 5
      %v539 = vor.u32 %v535, %v538
      %v540 = vrot.slane %v539, 4
      %v542 = vshll.u32 %v502, 16
      %v544 = vrot.slane %v542, 5
      %v545 = vsel %vm517, %v540, %v544
      %v547 = vshrl.u32 %v503, 16
      %v549 = vrot.slane %v547, 4
      %v550 = vshll.u32 %v503, 16
      %v552 = vrot.slane %v550, 5
      %v553 = vor.u32 %v549, %v552
      %v554 = vrot.slane %v553, 4
      %v556 = vshll.u32 %v504, 16
      %v558 = vrot.slane %v556, 5
      %v559 = vsel %vm517, %v554, %v558
      %v561 = vshrl.u32 %v505, 16
      %v563 = vrot.slane %v561, 4
      %v564 = vshll.u32 %v505, 16
      %v566 = vrot.slane %v564, 5
      %v567 = vor.u32 %v563, %v566
      %v568 = vrot.slane %v567, 4
      %v570 = vshll.u32 %v506, 16
      %v572 = vrot.slane %v570, 5
      %v573 = vsel %vm517, %v568, %v572
      %v575 = vshrl.u32 %v507, 16
      %v577 = vrot.slane %v575, 4
      %v578 = vshll.u32 %v507, 16
      %v580 = vrot.slane %v578, 5
      %v581 = vor.u32 %v577, %v580
      %v582 = vrot.slane %v581, 4
      %v584 = vshll.u32 %v508, 16
      %v586 = vrot.slane %v584, 5
      %v587 = vsel %vm517, %v582, %v586
      %v589 = vshrl.u32 %v509, 16
      %v591 = vrot.slane %v589, 4
      %v592 = vshll.u32 %v509, 16
      %v594 = vrot.slane %v592, 5
      %v595 = vor.u32 %v591, %v594
      %v596 = vrot.slane %v595, 4
      %v598 = vshll.u32 %v510, 16
      %v600 = vrot.slane %v598, 5
      %v601 = vsel %vm517, %v596, %v600
      %v603 = vshrl.u32 %v511, 16
      %v605 = vrot.slane %v603, 4
      %v606 = vshll.u32 %v511, 16
      %v608 = vrot.slane %v606, 5
      %v609 = vor.u32 %v605, %v608
      %v610 = vrot.slane %v609, 4
      %v612 = vshll.u32 %v512, 16
      %v614 = vrot.slane %v612, 5
      %v615 = vsel %vm517, %v610, %v614
      %v617 = vshrl.u32 %v513, 16
      %v619 = vrot.slane %v617, 4
      %v620 = vshll.u32 %v513, 16
      %v622 = vrot.slane %v620, 5
      %v623 = vor.u32 %v619, %v622
      %v624 = vrot.slane %v623, 4
      %v626 = vshll.u32 %v514, 16
      %v628 = vrot.slane %v626, 5
      %v629 = vsel %vm517, %v624, %v628
      %s630 = scalar_lea.vmem %s1, 64
      %v631 = vld [vmem:[%s630] sm:$0xf]
      %v632 = vld [vmem:[%s630 + $0x4] sm:$0xf]
      %v633 = vld [vmem:[%s630 + $0x8] sm:$0xf]
      %v634 = vld [vmem:[%s630 + $0xc] sm:$0xf]
      %v635 = vld [vmem:[%s630 + $0x10] sm:$0xf]
      %v636 = vld [vmem:[%s630 + $0x14] sm:$0xf]
      %v637 = vld [vmem:[%s630 + $0x18] sm:$0xf]
      %v638 = vld [vmem:[%s630 + $0x1c] sm:$0xf]
      %v639 = vld [vmem:[%s630 + $0x20] sm:$0xf]
      %v640 = vld [vmem:[%s630 + $0x24] sm:$0xf]
      %v641 = vld [vmem:[%s630 + $0x28] sm:$0xf]
      %v642 = vld [vmem:[%s630 + $0x2c] sm:$0xf]
      %v643 = vld [vmem:[%s630 + $0x30] sm:$0xf]
      %v644 = vld [vmem:[%s630 + $0x34] sm:$0xf]
      %v645 = vld [vmem:[%s630 + $0x38] sm:$0xf]
      %v646 = vld [vmem:[%s630 + $0x3c] sm:$0xf]
      %v647 = vunpack.c.l.b16 %v531
      %v648 = vunpack.c.l.b16 %v545
      %v649 = vunpack.c.l.b16 %v559
      %v650 = vunpack.c.l.b16 %v573
      %v651 = vunpack.c.l.b16 %v587
      %v652 = vunpack.c.l.b16 %v601
      %v653 = vunpack.c.l.b16 %v615
      %v654 = vunpack.c.l.b16 %v629
      %v655 = vpack.c.b16 %v648, %v647
      %v656 = vpack.c.b16 %v650, %v649
      %v657 = vpack.c.b16 %v652, %v651
      %v658 = vpack.c.b16 %v654, %v653
      %v679 = vunpack.c.l.b16 %v631
      %v680 = vunpack.c.l.b16 %v632
      %v681 = vunpack.c.l.b16 %v633
      %v682 = vunpack.c.l.b16 %v634
      %v683 = vunpack.c.l.b16 %v635
      %v684 = vunpack.c.l.b16 %v636
      %v685 = vunpack.c.l.b16 %v637
      %v686 = vunpack.c.l.b16 %v638
      %v687 = vunpack.c.l.b16 %v639
      %v688 = vunpack.c.l.b16 %v640
      %v689 = vunpack.c.l.b16 %v641
      %v690 = vunpack.c.l.b16 %v642
      %v691 = vunpack.c.l.b16 %v643
      %v692 = vunpack.c.l.b16 %v644
      %v693 = vunpack.c.l.b16 %v645
      %v694 = vunpack.c.l.b16 %v646
      %v695 = vpack.c.b16 %v680, %v679
      %v696 = vpack.c.b16 %v682, %v681
      %v697 = vpack.c.b16 %v684, %v683
      %v698 = vpack.c.b16 %v686, %v685
      %v699 = vpack.c.b16 %v688, %v687
      %v700 = vpack.c.b16 %v690, %v689
      %v701 = vpack.c.b16 %v692, %v691
      %v702 = vpack.c.b16 %v694, %v693
      %711 = vmatpush.bf16.msra.mxu0 %v702
      %712 = vmatpush.bf16.msra.mxu0 %v701
      %713 = vmatpush.bf16.msra.mxu0 %v700
      %714 = vmatpush.bf16.msra.mxu0 %v699
      %715 = vmatpush.bf16.msra.mxu0 %v698
      %716 = vmatpush.bf16.msra.mxu0 %v697
      %717 = vmatpush.bf16.msra.mxu0 %v696
      %718 = vmatpush.bf16.msra.mxu0 %v695
      %719 = vmatmul.bf16.gmra.mxu0 %v655
      %v720 = vpop.f32.mrf.mxu0
      %v721 = vadd.f32 0.0, %v720
      %v722 = vpop.f32.mrf.mxu0
      %v723 = vadd.f32 0.0, %v722
      %724 = vmatmul.bf16.gmra.mxu0 %v656
      %v725 = vpop.f32.mrf.mxu0
      %v726 = vadd.f32 0.0, %v725
      %v727 = vpop.f32.mrf.mxu0
      %v728 = vadd.f32 0.0, %v727
      %729 = vmatmul.bf16.gmra.mxu0 %v657
      %v730 = vpop.f32.mrf.mxu0
      %v731 = vadd.f32 0.0, %v730
      %v732 = vpop.f32.mrf.mxu0
      %v733 = vadd.f32 0.0, %v732
      %734 = vmatmul.bf16.gmra.mxu0 %v658
      %v735 = vpop.f32.mrf.mxu0
      %v736 = vadd.f32 0.0, %v735
      %v737 = vpop.f32.mrf.mxu0
      %v738 = vadd.f32 0.0, %v737
      %739 = vdwg.mxu0
      %v740 = vadd.f32 %v491, %v721
      %v741 = vadd.f32 %v492, %v723
      %v742 = vadd.f32 %v493, %v726
      %v743 = vadd.f32 %v494, %v728
      %v744 = vadd.f32 %v495, %v731
      %v745 = vadd.f32 %v496, %v733
      %v746 = vadd.f32 %v497, %v736
      %v747 = vadd.f32 %v498, %v738
      %v748 = vld [vmem:[%s365] sm:$0xe]
      %v749 = vld [vmem:[%s365 + $0x8] sm:$0xe]
      %v750 = vld [vmem:[%s365 + $0x10] sm:$0xe]
      %v751 = vld [vmem:[%s365 + $0x18] sm:$0xe]
      %v752 = vld [vmem:[%s365 + $0x20] sm:$0xe]
      %v753 = vld [vmem:[%s365 + $0x28] sm:$0xe]
      %v754 = vld [vmem:[%s365 + $0x30] sm:$0xe]
      %v755 = vld [vmem:[%s365 + $0x38] sm:$0xe]
      %vm772 = vcmask 1042432
      %vm773 = vcmask 1046532
      %vm774 = vmor %vm772, %vm773
      %v775 = vrot.slane %v748, 5
      %v776 = vrot.slane %v775, 4
      %v777 = vrot.slane %v500, 5
      %v778 = vsel %vm774, %v776, %v777
      %v779 = vrot.slane %v749, 5
      %v780 = vrot.slane %v779, 4
      %v781 = vrot.slane %v502, 5
      %v782 = vsel %vm774, %v780, %v781
      %v783 = vrot.slane %v750, 5
      %v784 = vrot.slane %v783, 4
      %v785 = vrot.slane %v504, 5
      %v786 = vsel %vm774, %v784, %v785
      %v787 = vrot.slane %v751, 5
      %v788 = vrot.slane %v787, 4
      %v789 = vrot.slane %v506, 5
      %v790 = vsel %vm774, %v788, %v789
      %v791 = vrot.slane %v752, 5
      %v792 = vrot.slane %v791, 4
      %v793 = vrot.slane %v508, 5
      %v794 = vsel %vm774, %v792, %v793
      %v795 = vrot.slane %v753, 5
      %v796 = vrot.slane %v795, 4
      %v797 = vrot.slane %v510, 5
      %v798 = vsel %vm774, %v796, %v797
      %v799 = vrot.slane %v754, 5
      %v800 = vrot.slane %v799, 4
      %v801 = vrot.slane %v512, 5
      %v802 = vsel %vm774, %v800, %v801
      %v803 = vrot.slane %v755, 5
      %v804 = vrot.slane %v803, 4
      %v805 = vrot.slane %v514, 5
      %v806 = vsel %vm774, %v804, %v805
      %s807 = scalar_lea.vmem %s1, 128
      %v808 = vld [vmem:[%s807] sm:$0xf]
      %v809 = vld [vmem:[%s807 + $0x4] sm:$0xf]
      %v810 = vld [vmem:[%s807 + $0x8] sm:$0xf]
      %v811 = vld [vmem:[%s807 + $0xc] sm:$0xf]
      %v812 = vld [vmem:[%s807 + $0x10] sm:$0xf]
      %v813 = vld [vmem:[%s807 + $0x14] sm:$0xf]
      %v814 = vld [vmem:[%s807 + $0x18] sm:$0xf]
      %v815 = vld [vmem:[%s807 + $0x1c] sm:$0xf]
      %v816 = vld [vmem:[%s807 + $0x20] sm:$0xf]
      %v817 = vld [vmem:[%s807 + $0x24] sm:$0xf]
      %v818 = vld [vmem:[%s807 + $0x28] sm:$0xf]
      %v819 = vld [vmem:[%s807 + $0x2c] sm:$0xf]
      %v820 = vld [vmem:[%s807 + $0x30] sm:$0xf]
      %v821 = vld [vmem:[%s807 + $0x34] sm:$0xf]
      %v822 = vld [vmem:[%s807 + $0x38] sm:$0xf]
      %v823 = vld [vmem:[%s807 + $0x3c] sm:$0xf]
      %v824 = vunpack.c.l.b16 %v778
      %v825 = vunpack.c.l.b16 %v782
      %v826 = vunpack.c.l.b16 %v786
      %v827 = vunpack.c.l.b16 %v790
      %v828 = vunpack.c.l.b16 %v794
      %v829 = vunpack.c.l.b16 %v798
      %v830 = vunpack.c.l.b16 %v802
      %v831 = vunpack.c.l.b16 %v806
      %v832 = vpack.c.b16 %v825, %v824
      %v833 = vpack.c.b16 %v827, %v826
      %v834 = vpack.c.b16 %v829, %v828
      %v835 = vpack.c.b16 %v831, %v830
      %v856 = vunpack.c.l.b16 %v808
      %v857 = vunpack.c.l.b16 %v809
      %v858 = vunpack.c.l.b16 %v810
      %v859 = vunpack.c.l.b16 %v811
      %v860 = vunpack.c.l.b16 %v812
      %v861 = vunpack.c.l.b16 %v813
      %v862 = vunpack.c.l.b16 %v814
      %v863 = vunpack.c.l.b16 %v815
      %v864 = vunpack.c.l.b16 %v816
      %v865 = vunpack.c.l.b16 %v817
      %v866 = vunpack.c.l.b16 %v818
      %v867 = vunpack.c.l.b16 %v819
      %v868 = vunpack.c.l.b16 %v820
      %v869 = vunpack.c.l.b16 %v821
      %v870 = vunpack.c.l.b16 %v822
      %v871 = vunpack.c.l.b16 %v823
      %v872 = vpack.c.b16 %v857, %v856
      %v873 = vpack.c.b16 %v859, %v858
      %v874 = vpack.c.b16 %v861, %v860
      %v875 = vpack.c.b16 %v863, %v862
      %v876 = vpack.c.b16 %v865, %v864
      %v877 = vpack.c.b16 %v867, %v866
      %v878 = vpack.c.b16 %v869, %v868
      %v879 = vpack.c.b16 %v871, %v870
      %888 = vmatpush.bf16.msra.mxu0 %v879
      %889 = vmatpush.bf16.msra.mxu0 %v878
      %890 = vmatpush.bf16.msra.mxu0 %v877
      %891 = vmatpush.bf16.msra.mxu0 %v876
      %892 = vmatpush.bf16.msra.mxu0 %v875
      %893 = vmatpush.bf16.msra.mxu0 %v874
      %894 = vmatpush.bf16.msra.mxu0 %v873
      %895 = vmatpush.bf16.msra.mxu0 %v872
      %896 = vmatmul.bf16.gmra.mxu0 %v832
      %v897 = vpop.f32.mrf.mxu0
      %v898 = vadd.f32 0.0, %v897
      %v899 = vpop.f32.mrf.mxu0
      %v900 = vadd.f32 0.0, %v899
      %901 = vmatmul.bf16.gmra.mxu0 %v833
      %v902 = vpop.f32.mrf.mxu0
      %v903 = vadd.f32 0.0, %v902
      %v904 = vpop.f32.mrf.mxu0
      %v905 = vadd.f32 0.0, %v904
      %906 = vmatmul.bf16.gmra.mxu0 %v834
      %v907 = vpop.f32.mrf.mxu0
      %v908 = vadd.f32 0.0, %v907
      %v909 = vpop.f32.mrf.mxu0
      %v910 = vadd.f32 0.0, %v909
      %911 = vmatmul.bf16.gmra.mxu0 %v835
      %v912 = vpop.f32.mrf.mxu0
      %v913 = vadd.f32 0.0, %v912
      %v914 = vpop.f32.mrf.mxu0
      %v915 = vadd.f32 0.0, %v914
      %916 = vdwg.mxu0
      %v917 = vadd.f32 %v740, %v898
      %v918 = vadd.f32 %v741, %v900
      %v919 = vadd.f32 %v742, %v903
      %v920 = vadd.f32 %v743, %v905
      %v921 = vadd.f32 %v744, %v908
      %v922 = vadd.f32 %v745, %v910
      %v923 = vadd.f32 %v746, %v913
      %v924 = vadd.f32 %v747, %v915
      %s925 = sadd.s32 %s358, 1
      %s926 = smul.u32 %s925, 2
      %s927 = smul.addr %s926, 4
      %s928 = scalar_lea.vmem [#allocation2], %s927
      %v929 = vld [vmem:[%s928] sm:$0xf]
      %v930 = vld [vmem:[%s928 + $0x8] sm:$0xf]
      %v931 = vld [vmem:[%s928 + $0x10] sm:$0xf]
      %v932 = vld [vmem:[%s928 + $0x18] sm:$0xf]
      %v933 = vld [vmem:[%s928 + $0x20] sm:$0xf]
      %v934 = vld [vmem:[%s928 + $0x28] sm:$0xf]
      %v935 = vld [vmem:[%s928 + $0x30] sm:$0xf]
      %v936 = vld [vmem:[%s928 + $0x38] sm:$0xf]
      %s937 = scalar_lea.vmem %s1, 192
      %v938 = vld [vmem:[%s937] sm:$0xf]
      %v939 = vld [vmem:[%s937 + $0x4] sm:$0xf]
      %v940 = vld [vmem:[%s937 + $0x8] sm:$0xf]
      %v941 = vld [vmem:[%s937 + $0xc] sm:$0xf]
      %v942 = vld [vmem:[%s937 + $0x10] sm:$0xf]
      %v943 = vld [vmem:[%s937 + $0x14] sm:$0xf]
      %v944 = vld [vmem:[%s937 + $0x18] sm:$0xf]
      %v945 = vld [vmem:[%s937 + $0x1c] sm:$0xf]
      %v946 = vld [vmem:[%s937 + $0x20] sm:$0xf]
      %v947 = vld [vmem:[%s937 + $0x24] sm:$0xf]
      %v948 = vld [vmem:[%s937 + $0x28] sm:$0xf]
      %v949 = vld [vmem:[%s937 + $0x2c] sm:$0xf]
      %v950 = vld [vmem:[%s937 + $0x30] sm:$0xf]
      %v951 = vld [vmem:[%s937 + $0x34] sm:$0xf]
      %v952 = vld [vmem:[%s937 + $0x38] sm:$0xf]
      %v953 = vld [vmem:[%s937 + $0x3c] sm:$0xf]
      %v962 = vunpack.c.l.b16 %v929
      %v963 = vunpack.c.l.b16 %v930
      %v964 = vunpack.c.l.b16 %v931
      %v965 = vunpack.c.l.b16 %v932
      %v966 = vunpack.c.l.b16 %v933
      %v967 = vunpack.c.l.b16 %v934
      %v968 = vunpack.c.l.b16 %v935
      %v969 = vunpack.c.l.b16 %v936
      %v970 = vpack.c.b16 %v963, %v962
      %v971 = vpack.c.b16 %v965, %v964
      %v972 = vpack.c.b16 %v967, %v966
      %v973 = vpack.c.b16 %v969, %v968
      %v994 = vunpack.c.l.b16 %v938
      %v995 = vunpack.c.l.b16 %v939
      %v996 = vunpack.c.l.b16 %v940
      %v997 = vunpack.c.l.b16 %v941
      %v998 = vunpack.c.l.b16 %v942
      %v999 = vunpack.c.l.b16 %v943
      %v1000 = vunpack.c.l.b16 %v944
      %v1001 = vunpack.c.l.b16 %v945
      %v1002 = vunpack.c.l.b16 %v946
      %v1003 = vunpack.c.l.b16 %v947
      %v1004 = vunpack.c.l.b16 %v948
      %v1005 = vunpack.c.l.b16 %v949
      %v1006 = vunpack.c.l.b16 %v950
      %v1007 = vunpack.c.l.b16 %v951
      %v1008 = vunpack.c.l.b16 %v952
      %v1009 = vunpack.c.l.b16 %v953
      %v1010 = vpack.c.b16 %v995, %v994
      %v1011 = vpack.c.b16 %v997, %v996
      %v1012 = vpack.c.b16 %v999, %v998
      %v1013 = vpack.c.b16 %v1001, %v1000
      %v1014 = vpack.c.b16 %v1003, %v1002
      %v1015 = vpack.c.b16 %v1005, %v1004
      %v1016 = vpack.c.b16 %v1007, %v1006
      %v1017 = vpack.c.b16 %v1009, %v1008
      %1026 = vmatpush.bf16.msra.mxu0 %v1017
      %1027 = vmatpush.bf16.msra.mxu0 %v1016
      %1028 = vmatpush.bf16.msra.mxu0 %v1015
      %1029 = vmatpush.bf16.msra.mxu0 %v1014
      %1030 = vmatpush.bf16.msra.mxu0 %v1013
      %1031 = vmatpush.bf16.msra.mxu0 %v1012
      %1032 = vmatpush.bf16.msra.mxu0 %v1011
      %1033 = vmatpush.bf16.msra.mxu0 %v1010
      %1034 = vmatmul.bf16.gmra.mxu0 %v970
      %v1035 = vpop.f32.mrf.mxu0
      %v1036 = vadd.f32 0.0, %v1035
      %v1037 = vpop.f32.mrf.mxu0
      %v1038 = vadd.f32 0.0, %v1037
      %1039 = vmatmul.bf16.gmra.mxu0 %v971
      %v1040 = vpop.f32.mrf.mxu0
      %v1041 = vadd.f32 0.0, %v1040
      %v1042 = vpop.f32.mrf.mxu0
      %v1043 = vadd.f32 0.0, %v1042
      %1044 = vmatmul.bf16.gmra.mxu0 %v972
      %v1045 = vpop.f32.mrf.mxu0
      %v1046 = vadd.f32 0.0, %v1045
      %v1047 = vpop.f32.mrf.mxu0
      %v1048 = vadd.f32 0.0, %v1047
      %1049 = vmatmul.bf16.gmra.mxu0 %v973
      %v1050 = vpop.f32.mrf.mxu0
      %v1051 = vadd.f32 0.0, %v1050
      %v1052 = vpop.f32.mrf.mxu0
      %v1053 = vadd.f32 0.0, %v1052
      %1054 = vdwg.mxu0
      %v1055 = vadd.f32 %v917, %v1036
      %v1056 = vadd.f32 %v918, %v1038
      %v1057 = vadd.f32 %v919, %v1041
      %v1058 = vadd.f32 %v920, %v1043
      %v1059 = vadd.f32 %v921, %v1046
      %v1060 = vadd.f32 %v922, %v1048
      %v1061 = vadd.f32 %v923, %v1051
      %v1062 = vadd.f32 %v924, %v1053
      %v1063 = vld [vmem:[%s928] sm:$0xf]
      %v1064 = vld [vmem:[%s928 + $0x4] sm:$0x1]
      %v1065 = vld [vmem:[%s928 + $0x8] sm:$0xf]
      %v1066 = vld [vmem:[%s928 + $0xc] sm:$0x1]
      %v1067 = vld [vmem:[%s928 + $0x10] sm:$0xf]
      %v1068 = vld [vmem:[%s928 + $0x14] sm:$0x1]
      %v1069 = vld [vmem:[%s928 + $0x18] sm:$0xf]
      %v1070 = vld [vmem:[%s928 + $0x1c] sm:$0x1]
      %v1071 = vld [vmem:[%s928 + $0x20] sm:$0xf]
      %v1072 = vld [vmem:[%s928 + $0x24] sm:$0x1]
      %v1073 = vld [vmem:[%s928 + $0x28] sm:$0xf]
      %v1074 = vld [vmem:[%s928 + $0x2c] sm:$0x1]
      %v1075 = vld [vmem:[%s928 + $0x30] sm:$0xf]
      %v1076 = vld [vmem:[%s928 + $0x34] sm:$0x1]
      %v1077 = vld [vmem:[%s928 + $0x38] sm:$0xf]
      %v1078 = vld [vmem:[%s928 + $0x3c] sm:$0x1]
      %v1080 = vshrl.u32 %v1063, 16
      %v1082 = vrot.slane %v1080, 4
      %v1083 = vshll.u32 %v1063, 16
      %v1085 = vrot.slane %v1083, 5
      %v1086 = vor.u32 %v1082, %v1085
      %v1087 = vrot.slane %v1086, 4
      %v1089 = vshll.u32 %v1064, 16
      %v1091 = vrot.slane %v1089, 5
      %v1092 = vsel %vm517, %v1087, %v1091
      %v1094 = vshrl.u32 %v1065, 16
      %v1096 = vrot.slane %v1094, 4
      %v1097 = vshll.u32 %v1065, 16
      %v1099 = vrot.slane %v1097, 5
      %v1100 = vor.u32 %v1096, %v1099
      %v1101 = vrot.slane %v1100, 4
      %v1103 = vshll.u32 %v1066, 16
      %v1105 = vrot.slane %v1103, 5
      %v1106 = vsel %vm517, %v1101, %v1105
      %v1108 = vshrl.u32 %v1067, 16
      %v1110 = vrot.slane %v1108, 4
      %v1111 = vshll.u32 %v1067, 16
      %v1113 = vrot.slane %v1111, 5
      %v1114 = vor.u32 %v1110, %v1113
      %v1115 = vrot.slane %v1114, 4
      %v1117 = vshll.u32 %v1068, 16
      %v1119 = vrot.slane %v1117, 5
      %v1120 = vsel %vm517, %v1115, %v1119
      %v1122 = vshrl.u32 %v1069, 16
      %v1124 = vrot.slane %v1122, 4
      %v1125 = vshll.u32 %v1069, 16
      %v1127 = vrot.slane %v1125, 5
      %v1128 = vor.u32 %v1124, %v1127
      %v1129 = vrot.slane %v1128, 4
      %v1131 = vshll.u32 %v1070, 16
      %v1133 = vrot.slane %v1131, 5
      %v1134 = vsel %vm517, %v1129, %v1133
      %v1136 = vshrl.u32 %v1071, 16
      %v1138 = vrot.slane %v1136, 4
      %v1139 = vshll.u32 %v1071, 16
      %v1141 = vrot.slane %v1139, 5
      %v1142 = vor.u32 %v1138, %v1141
      %v1143 = vrot.slane %v1142, 4
      %v1145 = vshll.u32 %v1072, 16
      %v1147 = vrot.slane %v1145, 5
      %v1148 = vsel %vm517, %v1143, %v1147
      %v1150 = vshrl.u32 %v1073, 16
      %v1152 = vrot.slane %v1150, 4
      %v1153 = vshll.u32 %v1073, 16
      %v1155 = vrot.slane %v1153, 5
      %v1156 = vor.u32 %v1152, %v1155
      %v1157 = vrot.slane %v1156, 4
      %v1159 = vshll.u32 %v1074, 16
      %v1161 = vrot.slane %v1159, 5
      %v1162 = vsel %vm517, %v1157, %v1161
      %v1164 = vshrl.u32 %v1075, 16
      %v1166 = vrot.slane %v1164, 4
      %v1167 = vshll.u32 %v1075, 16
      %v1169 = vrot.slane %v1167, 5
      %v1170 = vor.u32 %v1166, %v1169
      %v1171 = vrot.slane %v1170, 4
      %v1173 = vshll.u32 %v1076, 16
      %v1175 = vrot.slane %v1173, 5
      %v1176 = vsel %vm517, %v1171, %v1175
      %v1178 = vshrl.u32 %v1077, 16
      %v1180 = vrot.slane %v1178, 4
      %v1181 = vshll.u32 %v1077, 16
      %v1183 = vrot.slane %v1181, 5
      %v1184 = vor.u32 %v1180, %v1183
      %v1185 = vrot.slane %v1184, 4
      %v1187 = vshll.u32 %v1078, 16
      %v1189 = vrot.slane %v1187, 5
      %v1190 = vsel %vm517, %v1185, %v1189
      %s1199 = scalar_lea.vmem %s1, 256
      %v1200 = vld [vmem:[%s1199] sm:$0xf]
      %v1201 = vld [vmem:[%s1199 + $0x4] sm:$0xf]
      %v1202 = vld [vmem:[%s1199 + $0x8] sm:$0xf]
      %v1203 = vld [vmem:[%s1199 + $0xc] sm:$0xf]
      %v1204 = vld [vmem:[%s1199 + $0x10] sm:$0xf]
      %v1205 = vld [vmem:[%s1199 + $0x14] sm:$0xf]
      %v1206 = vld [vmem:[%s1199 + $0x18] sm:$0xf]
      %v1207 = vld [vmem:[%s1199 + $0x1c] sm:$0xf]
      %v1208 = vld [vmem:[%s1199 + $0x20] sm:$0xf]
      %v1209 = vld [vmem:[%s1199 + $0x24] sm:$0xf]
      %v1210 = vld [vmem:[%s1199 + $0x28] sm:$0xf]
      %v1211 = vld [vmem:[%s1199 + $0x2c] sm:$0xf]
      %v1212 = vld [vmem:[%s1199 + $0x30] sm:$0xf]
      %v1213 = vld [vmem:[%s1199 + $0x34] sm:$0xf]
      %v1214 = vld [vmem:[%s1199 + $0x38] sm:$0xf]
      %v1215 = vld [vmem:[%s1199 + $0x3c] sm:$0xf]
      %v1216 = vunpack.c.l.b16 %v1092
      %v1217 = vunpack.c.l.b16 %v1106
      %v1218 = vunpack.c.l.b16 %v1120
      %v1219 = vunpack.c.l.b16 %v1134
      %v1220 = vunpack.c.l.b16 %v1148
      %v1221 = vunpack.c.l.b16 %v1162
      %v1222 = vunpack.c.l.b16 %v1176
      %v1223 = vunpack.c.l.b16 %v1190
      %v1224 = vpack.c.b16 %v1217, %v1216
      %v1225 = vpack.c.b16 %v1219, %v1218
      %v1226 = vpack.c.b16 %v1221, %v1220
      %v1227 = vpack.c.b16 %v1223, %v1222
      %v1248 = vunpack.c.l.b16 %v1200
      %v1249 = vunpack.c.l.b16 %v1201
      %v1250 = vunpack.c.l.b16 %v1202
      %v1251 = vunpack.c.l.b16 %v1203
      %v1252 = vunpack.c.l.b16 %v1204
      %v1253 = vunpack.c.l.b16 %v1205
      %v1254 = vunpack.c.l.b16 %v1206
      %v1255 = vunpack.c.l.b16 %v1207
      %v1256 = vunpack.c.l.b16 %v1208
      %v1257 = vunpack.c.l.b16 %v1209
      %v1258 = vunpack.c.l.b16 %v1210
      %v1259 = vunpack.c.l.b16 %v1211
      %v1260 = vunpack.c.l.b16 %v1212
      %v1261 = vunpack.c.l.b16 %v1213
      %v1262 = vunpack.c.l.b16 %v1214
      %v1263 = vunpack.c.l.b16 %v1215
      %v1264 = vpack.c.b16 %v1249, %v1248
      %v1265 = vpack.c.b16 %v1251, %v1250
      %v1266 = vpack.c.b16 %v1253, %v1252
      %v1267 = vpack.c.b16 %v1255, %v1254
      %v1268 = vpack.c.b16 %v1257, %v1256
      %v1269 = vpack.c.b16 %v1259, %v1258
      %v1270 = vpack.c.b16 %v1261, %v1260
      %v1271 = vpack.c.b16 %v1263, %v1262
      %1280 = vmatpush.bf16.msra.mxu0 %v1271
      %1281 = vmatpush.bf16.msra.mxu0 %v1270
      %1282 = vmatpush.bf16.msra.mxu0 %v1269
      %1283 = vmatpush.bf16.msra.mxu0 %v1268
      %1284 = vmatpush.bf16.msra.mxu0 %v1267
      %1285 = vmatpush.bf16.msra.mxu0 %v1266
      %1286 = vmatpush.bf16.msra.mxu0 %v1265
      %1287 = vmatpush.bf16.msra.mxu0 %v1264
      %1288 = vmatmul.bf16.gmra.mxu0 %v1224
      %v1289 = vpop.f32.mrf.mxu0
      %v1290 = vadd.f32 0.0, %v1289
      %v1291 = vpop.f32.mrf.mxu0
      %v1292 = vadd.f32 0.0, %v1291
      %1293 = vmatmul.bf16.gmra.mxu0 %v1225
      %v1294 = vpop.f32.mrf.mxu0
      %v1295 = vadd.f32 0.0, %v1294
      %v1296 = vpop.f32.mrf.mxu0
      %v1297 = vadd.f32 0.0, %v1296
      %1298 = vmatmul.bf16.gmra.mxu0 %v1226
      %v1299 = vpop.f32.mrf.mxu0
      %v1300 = vadd.f32 0.0, %v1299
      %v1301 = vpop.f32.mrf.mxu0
      %v1302 = vadd.f32 0.0, %v1301
      %1303 = vmatmul.bf16.gmra.mxu0 %v1227
      %v1304 = vpop.f32.mrf.mxu0
      %v1305 = vadd.f32 0.0, %v1304
      %v1306 = vpop.f32.mrf.mxu0
      %v1307 = vadd.f32 0.0, %v1306
      %1308 = vdwg.mxu0
      %v1309 = vadd.f32 %v1055, %v1290
      %v1310 = vadd.f32 %v1056, %v1292
      %v1311 = vadd.f32 %v1057, %v1295
      %v1312 = vadd.f32 %v1058, %v1297
      %v1313 = vadd.f32 %v1059, %v1300
      %v1314 = vadd.f32 %v1060, %v1302
      %v1315 = vadd.f32 %v1061, %v1305
      %v1316 = vadd.f32 %v1062, %v1307
      %v1317 = vld [vmem:[%s928] sm:$0xe]
      %v1318 = vld [vmem:[%s928 + $0x8] sm:$0xe]
      %v1319 = vld [vmem:[%s928 + $0x10] sm:$0xe]
      %v1320 = vld [vmem:[%s928 + $0x18] sm:$0xe]
      %v1321 = vld [vmem:[%s928 + $0x20] sm:$0xe]
      %v1322 = vld [vmem:[%s928 + $0x28] sm:$0xe]
      %v1323 = vld [vmem:[%s928 + $0x30] sm:$0xe]
      %v1324 = vld [vmem:[%s928 + $0x38] sm:$0xe]
      %v1341 = vrot.slane %v1317, 5
      %v1342 = vrot.slane %v1341, 4
      %v1343 = vrot.slane %v1064, 5
      %v1344 = vsel %vm774, %v1342, %v1343
      %v1345 = vrot.slane %v1318, 5
      %v1346 = vrot.slane %v1345, 4
      %v1347 = vrot.slane %v1066, 5
      %v1348 = vsel %vm774, %v1346, %v1347
      %v1349 = vrot.slane %v1319, 5
      %v1350 = vrot.slane %v1349, 4
      %v1351 = vrot.slane %v1068, 5
      %v1352 = vsel %vm774, %v1350, %v1351
      %v1353 = vrot.slane %v1320, 5
      %v1354 = vrot.slane %v1353, 4
      %v1355 = vrot.slane %v1070, 5
      %v1356 = vsel %vm774, %v1354, %v1355
      %v1357 = vrot.slane %v1321, 5
      %v1358 = vrot.slane %v1357, 4
      %v1359 = vrot.slane %v1072, 5
      %v1360 = vsel %vm774, %v1358, %v1359
      %v1361 = vrot.slane %v1322, 5
      %v1362 = vrot.slane %v1361, 4
      %v1363 = vrot.slane %v1074, 5
      %v1364 = vsel %vm774, %v1362, %v1363
      %v1365 = vrot.slane %v1323, 5
      %v1366 = vrot.slane %v1365, 4
      %v1367 = vrot.slane %v1076, 5
      %v1368 = vsel %vm774, %v1366, %v1367
      %v1369 = vrot.slane %v1324, 5
      %v1370 = vrot.slane %v1369, 4
      %v1371 = vrot.slane %v1078, 5
      %v1372 = vsel %vm774, %v1370, %v1371
      %s1373 = scalar_lea.vmem %s1, 320
      %v1374 = vld [vmem:[%s1373] sm:$0xf]
      %v1375 = vld [vmem:[%s1373 + $0x4] sm:$0xf]
      %v1376 = vld [vmem:[%s1373 + $0x8] sm:$0xf]
      %v1377 = vld [vmem:[%s1373 + $0xc] sm:$0xf]
      %v1378 = vld [vmem:[%s1373 + $0x10] sm:$0xf]
      %v1379 = vld [vmem:[%s1373 + $0x14] sm:$0xf]
      %v1380 = vld [vmem:[%s1373 + $0x18] sm:$0xf]
      %v1381 = vld [vmem:[%s1373 + $0x1c] sm:$0xf]
      %v1382 = vld [vmem:[%s1373 + $0x20] sm:$0xf]
      %v1383 = vld [vmem:[%s1373 + $0x24] sm:$0xf]
      %v1384 = vld [vmem:[%s1373 + $0x28] sm:$0xf]
      %v1385 = vld [vmem:[%s1373 + $0x2c] sm:$0xf]
      %v1386 = vld [vmem:[%s1373 + $0x30] sm:$0xf]
      %v1387 = vld [vmem:[%s1373 + $0x34] sm:$0xf]
      %v1388 = vld [vmem:[%s1373 + $0x38] sm:$0xf]
      %v1389 = vld [vmem:[%s1373 + $0x3c] sm:$0xf]
      %v1390 = vunpack.c.l.b16 %v1344
      %v1391 = vunpack.c.l.b16 %v1348
      %v1392 = vunpack.c.l.b16 %v1352
      %v1393 = vunpack.c.l.b16 %v1356
      %v1394 = vunpack.c.l.b16 %v1360
      %v1395 = vunpack.c.l.b16 %v1364
      %v1396 = vunpack.c.l.b16 %v1368
      %v1397 = vunpack.c.l.b16 %v1372
      %v1398 = vpack.c.b16 %v1391, %v1390
      %v1399 = vpack.c.b16 %v1393, %v1392
      %v1400 = vpack.c.b16 %v1395, %v1394
      %v1401 = vpack.c.b16 %v1397, %v1396
      %v1422 = vunpack.c.l.b16 %v1374
      %v1423 = vunpack.c.l.b16 %v1375
      %v1424 = vunpack.c.l.b16 %v1376
      %v1425 = vunpack.c.l.b16 %v1377
      %v1426 = vunpack.c.l.b16 %v1378
      %v1427 = vunpack.c.l.b16 %v1379
      %v1428 = vunpack.c.l.b16 %v1380
      %v1429 = vunpack.c.l.b16 %v1381
      %v1430 = vunpack.c.l.b16 %v1382
      %v1431 = vunpack.c.l.b16 %v1383
      %v1432 = vunpack.c.l.b16 %v1384
      %v1433 = vunpack.c.l.b16 %v1385
      %v1434 = vunpack.c.l.b16 %v1386
      %v1435 = vunpack.c.l.b16 %v1387
      %v1436 = vunpack.c.l.b16 %v1388
      %v1437 = vunpack.c.l.b16 %v1389
      %v1438 = vpack.c.b16 %v1423, %v1422
      %v1439 = vpack.c.b16 %v1425, %v1424
      %v1440 = vpack.c.b16 %v1427, %v1426
      %v1441 = vpack.c.b16 %v1429, %v1428
      %v1442 = vpack.c.b16 %v1431, %v1430
      %v1443 = vpack.c.b16 %v1433, %v1432
      %v1444 = vpack.c.b16 %v1435, %v1434
      %v1445 = vpack.c.b16 %v1437, %v1436
      %1454 = vmatpush.bf16.msra.mxu0 %v1445
      %1455 = vmatpush.bf16.msra.mxu0 %v1444
      %1456 = vmatpush.bf16.msra.mxu0 %v1443
      %1457 = vmatpush.bf16.msra.mxu0 %v1442
      %1458 = vmatpush.bf16.msra.mxu0 %v1441
      %1459 = vmatpush.bf16.msra.mxu0 %v1440
      %1460 = vmatpush.bf16.msra.mxu0 %v1439
      %1461 = vmatpush.bf16.msra.mxu0 %v1438
      %1462 = vmatmul.bf16.gmra.mxu0 %v1398
      %v1463 = vpop.f32.mrf.mxu0
      %v1464 = vadd.f32 0.0, %v1463
      %v1465 = vpop.f32.mrf.mxu0
      %v1466 = vadd.f32 0.0, %v1465
      %1467 = vmatmul.bf16.gmra.mxu0 %v1399
      %v1468 = vpop.f32.mrf.mxu0
      %v1469 = vadd.f32 0.0, %v1468
      %v1470 = vpop.f32.mrf.mxu0
      %v1471 = vadd.f32 0.0, %v1470
      %1472 = vmatmul.bf16.gmra.mxu0 %v1400
      %v1473 = vpop.f32.mrf.mxu0
      %v1474 = vadd.f32 0.0, %v1473
      %v1475 = vpop.f32.mrf.mxu0
      %v1476 = vadd.f32 0.0, %v1475
      %1477 = vmatmul.bf16.gmra.mxu0 %v1401
      %v1478 = vpop.f32.mrf.mxu0
      %v1479 = vadd.f32 0.0, %v1478
      %v1480 = vpop.f32.mrf.mxu0
      %v1481 = vadd.f32 0.0, %v1480
      %1482 = vdwg.mxu0
      %v1483 = vadd.f32 %v1309, %v1464
      %v1484 = vadd.f32 %v1310, %v1466
      %v1485 = vadd.f32 %v1311, %v1469
      %v1486 = vadd.f32 %v1312, %v1471
      %v1487 = vadd.f32 %v1313, %v1474
      %v1488 = vadd.f32 %v1314, %v1476
      %v1489 = vadd.f32 %v1315, %v1479
      %v1490 = vadd.f32 %v1316, %v1481
      %s1491 = sadd.s32 %s358, 2
      %s1492 = smul.u32 %s1491, 2
      %s1493 = smul.addr %s1492, 4
      %s1494 = scalar_lea.vmem [#allocation2], %s1493
      %v1495 = vld [vmem:[%s1494] sm:$0xf]
      %v1496 = vld [vmem:[%s1494 + $0x8] sm:$0xf]
      %v1497 = vld [vmem:[%s1494 + $0x10] sm:$0xf]
      %v1498 = vld [vmem:[%s1494 + $0x18] sm:$0xf]
      %v1499 = vld [vmem:[%s1494 + $0x20] sm:$0xf]
      %v1500 = vld [vmem:[%s1494 + $0x28] sm:$0xf]
      %v1501 = vld [vmem:[%s1494 + $0x30] sm:$0xf]
      %v1502 = vld [vmem:[%s1494 + $0x38] sm:$0xf]
      %s1503 = scalar_lea.vmem %s1, 384
      %v1504 = vld [vmem:[%s1503] sm:$0xf]
      %v1505 = vld [vmem:[%s1503 + $0x4] sm:$0xf]
      %v1506 = vld [vmem:[%s1503 + $0x8] sm:$0xf]
      %v1507 = vld [vmem:[%s1503 + $0xc] sm:$0xf]
      %v1508 = vld [vmem:[%s1503 + $0x10] sm:$0xf]
      %v1509 = vld [vmem:[%s1503 + $0x14] sm:$0xf]
      %v1510 = vld [vmem:[%s1503 + $0x18] sm:$0xf]
      %v1511 = vld [vmem:[%s1503 + $0x1c] sm:$0xf]
      %v1512 = vld [vmem:[%s1503 + $0x20] sm:$0xf]
      %v1513 = vld [vmem:[%s1503 + $0x24] sm:$0xf]
      %v1514 = vld [vmem:[%s1503 + $0x28] sm:$0xf]
      %v1515 = vld [vmem:[%s1503 + $0x2c] sm:$0xf]
      %v1516 = vld [vmem:[%s1503 + $0x30] sm:$0xf]
      %v1517 = vld [vmem:[%s1503 + $0x34] sm:$0xf]
      %v1518 = vld [vmem:[%s1503 + $0x38] sm:$0xf]
      %v1519 = vld [vmem:[%s1503 + $0x3c] sm:$0xf]
      %v1528 = vunpack.c.l.b16 %v1495
      %v1529 = vunpack.c.l.b16 %v1496
      %v1530 = vunpack.c.l.b16 %v1497
      %v1531 = vunpack.c.l.b16 %v1498
      %v1532 = vunpack.c.l.b16 %v1499
      %v1533 = vunpack.c.l.b16 %v1500
      %v1534 = vunpack.c.l.b16 %v1501
      %v1535 = vunpack.c.l.b16 %v1502
      %v1536 = vpack.c.b16 %v1529, %v1528
      %v1537 = vpack.c.b16 %v1531, %v1530
      %v1538 = vpack.c.b16 %v1533, %v1532
      %v1539 = vpack.c.b16 %v1535, %v1534
      %v1560 = vunpack.c.l.b16 %v1504
      %v1561 = vunpack.c.l.b16 %v1505
      %v1562 = vunpack.c.l.b16 %v1506
      %v1563 = vunpack.c.l.b16 %v1507
      %v1564 = vunpack.c.l.b16 %v1508
      %v1565 = vunpack.c.l.b16 %v1509
      %v1566 = vunpack.c.l.b16 %v1510
      %v1567 = vunpack.c.l.b16 %v1511
      %v1568 = vunpack.c.l.b16 %v1512
      %v1569 = vunpack.c.l.b16 %v1513
      %v1570 = vunpack.c.l.b16 %v1514
      %v1571 = vunpack.c.l.b16 %v1515
      %v1572 = vunpack.c.l.b16 %v1516
      %v1573 = vunpack.c.l.b16 %v1517
      %v1574 = vunpack.c.l.b16 %v1518
      %v1575 = vunpack.c.l.b16 %v1519
      %v1576 = vpack.c.b16 %v1561, %v1560
      %v1577 = vpack.c.b16 %v1563, %v1562
      %v1578 = vpack.c.b16 %v1565, %v1564
      %v1579 = vpack.c.b16 %v1567, %v1566
      %v1580 = vpack.c.b16 %v1569, %v1568
      %v1581 = vpack.c.b16 %v1571, %v1570
      %v1582 = vpack.c.b16 %v1573, %v1572
      %v1583 = vpack.c.b16 %v1575, %v1574
      %1592 = vmatpush.bf16.msra.mxu0 %v1583
      %1593 = vmatpush.bf16.msra.mxu0 %v1582
      %1594 = vmatpush.bf16.msra.mxu0 %v1581
      %1595 = vmatpush.bf16.msra.mxu0 %v1580
      %1596 = vmatpush.bf16.msra.mxu0 %v1579
      %1597 = vmatpush.bf16.msra.mxu0 %v1578
      %1598 = vmatpush.bf16.msra.mxu0 %v1577
      %1599 = vmatpush.bf16.msra.mxu0 %v1576
      %1600 = vmatmul.bf16.gmra.mxu0 %v1536
      %v1601 = vpop.f32.mrf.mxu0
      %v1602 = vadd.f32 0.0, %v1601
      %v1603 = vpop.f32.mrf.mxu0
      %v1604 = vadd.f32 0.0, %v1603
      %1605 = vmatmul.bf16.gmra.mxu0 %v1537
      %v1606 = vpop.f32.mrf.mxu0
      %v1607 = vadd.f32 0.0, %v1606
      %v1608 = vpop.f32.mrf.mxu0
      %v1609 = vadd.f32 0.0, %v1608
      %1610 = vmatmul.bf16.gmra.mxu0 %v1538
      %v1611 = vpop.f32.mrf.mxu0
      %v1612 = vadd.f32 0.0, %v1611
      %v1613 = vpop.f32.mrf.mxu0
      %v1614 = vadd.f32 0.0, %v1613
      %1615 = vmatmul.bf16.gmra.mxu0 %v1539
      %v1616 = vpop.f32.mrf.mxu0
      %v1617 = vadd.f32 0.0, %v1616
      %v1618 = vpop.f32.mrf.mxu0
      %v1619 = vadd.f32 0.0, %v1618
      %1620 = vdwg.mxu0
      %v1621 = vadd.f32 %v1483, %v1602
      %v1622 = vadd.f32 %v1484, %v1604
      %v1623 = vadd.f32 %v1485, %v1607
      %v1624 = vadd.f32 %v1486, %v1609
      %v1625 = vadd.f32 %v1487, %v1612
      %v1626 = vadd.f32 %v1488, %v1614
      %v1627 = vadd.f32 %v1489, %v1617
      %v1628 = vadd.f32 %v1490, %v1619
      %v1629 = vld [vmem:[%s1494] sm:$0xf]
      %v1630 = vld [vmem:[%s1494 + $0x4] sm:$0x1]
      %v1631 = vld [vmem:[%s1494 + $0x8] sm:$0xf]
      %v1632 = vld [vmem:[%s1494 + $0xc] sm:$0x1]
      %v1633 = vld [vmem:[%s1494 + $0x10] sm:$0xf]
      %v1634 = vld [vmem:[%s1494 + $0x14] sm:$0x1]
      %v1635 = vld [vmem:[%s1494 + $0x18] sm:$0xf]
      %v1636 = vld [vmem:[%s1494 + $0x1c] sm:$0x1]
      %v1637 = vld [vmem:[%s1494 + $0x20] sm:$0xf]
      %v1638 = vld [vmem:[%s1494 + $0x24] sm:$0x1]
      %v1639 = vld [vmem:[%s1494 + $0x28] sm:$0xf]
      %v1640 = vld [vmem:[%s1494 + $0x2c] sm:$0x1]
      %v1641 = vld [vmem:[%s1494 + $0x30] sm:$0xf]
      %v1642 = vld [vmem:[%s1494 + $0x34] sm:$0x1]
      %v1643 = vld [vmem:[%s1494 + $0x38] sm:$0xf]
      %v1644 = vld [vmem:[%s1494 + $0x3c] sm:$0x1]
      %v1646 = vshrl.u32 %v1629, 16
      %v1648 = vrot.slane %v1646, 4
      %v1649 = vshll.u32 %v1629, 16
      %v1651 = vrot.slane %v1649, 5
      %v1652 = vor.u32 %v1648, %v1651
      %v1653 = vrot.slane %v1652, 4
      %v1655 = vshll.u32 %v1630, 16
      %v1657 = vrot.slane %v1655, 5
      %v1658 = vsel %vm517, %v1653, %v1657
      %v1660 = vshrl.u32 %v1631, 16
      %v1662 = vrot.slane %v1660, 4
      %v1663 = vshll.u32 %v1631, 16
      %v1665 = vrot.slane %v1663, 5
      %v1666 = vor.u32 %v1662, %v1665
      %v1667 = vrot.slane %v1666, 4
      %v1669 = vshll.u32 %v1632, 16
      %v1671 = vrot.slane %v1669, 5
      %v1672 = vsel %vm517, %v1667, %v1671
      %v1674 = vshrl.u32 %v1633, 16
      %v1676 = vrot.slane %v1674, 4
      %v1677 = vshll.u32 %v1633, 16
      %v1679 = vrot.slane %v1677, 5
      %v1680 = vor.u32 %v1676, %v1679
      %v1681 = vrot.slane %v1680, 4
      %v1683 = vshll.u32 %v1634, 16
      %v1685 = vrot.slane %v1683, 5
      %v1686 = vsel %vm517, %v1681, %v1685
      %v1688 = vshrl.u32 %v1635, 16
      %v1690 = vrot.slane %v1688, 4
      %v1691 = vshll.u32 %v1635, 16
      %v1693 = vrot.slane %v1691, 5
      %v1694 = vor.u32 %v1690, %v1693
      %v1695 = vrot.slane %v1694, 4
      %v1697 = vshll.u32 %v1636, 16
      %v1699 = vrot.slane %v1697, 5
      %v1700 = vsel %vm517, %v1695, %v1699
      %v1702 = vshrl.u32 %v1637, 16
      %v1704 = vrot.slane %v1702, 4
      %v1705 = vshll.u32 %v1637, 16
      %v1707 = vrot.slane %v1705, 5
      %v1708 = vor.u32 %v1704, %v1707
      %v1709 = vrot.slane %v1708, 4
      %v1711 = vshll.u32 %v1638, 16
      %v1713 = vrot.slane %v1711, 5
      %v1714 = vsel %vm517, %v1709, %v1713
      %v1716 = vshrl.u32 %v1639, 16
      %v1718 = vrot.slane %v1716, 4
      %v1719 = vshll.u32 %v1639, 16
      %v1721 = vrot.slane %v1719, 5
      %v1722 = vor.u32 %v1718, %v1721
      %v1723 = vrot.slane %v1722, 4
      %v1725 = vshll.u32 %v1640, 16
      %v1727 = vrot.slane %v1725, 5
      %v1728 = vsel %vm517, %v1723, %v1727
      %v1730 = vshrl.u32 %v1641, 16
      %v1732 = vrot.slane %v1730, 4
      %v1733 = vshll.u32 %v1641, 16
      %v1735 = vrot.slane %v1733, 5
      %v1736 = vor.u32 %v1732, %v1735
      %v1737 = vrot.slane %v1736, 4
      %v1739 = vshll.u32 %v1642, 16
      %v1741 = vrot.slane %v1739, 5
      %v1742 = vsel %vm517, %v1737, %v1741
      %v1744 = vshrl.u32 %v1643, 16
      %v1746 = vrot.slane %v1744, 4
      %v1747 = vshll.u32 %v1643, 16
      %v1749 = vrot.slane %v1747, 5
      %v1750 = vor.u32 %v1746, %v1749
      %v1751 = vrot.slane %v1750, 4
      %v1753 = vshll.u32 %v1644, 16
      %v1755 = vrot.slane %v1753, 5
      %v1756 = vsel %vm517, %v1751, %v1755
      %s1757 = scalar_lea.vmem %s1, 448
      %v1758 = vld [vmem:[%s1757] sm:$0xf]
      %v1759 = vld [vmem:[%s1757 + $0x4] sm:$0xf]
      %v1760 = vld [vmem:[%s1757 + $0x8] sm:$0xf]
      %v1761 = vld [vmem:[%s1757 + $0xc] sm:$0xf]
      %v1762 = vld [vmem:[%s1757 + $0x10] sm:$0xf]
      %v1763 = vld [vmem:[%s1757 + $0x14] sm:$0xf]
      %v1764 = vld [vmem:[%s1757 + $0x18] sm:$0xf]
      %v1765 = vld [vmem:[%s1757 + $0x1c] sm:$0xf]
      %v1766 = vld [vmem:[%s1757 + $0x20] sm:$0xf]
      %v1767 = vld [vmem:[%s1757 + $0x24] sm:$0xf]
      %v1768 = vld [vmem:[%s1757 + $0x28] sm:$0xf]
      %v1769 = vld [vmem:[%s1757 + $0x2c] sm:$0xf]
      %v1770 = vld [vmem:[%s1757 + $0x30] sm:$0xf]
      %v1771 = vld [vmem:[%s1757 + $0x34] sm:$0xf]
      %v1772 = vld [vmem:[%s1757 + $0x38] sm:$0xf]
      %v1773 = vld [vmem:[%s1757 + $0x3c] sm:$0xf]
      %v1774 = vunpack.c.l.b16 %v1658
      %v1775 = vunpack.c.l.b16 %v1672
      %v1776 = vunpack.c.l.b16 %v1686
      %v1777 = vunpack.c.l.b16 %v1700
      %v1778 = vunpack.c.l.b16 %v1714
      %v1779 = vunpack.c.l.b16 %v1728
      %v1780 = vunpack.c.l.b16 %v1742
      %v1781 = vunpack.c.l.b16 %v1756
      %v1782 = vpack.c.b16 %v1775, %v1774
      %v1783 = vpack.c.b16 %v1777, %v1776
      %v1784 = vpack.c.b16 %v1779, %v1778
      %v1785 = vpack.c.b16 %v1781, %v1780
      %v1806 = vunpack.c.l.b16 %v1758
      %v1807 = vunpack.c.l.b16 %v1759
      %v1808 = vunpack.c.l.b16 %v1760
      %v1809 = vunpack.c.l.b16 %v1761
      %v1810 = vunpack.c.l.b16 %v1762
      %v1811 = vunpack.c.l.b16 %v1763
      %v1812 = vunpack.c.l.b16 %v1764
      %v1813 = vunpack.c.l.b16 %v1765
      %v1814 = vunpack.c.l.b16 %v1766
      %v1815 = vunpack.c.l.b16 %v1767
      %v1816 = vunpack.c.l.b16 %v1768
      %v1817 = vunpack.c.l.b16 %v1769
      %v1818 = vunpack.c.l.b16 %v1770
      %v1819 = vunpack.c.l.b16 %v1771
      %v1820 = vunpack.c.l.b16 %v1772
      %v1821 = vunpack.c.l.b16 %v1773
      %v1822 = vpack.c.b16 %v1807, %v1806
      %v1823 = vpack.c.b16 %v1809, %v1808
      %v1824 = vpack.c.b16 %v1811, %v1810
      %v1825 = vpack.c.b16 %v1813, %v1812
      %v1826 = vpack.c.b16 %v1815, %v1814
      %v1827 = vpack.c.b16 %v1817, %v1816
      %v1828 = vpack.c.b16 %v1819, %v1818
      %v1829 = vpack.c.b16 %v1821, %v1820
      %1838 = vmatpush.bf16.msra.mxu0 %v1829
      %1839 = vmatpush.bf16.msra.mxu0 %v1828
      %1840 = vmatpush.bf16.msra.mxu0 %v1827
      %1841 = vmatpush.bf16.msra.mxu0 %v1826
      %1842 = vmatpush.bf16.msra.mxu0 %v1825
      %1843 = vmatpush.bf16.msra.mxu0 %v1824
      %1844 = vmatpush.bf16.msra.mxu0 %v1823
      %1845 = vmatpush.bf16.msra.mxu0 %v1822
      %1846 = vmatmul.bf16.gmra.mxu0 %v1782
      %v1847 = vpop.f32.mrf.mxu0
      %v1848 = vadd.f32 0.0, %v1847
      %v1849 = vpop.f32.mrf.mxu0
      %v1850 = vadd.f32 0.0, %v1849
      %1851 = vmatmul.bf16.gmra.mxu0 %v1783
      %v1852 = vpop.f32.mrf.mxu0
      %v1853 = vadd.f32 0.0, %v1852
      %v1854 = vpop.f32.mrf.mxu0
      %v1855 = vadd.f32 0.0, %v1854
      %1856 = vmatmul.bf16.gmra.mxu0 %v1784
      %v1857 = vpop.f32.mrf.mxu0
      %v1858 = vadd.f32 0.0, %v1857
      %v1859 = vpop.f32.mrf.mxu0
      %v1860 = vadd.f32 0.0, %v1859
      %1861 = vmatmul.bf16.gmra.mxu0 %v1785
      %v1862 = vpop.f32.mrf.mxu0
      %v1863 = vadd.f32 0.0, %v1862
      %v1864 = vpop.f32.mrf.mxu0
      %v1865 = vadd.f32 0.0, %v1864
      %1866 = vdwg.mxu0
      %v1867 = vadd.f32 %v1621, %v1848
      %v1868 = vadd.f32 %v1622, %v1850
      %v1869 = vadd.f32 %v1623, %v1853
      %v1870 = vadd.f32 %v1624, %v1855
      %v1871 = vadd.f32 %v1625, %v1858
      %v1872 = vadd.f32 %v1626, %v1860
      %v1873 = vadd.f32 %v1627, %v1863
      %v1874 = vadd.f32 %v1628, %v1865
      %v1875 = vld [vmem:[%s1494] sm:$0xe]
      %v1876 = vld [vmem:[%s1494 + $0x8] sm:$0xe]
      %v1877 = vld [vmem:[%s1494 + $0x10] sm:$0xe]
      %v1878 = vld [vmem:[%s1494 + $0x18] sm:$0xe]
      %v1879 = vld [vmem:[%s1494 + $0x20] sm:$0xe]
      %v1880 = vld [vmem:[%s1494 + $0x28] sm:$0xe]
      %v1881 = vld [vmem:[%s1494 + $0x30] sm:$0xe]
      %v1882 = vld [vmem:[%s1494 + $0x38] sm:$0xe]
      %v1899 = vrot.slane %v1875, 5
      %v1900 = vrot.slane %v1899, 4
      %v1901 = vrot.slane %v1630, 5
      %v1902 = vsel %vm774, %v1900, %v1901
      %v1903 = vrot.slane %v1876, 5
      %v1904 = vrot.slane %v1903, 4
      %v1905 = vrot.slane %v1632, 5
      %v1906 = vsel %vm774, %v1904, %v1905
      %v1907 = vrot.slane %v1877, 5
      %v1908 = vrot.slane %v1907, 4
      %v1909 = vrot.slane %v1634, 5
      %v1910 = vsel %vm774, %v1908, %v1909
      %v1911 = vrot.slane %v1878, 5
      %v1912 = vrot.slane %v1911, 4
      %v1913 = vrot.slane %v1636, 5
      %v1914 = vsel %vm774, %v1912, %v1913
      %v1915 = vrot.slane %v1879, 5
      %v1916 = vrot.slane %v1915, 4
      %v1917 = vrot.slane %v1638, 5
      %v1918 = vsel %vm774, %v1916, %v1917
      %v1919 = vrot.slane %v1880, 5
      %v1920 = vrot.slane %v1919, 4
      %v1921 = vrot.slane %v1640, 5
      %v1922 = vsel %vm774, %v1920, %v1921
      %v1923 = vrot.slane %v1881, 5
      %v1924 = vrot.slane %v1923, 4
      %v1925 = vrot.slane %v1642, 5
      %v1926 = vsel %vm774, %v1924, %v1925
      %v1927 = vrot.slane %v1882, 5
      %v1928 = vrot.slane %v1927, 4
      %v1929 = vrot.slane %v1644, 5
      %v1930 = vsel %vm774, %v1928, %v1929
      %s1931 = scalar_lea.vmem %s1, 512
      %v1932 = vld [vmem:[%s1931] sm:$0xf]
      %v1933 = vld [vmem:[%s1931 + $0x4] sm:$0xf]
      %v1934 = vld [vmem:[%s1931 + $0x8] sm:$0xf]
      %v1935 = vld [vmem:[%s1931 + $0xc] sm:$0xf]
      %v1936 = vld [vmem:[%s1931 + $0x10] sm:$0xf]
      %v1937 = vld [vmem:[%s1931 + $0x14] sm:$0xf]
      %v1938 = vld [vmem:[%s1931 + $0x18] sm:$0xf]
      %v1939 = vld [vmem:[%s1931 + $0x1c] sm:$0xf]
      %v1940 = vld [vmem:[%s1931 + $0x20] sm:$0xf]
      %v1941 = vld [vmem:[%s1931 + $0x24] sm:$0xf]
      %v1942 = vld [vmem:[%s1931 + $0x28] sm:$0xf]
      %v1943 = vld [vmem:[%s1931 + $0x2c] sm:$0xf]
      %v1944 = vld [vmem:[%s1931 + $0x30] sm:$0xf]
      %v1945 = vld [vmem:[%s1931 + $0x34] sm:$0xf]
      %v1946 = vld [vmem:[%s1931 + $0x38] sm:$0xf]
      %v1947 = vld [vmem:[%s1931 + $0x3c] sm:$0xf]
      %v1948 = vunpack.c.l.b16 %v1902
      %v1949 = vunpack.c.l.b16 %v1906
      %v1950 = vunpack.c.l.b16 %v1910
      %v1951 = vunpack.c.l.b16 %v1914
      %v1952 = vunpack.c.l.b16 %v1918
      %v1953 = vunpack.c.l.b16 %v1922
      %v1954 = vunpack.c.l.b16 %v1926
      %v1955 = vunpack.c.l.b16 %v1930
      %v1956 = vpack.c.b16 %v1949, %v1948
      %v1957 = vpack.c.b16 %v1951, %v1950
      %v1958 = vpack.c.b16 %v1953, %v1952
      %v1959 = vpack.c.b16 %v1955, %v1954
      %v1980 = vunpack.c.l.b16 %v1932
      %v1981 = vunpack.c.l.b16 %v1933
      %v1982 = vunpack.c.l.b16 %v1934
      %v1983 = vunpack.c.l.b16 %v1935
      %v1984 = vunpack.c.l.b16 %v1936
      %v1985 = vunpack.c.l.b16 %v1937
      %v1986 = vunpack.c.l.b16 %v1938
      %v1987 = vunpack.c.l.b16 %v1939
      %v1988 = vunpack.c.l.b16 %v1940
      %v1989 = vunpack.c.l.b16 %v1941
      %v1990 = vunpack.c.l.b16 %v1942
      %v1991 = vunpack.c.l.b16 %v1943
      %v1992 = vunpack.c.l.b16 %v1944
      %v1993 = vunpack.c.l.b16 %v1945
      %v1994 = vunpack.c.l.b16 %v1946
      %v1995 = vunpack.c.l.b16 %v1947
      %v1996 = vpack.c.b16 %v1981, %v1980
      %v1997 = vpack.c.b16 %v1983, %v1982
      %v1998 = vpack.c.b16 %v1985, %v1984
      %v1999 = vpack.c.b16 %v1987, %v1986
      %v2000 = vpack.c.b16 %v1989, %v1988
      %v2001 = vpack.c.b16 %v1991, %v1990
      %v2002 = vpack.c.b16 %v1993, %v1992
      %v2003 = vpack.c.b16 %v1995, %v1994
      %2012 = vmatpush.bf16.msra.mxu0 %v2003
      %2013 = vmatpush.bf16.msra.mxu0 %v2002
      %2014 = vmatpush.bf16.msra.mxu0 %v2001
      %2015 = vmatpush.bf16.msra.mxu0 %v2000
      %2016 = vmatpush.bf16.msra.mxu0 %v1999
      %2017 = vmatpush.bf16.msra.mxu0 %v1998
      %2018 = vmatpush.bf16.msra.mxu0 %v1997
      %2019 = vmatpush.bf16.msra.mxu0 %v1996
      %2020 = vmatmul.bf16.gmra.mxu0 %v1956
      %v2021 = vpop.f32.mrf.mxu0
      %v2022 = vadd.f32 0.0, %v2021
      %v2023 = vpop.f32.mrf.mxu0
      %v2024 = vadd.f32 0.0, %v2023
      %2025 = vmatmul.bf16.gmra.mxu0 %v1957
      %v2026 = vpop.f32.mrf.mxu0
      %v2027 = vadd.f32 0.0, %v2026
      %v2028 = vpop.f32.mrf.mxu0
      %v2029 = vadd.f32 0.0, %v2028
      %2030 = vmatmul.bf16.gmra.mxu0 %v1958
      %v2031 = vpop.f32.mrf.mxu0
      %v2032 = vadd.f32 0.0, %v2031
      %v2033 = vpop.f32.mrf.mxu0
      %v2034 = vadd.f32 0.0, %v2033
      %2035 = vmatmul.bf16.gmra.mxu0 %v1959
      %v2036 = vpop.f32.mrf.mxu0
      %v2037 = vadd.f32 0.0, %v2036
      %v2038 = vpop.f32.mrf.mxu0
      %v2039 = vadd.f32 0.0, %v2038
      %2040 = vdwg.mxu0
      %v2041 = vadd.f32 %v1867, %v2022
      %v2042 = vadd.f32 %v1868, %v2024
      %v2043 = vadd.f32 %v1869, %v2027
      %v2044 = vadd.f32 %v1870, %v2029
      %v2045 = vadd.f32 %v1871, %v2032
      %v2046 = vadd.f32 %v1872, %v2034
      %v2047 = vadd.f32 %v1873, %v2037
      %v2048 = vadd.f32 %v1874, %v2039
      %v2049 = vmul.f32 %v2041, 0.5
      %v2050 = vmul.f32 %v2042, 0.5
      %v2051 = vmul.f32 %v2043, 0.5
      %v2052 = vmul.f32 %v2044, 0.5
      %v2053 = vmul.f32 %v2045, 0.5
      %v2054 = vmul.f32 %v2046, 0.5
      %v2055 = vmul.f32 %v2047, 0.5
      %v2056 = vmul.f32 %v2048, 0.5
      %v2057 = vtanh.pop %v2049
      %v2058 = vtanh.pop %v2050
      %v2059 = vtanh.pop %v2051
      %v2060 = vtanh.pop %v2052
      %v2061 = vtanh.pop %v2053
      %v2062 = vtanh.pop %v2054
      %v2063 = vtanh.pop %v2055
      %v2064 = vtanh.pop %v2056
      %v2065 = vadd.f32 %v2057, 1.0
      %v2066 = vadd.f32 %v2058, 1.0
      %v2067 = vadd.f32 %v2059, 1.0
      %v2068 = vadd.f32 %v2060, 1.0
      %v2069 = vadd.f32 %v2061, 1.0
      %v2070 = vadd.f32 %v2062, 1.0
      %v2071 = vadd.f32 %v2063, 1.0
      %v2072 = vadd.f32 %v2064, 1.0
      %v2073 = vmul.f32 %v2065, 0.5
      %v2074 = vmul.f32 %v2066, 0.5
      %v2075 = vmul.f32 %v2067, 0.5
      %v2076 = vmul.f32 %v2068, 0.5
      %v2077 = vmul.f32 %v2069, 0.5
      %v2078 = vmul.f32 %v2070, 0.5
      %v2079 = vmul.f32 %v2071, 0.5
      %v2080 = vmul.f32 %v2072, 0.5
      %v2081 = vmul.f32 %v2041, %v2073
      %v2082 = vmul.f32 %v2042, %v2074
      %v2083 = vmul.f32 %v2043, %v2075
      %v2084 = vmul.f32 %v2044, %v2076
      %v2085 = vmul.f32 %v2045, %v2077
      %v2086 = vmul.f32 %v2046, %v2078
      %v2087 = vmul.f32 %v2047, %v2079
      %v2088 = vmul.f32 %v2048, %v2080
      %v2089 = vunpack.c.l.bf16 %v1092
      %v2090 = vunpack.c.l.bf16 %v1106
      %v2091 = vunpack.c.l.bf16 %v1120
      %v2092 = vunpack.c.l.bf16 %v1134
      %v2093 = vunpack.c.l.bf16 %v1148
      %v2094 = vunpack.c.l.bf16 %v1162
      %v2095 = vunpack.c.l.bf16 %v1176
      %v2096 = vunpack.c.l.bf16 %v1190
      %v2097 = vadd.f32 %v2081, %v2089
      %v2098 = vadd.f32 %v2082, %v2090
      %v2099 = vadd.f32 %v2083, %v2091
      %v2100 = vadd.f32 %v2084, %v2092
      %v2101 = vadd.f32 %v2085, %v2093
      %v2102 = vadd.f32 %v2086, %v2094
      %v2103 = vadd.f32 %v2087, %v2095
      %v2104 = vadd.f32 %v2088, %v2096
      %v2105 = vpack.c.bf16 %v2097, %v2097
      %v2106 = vpack.c.bf16 %v2098, %v2098
      %v2107 = vpack.c.bf16 %v2099, %v2099
      %v2108 = vpack.c.bf16 %v2100, %v2100
      %v2109 = vpack.c.bf16 %v2101, %v2101
      %v2110 = vpack.c.bf16 %v2102, %v2102
      %v2111 = vpack.c.bf16 %v2103, %v2103
      %v2112 = vpack.c.bf16 %v2104, %v2104
      %2113 = vst [vmem:[%s192] sm:$0xf] %v2105
      %2114 = vst [vmem:[%s192 + $0x4] sm:$0xf] %v2106
      %2115 = vst [vmem:[%s192 + $0x8] sm:$0xf] %v2107
      %2116 = vst [vmem:[%s192 + $0xc] sm:$0xf] %v2108
      %2117 = vst [vmem:[%s192 + $0x10] sm:$0xf] %v2109
      %2118 = vst [vmem:[%s192 + $0x14] sm:$0xf] %v2110
      %2119 = vst [vmem:[%s192 + $0x18] sm:$0xf] %v2111
      %2120 = vst [vmem:[%s192 + $0x1c] sm:$0xf] %v2112
      %s2121 = smul.u32 8, %s19
      %p2122 = scmp.lt.s32.totalorder %s18, 1
      %s2123 = scalar_select %p2122, %s18, 1
      %p2124 = scmp.lt.s32.totalorder %s2121, 7
      %s2125 = scalar_select %p2124, %s2121, 7
      %s2126 = smul.addr %s2123, 8
      %s2127 = sadd.s32 %s2125, %s2126
      %s2128 = smul.addr %s2127, 4
      %s2129 = scalar_lea.vmem %s3, %s2128
      // Predicated region
      $region33: #{timm_model_forward.5} parent=31 // pred_check
        %p2130 = pneg %p114
      $region34: #{timm_model_forward.5} parent=31 // pred_check_branch
        %2132 = sbr.rel (%p2130) target = $region36
      $region35: #{timm_model_forward.5} parent=31 // pred_region
        %s2133 = smul.u32 8, %s19
      $region36: #{timm_model_forward.5} parent=31 // pred_fallthru
        _
    $region32: #{timm_model_forward.5} parent=5 // pred_fallthru
      _
    %p2134 = scmp.le.s32.totalorder 2, %s9
    // Predicated region
    $region37: #{timm_model_forward.5} parent=5 // pred_check
      %p2135 = pneg %p2134
    $region38: #{timm_model_forward.5} parent=5 // pred_check_branch
      %2137 = sbr.rel (%p2135) target = $region40
    $region39: #{timm_model_forward.5} parent=5 // pred_region
      %s2138 = ssub.s32 %s9, 2
      // Predicated region
      $region41: #{timm_model_forward.5} parent=39 // pred_check
        %p2139 = pneg %p120
      $region42: #{timm_model_forward.5} parent=39 // pred_check_branch
        %2141 = sbr.rel (%p2139) target = $region44
      $region43: #{timm_model_forward.5} parent=39 // pred_region
        %s2142 = smul.u32 8, %s21
        %p2143 = scmp.lt.s32.totalorder %s20, 1
        %s2144 = scalar_select %p2143, %s20, 1
        %p2145 = scmp.lt.s32.totalorder %s2142, 7
        %s2146 = scalar_select %p2145, %s2142, 7
        %s2147 = smul.addr %s2144, 8
        %s2148 = sadd.s32 %s2146, %s2147
        %s2149 = smul.addr %s2148, 4
        %s2150 = scalar_lea.vmem %s3, %s2149
      $region44: #{timm_model_forward.5} parent=39 // pred_fallthru
        _
    $region40: #{timm_model_forward.5} parent=5 // pred_fallthru
      _
  $region6: #{timm_model_forward.5} parent=0 // loop_footer
    %s13 = sadd.s32 1, %s9
  $region7: #{timm_model_forward.5} parent=0 // loop_footer_branch
    %8 = sbr.rel target = $region3
  $region8: #{timm_model_forward.5} parent=0 // loop_exit
    _

// kernel: timm_model_forward.4
$region0: #{timm_model_forward.4}
  #allocation0 [shape = 'u32[]', space=smem, size = 0x4, offset = 0x4, fixed_abs, tag = 'smem constant byte address 0x4 - core index']
  #allocation1 [shape = 'u32[72,128]{1,0:T(1,128)}', space=vmem, size = 0x9000, scoped, tag = 'internal scratch']
  #allocation2 [shape = 'bf16[4,9,9,128]{3,2,1,0:T(8,128)(2,1)}', space=vmem, size = 0x24000, scoped, tag = 'scratch operand']
  %s0 = inlined_call_operand.vmem [shape: bf16[2,4,8,8,128], index: 0, kind: input, shape index: {}]
  %s1 = inlined_call_operand.vmem [shape: bf16[9,128,128], index: 1, kind: input, shape index: {}]
  %s2 = inlined_call_operand.vmem [shape: f32[1,128], index: 2, kind: input, shape index: {}]
  %s3 = inlined_call_operand.vmem [shape: bf16[2,8,8,128], index: 3, kind: output, shape index: {}]
  %s4 = sld [smem:[#allocation0]]
  $region45: #{timm_model_forward.4} parent=0
    _
  %s6 = ssub.s32 1, %s4
  %s7 = scalar_select 0, %s6, %s4
  loop: start=0, step=1, limit=4
  $region2: #{timm_model_forward.4} parent=0 // loop_pre_header
    _
  $region3: #{timm_model_forward.4} parent=0 // loop_header
    %s9 = sphi 0, %s13
    %p10 = scmp.ge.s32.totalorder %s9, 4
    %s16 = sphi 0, %s28
    %s17 = sphi 0, %s24
    %s18 = sphi 0, %s16
    %s19 = sphi 0, %s17
    %s20 = sphi 0, %s18
    %s21 = sphi 0, %s19
    %s31 = sphi 0, %s33
    %s34 = sphi 0, %s31
    %s35 = sphi 0, %s34
    %s51 = sphi 0, %s35
    %s55 = sphi 0, %s55
    %s57 = sphi 0, %s55
    %s58 = sphi 0, %s57
    %s72 = sphi 0, %s58
    %s76 = sphi 0, %s76
    %s78 = sphi 0, %s76
    %s79 = sphi 0, %s78
    %s93 = sphi 0, %s79
    %s101 = sphi 0, %s103
    %s104 = sphi 0, %s101
    %s105 = sphi 0, %s104
    %s121 = sphi 0, %s105
  $region4: #{timm_model_forward.4} parent=0 // loop_header_branch
    %12 = sbr.rel (%p10) target = $region8
  $region5: #{timm_model_forward.4} parent=0 // loop_body
    %s14 = ssub.s32 %s9, 1
    %s15 = ssub.s32 %s9, 2
    %s22 = sadd.s32 1, %s17
    %p23 = scmp.ge.s32.totalorder %s22, 1
    %s24 = scalar_select %p23, 0, %s22
    %s25 = sadd.s32 1, %s16
    %s26 = scalar_select %p23, %s25, %s16
    %p27 = scmp.ge.s32.totalorder %s26, 2
    %s28 = scalar_select %p27, 0, %s26
    %s29 = ssub.s32 %s16, %s28
    %p30 = scmp.eq.s32.totalorder %s29, 0
    %s32 = sadd.s32 %s31, 1
    %s33 = scalar_select %p30, %s31, %s32
    %p36 = pneg %p30
    %p37 = scmp.eq.s32.totalorder %s9, 1
    %p38 = por %p36, %p37
    %p39 = scmp.ne.s32.totalorder %s31, %s34
    %p40 = scmp.eq.s32.totalorder %s9, 0
    %p41 = por %p39, %p40
    %p42 = scmp.ne.s32.totalorder %s31, %s34
    %p43 = scmp.eq.s32.totalorder %s14, 1
    %p44 = por %p42, %p43
    %p45 = scmp.ne.s32.totalorder %s34, %s35
    %p46 = scmp.eq.s32.totalorder %s14, 0
    %p47 = por %p45, %p46
    %p48 = scmp.ne.s32.totalorder %s34, %s35
    %p49 = scmp.eq.s32.totalorder %s15, 1
    %p50 = por %p48, %p49
    %p52 = scmp.ne.s32.totalorder %s35, %s51
    %p53 = scmp.eq.s32.totalorder %s15, 0
    %p54 = por %p52, %p53
    %s56 = sadd.s32 %s55, 1
    %p59 = scmp.eq.s32.totalorder %s9, 1
    %p60 = scmp.ne.s32.totalorder %s55, %s57
    %p61 = scmp.eq.s32.totalorder %s9, 0
    %p62 = por %p60, %p61
    %p63 = scmp.ne.s32.totalorder %s55, %s57
    %p64 = scmp.eq.s32.totalorder %s14, 1
    %p65 = por %p63, %p64
    %p66 = scmp.ne.s32.totalorder %s57, %s58
    %p67 = scmp.eq.s32.totalorder %s14, 0
    %p68 = por %p66, %p67
    %p69 = scmp.ne.s32.totalorder %s57, %s58
    %p70 = scmp.eq.s32.totalorder %s15, 1
    %p71 = por %p69, %p70
    %p73 = scmp.ne.s32.totalorder %s58, %s72
    %p74 = scmp.eq.s32.totalorder %s15, 0
    %p75 = por %p73, %p74
    %s77 = sadd.s32 %s76, 1
    %p80 = scmp.eq.s32.totalorder %s9, 1
    %p81 = scmp.ne.s32.totalorder %s76, %s78
    %p82 = scmp.eq.s32.totalorder %s9, 0
    %p83 = por %p81, %p82
    %p84 = scmp.ne.s32.totalorder %s76, %s78
    %p85 = scmp.eq.s32.totalorder %s14, 1
    %p86 = por %p84, %p85
    %p87 = scmp.ne.s32.totalorder %s78, %s79
    %p88 = scmp.eq.s32.totalorder %s14, 0
    %p89 = por %p87, %p88
    %p90 = scmp.ne.s32.totalorder %s78, %s79
    %p91 = scmp.eq.s32.totalorder %s15, 1
    %p92 = por %p90, %p91
    %p94 = scmp.ne.s32.totalorder %s79, %s93
    %p95 = scmp.eq.s32.totalorder %s15, 0
    %p96 = por %p94, %p95
    %s97 = ssub.s32 %s16, %s28
    %s98 = ssub.s32 %s17, %s24
    %s99 = sor.u32 %s97, %s98
    %p100 = scmp.eq.s32.totalorder %s99, 0
    %s102 = sadd.s32 %s101, 1
    %s103 = scalar_select %p100, %s101, %s102
    %p106 = pneg %p100
    %p107 = scmp.eq.s32.totalorder %s9, 1
    %p108 = por %p106, %p107
    %p109 = scmp.ne.s32.totalorder %s101, %s104
    %p110 = scmp.eq.s32.totalorder %s9, 0
    %p111 = por %p109, %p110
    %p112 = scmp.ne.s32.totalorder %s101, %s104
    %p113 = scmp.eq.s32.totalorder %s14, 1
    %p114 = por %p112, %p113
    %p115 = scmp.ne.s32.totalorder %s104, %s105
    %p116 = scmp.eq.s32.totalorder %s14, 0
    %p117 = por %p115, %p116
    %p118 = scmp.ne.s32.totalorder %s104, %s105
    %p119 = scmp.eq.s32.totalorder %s15, 1
    %p120 = por %p118, %p119
    %p122 = scmp.ne.s32.totalorder %s105, %s121
    %p123 = scmp.eq.s32.totalorder %s15, 0
    %p124 = por %p122, %p123
    %p125 = scmp.le.s32.totalorder 1, %s9
    %p126 = scmp.lt.s32.totalorder %s9, 3
    %p127 = pnand %p125, %p126
    %p128 = pneg %p127
    // Predicated region
    $region9: #{timm_model_forward.4} parent=5 // pred_check
      _
    $region10: #{timm_model_forward.4} parent=5 // pred_check_branch
      %130 = sbr.rel (%p127) target = $region12
    $region11: #{timm_model_forward.4} parent=5 // pred_region
      %s131 = ssub.s32 %s9, 1
      // Predicated region
      $region13: #{timm_model_forward.4} parent=11 // pred_check
        %p132 = pneg %p68
      $region14: #{timm_model_forward.4} parent=11 // pred_check_branch
        %134 = sbr.rel (%p132) target = $region16
      $region15: #{timm_model_forward.4} parent=11 // pred_region
        _
      $region16: #{timm_model_forward.4} parent=11 // pred_fallthru
        _
      // Predicated region
      $region17: #{timm_model_forward.4} parent=11 // pred_check
        %p135 = pneg %p89
      $region18: #{timm_model_forward.4} parent=11 // pred_check_branch
        %137 = sbr.rel (%p135) target = $region20
      $region19: #{timm_model_forward.4} parent=11 // pred_region
        _
      $region20: #{timm_model_forward.4} parent=11 // pred_fallthru
        _
    $region12: #{timm_model_forward.4} parent=5 // pred_fallthru
      _
    %p138 = scmp.lt.s32.totalorder %s9, 2
    // Predicated region
    $region21: #{timm_model_forward.4} parent=5 // pred_check
      %p139 = pneg %p138
    $region22: #{timm_model_forward.4} parent=5 // pred_check_branch
      %141 = sbr.rel (%p139) target = $region24
    $region23: #{timm_model_forward.4} parent=5 // pred_region
      // Predicated region
      $region25: #{timm_model_forward.4} parent=23 // pred_check
        %p142 = pneg %p41
      $region26: #{timm_model_forward.4} parent=23 // pred_check_branch
        %144 = sbr.rel (%p142) target = $region28
      $region27: #{timm_model_forward.4} parent=23 // pred_region
        %p145 = scmp.lt.s32.totalorder %s16, 1
        %s146 = scalar_select %p145, %s16, 1
        %s147 = smul.addr %s146, 32
        %s148 = smul.addr %s147, 4
        %s149 = scalar_lea.vmem %s0, %s148
      $region28: #{timm_model_forward.4} parent=23 // pred_fallthru
        _
    $region24: #{timm_model_forward.4} parent=5 // pred_fallthru
      _
    %p150 = scmp.le.s32.totalorder 1, %s9
    %p151 = scmp.lt.s32.totalorder %s9, 3
    %p152 = pnand %p150, %p151
    %p153 = pneg %p152
    // Predicated region
    $region29: #{timm_model_forward.4} parent=5 // pred_check
      _
    $region30: #{timm_model_forward.4} parent=5 // pred_check_branch
      %155 = sbr.rel (%p152) target = $region32
    $region31: #{timm_model_forward.4} parent=5 // pred_region
      %s156 = ssub.s32 %s9, 1
      %p157 = scmp.lt.s32.totalorder %s18, 1
      %s158 = scalar_select %p157, %s18, 1
      %s159 = smul.addr %s158, 32
      %s160 = smul.addr %s159, 4
      %s161 = scalar_lea.vmem %s0, %s160
      %p162 = pneg %p47
      %p163 = pneg %p44
      %p164 = pneg %p68
      %p165 = pneg %p65
      %p166 = pneg %p89
      %p167 = pneg %p86
      %p168 = pneg %p117
      %p169 = pneg %p114
      %s170 = smul.u32 8, %s19
      %p171 = scmp.lt.s32.totalorder %s18, 1
      %s172 = scalar_select %p171, %s18, 1
      %p173 = scmp.lt.s32.totalorder %s170, 7
      %s174 = scalar_select %p173, %s170, 7
      %s175 = smul.addr %s172, 8
      %s176 = sadd.s32 %s174, %s175
      %s177 = smul.addr %s176, 4
      %s178 = scalar_lea.vmem %s3, %s177
      %p179 = scmp.lt.s32.totalorder %s18, 1
      %s180 = scalar_select %p179, %s18, 1
      %s181 = smul.addr %s180, 32
      %s182 = smul.addr %s181, 4
      %s183 = scalar_lea.vmem %s0, %s182
      %s184 = smul.u32 8, %s19
      %p185 = scmp.lt.s32.totalorder %s18, 1
      %s186 = scalar_select %p185, %s18, 1
      %p187 = scmp.lt.s32.totalorder %s184, 7
      %s188 = scalar_select %p187, %s184, 7
      %s189 = smul.addr %s186, 8
      %s190 = sadd.s32 %s188, %s189
      %s191 = smul.addr %s190, 4
      %s192 = scalar_lea.vmem %s3, %s191
      %s193 = smul.u32 8, %s19
      %195 = vst [vmem:[#allocation2] sm:$0xf] 0
      %vm196 = vcmask 1040384
      %vm197 = vsmask.f32 256
      %vm198 = vmand %vm196, %vm197
      %v199 = vld [vmem:[#allocation2 + $0x4] sm:$0x1]
      %v200 = vsel %vm198, 0, %v199
      %201 = vst [vmem:[#allocation2 + $0x4] sm:$0x1] %v200
      %202 = vst [vmem:[#allocation2 + $0x8] sm:$0xf] 0
      %v203 = vld [vmem:[#allocation2 + $0xc] sm:$0x1]
      %v204 = vsel %vm198, 0, %v203
      %205 = vst [vmem:[#allocation2 + $0xc] sm:$0x1] %v204
      %206 = vst [vmem:[#allocation2 + $0x10] sm:$0xf] 0
      %v207 = vld [vmem:[#allocation2 + $0x14] sm:$0x1]
      %v208 = vsel %vm198, 0, %v207
      %209 = vst [vmem:[#allocation2 + $0x14] sm:$0x1] %v208
      %210 = vst [vmem:[#allocation2 + $0x18] sm:$0xf] 0
      %v211 = vld [vmem:[#allocation2 + $0x1c] sm:$0x1]
      %v212 = vsel %vm198, 0, %v211
      %213 = vst [vmem:[#allocation2 + $0x1c] sm:$0x1] %v212
      %214 = vst [vmem:[#allocation2 + $0x20] sm:$0xf] 0
      %v215 = vld [vmem:[#allocation2 + $0x24] sm:$0x1]
      %v216 = vsel %vm198, 0, %v215
      %217 = vst [vmem:[#allocation2 + $0x24] sm:$0x1] %v216
      %218 = vst [vmem:[#allocation2 + $0x28] sm:$0xf] 0
      %v219 = vld [vmem:[#allocation2 + $0x2c] sm:$0x1]
      %v220 = vsel %vm198, 0, %v219
      %221 = vst [vmem:[#allocation2 + $0x2c] sm:$0x1] %v220
      %222 = vst [vmem:[#allocation2 + $0x30] sm:$0xf] 0
      %v223 = vld [vmem:[#allocation2 + $0x34] sm:$0x1]
      %v224 = vsel %vm198, 0, %v223
      %225 = vst [vmem:[#allocation2 + $0x34] sm:$0x1] %v224
      %226 = vst [vmem:[#allocation2 + $0x38] sm:$0xf] 0
      %v227 = vld [vmem:[#allocation2 + $0x3c] sm:$0x1]
      %v228 = vsel %vm198, 0, %v227
      %229 = vst [vmem:[#allocation2 + $0x3c] sm:$0x1] %v228
      %230 = vst [vmem:[#allocation2 + $0x40] sm:$0xf] 0
      %v231 = vld [vmem:[#allocation2 + $0x44] sm:$0x1]
      %v232 = vsel %vm198, 0, %v231
      %233 = vst [vmem:[#allocation2 + $0x44] sm:$0x1] %v232
      %234 = vst [vmem:[#allocation2 + $0x48] sm:$0xf] 0
      %v235 = vld [vmem:[#allocation2 + $0x4c] sm:$0x1]
      %v236 = vsel %vm198, 0, %v235
      %237 = vst [vmem:[#allocation2 + $0x4c] sm:$0x1] %v236
      %238 = vst [vmem:[#allocation2 + $0x50] sm:$0xf] 0
      %v239 = vld [vmem:[#allocation2 + $0x54] sm:$0x1]
      %v240 = vsel %vm198, 0, %v239
      %241 = vst [vmem:[#allocation2 + $0x54] sm:$0x1] %v240
      %242 = vst [vmem:[#allocation2 + $0x58] sm:$0xf] 0
      %v243 = vld [vmem:[#allocation2 + $0x5c] sm:$0x1]
      %v244 = vsel %vm198, 0, %v243
      %245 = vst [vmem:[#allocation2 + $0x5c] sm:$0x1] %v244
      %246 = vst [vmem:[#allocation2 + $0x60] sm:$0xf] 0
      %v247 = vld [vmem:[#allocation2 + $0x64] sm:$0x1]
      %v248 = vsel %vm198, 0, %v247
      %249 = vst [vmem:[#allocation2 + $0x64] sm:$0x1] %v248
      %250 = vst [vmem:[#allocation2 + $0x68] sm:$0xf] 0
      %v251 = vld [vmem:[#allocation2 + $0x6c] sm:$0x1]
      %v252 = vsel %vm198, 0, %v251
      %253 = vst [vmem:[#allocation2 + $0x6c] sm:$0x1] %v252
      %254 = vst [vmem:[#allocation2 + $0x70] sm:$0xf] 0
      %v255 = vld [vmem:[#allocation2 + $0x74] sm:$0x1]
      %v256 = vsel %vm198, 0, %v255
      %257 = vst [vmem:[#allocation2 + $0x74] sm:$0x1] %v256
      %258 = vst [vmem:[#allocation2 + $0x78] sm:$0xf] 0
      %v259 = vld [vmem:[#allocation2 + $0x7c] sm:$0x1]
      %v260 = vsel %vm198, 0, %v259
      %261 = vst [vmem:[#allocation2 + $0x7c] sm:$0x1] %v260
      %262 = vst [vmem:[#allocation2 + $0x80] sm:$0xf] 0
      %v263 = vld [vmem:[#allocation2 + $0x84] sm:$0x1]
      %v264 = vsel %vm198, 0, %v263
      %265 = vst [vmem:[#allocation2 + $0x84] sm:$0x1] %v264
      %266 = vst [vmem:[#allocation2 + $0x88] sm:$0xf] 0
      %v267 = vld [vmem:[#allocation2 + $0x8c] sm:$0x1]
      %v268 = vsel %vm198, 0, %v267
      %269 = vst [vmem:[#allocation2 + $0x8c] sm:$0x1] %v268
      %270 = vst [vmem:[#allocation2 + $0x90] sm:$0xf] 0
      %v271 = vld [vmem:[#allocation2 + $0x94] sm:$0x1]
      %v272 = vsel %vm198, 0, %v271
      %273 = vst [vmem:[#allocation2 + $0x94] sm:$0x1] %v272
      %274 = vst [vmem:[#allocation2 + $0x98] sm:$0xf] 0
      %v275 = vld [vmem:[#allocation2 + $0x9c] sm:$0x1]
      %v276 = vsel %vm198, 0, %v275
      %277 = vst [vmem:[#allocation2 + $0x9c] sm:$0x1] %v276
      %278 = vst [vmem:[#allocation2 + $0xa0] sm:$0xf] 0
      %v279 = vld [vmem:[#allocation2 + $0xa4] sm:$0x1]
      %v280 = vsel %vm198, 0, %v279
      %281 = vst [vmem:[#allocation2 + $0xa4] sm:$0x1] %v280
      %282 = vst [vmem:[#allocation2 + $0xa8] sm:$0xf] 0
      %v283 = vld [vmem:[#allocation2 + $0xac] sm:$0x1]
      %v284 = vsel %vm198, 0, %v283
      %285 = vst [vmem:[#allocation2 + $0xac] sm:$0x1] %v284
      %286 = vst [vmem:[#allocation2 + $0xb0] sm:$0xf] 0
      %v287 = vld [vmem:[#allocation2 + $0xb4] sm:$0x1]
      %v288 = vsel %vm198, 0, %v287
      %289 = vst [vmem:[#allocation2 + $0xb4] sm:$0x1] %v288
      %290 = vst [vmem:[#allocation2 + $0xb8] sm:$0xf] 0
      %v291 = vld [vmem:[#allocation2 + $0xbc] sm:$0x1]
      %v292 = vsel %vm198, 0, %v291
      %293 = vst [vmem:[#allocation2 + $0xbc] sm:$0x1] %v292
      %294 = vst [vmem:[#allocation2 + $0xc0] sm:$0xf] 0
      %v295 = vld [vmem:[#allocation2 + $0xc4] sm:$0x1]
      %v296 = vsel %vm198, 0, %v295
      %297 = vst [vmem:[#allocation2 + $0xc4] sm:$0x1] %v296
      %298 = vst [vmem:[#allocation2 + $0xc8] sm:$0xf] 0
      %v299 = vld [vmem:[#allocation2 + $0xcc] sm:$0x1]
      %v300 = vsel %vm198, 0, %v299
      %301 = vst [vmem:[#allocation2 + $0xcc] sm:$0x1] %v300
      %302 = vst [vmem:[#allocation2 + $0xd0] sm:$0xf] 0
      %v303 = vld [vmem:[#allocation2 + $0xd4] sm:$0x1]
      %v304 = vsel %vm198, 0, %v303
      %305 = vst [vmem:[#allocation2 + $0xd4] sm:$0x1] %v304
      %306 = vst [vmem:[#allocation2 + $0xd8] sm:$0xf] 0
      %v307 = vld [vmem:[#allocation2 + $0xdc] sm:$0x1]
      %v308 = vsel %vm198, 0, %v307
      %309 = vst [vmem:[#allocation2 + $0xdc] sm:$0x1] %v308
      %310 = vst [vmem:[#allocation2 + $0xe0] sm:$0xf] 0
      %v311 = vld [vmem:[#allocation2 + $0xe4] sm:$0x1]
      %v312 = vsel %vm198, 0, %v311
      %313 = vst [vmem:[#allocation2 + $0xe4] sm:$0x1] %v312
      %314 = vst [vmem:[#allocation2 + $0xe8] sm:$0xf] 0
      %v315 = vld [vmem:[#allocation2 + $0xec] sm:$0x1]
      %v316 = vsel %vm198, 0, %v315
      %317 = vst [vmem:[#allocation2 + $0xec] sm:$0x1] %v316
      %318 = vst [vmem:[#allocation2 + $0xf0] sm:$0xf] 0
      %v319 = vld [vmem:[#allocation2 + $0xf4] sm:$0x1]
      %v320 = vsel %vm198, 0, %v319
      %321 = vst [vmem:[#allocation2 + $0xf4] sm:$0x1] %v320
      %322 = vst [vmem:[#allocation2 + $0xf8] sm:$0xf] 0
      %v323 = vld [vmem:[#allocation2 + $0xfc] sm:$0x1]
      %v324 = vsel %vm198, 0, %v323
      %325 = vst [vmem:[#allocation2 + $0xfc] sm:$0x1] %v324
      %326 = vst [vmem:[#allocation2 + $0x100] sm:$0xf] 0
      %v327 = vld [vmem:[#allocation2 + $0x104] sm:$0x1]
      %v328 = vsel %vm198, 0, %v327
      %329 = vst [vmem:[#allocation2 + $0x104] sm:$0x1] %v328
      %330 = vst [vmem:[#allocation2 + $0x108] sm:$0xf] 0
      %v331 = vld [vmem:[#allocation2 + $0x10c] sm:$0x1]
      %v332 = vsel %vm198, 0, %v331
      %333 = vst [vmem:[#allocation2 + $0x10c] sm:$0x1] %v332
      %334 = vst [vmem:[#allocation2 + $0x110] sm:$0xf] 0
      %v335 = vld [vmem:[#allocation2 + $0x114] sm:$0x1]
      %v336 = vsel %vm198, 0, %v335
      %337 = vst [vmem:[#allocation2 + $0x114] sm:$0x1] %v336
      %338 = vst [vmem:[#allocation2 + $0x118] sm:$0xf] 0
      %v339 = vld [vmem:[#allocation2 + $0x11c] sm:$0x1]
      %v340 = vsel %vm198, 0, %v339
      %341 = vst [vmem:[#allocation2 + $0x11c] sm:$0x1] %v340
      %v342 = vld [vmem:[%s183] sm:$0xf]
      %v343 = vld [vmem:[%s183 + $0x4] sm:$0xf]
      %v344 = vld [vmem:[%s183 + $0x8] sm:$0xf]
      %v345 = vld [vmem:[%s183 + $0xc] sm:$0xf]
      %v346 = vld [vmem:[%s183 + $0x10] sm:$0xf]
      %v347 = vld [vmem:[%s183 + $0x14] sm:$0xf]
      %v348 = vld [vmem:[%s183 + $0x18] sm:$0xf]
      %v349 = vld [vmem:[%s183 + $0x1c] sm:$0xf]
      %v350 = vld [vmem:[%s183 + $0x20] sm:$0xf]
      %v351 = vld [vmem:[%s183 + $0x24] sm:$0xf]
      %v352 = vld [vmem:[%s183 + $0x28] sm:$0xf]
      %v353 = vld [vmem:[%s183 + $0x2c] sm:$0xf]
      %v354 = vld [vmem:[%s183 + $0x30] sm:$0xf]
      %v355 = vld [vmem:[%s183 + $0x34] sm:$0xf]
      %v356 = vld [vmem:[%s183 + $0x38] sm:$0xf]
      %v357 = vld [vmem:[%s183 + $0x3c] sm:$0xf]
      %v358 = vld [vmem:[%s183 + $0x40] sm:$0xf]
      %v359 = vld [vmem:[%s183 + $0x44] sm:$0xf]
      %v360 = vld [vmem:[%s183 + $0x48] sm:$0xf]
      %v361 = vld [vmem:[%s183 + $0x4c] sm:$0xf]
      %v362 = vld [vmem:[%s183 + $0x50] sm:$0xf]
      %v363 = vld [vmem:[%s183 + $0x54] sm:$0xf]
      %v364 = vld [vmem:[%s183 + $0x58] sm:$0xf]
      %v365 = vld [vmem:[%s183 + $0x5c] sm:$0xf]
      %v366 = vld [vmem:[%s183 + $0x60] sm:$0xf]
      %v367 = vld [vmem:[%s183 + $0x64] sm:$0xf]
      %v368 = vld [vmem:[%s183 + $0x68] sm:$0xf]
      %v369 = vld [vmem:[%s183 + $0x6c] sm:$0xf]
      %v370 = vld [vmem:[%s183 + $0x70] sm:$0xf]
      %v371 = vld [vmem:[%s183 + $0x74] sm:$0xf]
      %v372 = vld [vmem:[%s183 + $0x78] sm:$0xf]
      %v373 = vld [vmem:[%s183 + $0x7c] sm:$0xf]
      %374 = vst [vmem:[#allocation2] sm:$0xf] %v342
      %375 = vst [vmem:[#allocation2 + $0x8] sm:$0xf] %v343
      %376 = vst [vmem:[#allocation2 + $0x10] sm:$0xf] %v344
      %377 = vst [vmem:[#allocation2 + $0x18] sm:$0xf] %v345
      %378 = vst [vmem:[#allocation2 + $0x20] sm:$0xf] %v346
      %379 = vst [vmem:[#allocation2 + $0x28] sm:$0xf] %v347
      %380 = vst [vmem:[#allocation2 + $0x30] sm:$0xf] %v348
      %381 = vst [vmem:[#allocation2 + $0x38] sm:$0xf] %v349
      %382 = vst [vmem:[#allocation2 + $0x48] sm:$0xf] %v350
      %383 = vst [vmem:[#allocation2 + $0x50] sm:$0xf] %v351
      %384 = vst [vmem:[#allocation2 + $0x58] sm:$0xf] %v352
      %385 = vst [vmem:[#allocation2 + $0x60] sm:$0xf] %v353
      %386 = vst [vmem:[#allocation2 + $0x68] sm:$0xf] %v354
      %387 = vst [vmem:[#allocation2 + $0x70] sm:$0xf] %v355
      %388 = vst [vmem:[#allocation2 + $0x78] sm:$0xf] %v356
      %389 = vst [vmem:[#allocation2 + $0x80] sm:$0xf] %v357
      %390 = vst [vmem:[#allocation2 + $0x90] sm:$0xf] %v358
      %391 = vst [vmem:[#allocation2 + $0x98] sm:$0xf] %v359
      %392 = vst [vmem:[#allocation2 + $0xa0] sm:$0xf] %v360
      %393 = vst [vmem:[#allocation2 + $0xa8] sm:$0xf] %v361
      %394 = vst [vmem:[#allocation2 + $0xb0] sm:$0xf] %v362
      %395 = vst [vmem:[#allocation2 + $0xb8] sm:$0xf] %v363
      %396 = vst [vmem:[#allocation2 + $0xc0] sm:$0xf] %v364
      %397 = vst [vmem:[#allocation2 + $0xc8] sm:$0xf] %v365
      %398 = vst [vmem:[#allocation2 + $0xd8] sm:$0xf] %v366
      %399 = vst [vmem:[#allocation2 + $0xe0] sm:$0xf] %v367
      %400 = vst [vmem:[#allocation2 + $0xe8] sm:$0xf] %v368
      %401 = vst [vmem:[#allocation2 + $0xf0] sm:$0xf] %v369
      %402 = vst [vmem:[#allocation2 + $0xf8] sm:$0xf] %v370
      %403 = vst [vmem:[#allocation2 + $0x100] sm:$0xf] %v371
      %404 = vst [vmem:[#allocation2 + $0x108] sm:$0xf] %v372
      %405 = vst [vmem:[#allocation2 + $0x110] sm:$0xf] %v373
      %s406 = smul.u32 %s19, 8
      %v407 = vld [vmem:[%s2] sm:$0x1]
      %v409 = vperm.slane %v407, 0
      %s411 = smul.u32 %s406, 2
      %s412 = smul.addr %s411, 4
      %s413 = scalar_lea.vmem [#allocation2], %s412
      %v414 = vld [vmem:[%s413] sm:$0xf]
      %v415 = vld [vmem:[%s413 + $0x8] sm:$0xf]
      %v416 = vld [vmem:[%s413 + $0x10] sm:$0xf]
      %v417 = vld [vmem:[%s413 + $0x18] sm:$0xf]
      %v418 = vld [vmem:[%s413 + $0x20] sm:$0xf]
      %v419 = vld [vmem:[%s413 + $0x28] sm:$0xf]
      %v420 = vld [vmem:[%s413 + $0x30] sm:$0xf]
      %v421 = vld [vmem:[%s413 + $0x38] sm:$0xf]
      %v422 = vld [vmem:[%s1] sm:$0xf]
      %v423 = vld [vmem:[%s1 + $0x4] sm:$0xf]
      %v424 = vld [vmem:[%s1 + $0x8] sm:$0xf]
      %v425 = vld [vmem:[%s1 + $0xc] sm:$0xf]
      %v426 = vld [vmem:[%s1 + $0x10] sm:$0xf]
      %v427 = vld [vmem:[%s1 + $0x14] sm:$0xf]
      %v428 = vld [vmem:[%s1 + $0x18] sm:$0xf]
      %v429 = vld [vmem:[%s1 + $0x1c] sm:$0xf]
      %v430 = vld [vmem:[%s1 + $0x20] sm:$0xf]
      %v431 = vld [vmem:[%s1 + $0x24] sm:$0xf]
      %v432 = vld [vmem:[%s1 + $0x28] sm:$0xf]
      %v433 = vld [vmem:[%s1 + $0x2c] sm:$0xf]
      %v434 = vld [vmem:[%s1 + $0x30] sm:$0xf]
      %v435 = vld [vmem:[%s1 + $0x34] sm:$0xf]
      %v436 = vld [vmem:[%s1 + $0x38] sm:$0xf]
      %v437 = vld [vmem:[%s1 + $0x3c] sm:$0xf]
      %v446 = vunpack.c.l.b16 %v414
      %v447 = vunpack.c.l.b16 %v415
      %v448 = vunpack.c.l.b16 %v416
      %v449 = vunpack.c.l.b16 %v417
      %v450 = vunpack.c.l.b16 %v418
      %v451 = vunpack.c.l.b16 %v419
      %v452 = vunpack.c.l.b16 %v420
      %v453 = vunpack.c.l.b16 %v421
      %v454 = vpack.c.b16 %v447, %v446
      %v455 = vpack.c.b16 %v449, %v448
      %v456 = vpack.c.b16 %v451, %v450
      %v457 = vpack.c.b16 %v453, %v452
      %v478 = vunpack.c.l.b16 %v422
      %v479 = vunpack.c.l.b16 %v423
      %v480 = vunpack.c.l.b16 %v424
      %v481 = vunpack.c.l.b16 %v425
      %v482 = vunpack.c.l.b16 %v426
      %v483 = vunpack.c.l.b16 %v427
      %v484 = vunpack.c.l.b16 %v428
      %v485 = vunpack.c.l.b16 %v429
      %v486 = vunpack.c.l.b16 %v430
      %v487 = vunpack.c.l.b16 %v431
      %v488 = vunpack.c.l.b16 %v432
      %v489 = vunpack.c.l.b16 %v433
      %v490 = vunpack.c.l.b16 %v434
      %v491 = vunpack.c.l.b16 %v435
      %v492 = vunpack.c.l.b16 %v436
      %v493 = vunpack.c.l.b16 %v437
      %v494 = vpack.c.b16 %v479, %v478
      %v495 = vpack.c.b16 %v481, %v480
      %v496 = vpack.c.b16 %v483, %v482
      %v497 = vpack.c.b16 %v485, %v484
      %v498 = vpack.c.b16 %v487, %v486
      %v499 = vpack.c.b16 %v489, %v488
      %v500 = vpack.c.b16 %v491, %v490
      %v501 = vpack.c.b16 %v493, %v492
      %510 = vmatpush.bf16.msra.mxu0 %v501
      %511 = vmatpush.bf16.msra.mxu0 %v500
      %512 = vmatpush.bf16.msra.mxu0 %v499
      %513 = vmatpush.bf16.msra.mxu0 %v498
      %514 = vmatpush.bf16.msra.mxu0 %v497
      %515 = vmatpush.bf16.msra.mxu0 %v496
      %516 = vmatpush.bf16.msra.mxu0 %v495
      %517 = vmatpush.bf16.msra.mxu0 %v494
      %518 = vmatmul.bf16.gmra.mxu0 %v454
      %v519 = vpop.f32.mrf.mxu0
      %v520 = vadd.f32 0.0, %v519
      %v521 = vpop.f32.mrf.mxu0
      %v522 = vadd.f32 0.0, %v521
      %523 = vmatmul.bf16.gmra.mxu0 %v455
      %v524 = vpop.f32.mrf.mxu0
      %v525 = vadd.f32 0.0, %v524
      %v526 = vpop.f32.mrf.mxu0
      %v527 = vadd.f32 0.0, %v526
      %528 = vmatmul.bf16.gmra.mxu0 %v456
      %v529 = vpop.f32.mrf.mxu0
      %v530 = vadd.f32 0.0, %v529
      %v531 = vpop.f32.mrf.mxu0
      %v532 = vadd.f32 0.0, %v531
      %533 = vmatmul.bf16.gmra.mxu0 %v457
      %v534 = vpop.f32.mrf.mxu0
      %v535 = vadd.f32 0.0, %v534
      %v536 = vpop.f32.mrf.mxu0
      %v537 = vadd.f32 0.0, %v536
      %538 = vdwg.mxu0
      %v539 = vadd.f32 %v409, %v520
      %v540 = vadd.f32 %v409, %v522
      %v541 = vadd.f32 %v409, %v525
      %v542 = vadd.f32 %v409, %v527
      %v543 = vadd.f32 %v409, %v530
      %v544 = vadd.f32 %v409, %v532
      %v545 = vadd.f32 %v409, %v535
      %v546 = vadd.f32 %v409, %v537
      %s547 = sadd.s32 %s411, 18
      %s548 = smul.addr %s547, 4
      %s549 = scalar_lea.vmem [#allocation2], %s548
      %v550 = vld [vmem:[%s549] sm:$0xf]
      %v551 = vld [vmem:[%s549 + $0x8] sm:$0xf]
      %v552 = vld [vmem:[%s549 + $0x10] sm:$0xf]
      %v553 = vld [vmem:[%s549 + $0x18] sm:$0xf]
      %v554 = vld [vmem:[%s549 + $0x20] sm:$0xf]
      %v555 = vld [vmem:[%s549 + $0x28] sm:$0xf]
      %v556 = vld [vmem:[%s549 + $0x30] sm:$0xf]
      %v557 = vld [vmem:[%s549 + $0x38] sm:$0xf]
      %s558 = scalar_lea.vmem %s1, 64
      %v559 = vld [vmem:[%s558] sm:$0xf]
      %v560 = vld [vmem:[%s558 + $0x4] sm:$0xf]
      %v561 = vld [vmem:[%s558 + $0x8] sm:$0xf]
      %v562 = vld [vmem:[%s558 + $0xc] sm:$0xf]
      %v563 = vld [vmem:[%s558 + $0x10] sm:$0xf]
      %v564 = vld [vmem:[%s558 + $0x14] sm:$0xf]
      %v565 = vld [vmem:[%s558 + $0x18] sm:$0xf]
      %v566 = vld [vmem:[%s558 + $0x1c] sm:$0xf]
      %v567 = vld [vmem:[%s558 + $0x20] sm:$0xf]
      %v568 = vld [vmem:[%s558 + $0x24] sm:$0xf]
      %v569 = vld [vmem:[%s558 + $0x28] sm:$0xf]
      %v570 = vld [vmem:[%s558 + $0x2c] sm:$0xf]
      %v571 = vld [vmem:[%s558 + $0x30] sm:$0xf]
      %v572 = vld [vmem:[%s558 + $0x34] sm:$0xf]
      %v573 = vld [vmem:[%s558 + $0x38] sm:$0xf]
      %v574 = vld [vmem:[%s558 + $0x3c] sm:$0xf]
      %v583 = vunpack.c.l.b16 %v550
      %v584 = vunpack.c.l.b16 %v551
      %v585 = vunpack.c.l.b16 %v552
      %v586 = vunpack.c.l.b16 %v553
      %v587 = vunpack.c.l.b16 %v554
      %v588 = vunpack.c.l.b16 %v555
      %v589 = vunpack.c.l.b16 %v556
      %v590 = vunpack.c.l.b16 %v557
      %v591 = vpack.c.b16 %v584, %v583
      %v592 = vpack.c.b16 %v586, %v585
      %v593 = vpack.c.b16 %v588, %v587
      %v594 = vpack.c.b16 %v590, %v589
      %v615 = vunpack.c.l.b16 %v559
      %v616 = vunpack.c.l.b16 %v560
      %v617 = vunpack.c.l.b16 %v561
      %v618 = vunpack.c.l.b16 %v562
      %v619 = vunpack.c.l.b16 %v563
      %v620 = vunpack.c.l.b16 %v564
      %v621 = vunpack.c.l.b16 %v565
      %v622 = vunpack.c.l.b16 %v566
      %v623 = vunpack.c.l.b16 %v567
      %v624 = vunpack.c.l.b16 %v568
      %v625 = vunpack.c.l.b16 %v569
      %v626 = vunpack.c.l.b16 %v570
      %v627 = vunpack.c.l.b16 %v571
      %v628 = vunpack.c.l.b16 %v572
      %v629 = vunpack.c.l.b16 %v573
      %v630 = vunpack.c.l.b16 %v574
      %v631 = vpack.c.b16 %v616, %v615
      %v632 = vpack.c.b16 %v618, %v617
      %v633 = vpack.c.b16 %v620, %v619
      %v634 = vpack.c.b16 %v622, %v621
      %v635 = vpack.c.b16 %v624, %v623
      %v636 = vpack.c.b16 %v626, %v625
      %v637 = vpack.c.b16 %v628, %v627
      %v638 = vpack.c.b16 %v630, %v629
      %647 = vmatpush.bf16.msra.mxu0 %v638
      %648 = vmatpush.bf16.msra.mxu0 %v637
      %649 = vmatpush.bf16.msra.mxu0 %v636
      %650 = vmatpush.bf16.msra.mxu0 %v635
      %651 = vmatpush.bf16.msra.mxu0 %v634
      %652 = vmatpush.bf16.msra.mxu0 %v633
      %653 = vmatpush.bf16.msra.mxu0 %v632
      %654 = vmatpush.bf16.msra.mxu0 %v631
      %655 = vmatmul.bf16.gmra.mxu0 %v591
      %v656 = vpop.f32.mrf.mxu0
      %v657 = vadd.f32 0.0, %v656
      %v658 = vpop.f32.mrf.mxu0
      %v659 = vadd.f32 0.0, %v658
      %660 = vmatmul.bf16.gmra.mxu0 %v592
      %v661 = vpop.f32.mrf.mxu0
      %v662 = vadd.f32 0.0, %v661
      %v663 = vpop.f32.mrf.mxu0
      %v664 = vadd.f32 0.0, %v663
      %665 = vmatmul.bf16.gmra.mxu0 %v593
      %v666 = vpop.f32.mrf.mxu0
      %v667 = vadd.f32 0.0, %v666
      %v668 = vpop.f32.mrf.mxu0
      %v669 = vadd.f32 0.0, %v668
      %670 = vmatmul.bf16.gmra.mxu0 %v594
      %v671 = vpop.f32.mrf.mxu0
      %v672 = vadd.f32 0.0, %v671
      %v673 = vpop.f32.mrf.mxu0
      %v674 = vadd.f32 0.0, %v673
      %675 = vdwg.mxu0
      %v676 = vadd.f32 %v539, %v657
      %v677 = vadd.f32 %v540, %v659
      %v678 = vadd.f32 %v541, %v662
      %v679 = vadd.f32 %v542, %v664
      %v680 = vadd.f32 %v543, %v667
      %v681 = vadd.f32 %v544, %v669
      %v682 = vadd.f32 %v545, %v672
      %v683 = vadd.f32 %v546, %v674
      %v684 = vld [vmem:[%s413] sm:$0xf]
      %v685 = vld [vmem:[%s413 + $0x4] sm:$0x1]
      %v686 = vld [vmem:[%s413 + $0x8] sm:$0xf]
      %v687 = vld [vmem:[%s413 + $0xc] sm:$0x1]
      %v688 = vld [vmem:[%s413 + $0x10] sm:$0xf]
      %v689 = vld [vmem:[%s413 + $0x14] sm:$0x1]
      %v690 = vld [vmem:[%s413 + $0x18] sm:$0xf]
      %v691 = vld [vmem:[%s413 + $0x1c] sm:$0x1]
      %v692 = vld [vmem:[%s413 + $0x20] sm:$0xf]
      %v693 = vld [vmem:[%s413 + $0x24] sm:$0x1]
      %v694 = vld [vmem:[%s413 + $0x28] sm:$0xf]
      %v695 = vld [vmem:[%s413 + $0x2c] sm:$0x1]
      %v696 = vld [vmem:[%s413 + $0x30] sm:$0xf]
      %v697 = vld [vmem:[%s413 + $0x34] sm:$0x1]
      %v698 = vld [vmem:[%s413 + $0x38] sm:$0xf]
      %v699 = vld [vmem:[%s413 + $0x3c] sm:$0x1]
      %vm700 = vsmask.f32 3328
      %vm701 = vsmask.f32 7440
      %vm702 = vmor %vm700, %vm701
      %v704 = vshrl.u32 %v684, 16
      %v706 = vrot.slane %v704, 4
      %v707 = vshll.u32 %v684, 16
      %v709 = vrot.slane %v707, 5
      %v710 = vor.u32 %v706, %v709
      %v711 = vrot.slane %v710, 4
      %v713 = vshll.u32 %v685, 16
      %v715 = vrot.slane %v713, 5
      %v716 = vsel %vm702, %v711, %v715
      %v718 = vshrl.u32 %v686, 16
      %v720 = vrot.slane %v718, 4
      %v721 = vshll.u32 %v686, 16
      %v723 = vrot.slane %v721, 5
      %v724 = vor.u32 %v720, %v723
      %v725 = vrot.slane %v724, 4
      %v727 = vshll.u32 %v687, 16
      %v729 = vrot.slane %v727, 5
      %v730 = vsel %vm702, %v725, %v729
      %v732 = vshrl.u32 %v688, 16
      %v734 = vrot.slane %v732, 4
      %v735 = vshll.u32 %v688, 16
      %v737 = vrot.slane %v735, 5
      %v738 = vor.u32 %v734, %v737
      %v739 = vrot.slane %v738, 4
      %v741 = vshll.u32 %v689, 16
      %v743 = vrot.slane %v741, 5
      %v744 = vsel %vm702, %v739, %v743
      %v746 = vshrl.u32 %v690, 16
      %v748 = vrot.slane %v746, 4
      %v749 = vshll.u32 %v690, 16
      %v751 = vrot.slane %v749, 5
      %v752 = vor.u32 %v748, %v751
      %v753 = vrot.slane %v752, 4
      %v755 = vshll.u32 %v691, 16
      %v757 = vrot.slane %v755, 5
      %v758 = vsel %vm702, %v753, %v757
      %v760 = vshrl.u32 %v692, 16
      %v762 = vrot.slane %v760, 4
      %v763 = vshll.u32 %v692, 16
      %v765 = vrot.slane %v763, 5
      %v766 = vor.u32 %v762, %v765
      %v767 = vrot.slane %v766, 4
      %v769 = vshll.u32 %v693, 16
      %v771 = vrot.slane %v769, 5
      %v772 = vsel %vm702, %v767, %v771
      %v774 = vshrl.u32 %v694, 16
      %v776 = vrot.slane %v774, 4
      %v777 = vshll.u32 %v694, 16
      %v779 = vrot.slane %v777, 5
      %v780 = vor.u32 %v776, %v779
      %v781 = vrot.slane %v780, 4
      %v783 = vshll.u32 %v695, 16
      %v785 = vrot.slane %v783, 5
      %v786 = vsel %vm702, %v781, %v785
      %v788 = vshrl.u32 %v696, 16
      %v790 = vrot.slane %v788, 4
      %v791 = vshll.u32 %v696, 16
      %v793 = vrot.slane %v791, 5
      %v794 = vor.u32 %v790, %v793
      %v795 = vrot.slane %v794, 4
      %v797 = vshll.u32 %v697, 16
      %v799 = vrot.slane %v797, 5
      %v800 = vsel %vm702, %v795, %v799
      %v802 = vshrl.u32 %v698, 16
      %v804 = vrot.slane %v802, 4
      %v805 = vshll.u32 %v698, 16
      %v807 = vrot.slane %v805, 5
      %v808 = vor.u32 %v804, %v807
      %v809 = vrot.slane %v808, 4
      %v811 = vshll.u32 %v699, 16
      %v813 = vrot.slane %v811, 5
      %v814 = vsel %vm702, %v809, %v813
      %s815 = scalar_lea.vmem %s1, 128
      %v816 = vld [vmem:[%s815] sm:$0xf]
      %v817 = vld [vmem:[%s815 + $0x4] sm:$0xf]
      %v818 = vld [vmem:[%s815 + $0x8] sm:$0xf]
      %v819 = vld [vmem:[%s815 + $0xc] sm:$0xf]
      %v820 = vld [vmem:[%s815 + $0x10] sm:$0xf]
      %v821 = vld [vmem:[%s815 + $0x14] sm:$0xf]
      %v822 = vld [vmem:[%s815 + $0x18] sm:$0xf]
      %v823 = vld [vmem:[%s815 + $0x1c] sm:$0xf]
      %v824 = vld [vmem:[%s815 + $0x20] sm:$0xf]
      %v825 = vld [vmem:[%s815 + $0x24] sm:$0xf]
      %v826 = vld [vmem:[%s815 + $0x28] sm:$0xf]
      %v827 = vld [vmem:[%s815 + $0x2c] sm:$0xf]
      %v828 = vld [vmem:[%s815 + $0x30] sm:$0xf]
      %v829 = vld [vmem:[%s815 + $0x34] sm:$0xf]
      %v830 = vld [vmem:[%s815 + $0x38] sm:$0xf]
      %v831 = vld [vmem:[%s815 + $0x3c] sm:$0xf]
      %v832 = vunpack.c.l.b16 %v716
      %v833 = vunpack.c.l.b16 %v730
      %v834 = vunpack.c.l.b16 %v744
      %v835 = vunpack.c.l.b16 %v758
      %v836 = vunpack.c.l.b16 %v772
      %v837 = vunpack.c.l.b16 %v786
      %v838 = vunpack.c.l.b16 %v800
      %v839 = vunpack.c.l.b16 %v814
      %v840 = vpack.c.b16 %v833, %v832
      %v841 = vpack.c.b16 %v835, %v834
      %v842 = vpack.c.b16 %v837, %v836
      %v843 = vpack.c.b16 %v839, %v838
      %v864 = vunpack.c.l.b16 %v816
      %v865 = vunpack.c.l.b16 %v817
      %v866 = vunpack.c.l.b16 %v818
      %v867 = vunpack.c.l.b16 %v819
      %v868 = vunpack.c.l.b16 %v820
      %v869 = vunpack.c.l.b16 %v821
      %v870 = vunpack.c.l.b16 %v822
      %v871 = vunpack.c.l.b16 %v823
      %v872 = vunpack.c.l.b16 %v824
      %v873 = vunpack.c.l.b16 %v825
      %v874 = vunpack.c.l.b16 %v826
      %v875 = vunpack.c.l.b16 %v827
      %v876 = vunpack.c.l.b16 %v828
      %v877 = vunpack.c.l.b16 %v829
      %v878 = vunpack.c.l.b16 %v830
      %v879 = vunpack.c.l.b16 %v831
      %v880 = vpack.c.b16 %v865, %v864
      %v881 = vpack.c.b16 %v867, %v866
      %v882 = vpack.c.b16 %v869, %v868
      %v883 = vpack.c.b16 %v871, %v870
      %v884 = vpack.c.b16 %v873, %v872
      %v885 = vpack.c.b16 %v875, %v874
      %v886 = vpack.c.b16 %v877, %v876
      %v887 = vpack.c.b16 %v879, %v878
      %896 = vmatpush.bf16.msra.mxu0 %v887
      %897 = vmatpush.bf16.msra.mxu0 %v886
      %898 = vmatpush.bf16.msra.mxu0 %v885
      %899 = vmatpush.bf16.msra.mxu0 %v884
      %900 = vmatpush.bf16.msra.mxu0 %v883
      %901 = vmatpush.bf16.msra.mxu0 %v882
      %902 = vmatpush.bf16.msra.mxu0 %v881
      %903 = vmatpush.bf16.msra.mxu0 %v880
      %904 = vmatmul.bf16.gmra.mxu0 %v840
      %v905 = vpop.f32.mrf.mxu0
      %v906 = vadd.f32 0.0, %v905
      %v907 = vpop.f32.mrf.mxu0
      %v908 = vadd.f32 0.0, %v907
      %909 = vmatmul.bf16.gmra.mxu0 %v841
      %v910 = vpop.f32.mrf.mxu0
      %v911 = vadd.f32 0.0, %v910
      %v912 = vpop.f32.mrf.mxu0
      %v913 = vadd.f32 0.0, %v912
      %914 = vmatmul.bf16.gmra.mxu0 %v842
      %v915 = vpop.f32.mrf.mxu0
      %v916 = vadd.f32 0.0, %v915
      %v917 = vpop.f32.mrf.mxu0
      %v918 = vadd.f32 0.0, %v917
      %919 = vmatmul.bf16.gmra.mxu0 %v843
      %v920 = vpop.f32.mrf.mxu0
      %v921 = vadd.f32 0.0, %v920
      %v922 = vpop.f32.mrf.mxu0
      %v923 = vadd.f32 0.0, %v922
      %924 = vdwg.mxu0
      %v925 = vadd.f32 %v676, %v906
      %v926 = vadd.f32 %v677, %v908
      %v927 = vadd.f32 %v678, %v911
      %v928 = vadd.f32 %v679, %v913
      %v929 = vadd.f32 %v680, %v916
      %v930 = vadd.f32 %v681, %v918
      %v931 = vadd.f32 %v682, %v921
      %v932 = vadd.f32 %v683, %v923
      %s933 = sadd.s32 %s411, 36
      %s934 = smul.addr %s933, 4
      %s935 = scalar_lea.vmem [#allocation2], %s934
      %v936 = vld [vmem:[%s935] sm:$0xf]
      %v937 = vld [vmem:[%s935 + $0x8] sm:$0xf]
      %v938 = vld [vmem:[%s935 + $0x10] sm:$0xf]
      %v939 = vld [vmem:[%s935 + $0x18] sm:$0xf]
      %v940 = vld [vmem:[%s935 + $0x20] sm:$0xf]
      %v941 = vld [vmem:[%s935 + $0x28] sm:$0xf]
      %v942 = vld [vmem:[%s935 + $0x30] sm:$0xf]
      %v943 = vld [vmem:[%s935 + $0x38] sm:$0xf]
      %s944 = scalar_lea.vmem %s1, 192
      %v945 = vld [vmem:[%s944] sm:$0xf]
      %v946 = vld [vmem:[%s944 + $0x4] sm:$0xf]
      %v947 = vld [vmem:[%s944 + $0x8] sm:$0xf]
      %v948 = vld [vmem:[%s944 + $0xc] sm:$0xf]
      %v949 = vld [vmem:[%s944 + $0x10] sm:$0xf]
      %v950 = vld [vmem:[%s944 + $0x14] sm:$0xf]
      %v951 = vld [vmem:[%s944 + $0x18] sm:$0xf]
      %v952 = vld [vmem:[%s944 + $0x1c] sm:$0xf]
      %v953 = vld [vmem:[%s944 + $0x20] sm:$0xf]
      %v954 = vld [vmem:[%s944 + $0x24] sm:$0xf]
      %v955 = vld [vmem:[%s944 + $0x28] sm:$0xf]
      %v956 = vld [vmem:[%s944 + $0x2c] sm:$0xf]
      %v957 = vld [vmem:[%s944 + $0x30] sm:$0xf]
      %v958 = vld [vmem:[%s944 + $0x34] sm:$0xf]
      %v959 = vld [vmem:[%s944 + $0x38] sm:$0xf]
      %v960 = vld [vmem:[%s944 + $0x3c] sm:$0xf]
      %v969 = vunpack.c.l.b16 %v936
      %v970 = vunpack.c.l.b16 %v937
      %v971 = vunpack.c.l.b16 %v938
      %v972 = vunpack.c.l.b16 %v939
      %v973 = vunpack.c.l.b16 %v940
      %v974 = vunpack.c.l.b16 %v941
      %v975 = vunpack.c.l.b16 %v942
      %v976 = vunpack.c.l.b16 %v943
      %v977 = vpack.c.b16 %v970, %v969
      %v978 = vpack.c.b16 %v972, %v971
      %v979 = vpack.c.b16 %v974, %v973
      %v980 = vpack.c.b16 %v976, %v975
      %v1001 = vunpack.c.l.b16 %v945
      %v1002 = vunpack.c.l.b16 %v946
      %v1003 = vunpack.c.l.b16 %v947
      %v1004 = vunpack.c.l.b16 %v948
      %v1005 = vunpack.c.l.b16 %v949
      %v1006 = vunpack.c.l.b16 %v950
      %v1007 = vunpack.c.l.b16 %v951
      %v1008 = vunpack.c.l.b16 %v952
      %v1009 = vunpack.c.l.b16 %v953
      %v1010 = vunpack.c.l.b16 %v954
      %v1011 = vunpack.c.l.b16 %v955
      %v1012 = vunpack.c.l.b16 %v956
      %v1013 = vunpack.c.l.b16 %v957
      %v1014 = vunpack.c.l.b16 %v958
      %v1015 = vunpack.c.l.b16 %v959
      %v1016 = vunpack.c.l.b16 %v960
      %v1017 = vpack.c.b16 %v1002, %v1001
      %v1018 = vpack.c.b16 %v1004, %v1003
      %v1019 = vpack.c.b16 %v1006, %v1005
      %v1020 = vpack.c.b16 %v1008, %v1007
      %v1021 = vpack.c.b16 %v1010, %v1009
      %v1022 = vpack.c.b16 %v1012, %v1011
      %v1023 = vpack.c.b16 %v1014, %v1013
      %v1024 = vpack.c.b16 %v1016, %v1015
      %1033 = vmatpush.bf16.msra.mxu0 %v1024
      %1034 = vmatpush.bf16.msra.mxu0 %v1023
      %1035 = vmatpush.bf16.msra.mxu0 %v1022
      %1036 = vmatpush.bf16.msra.mxu0 %v1021
      %1037 = vmatpush.bf16.msra.mxu0 %v1020
      %1038 = vmatpush.bf16.msra.mxu0 %v1019
      %1039 = vmatpush.bf16.msra.mxu0 %v1018
      %1040 = vmatpush.bf16.msra.mxu0 %v1017
      %1041 = vmatmul.bf16.gmra.mxu0 %v977
      %v1042 = vpop.f32.mrf.mxu0
      %v1043 = vadd.f32 0.0, %v1042
      %v1044 = vpop.f32.mrf.mxu0
      %v1045 = vadd.f32 0.0, %v1044
      %1046 = vmatmul.bf16.gmra.mxu0 %v978
      %v1047 = vpop.f32.mrf.mxu0
      %v1048 = vadd.f32 0.0, %v1047
      %v1049 = vpop.f32.mrf.mxu0
      %v1050 = vadd.f32 0.0, %v1049
      %1051 = vmatmul.bf16.gmra.mxu0 %v979
      %v1052 = vpop.f32.mrf.mxu0
      %v1053 = vadd.f32 0.0, %v1052
      %v1054 = vpop.f32.mrf.mxu0
      %v1055 = vadd.f32 0.0, %v1054
      %1056 = vmatmul.bf16.gmra.mxu0 %v980
      %v1057 = vpop.f32.mrf.mxu0
      %v1058 = vadd.f32 0.0, %v1057
      %v1059 = vpop.f32.mrf.mxu0
      %v1060 = vadd.f32 0.0, %v1059
      %1061 = vdwg.mxu0
      %v1062 = vadd.f32 %v925, %v1043
      %v1063 = vadd.f32 %v926, %v1045
      %v1064 = vadd.f32 %v927, %v1048
      %v1065 = vadd.f32 %v928, %v1050
      %v1066 = vadd.f32 %v929, %v1053
      %v1067 = vadd.f32 %v930, %v1055
      %v1068 = vadd.f32 %v931, %v1058
      %v1069 = vadd.f32 %v932, %v1060
      %s1070 = sadd.s32 %s411, 54
      %s1071 = smul.addr %s1070, 4
      %s1072 = scalar_lea.vmem [#allocation2], %s1071
      %v1073 = vld [vmem:[%s1072] sm:$0xf]
      %v1074 = vld [vmem:[%s1072 + $0x8] sm:$0xf]
      %v1075 = vld [vmem:[%s1072 + $0x10] sm:$0xf]
      %v1076 = vld [vmem:[%s1072 + $0x18] sm:$0xf]
      %v1077 = vld [vmem:[%s1072 + $0x20] sm:$0xf]
      %v1078 = vld [vmem:[%s1072 + $0x28] sm:$0xf]
      %v1079 = vld [vmem:[%s1072 + $0x30] sm:$0xf]
      %v1080 = vld [vmem:[%s1072 + $0x38] sm:$0xf]
      %s1081 = scalar_lea.vmem %s1, 256
      %v1082 = vld [vmem:[%s1081] sm:$0xf]
      %v1083 = vld [vmem:[%s1081 + $0x4] sm:$0xf]
      %v1084 = vld [vmem:[%s1081 + $0x8] sm:$0xf]
      %v1085 = vld [vmem:[%s1081 + $0xc] sm:$0xf]
      %v1086 = vld [vmem:[%s1081 + $0x10] sm:$0xf]
      %v1087 = vld [vmem:[%s1081 + $0x14] sm:$0xf]
      %v1088 = vld [vmem:[%s1081 + $0x18] sm:$0xf]
      %v1089 = vld [vmem:[%s1081 + $0x1c] sm:$0xf]
      %v1090 = vld [vmem:[%s1081 + $0x20] sm:$0xf]
      %v1091 = vld [vmem:[%s1081 + $0x24] sm:$0xf]
      %v1092 = vld [vmem:[%s1081 + $0x28] sm:$0xf]
      %v1093 = vld [vmem:[%s1081 + $0x2c] sm:$0xf]
      %v1094 = vld [vmem:[%s1081 + $0x30] sm:$0xf]
      %v1095 = vld [vmem:[%s1081 + $0x34] sm:$0xf]
      %v1096 = vld [vmem:[%s1081 + $0x38] sm:$0xf]
      %v1097 = vld [vmem:[%s1081 + $0x3c] sm:$0xf]
      %v1106 = vunpack.c.l.b16 %v1073
      %v1107 = vunpack.c.l.b16 %v1074
      %v1108 = vunpack.c.l.b16 %v1075
      %v1109 = vunpack.c.l.b16 %v1076
      %v1110 = vunpack.c.l.b16 %v1077
      %v1111 = vunpack.c.l.b16 %v1078
      %v1112 = vunpack.c.l.b16 %v1079
      %v1113 = vunpack.c.l.b16 %v1080
      %v1114 = vpack.c.b16 %v1107, %v1106
      %v1115 = vpack.c.b16 %v1109, %v1108
      %v1116 = vpack.c.b16 %v1111, %v1110
      %v1117 = vpack.c.b16 %v1113, %v1112
      %v1138 = vunpack.c.l.b16 %v1082
      %v1139 = vunpack.c.l.b16 %v1083
      %v1140 = vunpack.c.l.b16 %v1084
      %v1141 = vunpack.c.l.b16 %v1085
      %v1142 = vunpack.c.l.b16 %v1086
      %v1143 = vunpack.c.l.b16 %v1087
      %v1144 = vunpack.c.l.b16 %v1088
      %v1145 = vunpack.c.l.b16 %v1089
      %v1146 = vunpack.c.l.b16 %v1090
      %v1147 = vunpack.c.l.b16 %v1091
      %v1148 = vunpack.c.l.b16 %v1092
      %v1149 = vunpack.c.l.b16 %v1093
      %v1150 = vunpack.c.l.b16 %v1094
      %v1151 = vunpack.c.l.b16 %v1095
      %v1152 = vunpack.c.l.b16 %v1096
      %v1153 = vunpack.c.l.b16 %v1097
      %v1154 = vpack.c.b16 %v1139, %v1138
      %v1155 = vpack.c.b16 %v1141, %v1140
      %v1156 = vpack.c.b16 %v1143, %v1142
      %v1157 = vpack.c.b16 %v1145, %v1144
      %v1158 = vpack.c.b16 %v1147, %v1146
      %v1159 = vpack.c.b16 %v1149, %v1148
      %v1160 = vpack.c.b16 %v1151, %v1150
      %v1161 = vpack.c.b16 %v1153, %v1152
      %1170 = vmatpush.bf16.msra.mxu0 %v1161
      %1171 = vmatpush.bf16.msra.mxu0 %v1160
      %1172 = vmatpush.bf16.msra.mxu0 %v1159
      %1173 = vmatpush.bf16.msra.mxu0 %v1158
      %1174 = vmatpush.bf16.msra.mxu0 %v1157
      %1175 = vmatpush.bf16.msra.mxu0 %v1156
      %1176 = vmatpush.bf16.msra.mxu0 %v1155
      %1177 = vmatpush.bf16.msra.mxu0 %v1154
      %1178 = vmatmul.bf16.gmra.mxu0 %v1114
      %v1179 = vpop.f32.mrf.mxu0
      %v1180 = vadd.f32 0.0, %v1179
      %v1181 = vpop.f32.mrf.mxu0
      %v1182 = vadd.f32 0.0, %v1181
      %1183 = vmatmul.bf16.gmra.mxu0 %v1115
      %v1184 = vpop.f32.mrf.mxu0
      %v1185 = vadd.f32 0.0, %v1184
      %v1186 = vpop.f32.mrf.mxu0
      %v1187 = vadd.f32 0.0, %v1186
      %1188 = vmatmul.bf16.gmra.mxu0 %v1116
      %v1189 = vpop.f32.mrf.mxu0
      %v1190 = vadd.f32 0.0, %v1189
      %v1191 = vpop.f32.mrf.mxu0
      %v1192 = vadd.f32 0.0, %v1191
      %1193 = vmatmul.bf16.gmra.mxu0 %v1117
      %v1194 = vpop.f32.mrf.mxu0
      %v1195 = vadd.f32 0.0, %v1194
      %v1196 = vpop.f32.mrf.mxu0
      %v1197 = vadd.f32 0.0, %v1196
      %1198 = vdwg.mxu0
      %v1199 = vadd.f32 %v1062, %v1180
      %v1200 = vadd.f32 %v1063, %v1182
      %v1201 = vadd.f32 %v1064, %v1185
      %v1202 = vadd.f32 %v1065, %v1187
      %v1203 = vadd.f32 %v1066, %v1190
      %v1204 = vadd.f32 %v1067, %v1192
      %v1205 = vadd.f32 %v1068, %v1195
      %v1206 = vadd.f32 %v1069, %v1197
      %v1207 = vld [vmem:[%s935] sm:$0xf]
      %v1208 = vld [vmem:[%s935 + $0x4] sm:$0x1]
      %v1209 = vld [vmem:[%s935 + $0x8] sm:$0xf]
      %v1210 = vld [vmem:[%s935 + $0xc] sm:$0x1]
      %v1211 = vld [vmem:[%s935 + $0x10] sm:$0xf]
      %v1212 = vld [vmem:[%s935 + $0x14] sm:$0x1]
      %v1213 = vld [vmem:[%s935 + $0x18] sm:$0xf]
      %v1214 = vld [vmem:[%s935 + $0x1c] sm:$0x1]
      %v1215 = vld [vmem:[%s935 + $0x20] sm:$0xf]
      %v1216 = vld [vmem:[%s935 + $0x24] sm:$0x1]
      %v1217 = vld [vmem:[%s935 + $0x28] sm:$0xf]
      %v1218 = vld [vmem:[%s935 + $0x2c] sm:$0x1]
      %v1219 = vld [vmem:[%s935 + $0x30] sm:$0xf]
      %v1220 = vld [vmem:[%s935 + $0x34] sm:$0x1]
      %v1221 = vld [vmem:[%s935 + $0x38] sm:$0xf]
      %v1222 = vld [vmem:[%s935 + $0x3c] sm:$0x1]
      %v1224 = vshrl.u32 %v1207, 16
      %v1226 = vrot.slane %v1224, 4
      %v1227 = vshll.u32 %v1207, 16
      %v1229 = vrot.slane %v1227, 5
      %v1230 = vor.u32 %v1226, %v1229
      %v1231 = vrot.slane %v1230, 4
      %v1233 = vshll.u32 %v1208, 16
      %v1235 = vrot.slane %v1233, 5
      %v1236 = vsel %vm702, %v1231, %v1235
      %v1238 = vshrl.u32 %v1209, 16
      %v1240 = vrot.slane %v1238, 4
      %v1241 = vshll.u32 %v1209, 16
      %v1243 = vrot.slane %v1241, 5
      %v1244 = vor.u32 %v1240, %v1243
      %v1245 = vrot.slane %v1244, 4
      %v1247 = vshll.u32 %v1210, 16
      %v1249 = vrot.slane %v1247, 5
      %v1250 = vsel %vm702, %v1245, %v1249
      %v1252 = vshrl.u32 %v1211, 16
      %v1254 = vrot.slane %v1252, 4
      %v1255 = vshll.u32 %v1211, 16
      %v1257 = vrot.slane %v1255, 5
      %v1258 = vor.u32 %v1254, %v1257
      %v1259 = vrot.slane %v1258, 4
      %v1261 = vshll.u32 %v1212, 16
      %v1263 = vrot.slane %v1261, 5
      %v1264 = vsel %vm702, %v1259, %v1263
      %v1266 = vshrl.u32 %v1213, 16
      %v1268 = vrot.slane %v1266, 4
      %v1269 = vshll.u32 %v1213, 16
      %v1271 = vrot.slane %v1269, 5
      %v1272 = vor.u32 %v1268, %v1271
      %v1273 = vrot.slane %v1272, 4
      %v1275 = vshll.u32 %v1214, 16
      %v1277 = vrot.slane %v1275, 5
      %v1278 = vsel %vm702, %v1273, %v1277
      %v1280 = vshrl.u32 %v1215, 16
      %v1282 = vrot.slane %v1280, 4
      %v1283 = vshll.u32 %v1215, 16
      %v1285 = vrot.slane %v1283, 5
      %v1286 = vor.u32 %v1282, %v1285
      %v1287 = vrot.slane %v1286, 4
      %v1289 = vshll.u32 %v1216, 16
      %v1291 = vrot.slane %v1289, 5
      %v1292 = vsel %vm702, %v1287, %v1291
      %v1294 = vshrl.u32 %v1217, 16
      %v1296 = vrot.slane %v1294, 4
      %v1297 = vshll.u32 %v1217, 16
      %v1299 = vrot.slane %v1297, 5
      %v1300 = vor.u32 %v1296, %v1299
      %v1301 = vrot.slane %v1300, 4
      %v1303 = vshll.u32 %v1218, 16
      %v1305 = vrot.slane %v1303, 5
      %v1306 = vsel %vm702, %v1301, %v1305
      %v1308 = vshrl.u32 %v1219, 16
      %v1310 = vrot.slane %v1308, 4
      %v1311 = vshll.u32 %v1219, 16
      %v1313 = vrot.slane %v1311, 5
      %v1314 = vor.u32 %v1310, %v1313
      %v1315 = vrot.slane %v1314, 4
      %v1317 = vshll.u32 %v1220, 16
      %v1319 = vrot.slane %v1317, 5
      %v1320 = vsel %vm702, %v1315, %v1319
      %v1322 = vshrl.u32 %v1221, 16
      %v1324 = vrot.slane %v1322, 4
      %v1325 = vshll.u32 %v1221, 16
      %v1327 = vrot.slane %v1325, 5
      %v1328 = vor.u32 %v1324, %v1327
      %v1329 = vrot.slane %v1328, 4
      %v1331 = vshll.u32 %v1222, 16
      %v1333 = vrot.slane %v1331, 5
      %v1334 = vsel %vm702, %v1329, %v1333
      %s1335 = scalar_lea.vmem %s1, 320
      %v1336 = vld [vmem:[%s1335] sm:$0xf]
      %v1337 = vld [vmem:[%s1335 + $0x4] sm:$0xf]
      %v1338 = vld [vmem:[%s1335 + $0x8] sm:$0xf]
      %v1339 = vld [vmem:[%s1335 + $0xc] sm:$0xf]
      %v1340 = vld [vmem:[%s1335 + $0x10] sm:$0xf]
      %v1341 = vld [vmem:[%s1335 + $0x14] sm:$0xf]
      %v1342 = vld [vmem:[%s1335 + $0x18] sm:$0xf]
      %v1343 = vld [vmem:[%s1335 + $0x1c] sm:$0xf]
      %v1344 = vld [vmem:[%s1335 + $0x20] sm:$0xf]
      %v1345 = vld [vmem:[%s1335 + $0x24] sm:$0xf]
      %v1346 = vld [vmem:[%s1335 + $0x28] sm:$0xf]
      %v1347 = vld [vmem:[%s1335 + $0x2c] sm:$0xf]
      %v1348 = vld [vmem:[%s1335 + $0x30] sm:$0xf]
      %v1349 = vld [vmem:[%s1335 + $0x34] sm:$0xf]
      %v1350 = vld [vmem:[%s1335 + $0x38] sm:$0xf]
      %v1351 = vld [vmem:[%s1335 + $0x3c] sm:$0xf]
      %v1352 = vunpack.c.l.b16 %v1236
      %v1353 = vunpack.c.l.b16 %v1250
      %v1354 = vunpack.c.l.b16 %v1264
      %v1355 = vunpack.c.l.b16 %v1278
      %v1356 = vunpack.c.l.b16 %v1292
      %v1357 = vunpack.c.l.b16 %v1306
      %v1358 = vunpack.c.l.b16 %v1320
      %v1359 = vunpack.c.l.b16 %v1334
      %v1360 = vpack.c.b16 %v1353, %v1352
      %v1361 = vpack.c.b16 %v1355, %v1354
      %v1362 = vpack.c.b16 %v1357, %v1356
      %v1363 = vpack.c.b16 %v1359, %v1358
      %v1384 = vunpack.c.l.b16 %v1336
      %v1385 = vunpack.c.l.b16 %v1337
      %v1386 = vunpack.c.l.b16 %v1338
      %v1387 = vunpack.c.l.b16 %v1339
      %v1388 = vunpack.c.l.b16 %v1340
      %v1389 = vunpack.c.l.b16 %v1341
      %v1390 = vunpack.c.l.b16 %v1342
      %v1391 = vunpack.c.l.b16 %v1343
      %v1392 = vunpack.c.l.b16 %v1344
      %v1393 = vunpack.c.l.b16 %v1345
      %v1394 = vunpack.c.l.b16 %v1346
      %v1395 = vunpack.c.l.b16 %v1347
      %v1396 = vunpack.c.l.b16 %v1348
      %v1397 = vunpack.c.l.b16 %v1349
      %v1398 = vunpack.c.l.b16 %v1350
      %v1399 = vunpack.c.l.b16 %v1351
      %v1400 = vpack.c.b16 %v1385, %v1384
      %v1401 = vpack.c.b16 %v1387, %v1386
      %v1402 = vpack.c.b16 %v1389, %v1388
      %v1403 = vpack.c.b16 %v1391, %v1390
      %v1404 = vpack.c.b16 %v1393, %v1392
      %v1405 = vpack.c.b16 %v1395, %v1394
      %v1406 = vpack.c.b16 %v1397, %v1396
      %v1407 = vpack.c.b16 %v1399, %v1398
      %1416 = vmatpush.bf16.msra.mxu0 %v1407
      %1417 = vmatpush.bf16.msra.mxu0 %v1406
      %1418 = vmatpush.bf16.msra.mxu0 %v1405
      %1419 = vmatpush.bf16.msra.mxu0 %v1404
      %1420 = vmatpush.bf16.msra.mxu0 %v1403
      %1421 = vmatpush.bf16.msra.mxu0 %v1402
      %1422 = vmatpush.bf16.msra.mxu0 %v1401
      %1423 = vmatpush.bf16.msra.mxu0 %v1400
      %1424 = vmatmul.bf16.gmra.mxu0 %v1360
      %v1425 = vpop.f32.mrf.mxu0
      %v1426 = vadd.f32 0.0, %v1425
      %v1427 = vpop.f32.mrf.mxu0
      %v1428 = vadd.f32 0.0, %v1427
      %1429 = vmatmul.bf16.gmra.mxu0 %v1361
      %v1430 = vpop.f32.mrf.mxu0
      %v1431 = vadd.f32 0.0, %v1430
      %v1432 = vpop.f32.mrf.mxu0
      %v1433 = vadd.f32 0.0, %v1432
      %1434 = vmatmul.bf16.gmra.mxu0 %v1362
      %v1435 = vpop.f32.mrf.mxu0
      %v1436 = vadd.f32 0.0, %v1435
      %v1437 = vpop.f32.mrf.mxu0
      %v1438 = vadd.f32 0.0, %v1437
      %1439 = vmatmul.bf16.gmra.mxu0 %v1363
      %v1440 = vpop.f32.mrf.mxu0
      %v1441 = vadd.f32 0.0, %v1440
      %v1442 = vpop.f32.mrf.mxu0
      %v1443 = vadd.f32 0.0, %v1442
      %1444 = vdwg.mxu0
      %v1445 = vadd.f32 %v1199, %v1426
      %v1446 = vadd.f32 %v1200, %v1428
      %v1447 = vadd.f32 %v1201, %v1431
      %v1448 = vadd.f32 %v1202, %v1433
      %v1449 = vadd.f32 %v1203, %v1436
      %v1450 = vadd.f32 %v1204, %v1438
      %v1451 = vadd.f32 %v1205, %v1441
      %v1452 = vadd.f32 %v1206, %v1443
      %s1453 = sadd.s32 %s406, 1
      %s1454 = smul.u32 %s1453, 2
      %s1455 = smul.addr %s1454, 4
      %s1456 = scalar_lea.vmem [#allocation2], %s1455
      %v1457 = vld [vmem:[%s1456] sm:$0xf]
      %v1458 = vld [vmem:[%s1456 + $0x8] sm:$0xf]
      %v1459 = vld [vmem:[%s1456 + $0x10] sm:$0xf]
      %v1460 = vld [vmem:[%s1456 + $0x18] sm:$0xf]
      %v1461 = vld [vmem:[%s1456 + $0x20] sm:$0xf]
      %v1462 = vld [vmem:[%s1456 + $0x28] sm:$0xf]
      %v1463 = vld [vmem:[%s1456 + $0x30] sm:$0xf]
      %v1464 = vld [vmem:[%s1456 + $0x38] sm:$0xf]
      %s1465 = scalar_lea.vmem %s1, 384
      %v1466 = vld [vmem:[%s1465] sm:$0xf]
      %v1467 = vld [vmem:[%s1465 + $0x4] sm:$0xf]
      %v1468 = vld [vmem:[%s1465 + $0x8] sm:$0xf]
      %v1469 = vld [vmem:[%s1465 + $0xc] sm:$0xf]
      %v1470 = vld [vmem:[%s1465 + $0x10] sm:$0xf]
      %v1471 = vld [vmem:[%s1465 + $0x14] sm:$0xf]
      %v1472 = vld [vmem:[%s1465 + $0x18] sm:$0xf]
      %v1473 = vld [vmem:[%s1465 + $0x1c] sm:$0xf]
      %v1474 = vld [vmem:[%s1465 + $0x20] sm:$0xf]
      %v1475 = vld [vmem:[%s1465 + $0x24] sm:$0xf]
      %v1476 = vld [vmem:[%s1465 + $0x28] sm:$0xf]
      %v1477 = vld [vmem:[%s1465 + $0x2c] sm:$0xf]
      %v1478 = vld [vmem:[%s1465 + $0x30] sm:$0xf]
      %v1479 = vld [vmem:[%s1465 + $0x34] sm:$0xf]
      %v1480 = vld [vmem:[%s1465 + $0x38] sm:$0xf]
      %v1481 = vld [vmem:[%s1465 + $0x3c] sm:$0xf]
      %v1490 = vunpack.c.l.b16 %v1457
      %v1491 = vunpack.c.l.b16 %v1458
      %v1492 = vunpack.c.l.b16 %v1459
      %v1493 = vunpack.c.l.b16 %v1460
      %v1494 = vunpack.c.l.b16 %v1461
      %v1495 = vunpack.c.l.b16 %v1462
      %v1496 = vunpack.c.l.b16 %v1463
      %v1497 = vunpack.c.l.b16 %v1464
      %v1498 = vpack.c.b16 %v1491, %v1490
      %v1499 = vpack.c.b16 %v1493, %v1492
      %v1500 = vpack.c.b16 %v1495, %v1494
      %v1501 = vpack.c.b16 %v1497, %v1496
      %v1522 = vunpack.c.l.b16 %v1466
      %v1523 = vunpack.c.l.b16 %v1467
      %v1524 = vunpack.c.l.b16 %v1468
      %v1525 = vunpack.c.l.b16 %v1469
      %v1526 = vunpack.c.l.b16 %v1470
      %v1527 = vunpack.c.l.b16 %v1471
      %v1528 = vunpack.c.l.b16 %v1472
      %v1529 = vunpack.c.l.b16 %v1473
      %v1530 = vunpack.c.l.b16 %v1474
      %v1531 = vunpack.c.l.b16 %v1475
      %v1532 = vunpack.c.l.b16 %v1476
      %v1533 = vunpack.c.l.b16 %v1477
      %v1534 = vunpack.c.l.b16 %v1478
      %v1535 = vunpack.c.l.b16 %v1479
      %v1536 = vunpack.c.l.b16 %v1480
      %v1537 = vunpack.c.l.b16 %v1481
      %v1538 = vpack.c.b16 %v1523, %v1522
      %v1539 = vpack.c.b16 %v1525, %v1524
      %v1540 = vpack.c.b16 %v1527, %v1526
      %v1541 = vpack.c.b16 %v1529, %v1528
      %v1542 = vpack.c.b16 %v1531, %v1530
      %v1543 = vpack.c.b16 %v1533, %v1532
      %v1544 = vpack.c.b16 %v1535, %v1534
      %v1545 = vpack.c.b16 %v1537, %v1536
      %1554 = vmatpush.bf16.msra.mxu0 %v1545
      %1555 = vmatpush.bf16.msra.mxu0 %v1544
      %1556 = vmatpush.bf16.msra.mxu0 %v1543
      %1557 = vmatpush.bf16.msra.mxu0 %v1542
      %1558 = vmatpush.bf16.msra.mxu0 %v1541
      %1559 = vmatpush.bf16.msra.mxu0 %v1540
      %1560 = vmatpush.bf16.msra.mxu0 %v1539
      %1561 = vmatpush.bf16.msra.mxu0 %v1538
      %1562 = vmatmul.bf16.gmra.mxu0 %v1498
      %v1563 = vpop.f32.mrf.mxu0
      %v1564 = vadd.f32 0.0, %v1563
      %v1565 = vpop.f32.mrf.mxu0
      %v1566 = vadd.f32 0.0, %v1565
      %1567 = vmatmul.bf16.gmra.mxu0 %v1499
      %v1568 = vpop.f32.mrf.mxu0
      %v1569 = vadd.f32 0.0, %v1568
      %v1570 = vpop.f32.mrf.mxu0
      %v1571 = vadd.f32 0.0, %v1570
      %1572 = vmatmul.bf16.gmra.mxu0 %v1500
      %v1573 = vpop.f32.mrf.mxu0
      %v1574 = vadd.f32 0.0, %v1573
      %v1575 = vpop.f32.mrf.mxu0
      %v1576 = vadd.f32 0.0, %v1575
      %1577 = vmatmul.bf16.gmra.mxu0 %v1501
      %v1578 = vpop.f32.mrf.mxu0
      %v1579 = vadd.f32 0.0, %v1578
      %v1580 = vpop.f32.mrf.mxu0
      %v1581 = vadd.f32 0.0, %v1580
      %1582 = vdwg.mxu0
      %v1583 = vadd.f32 %v1445, %v1564
      %v1584 = vadd.f32 %v1446, %v1566
      %v1585 = vadd.f32 %v1447, %v1569
      %v1586 = vadd.f32 %v1448, %v1571
      %v1587 = vadd.f32 %v1449, %v1574
      %v1588 = vadd.f32 %v1450, %v1576
      %v1589 = vadd.f32 %v1451, %v1579
      %v1590 = vadd.f32 %v1452, %v1581
      %s1591 = sadd.s32 %s1454, 18
      %s1592 = smul.addr %s1591, 4
      %s1593 = scalar_lea.vmem [#allocation2], %s1592
      %v1594 = vld [vmem:[%s1593] sm:$0xf]
      %v1595 = vld [vmem:[%s1593 + $0x8] sm:$0xf]
      %v1596 = vld [vmem:[%s1593 + $0x10] sm:$0xf]
      %v1597 = vld [vmem:[%s1593 + $0x18] sm:$0xf]
      %v1598 = vld [vmem:[%s1593 + $0x20] sm:$0xf]
      %v1599 = vld [vmem:[%s1593 + $0x28] sm:$0xf]
      %v1600 = vld [vmem:[%s1593 + $0x30] sm:$0xf]
      %v1601 = vld [vmem:[%s1593 + $0x38] sm:$0xf]
      %s1602 = scalar_lea.vmem %s1, 448
      %v1603 = vld [vmem:[%s1602] sm:$0xf]
      %v1604 = vld [vmem:[%s1602 + $0x4] sm:$0xf]
      %v1605 = vld [vmem:[%s1602 + $0x8] sm:$0xf]
      %v1606 = vld [vmem:[%s1602 + $0xc] sm:$0xf]
      %v1607 = vld [vmem:[%s1602 + $0x10] sm:$0xf]
      %v1608 = vld [vmem:[%s1602 + $0x14] sm:$0xf]
      %v1609 = vld [vmem:[%s1602 + $0x18] sm:$0xf]
      %v1610 = vld [vmem:[%s1602 + $0x1c] sm:$0xf]
      %v1611 = vld [vmem:[%s1602 + $0x20] sm:$0xf]
      %v1612 = vld [vmem:[%s1602 + $0x24] sm:$0xf]
      %v1613 = vld [vmem:[%s1602 + $0x28] sm:$0xf]
      %v1614 = vld [vmem:[%s1602 + $0x2c] sm:$0xf]
      %v1615 = vld [vmem:[%s1602 + $0x30] sm:$0xf]
      %v1616 = vld [vmem:[%s1602 + $0x34] sm:$0xf]
      %v1617 = vld [vmem:[%s1602 + $0x38] sm:$0xf]
      %v1618 = vld [vmem:[%s1602 + $0x3c] sm:$0xf]
      %v1627 = vunpack.c.l.b16 %v1594
      %v1628 = vunpack.c.l.b16 %v1595
      %v1629 = vunpack.c.l.b16 %v1596
      %v1630 = vunpack.c.l.b16 %v1597
      %v1631 = vunpack.c.l.b16 %v1598
      %v1632 = vunpack.c.l.b16 %v1599
      %v1633 = vunpack.c.l.b16 %v1600
      %v1634 = vunpack.c.l.b16 %v1601
      %v1635 = vpack.c.b16 %v1628, %v1627
      %v1636 = vpack.c.b16 %v1630, %v1629
      %v1637 = vpack.c.b16 %v1632, %v1631
      %v1638 = vpack.c.b16 %v1634, %v1633
      %v1659 = vunpack.c.l.b16 %v1603
      %v1660 = vunpack.c.l.b16 %v1604
      %v1661 = vunpack.c.l.b16 %v1605
      %v1662 = vunpack.c.l.b16 %v1606
      %v1663 = vunpack.c.l.b16 %v1607
      %v1664 = vunpack.c.l.b16 %v1608
      %v1665 = vunpack.c.l.b16 %v1609
      %v1666 = vunpack.c.l.b16 %v1610
      %v1667 = vunpack.c.l.b16 %v1611
      %v1668 = vunpack.c.l.b16 %v1612
      %v1669 = vunpack.c.l.b16 %v1613
      %v1670 = vunpack.c.l.b16 %v1614
      %v1671 = vunpack.c.l.b16 %v1615
      %v1672 = vunpack.c.l.b16 %v1616
      %v1673 = vunpack.c.l.b16 %v1617
      %v1674 = vunpack.c.l.b16 %v1618
      %v1675 = vpack.c.b16 %v1660, %v1659
      %v1676 = vpack.c.b16 %v1662, %v1661
      %v1677 = vpack.c.b16 %v1664, %v1663
      %v1678 = vpack.c.b16 %v1666, %v1665
      %v1679 = vpack.c.b16 %v1668, %v1667
      %v1680 = vpack.c.b16 %v1670, %v1669
      %v1681 = vpack.c.b16 %v1672, %v1671
      %v1682 = vpack.c.b16 %v1674, %v1673
      %1691 = vmatpush.bf16.msra.mxu0 %v1682
      %1692 = vmatpush.bf16.msra.mxu0 %v1681
      %1693 = vmatpush.bf16.msra.mxu0 %v1680
      %1694 = vmatpush.bf16.msra.mxu0 %v1679
      %1695 = vmatpush.bf16.msra.mxu0 %v1678
      %1696 = vmatpush.bf16.msra.mxu0 %v1677
      %1697 = vmatpush.bf16.msra.mxu0 %v1676
      %1698 = vmatpush.bf16.msra.mxu0 %v1675
      %1699 = vmatmul.bf16.gmra.mxu0 %v1635
      %v1700 = vpop.f32.mrf.mxu0
      %v1701 = vadd.f32 0.0, %v1700
      %v1702 = vpop.f32.mrf.mxu0
      %v1703 = vadd.f32 0.0, %v1702
      %1704 = vmatmul.bf16.gmra.mxu0 %v1636
      %v1705 = vpop.f32.mrf.mxu0
      %v1706 = vadd.f32 0.0, %v1705
      %v1707 = vpop.f32.mrf.mxu0
      %v1708 = vadd.f32 0.0, %v1707
      %1709 = vmatmul.bf16.gmra.mxu0 %v1637
      %v1710 = vpop.f32.mrf.mxu0
      %v1711 = vadd.f32 0.0, %v1710
      %v1712 = vpop.f32.mrf.mxu0
      %v1713 = vadd.f32 0.0, %v1712
      %1714 = vmatmul.bf16.gmra.mxu0 %v1638
      %v1715 = vpop.f32.mrf.mxu0
      %v1716 = vadd.f32 0.0, %v1715
      %v1717 = vpop.f32.mrf.mxu0
      %v1718 = vadd.f32 0.0, %v1717
      %1719 = vdwg.mxu0
      %v1720 = vadd.f32 %v1583, %v1701
      %v1721 = vadd.f32 %v1584, %v1703
      %v1722 = vadd.f32 %v1585, %v1706
      %v1723 = vadd.f32 %v1586, %v1708
      %v1724 = vadd.f32 %v1587, %v1711
      %v1725 = vadd.f32 %v1588, %v1713
      %v1726 = vadd.f32 %v1589, %v1716
      %v1727 = vadd.f32 %v1590, %v1718
      %v1728 = vld [vmem:[%s1456] sm:$0xf]
      %v1729 = vld [vmem:[%s1456 + $0x4] sm:$0x1]
      %v1730 = vld [vmem:[%s1456 + $0x8] sm:$0xf]
      %v1731 = vld [vmem:[%s1456 + $0xc] sm:$0x1]
      %v1732 = vld [vmem:[%s1456 + $0x10] sm:$0xf]
      %v1733 = vld [vmem:[%s1456 + $0x14] sm:$0x1]
      %v1734 = vld [vmem:[%s1456 + $0x18] sm:$0xf]
      %v1735 = vld [vmem:[%s1456 + $0x1c] sm:$0x1]
      %v1736 = vld [vmem:[%s1456 + $0x20] sm:$0xf]
      %v1737 = vld [vmem:[%s1456 + $0x24] sm:$0x1]
      %v1738 = vld [vmem:[%s1456 + $0x28] sm:$0xf]
      %v1739 = vld [vmem:[%s1456 + $0x2c] sm:$0x1]
      %v1740 = vld [vmem:[%s1456 + $0x30] sm:$0xf]
      %v1741 = vld [vmem:[%s1456 + $0x34] sm:$0x1]
      %v1742 = vld [vmem:[%s1456 + $0x38] sm:$0xf]
      %v1743 = vld [vmem:[%s1456 + $0x3c] sm:$0x1]
      %v1745 = vshrl.u32 %v1728, 16
      %v1747 = vrot.slane %v1745, 4
      %v1748 = vshll.u32 %v1728, 16
      %v1750 = vrot.slane %v1748, 5
      %v1751 = vor.u32 %v1747, %v1750
      %v1752 = vrot.slane %v1751, 4
      %v1754 = vshll.u32 %v1729, 16
      %v1756 = vrot.slane %v1754, 5
      %v1757 = vsel %vm702, %v1752, %v1756
      %v1759 = vshrl.u32 %v1730, 16
      %v1761 = vrot.slane %v1759, 4
      %v1762 = vshll.u32 %v1730, 16
      %v1764 = vrot.slane %v1762, 5
      %v1765 = vor.u32 %v1761, %v1764
      %v1766 = vrot.slane %v1765, 4
      %v1768 = vshll.u32 %v1731, 16
      %v1770 = vrot.slane %v1768, 5
      %v1771 = vsel %vm702, %v1766, %v1770
      %v1773 = vshrl.u32 %v1732, 16
      %v1775 = vrot.slane %v1773, 4
      %v1776 = vshll.u32 %v1732, 16
      %v1778 = vrot.slane %v1776, 5
      %v1779 = vor.u32 %v1775, %v1778
      %v1780 = vrot.slane %v1779, 4
      %v1782 = vshll.u32 %v1733, 16
      %v1784 = vrot.slane %v1782, 5
      %v1785 = vsel %vm702, %v1780, %v1784
      %v1787 = vshrl.u32 %v1734, 16
      %v1789 = vrot.slane %v1787, 4
      %v1790 = vshll.u32 %v1734, 16
      %v1792 = vrot.slane %v1790, 5
      %v1793 = vor.u32 %v1789, %v1792
      %v1794 = vrot.slane %v1793, 4
      %v1796 = vshll.u32 %v1735, 16
      %v1798 = vrot.slane %v1796, 5
      %v1799 = vsel %vm702, %v1794, %v1798
      %v1801 = vshrl.u32 %v1736, 16
      %v1803 = vrot.slane %v1801, 4
      %v1804 = vshll.u32 %v1736, 16
      %v1806 = vrot.slane %v1804, 5
      %v1807 = vor.u32 %v1803, %v1806
      %v1808 = vrot.slane %v1807, 4
      %v1810 = vshll.u32 %v1737, 16
      %v1812 = vrot.slane %v1810, 5
      %v1813 = vsel %vm702, %v1808, %v1812
      %v1815 = vshrl.u32 %v1738, 16
      %v1817 = vrot.slane %v1815, 4
      %v1818 = vshll.u32 %v1738, 16
      %v1820 = vrot.slane %v1818, 5
      %v1821 = vor.u32 %v1817, %v1820
      %v1822 = vrot.slane %v1821, 4
      %v1824 = vshll.u32 %v1739, 16
      %v1826 = vrot.slane %v1824, 5
      %v1827 = vsel %vm702, %v1822, %v1826
      %v1829 = vshrl.u32 %v1740, 16
      %v1831 = vrot.slane %v1829, 4
      %v1832 = vshll.u32 %v1740, 16
      %v1834 = vrot.slane %v1832, 5
      %v1835 = vor.u32 %v1831, %v1834
      %v1836 = vrot.slane %v1835, 4
      %v1838 = vshll.u32 %v1741, 16
      %v1840 = vrot.slane %v1838, 5
      %v1841 = vsel %vm702, %v1836, %v1840
      %v1843 = vshrl.u32 %v1742, 16
      %v1845 = vrot.slane %v1843, 4
      %v1846 = vshll.u32 %v1742, 16
      %v1848 = vrot.slane %v1846, 5
      %v1849 = vor.u32 %v1845, %v1848
      %v1850 = vrot.slane %v1849, 4
      %v1852 = vshll.u32 %v1743, 16
      %v1854 = vrot.slane %v1852, 5
      %v1855 = vsel %vm702, %v1850, %v1854
      %s1856 = scalar_lea.vmem %s1, 512
      %v1857 = vld [vmem:[%s1856] sm:$0xf]
      %v1858 = vld [vmem:[%s1856 + $0x4] sm:$0xf]
      %v1859 = vld [vmem:[%s1856 + $0x8] sm:$0xf]
      %v1860 = vld [vmem:[%s1856 + $0xc] sm:$0xf]
      %v1861 = vld [vmem:[%s1856 + $0x10] sm:$0xf]
      %v1862 = vld [vmem:[%s1856 + $0x14] sm:$0xf]
      %v1863 = vld [vmem:[%s1856 + $0x18] sm:$0xf]
      %v1864 = vld [vmem:[%s1856 + $0x1c] sm:$0xf]
      %v1865 = vld [vmem:[%s1856 + $0x20] sm:$0xf]
      %v1866 = vld [vmem:[%s1856 + $0x24] sm:$0xf]
      %v1867 = vld [vmem:[%s1856 + $0x28] sm:$0xf]
      %v1868 = vld [vmem:[%s1856 + $0x2c] sm:$0xf]
      %v1869 = vld [vmem:[%s1856 + $0x30] sm:$0xf]
      %v1870 = vld [vmem:[%s1856 + $0x34] sm:$0xf]
      %v1871 = vld [vmem:[%s1856 + $0x38] sm:$0xf]
      %v1872 = vld [vmem:[%s1856 + $0x3c] sm:$0xf]
      %v1873 = vunpack.c.l.b16 %v1757
      %v1874 = vunpack.c.l.b16 %v1771
      %v1875 = vunpack.c.l.b16 %v1785
      %v1876 = vunpack.c.l.b16 %v1799
      %v1877 = vunpack.c.l.b16 %v1813
      %v1878 = vunpack.c.l.b16 %v1827
      %v1879 = vunpack.c.l.b16 %v1841
      %v1880 = vunpack.c.l.b16 %v1855
      %v1881 = vpack.c.b16 %v1874, %v1873
      %v1882 = vpack.c.b16 %v1876, %v1875
      %v1883 = vpack.c.b16 %v1878, %v1877
      %v1884 = vpack.c.b16 %v1880, %v1879
      %v1905 = vunpack.c.l.b16 %v1857
      %v1906 = vunpack.c.l.b16 %v1858
      %v1907 = vunpack.c.l.b16 %v1859
      %v1908 = vunpack.c.l.b16 %v1860
      %v1909 = vunpack.c.l.b16 %v1861
      %v1910 = vunpack.c.l.b16 %v1862
      %v1911 = vunpack.c.l.b16 %v1863
      %v1912 = vunpack.c.l.b16 %v1864
      %v1913 = vunpack.c.l.b16 %v1865
      %v1914 = vunpack.c.l.b16 %v1866
      %v1915 = vunpack.c.l.b16 %v1867
      %v1916 = vunpack.c.l.b16 %v1868
      %v1917 = vunpack.c.l.b16 %v1869
      %v1918 = vunpack.c.l.b16 %v1870
      %v1919 = vunpack.c.l.b16 %v1871
      %v1920 = vunpack.c.l.b16 %v1872
      %v1921 = vpack.c.b16 %v1906, %v1905
      %v1922 = vpack.c.b16 %v1908, %v1907
      %v1923 = vpack.c.b16 %v1910, %v1909
      %v1924 = vpack.c.b16 %v1912, %v1911
      %v1925 = vpack.c.b16 %v1914, %v1913
      %v1926 = vpack.c.b16 %v1916, %v1915
      %v1927 = vpack.c.b16 %v1918, %v1917
      %v1928 = vpack.c.b16 %v1920, %v1919
      %1937 = vmatpush.bf16.msra.mxu0 %v1928
      %1938 = vmatpush.bf16.msra.mxu0 %v1927
      %1939 = vmatpush.bf16.msra.mxu0 %v1926
      %1940 = vmatpush.bf16.msra.mxu0 %v1925
      %1941 = vmatpush.bf16.msra.mxu0 %v1924
      %1942 = vmatpush.bf16.msra.mxu0 %v1923
      %1943 = vmatpush.bf16.msra.mxu0 %v1922
      %1944 = vmatpush.bf16.msra.mxu0 %v1921
      %1945 = vmatmul.bf16.gmra.mxu0 %v1881
      %v1946 = vpop.f32.mrf.mxu0
      %v1947 = vadd.f32 0.0, %v1946
      %v1948 = vpop.f32.mrf.mxu0
      %v1949 = vadd.f32 0.0, %v1948
      %1950 = vmatmul.bf16.gmra.mxu0 %v1882
      %v1951 = vpop.f32.mrf.mxu0
      %v1952 = vadd.f32 0.0, %v1951
      %v1953 = vpop.f32.mrf.mxu0
      %v1954 = vadd.f32 0.0, %v1953
      %1955 = vmatmul.bf16.gmra.mxu0 %v1883
      %v1956 = vpop.f32.mrf.mxu0
      %v1957 = vadd.f32 0.0, %v1956
      %v1958 = vpop.f32.mrf.mxu0
      %v1959 = vadd.f32 0.0, %v1958
      %1960 = vmatmul.bf16.gmra.mxu0 %v1884
      %v1961 = vpop.f32.mrf.mxu0
      %v1962 = vadd.f32 0.0, %v1961
      %v1963 = vpop.f32.mrf.mxu0
      %v1964 = vadd.f32 0.0, %v1963
      %1965 = vdwg.mxu0
      %v1966 = vadd.f32 %v1720, %v1947
      %v1967 = vadd.f32 %v1721, %v1949
      %v1968 = vadd.f32 %v1722, %v1952
      %v1969 = vadd.f32 %v1723, %v1954
      %v1970 = vadd.f32 %v1724, %v1957
      %v1971 = vadd.f32 %v1725, %v1959
      %v1972 = vadd.f32 %v1726, %v1962
      %v1973 = vadd.f32 %v1727, %v1964
      %v1974 = vmul.f32 %v1966, 0.5
      %v1975 = vmul.f32 %v1967, 0.5
      %v1976 = vmul.f32 %v1968, 0.5
      %v1977 = vmul.f32 %v1969, 0.5
      %v1978 = vmul.f32 %v1970, 0.5
      %v1979 = vmul.f32 %v1971, 0.5
      %v1980 = vmul.f32 %v1972, 0.5
      %v1981 = vmul.f32 %v1973, 0.5
      %v1982 = vtanh.pop %v1974
      %v1983 = vtanh.pop %v1975
      %v1984 = vtanh.pop %v1976
      %v1985 = vtanh.pop %v1977
      %v1986 = vtanh.pop %v1978
      %v1987 = vtanh.pop %v1979
      %v1988 = vtanh.pop %v1980
      %v1989 = vtanh.pop %v1981
      %v1990 = vadd.f32 %v1982, 1.0
      %v1991 = vadd.f32 %v1983, 1.0
      %v1992 = vadd.f32 %v1984, 1.0
      %v1993 = vadd.f32 %v1985, 1.0
      %v1994 = vadd.f32 %v1986, 1.0
      %v1995 = vadd.f32 %v1987, 1.0
      %v1996 = vadd.f32 %v1988, 1.0
      %v1997 = vadd.f32 %v1989, 1.0
      %v1998 = vmul.f32 %v1990, 0.5
      %v1999 = vmul.f32 %v1991, 0.5
      %v2000 = vmul.f32 %v1992, 0.5
      %v2001 = vmul.f32 %v1993, 0.5
      %v2002 = vmul.f32 %v1994, 0.5
      %v2003 = vmul.f32 %v1995, 0.5
      %v2004 = vmul.f32 %v1996, 0.5
      %v2005 = vmul.f32 %v1997, 0.5
      %v2006 = vmul.f32 %v1966, %v1998
      %v2007 = vmul.f32 %v1967, %v1999
      %v2008 = vmul.f32 %v1968, %v2000
      %v2009 = vmul.f32 %v1969, %v2001
      %v2010 = vmul.f32 %v1970, %v2002
      %v2011 = vmul.f32 %v1971, %v2003
      %v2012 = vmul.f32 %v1972, %v2004
      %v2013 = vmul.f32 %v1973, %v2005
      %v2014 = vpack.c.bf16 %v2006, %v2006
      %v2015 = vpack.c.bf16 %v2007, %v2007
      %v2016 = vpack.c.bf16 %v2008, %v2008
      %v2017 = vpack.c.bf16 %v2009, %v2009
      %v2018 = vpack.c.bf16 %v2010, %v2010
      %v2019 = vpack.c.bf16 %v2011, %v2011
      %v2020 = vpack.c.bf16 %v2012, %v2012
      %v2021 = vpack.c.bf16 %v2013, %v2013
      %2022 = vst [vmem:[%s192] sm:$0xf] %v2014
      %2023 = vst [vmem:[%s192 + $0x4] sm:$0xf] %v2015
      %2024 = vst [vmem:[%s192 + $0x8] sm:$0xf] %v2016
      %2025 = vst [vmem:[%s192 + $0xc] sm:$0xf] %v2017
      %2026 = vst [vmem:[%s192 + $0x10] sm:$0xf] %v2018
      %2027 = vst [vmem:[%s192 + $0x14] sm:$0xf] %v2019
      %2028 = vst [vmem:[%s192 + $0x18] sm:$0xf] %v2020
      %2029 = vst [vmem:[%s192 + $0x1c] sm:$0xf] %v2021
      %s2030 = smul.u32 8, %s19
      %p2031 = scmp.lt.s32.totalorder %s18, 1
      %s2032 = scalar_select %p2031, %s18, 1
      %p2033 = scmp.lt.s32.totalorder %s2030, 7
      %s2034 = scalar_select %p2033, %s2030, 7
      %s2035 = smul.addr %s2032, 8
      %s2036 = sadd.s32 %s2034, %s2035
      %s2037 = smul.addr %s2036, 4
      %s2038 = scalar_lea.vmem %s3, %s2037
      // Predicated region
      $region33: #{timm_model_forward.4} parent=31 // pred_check
        %p2039 = pneg %p114
      $region34: #{timm_model_forward.4} parent=31 // pred_check_branch
        %2041 = sbr.rel (%p2039) target = $region36
      $region35: #{timm_model_forward.4} parent=31 // pred_region
        %s2042 = smul.u32 8, %s19
      $region36: #{timm_model_forward.4} parent=31 // pred_fallthru
        _
    $region32: #{timm_model_forward.4} parent=5 // pred_fallthru
      _
    %p2043 = scmp.le.s32.totalorder 2, %s9
    // Predicated region
    $region37: #{timm_model_forward.4} parent=5 // pred_check
      %p2044 = pneg %p2043
    $region38: #{timm_model_forward.4} parent=5 // pred_check_branch
      %2046 = sbr.rel (%p2044) target = $region40
    $region39: #{timm_model_forward.4} parent=5 // pred_region
      %s2047 = ssub.s32 %s9, 2
      // Predicated region
      $region41: #{timm_model_forward.4} parent=39 // pred_check
        %p2048 = pneg %p120
      $region42: #{timm_model_forward.4} parent=39 // pred_check_branch
        %2050 = sbr.rel (%p2048) target = $region44
      $region43: #{timm_model_forward.4} parent=39 // pred_region
        %s2051 = smul.u32 8, %s21
        %p2052 = scmp.lt.s32.totalorder %s20, 1
        %s2053 = scalar_select %p2052, %s20, 1
        %p2054 = scmp.lt.s32.totalorder %s2051, 7
        %s2055 = scalar_select %p2054, %s2051, 7
        %s2056 = smul.addr %s2053, 8
        %s2057 = sadd.s32 %s2055, %s2056
        %s2058 = smul.addr %s2057, 4
        %s2059 = scalar_lea.vmem %s3, %s2058
      $region44: #{timm_model_forward.4} parent=39 // pred_fallthru
        _
    $region40: #{timm_model_forward.4} parent=5 // pred_fallthru
      _
  $region6: #{timm_model_forward.4} parent=0 // loop_footer
    %s13 = sadd.s32 1, %s9
  $region7: #{timm_model_forward.4} parent=0 // loop_footer_branch
    %8 = sbr.rel target = $region3
  $region8: #{timm_model_forward.4} parent=0 // loop_exit
    _

</llo_original>
